<compile_context>
chip_gen: v6e
topology: v6e:2x2x1
jax: 0.10.0
libtpu: 0.0.40
codegen_flags: <defaults>
</compile_context>

<pallas_src>
import functools

import jax
import jax.numpy as jnp
from jax.experimental import pallas as pl
from jax.experimental.pallas import tpu as pltpu


# ----------------------------------------------------------------------------
# In-kernel helpers
# ----------------------------------------------------------------------------
def _ln(x, g, b, eps=1e-5):
    # x: (R, W) f32; g, b: (1, W) f32
    mean = jnp.mean(x, axis=-1, keepdims=True)
    var = jnp.mean((x - mean) ** 2, axis=-1, keepdims=True)
    return (x - mean) * jax.lax.rsqrt(var + eps) * g + b


# ----------------------------------------------------------------------------
# Fused transformer kernel: ln_pre -> [layers x (MHA + MLP)] -> ln_post
# ----------------------------------------------------------------------------
def fused_transformer_kernel(
        x_ref,
        lnpre_g_ref, lnpre_b_ref,
        ln1g_ref, ln1b_ref,
        wq_ref, bq_ref, wk_ref, bk_ref, wv_ref, bv_ref,
        wo_ref, bo_ref,
        ln2g_ref, ln2b_ref,
        wfc_ref, bfc_ref, wpr_ref, bpr_ref,
        lnpost_g_ref, lnpost_b_ref,
        o_ref,
        *, heads, seq_len):
    R, W = x_ref.shape                   # R = (sequences in this chunk) * seq_len
    L = seq_len
    Bc = R // L
    dh = W // heads
    nl = wq_ref.shape[0]
    scale = 1.0 / (dh ** 0.5)
    cdt = jnp.bfloat16                   # MXU operand dtype; accumulation stays f32

    # ln_pre (whole chunk at once)
    x = _ln(x_ref[...], lnpre_g_ref[...], lnpre_b_ref[...])

    for l in range(nl):                  # static unroll (small, weights VMEM-resident)
        # hoist all per-layer params out of the head loop (read once per layer)
        g1, b1 = ln1g_ref[l], ln1b_ref[l]
        wq, bq = wq_ref[l], bq_ref[l]
        wk, bk = wk_ref[l], bk_ref[l]
        wv, bv = wv_ref[l], bv_ref[l]
        wo, bo = wo_ref[l], bo_ref[l]
        g2, b2 = ln2g_ref[l], ln2b_ref[l]
        wfc, bfc = wfc_ref[l], bfc_ref[l]
        wpr, bpr = wpr_ref[l], bpr_ref[l]

        # ---- multi-head self-attention ----
        h = _ln(x, g1, b1).astype(cdt)                                   # (R, W) bf16
        q = jnp.dot(h, wq, preferred_element_type=jnp.float32) + bq      # (R, W) f32
        k = jnp.dot(h, wk, preferred_element_type=jnp.float32) + bk
        v = jnp.dot(h, wv, preferred_element_type=jnp.float32) + bv
        q3 = q.reshape(Bc, L, W)
        k3 = k.reshape(Bc, L, W)
        v3 = v.reshape(Bc, L, W)

        # residual + out-proj bias; per-head context folded through wo row block,
        # which removes the lane-wise concat of head outputs.
        acc = x + bo
        for hd in range(heads):
            sl = slice(hd * dh, (hd + 1) * dh)
            qh = (q3[:, :, sl] * scale).astype(cdt)                      # (Bc, L, dh)
            kh = k3[:, :, sl].astype(cdt)
            vh = v3[:, :, sl].astype(cdt)
            s = jnp.einsum('bqd,bkd->bqk', qh, kh,
                           preferred_element_type=jnp.float32)           # (Bc, L, L)
            s = s - jnp.max(s, axis=-1, keepdims=True)
            e = jnp.exp(s)
            p = e * pl.reciprocal(jnp.sum(e, axis=-1, keepdims=True), approx=True)
            ctx = jnp.einsum('bqk,bkd->bqd', p.astype(cdt), vh,
                             preferred_element_type=jnp.float32)         # (Bc, L, dh)
            acc = acc + jnp.dot(ctx.reshape(R, dh).astype(cdt), wo[sl, :],
                                preferred_element_type=jnp.float32)
        x = acc

        # ---- MLP: c_fc -> QuickGELU -> c_proj ----
        h2 = _ln(x, g2, b2).astype(cdt)
        ff = jnp.dot(h2, wfc, preferred_element_type=jnp.float32) + bfc  # (R, 4W)
        ff = ff * jax.nn.sigmoid(1.702 * ff)                             # QuickGELU (f32)
        x = x + jnp.dot(ff.astype(cdt), wpr, preferred_element_type=jnp.float32) + bpr

    # ln_post
    # TODO(synk): W=64 < 128 lanes -> stores are lane-masked; packing two rows per vreg
    # (or W>=128 models) would make the output slab fully lane-dense.
    o_ref[...] = _ln(x, lnpost_g_ref[...], lnpost_b_ref[...]).astype(o_ref.dtype)


def transformer_stack_pallas(x, params, cfg):
    """x: (B, L, W) f32 batch-major token embeddings -> (B, L, W) f32."""
    B, L, W = x.shape
    heads = cfg["heads"]
    assert W % heads == 0
    # 2 batch chunks -> both TensorCores on v7x; negligible overhead on v5e/v6e.
    n_chunks = 2 if (B % 2 == 0 and B >= 2) else 1
    rows = (B // n_chunks) * L

    lw = params["layers"]
    lnpre_g, lnpre_b = params["ln_pre"]
    lnpost_g, lnpost_b = params["ln_post"]

    x2 = x.reshape(B * L, W)

    args = (
        x2, lnpre_g, lnpre_b,
        lw["ln1_g"], lw["ln1_b"],
        lw["wq"], lw["bq"], lw["wk"], lw["bk"], lw["wv"], lw["bv"],
        lw["wo"], lw["bo"],
        lw["ln2_g"], lw["ln2_b"],
        lw["wfc"], lw["bfc"], lw["wpr"], lw["bpr"],
        lnpost_g, lnpost_b,
    )

    def full_spec(a):
        nd = a.ndim
        return pl.BlockSpec(a.shape, lambda i, _nd=nd: (0,) * _nd)

    in_specs = [pl.BlockSpec((rows, W), lambda i: (i, 0))]
    in_specs += [full_spec(a) for a in args[1:]]

    out = pl.pallas_call(
        functools.partial(fused_transformer_kernel, heads=heads, seq_len=L),
        out_shape=jax.ShapeDtypeStruct((B * L, W), jnp.float32),
        grid=(n_chunks,),
        in_specs=in_specs,
        out_specs=pl.BlockSpec((rows, W), lambda i: (i, 0)),
        compiler_params=pltpu.CompilerParams(dimension_semantics=("parallel",)),
    )(*args)
    return out.reshape(B, L, W)


# ----------------------------------------------------------------------------
# Parameter init (deterministic, synthetic — no checkpoint load)
# ----------------------------------------------------------------------------
def init_params(key, cfg):
    W = cfg["width"]
    nl = cfg["layers"]
    scale = W ** (-0.5)
    wstd = 0.02
    f32, bf16 = jnp.float32, jnp.bfloat16
    keys = iter(jax.random.split(key, 18))

    def nrm(shape, std):
        return std * jax.random.normal(next(keys), shape, f32)

    p = {
        "pos_emb": nrm((cfg["max_input_relationships"] * 3, W), scale),
        "entity_emb": nrm((cfg["num_entities"], W), scale),
        "rel_type_emb": nrm((cfg["num_relationship_types"], W), scale),
        "instance_emb": nrm((cfg["max_entity_instances"], W), scale),
        "class_emb": nrm((1, W), scale),
        # null_embedding exists in the module but is unused in forward (kept for parity)
        "null_emb": nrm((1, W), scale),
        "ln_pre": (jnp.ones((1, W), f32), jnp.zeros((1, W), f32)),
        "ln_post": (jnp.ones((1, W), f32), jnp.zeros((1, W), f32)),
    }
    # Per-layer weights stacked on a leading (layers,) dim; matmul weights stored bf16
    # (halved DMA, native MXU dtype); biases / LN params stay f32.
    p["layers"] = {
        "ln1_g": jnp.ones((nl, 1, W), f32), "ln1_b": jnp.zeros((nl, 1, W), f32),
        "wq": nrm((nl, W, W), wstd).astype(bf16), "bq": nrm((nl, 1, W), wstd),
        "wk": nrm((nl, W, W), wstd).astype(bf16), "bk": nrm((nl, 1, W), wstd),
        "wv": nrm((nl, W, W), wstd).astype(bf16), "bv": nrm((nl, 1, W), wstd),
        "wo": nrm((nl, W, W), wstd).astype(bf16), "bo": nrm((nl, 1, W), wstd),
        "ln2_g": jnp.ones((nl, 1, W), f32), "ln2_b": jnp.zeros((nl, 1, W), f32),
        "wfc": nrm((nl, W, 4 * W), wstd).astype(bf16), "bfc": nrm((nl, 1, 4 * W), wstd),
        "wpr": nrm((nl, 4 * W, W), wstd).astype(bf16), "bpr": nrm((nl, 1, W), wstd),
    }
    return p


# ----------------------------------------------------------------------------
# Forward pass (embedding glue in JAX, whole transformer in one Pallas call)
# ----------------------------------------------------------------------------
def relationship_transformer_forward(params, e0, i0, e1, i1, rel_type, memory, cfg):
    num_steps, num_samplers, R = e0.shape
    assert R == cfg["max_input_relationships"]
    W = cfg["width"]

    rel_emb = jnp.take(params["rel_type_emb"], rel_type, axis=0)
    e0_emb = jnp.take(params["entity_emb"], e0, axis=0) + jnp.take(params["instance_emb"], i0, axis=0)
    e1_emb = jnp.take(params["entity_emb"], e1, axis=0) + jnp.take(params["instance_emb"], i1, axis=0)

    x = jnp.concatenate((rel_emb, e0_emb, e1_emb), axis=2) + params["pos_emb"][None, None]
    cls = jnp.broadcast_to(params["class_emb"].reshape(1, 1, 1, W),
                           (num_steps, num_samplers, 1, W))
    x = jnp.concatenate((cls, x, memory), axis=2)          # (S, N, L, W)
    S, N, L, _ = x.shape
    x = x.reshape(S * N, L, W)

    x = transformer_stack_pallas(x, params, cfg)           # fused ln_pre+layers+ln_post

    x = x.reshape(S, N, L, W)
    cls_emb = x[:, :, 0]
    rel_type_out = x[:, :, 1:R + 1]
    return cls_emb, rel_type_out


# ----------------------------------------------------------------------------
# Pure-JAX f32 reference (numerical sanity check)
# ----------------------------------------------------------------------------
def _ref_ln(x, g, b, eps=1e-5):
    m = jnp.mean(x, axis=-1, keepdims=True)
    v = jnp.mean((x - m) ** 2, axis=-1, keepdims=True)
    return (x - m) * jax.lax.rsqrt(v + eps) * g.reshape(1, 1, -1) + b.reshape(1, 1, -1)


def ref_forward(params, e0, i0, e1, i1, rel_type, memory, cfg):
    S, N, R = e0.shape
    W, heads = cfg["width"], cfg["heads"]
    dh = W // heads
    f32 = jnp.float32
    rel_emb = jnp.take(params["rel_type_emb"], rel_type, axis=0)
    e0_emb = jnp.take(params["entity_emb"], e0, axis=0) + jnp.take(params["instance_emb"], i0, axis=0)
    e1_emb = jnp.take(params["entity_emb"], e1, axis=0) + jnp.take(params["instance_emb"], i1, axis=0)
    x = jnp.concatenate((rel_emb, e0_emb, e1_emb), axis=2) + params["pos_emb"][None, None]
    cls = jnp.broadcast_to(params["class_emb"].reshape(1, 1, 1, W), (S, N, 1, W))
    x = jnp.concatenate((cls, x, memory), axis=2)
    L = x.shape[2]
    B = S * N
    x = x.reshape(B, L, W)
    x = _ref_ln(x, params["ln_pre"][0][0], params["ln_pre"][1][0])
    lw = params["layers"]
    for l in range(cfg["layers"]):
        h = _ref_ln(x, lw["ln1_g"][l, 0], lw["ln1_b"][l, 0])
        q = h @ lw["wq"][l].astype(f32) + lw["bq"][l]
        k = h @ lw["wk"][l].astype(f32) + lw["bk"][l]
        v = h @ lw["wv"][l].astype(f32) + lw["bv"][l]
        q = q.reshape(B, L, heads, dh) / (dh ** 0.5)
        k = k.reshape(B, L, heads, dh)
        v = v.reshape(B, L, heads, dh)
        s = jnp.einsum("blhd,bmhd->bhlm", q, k)
        p = jax.nn.softmax(s, axis=-1)
        ctx = jnp.einsum("bhlm,bmhd->blhd", p, v).reshape(B, L, W)
        x = x + ctx @ lw["wo"][l].astype(f32) + lw["bo"][l]
        h2 = _ref_ln(x, lw["ln2_g"][l, 0], lw["ln2_b"][l, 0])
        ff = h2 @ lw["wfc"][l].astype(f32) + lw["bfc"][l]
        ff = ff * jax.nn.sigmoid(1.702 * ff)
        x = x + ff @ lw["wpr"][l].astype(f32) + lw["bpr"][l]
    x = _ref_ln(x, params["ln_post"][0][0], params["ln_post"][1][0])
    x = x.reshape(S, N, L, W)
    return x[:, :, 0], x[:, :, 1:R + 1]


# ----------------------------------------------------------------------------
# Main
# ----------------------------------------------------------------------------
if __name__ == "__main__":
    cfg = dict(
        num_entities=11,
        num_relationship_types=5,
        max_entity_instances=6,
        max_input_relationships=8,   # -> 3*8 = 24 relationship tokens
        num_memory=7,                # total seq L = 1 + 24 + 7 = 32
        width=64,
        layers=2,
        heads=4,
    )
    num_steps, num_samplers = 2, 2

    key = jax.random.PRNGKey(0)
    kp, ke0, ki0, ke1, ki1, kr, km = jax.random.split(key, 7)
    params = init_params(kp, cfg)

    shp = (num_steps, num_samplers, cfg["max_input_relationships"])
    e0 = jax.random.randint(ke0, shp, 0, cfg["num_entities"], dtype=jnp.int32)
    i0 = jax.random.randint(ki0, shp, 0, cfg["max_entity_instances"], dtype=jnp.int32)
    e1 = jax.random.randint(ke1, shp, 0, cfg["num_entities"], dtype=jnp.int32)
    i1 = jax.random.randint(ki1, shp, 0, cfg["max_entity_instances"], dtype=jnp.int32)
    rel_type = jax.random.randint(kr, shp, 0, cfg["num_relationship_types"], dtype=jnp.int32)
    memory = 0.02 * jax.random.normal(
        km, (num_steps, num_samplers, cfg["num_memory"], cfg["width"]), jnp.float32)

    cls_emb, rel_out = relationship_transformer_forward(
        params, e0, i0, e1, i1, rel_type, memory, cfg)
    cls_emb = jax.block_until_ready(cls_emb)
    rel_out = jax.block_until_ready(rel_out)

    assert cls_emb.shape == (num_steps, num_samplers, cfg["width"])
    assert rel_out.shape == (num_steps, num_samplers, cfg["max_input_relationships"], cfg["width"])
    assert bool(jnp.all(jnp.isfinite(cls_emb))) and bool(jnp.all(jnp.isfinite(rel_out)))

    # numerical check against a pure-JAX f32 reference (kernel uses bf16 matmul operands
    # with f32 accumulation, so allow a modest tolerance)
    ref_cls, ref_rel = ref_forward(params, e0, i0, e1, i1, rel_type, memory, cfg)
    assert bool(jnp.allclose(cls_emb, ref_cls, atol=2e-2, rtol=2e-2))
    assert bool(jnp.allclose(rel_out, ref_rel, atol=2e-2, rtol=2e-2))

    print("KERNEL_OK")
</pallas_src>

<mosaic_0001>
module attributes {stable_mosaic.version = 11 : i64} {
  func.func @fused_transformer_kernel(%arg0: i32, %arg1: memref<64x64xf32, #tpu.memory_space<vmem>>, %arg2: memref<1x64xf32, #tpu.memory_space<vmem>>, %arg3: memref<1x64xf32, #tpu.memory_space<vmem>>, %arg4: memref<2x1x64xf32, #tpu.memory_space<vmem>>, %arg5: memref<2x1x64xf32, #tpu.memory_space<vmem>>, %arg6: memref<2x64x64xbf16, #tpu.memory_space<vmem>>, %arg7: memref<2x1x64xf32, #tpu.memory_space<vmem>>, %arg8: memref<2x64x64xbf16, #tpu.memory_space<vmem>>, %arg9: memref<2x1x64xf32, #tpu.memory_space<vmem>>, %arg10: memref<2x64x64xbf16, #tpu.memory_space<vmem>>, %arg11: memref<2x1x64xf32, #tpu.memory_space<vmem>>, %arg12: memref<2x64x64xbf16, #tpu.memory_space<vmem>>, %arg13: memref<2x1x64xf32, #tpu.memory_space<vmem>>, %arg14: memref<2x1x64xf32, #tpu.memory_space<vmem>>, %arg15: memref<2x1x64xf32, #tpu.memory_space<vmem>>, %arg16: memref<2x64x256xbf16, #tpu.memory_space<vmem>>, %arg17: memref<2x1x256xf32, #tpu.memory_space<vmem>>, %arg18: memref<2x256x64xbf16, #tpu.memory_space<vmem>>, %arg19: memref<2x1x64xf32, #tpu.memory_space<vmem>>, %arg20: memref<1x64xf32, #tpu.memory_space<vmem>>, %arg21: memref<1x64xf32, #tpu.memory_space<vmem>>, %arg22: memref<64x64xf32, #tpu.memory_space<vmem>>) attributes {dimension_semantics = [#tpu.dimension_semantics<parallel>], iteration_bounds = array<i64: 2>, scalar_prefetch = 0 : i64, scratch_operands = 0 : i64, tpu.core_type = #tpu.core_type<tc>, window_params = [{transform_indices = @transform_0, window_bounds = array<i64: 64, 64>}, {pipeline_mode = #tpu.pipeline_mode<synchronous>, transform_indices = @transform_1, window_bounds = array<i64: 1, 64>}, {pipeline_mode = #tpu.pipeline_mode<synchronous>, transform_indices = @transform_2, window_bounds = array<i64: 1, 64>}, {pipeline_mode = #tpu.pipeline_mode<synchronous>, transform_indices = @transform_3, window_bounds = array<i64: 2, 1, 64>}, {pipeline_mode = #tpu.pipeline_mode<synchronous>, transform_indices = @transform_4, window_bounds = array<i64: 2, 1, 64>}, {pipeline_mode = #tpu.pipeline_mode<synchronous>, transform_indices = @transform_5, window_bounds = array<i64: 2, 64, 64>}, {pipeline_mode = #tpu.pipeline_mode<synchronous>, transform_indices = @transform_6, window_bounds = array<i64: 2, 1, 64>}, {pipeline_mode = #tpu.pipeline_mode<synchronous>, transform_indices = @transform_7, window_bounds = array<i64: 2, 64, 64>}, {pipeline_mode = #tpu.pipeline_mode<synchronous>, transform_indices = @transform_8, window_bounds = array<i64: 2, 1, 64>}, {pipeline_mode = #tpu.pipeline_mode<synchronous>, transform_indices = @transform_9, window_bounds = array<i64: 2, 64, 64>}, {pipeline_mode = #tpu.pipeline_mode<synchronous>, transform_indices = @transform_10, window_bounds = array<i64: 2, 1, 64>}, {pipeline_mode = #tpu.pipeline_mode<synchronous>, transform_indices = @transform_11, window_bounds = array<i64: 2, 64, 64>}, {pipeline_mode = #tpu.pipeline_mode<synchronous>, transform_indices = @transform_12, window_bounds = array<i64: 2, 1, 64>}, {pipeline_mode = #tpu.pipeline_mode<synchronous>, transform_indices = @transform_13, window_bounds = array<i64: 2, 1, 64>}, {pipeline_mode = #tpu.pipeline_mode<synchronous>, transform_indices = @transform_14, window_bounds = array<i64: 2, 1, 64>}, {pipeline_mode = #tpu.pipeline_mode<synchronous>, transform_indices = @transform_15, window_bounds = array<i64: 2, 64, 256>}, {pipeline_mode = #tpu.pipeline_mode<synchronous>, transform_indices = @transform_16, window_bounds = array<i64: 2, 1, 256>}, {pipeline_mode = #tpu.pipeline_mode<synchronous>, transform_indices = @transform_17, window_bounds = array<i64: 2, 256, 64>}, {pipeline_mode = #tpu.pipeline_mode<synchronous>, transform_indices = @transform_18, window_bounds = array<i64: 2, 1, 64>}, {pipeline_mode = #tpu.pipeline_mode<synchronous>, transform_indices = @transform_19, window_bounds = array<i64: 1, 64>}, {pipeline_mode = #tpu.pipeline_mode<synchronous>, transform_indices = @transform_20, window_bounds = array<i64: 1, 64>}, {transform_indices = @transform_21, window_bounds = array<i64: 64, 64>}]} {
    %c0 = arith.constant 0 : index
    %c0_0 = arith.constant 0 : index
    %0 = vector.load %arg1[%c0, %c0_0] : memref<64x64xf32, #tpu.memory_space<vmem>>, vector<64x64xf32>
    %c0_1 = arith.constant 0 : index
    %c0_2 = arith.constant 0 : index
    %1 = vector.load %arg2[%c0_1, %c0_2] : memref<1x64xf32, #tpu.memory_space<vmem>>, vector<1x64xf32>
    %c0_3 = arith.constant 0 : index
    %c0_4 = arith.constant 0 : index
    %2 = vector.load %arg3[%c0_3, %c0_4] : memref<1x64xf32, #tpu.memory_space<vmem>>, vector<1x64xf32>
    %cst = arith.constant dense<0.000000e+00> : vector<64xf32>
    %3 = vector.multi_reduction <add>, %0, %cst [1] : vector<64x64xf32> to vector<64xf32>
    %4 = vector.shape_cast %3 : vector<64xf32> to vector<64x1xf32>
    %cst_5 = arith.constant 6.400000e+01 : f32
    %5 = vector.broadcast %cst_5 : f32 to vector<64x1xf32>
    %6 = arith.divf %4, %5 : vector<64x1xf32>
    %7 = vector.broadcast %6 : vector<64x1xf32> to vector<64x64xf32>
    %8 = arith.subf %0, %7 : vector<64x64xf32>
    %9 = arith.mulf %8, %8 : vector<64x64xf32>
    %cst_6 = arith.constant dense<0.000000e+00> : vector<64xf32>
    %10 = vector.multi_reduction <add>, %9, %cst_6 [1] : vector<64x64xf32> to vector<64xf32>
    %11 = vector.shape_cast %10 : vector<64xf32> to vector<64x1xf32>
    %cst_7 = arith.constant 6.400000e+01 : f32
    %12 = vector.broadcast %cst_7 : f32 to vector<64x1xf32>
    %13 = arith.divf %11, %12 : vector<64x1xf32>
    %14 = vector.broadcast %6 : vector<64x1xf32> to vector<64x64xf32>
    %15 = arith.subf %0, %14 : vector<64x64xf32>
    %cst_8 = arith.constant 9.99999974E-6 : f32
    %16 = vector.broadcast %cst_8 : f32 to vector<64x1xf32>
    %17 = arith.addf %13, %16 : vector<64x1xf32>
    %18 = math.rsqrt %17 : vector<64x1xf32>
    %19 = vector.broadcast %18 : vector<64x1xf32> to vector<64x64xf32>
    %20 = arith.mulf %15, %19 : vector<64x64xf32>
    %21 = vector.broadcast %1 : vector<1x64xf32> to vector<64x64xf32>
    %22 = arith.mulf %20, %21 : vector<64x64xf32>
    %23 = vector.broadcast %2 : vector<1x64xf32> to vector<64x64xf32>
    %24 = arith.addf %22, %23 : vector<64x64xf32>
    %c0_9 = arith.constant 0 : index
    %c0_10 = arith.constant 0 : index
    %c0_11 = arith.constant 0 : index
    %25 = vector.load %arg4[%c0_9, %c0_10, %c0_11] : memref<2x1x64xf32, #tpu.memory_space<vmem>>, vector<1x1x64xf32>
    %26 = vector.shape_cast %25 : vector<1x1x64xf32> to vector<1x64xf32>
    %c0_12 = arith.constant 0 : index
    %c0_13 = arith.constant 0 : index
    %c0_14 = arith.constant 0 : index
    %27 = vector.load %arg5[%c0_12, %c0_13, %c0_14] : memref<2x1x64xf32, #tpu.memory_space<vmem>>, vector<1x1x64xf32>
    %28 = vector.shape_cast %27 : vector<1x1x64xf32> to vector<1x64xf32>
    %c0_15 = arith.constant 0 : index
    %c0_16 = arith.constant 0 : index
    %c0_17 = arith.constant 0 : index
    %29 = vector.load %arg6[%c0_15, %c0_16, %c0_17] : memref<2x64x64xbf16, #tpu.memory_space<vmem>>, vector<1x64x64xbf16>
    %30 = vector.shape_cast %29 : vector<1x64x64xbf16> to vector<64x64xbf16>
    %c0_18 = arith.constant 0 : index
    %c0_19 = arith.constant 0 : index
    %c0_20 = arith.constant 0 : index
    %31 = vector.load %arg7[%c0_18, %c0_19, %c0_20] : memref<2x1x64xf32, #tpu.memory_space<vmem>>, vector<1x1x64xf32>
    %32 = vector.shape_cast %31 : vector<1x1x64xf32> to vector<1x64xf32>
    %c0_21 = arith.constant 0 : index
    %c0_22 = arith.constant 0 : index
    %c0_23 = arith.constant 0 : index
    %33 = vector.load %arg8[%c0_21, %c0_22, %c0_23] : memref<2x64x64xbf16, #tpu.memory_space<vmem>>, vector<1x64x64xbf16>
    %34 = vector.shape_cast %33 : vector<1x64x64xbf16> to vector<64x64xbf16>
    %c0_24 = arith.constant 0 : index
    %c0_25 = arith.constant 0 : index
    %c0_26 = arith.constant 0 : index
    %35 = vector.load %arg9[%c0_24, %c0_25, %c0_26] : memref<2x1x64xf32, #tpu.memory_space<vmem>>, vector<1x1x64xf32>
    %36 = vector.shape_cast %35 : vector<1x1x64xf32> to vector<1x64xf32>
    %c0_27 = arith.constant 0 : index
    %c0_28 = arith.constant 0 : index
    %c0_29 = arith.constant 0 : index
    %37 = vector.load %arg10[%c0_27, %c0_28, %c0_29] : memref<2x64x64xbf16, #tpu.memory_space<vmem>>, vector<1x64x64xbf16>
    %38 = vector.shape_cast %37 : vector<1x64x64xbf16> to vector<64x64xbf16>
    %c0_30 = arith.constant 0 : index
    %c0_31 = arith.constant 0 : index
    %c0_32 = arith.constant 0 : index
    %39 = vector.load %arg11[%c0_30, %c0_31, %c0_32] : memref<2x1x64xf32, #tpu.memory_space<vmem>>, vector<1x1x64xf32>
    %40 = vector.shape_cast %39 : vector<1x1x64xf32> to vector<1x64xf32>
    %c0_33 = arith.constant 0 : index
    %c0_34 = arith.constant 0 : index
    %c0_35 = arith.constant 0 : index
    %41 = vector.load %arg12[%c0_33, %c0_34, %c0_35] : memref<2x64x64xbf16, #tpu.memory_space<vmem>>, vector<1x64x64xbf16>
    %42 = vector.shape_cast %41 : vector<1x64x64xbf16> to vector<64x64xbf16>
    %c0_36 = arith.constant 0 : index
    %c0_37 = arith.constant 0 : index
    %c0_38 = arith.constant 0 : index
    %43 = vector.load %arg13[%c0_36, %c0_37, %c0_38] : memref<2x1x64xf32, #tpu.memory_space<vmem>>, vector<1x1x64xf32>
    %44 = vector.shape_cast %43 : vector<1x1x64xf32> to vector<1x64xf32>
    %c0_39 = arith.constant 0 : index
    %c0_40 = arith.constant 0 : index
    %c0_41 = arith.constant 0 : index
    %45 = vector.load %arg14[%c0_39, %c0_40, %c0_41] : memref<2x1x64xf32, #tpu.memory_space<vmem>>, vector<1x1x64xf32>
    %46 = vector.shape_cast %45 : vector<1x1x64xf32> to vector<1x64xf32>
    %c0_42 = arith.constant 0 : index
    %c0_43 = arith.constant 0 : index
    %c0_44 = arith.constant 0 : index
    %47 = vector.load %arg15[%c0_42, %c0_43, %c0_44] : memref<2x1x64xf32, #tpu.memory_space<vmem>>, vector<1x1x64xf32>
    %48 = vector.shape_cast %47 : vector<1x1x64xf32> to vector<1x64xf32>
    %c0_45 = arith.constant 0 : index
    %c0_46 = arith.constant 0 : index
    %c0_47 = arith.constant 0 : index
    %49 = vector.load %arg16[%c0_45, %c0_46, %c0_47] : memref<2x64x256xbf16, #tpu.memory_space<vmem>>, vector<1x64x256xbf16>
    %50 = vector.shape_cast %49 : vector<1x64x256xbf16> to vector<64x256xbf16>
    %c0_48 = arith.constant 0 : index
    %c0_49 = arith.constant 0 : index
    %c0_50 = arith.constant 0 : index
    %51 = vector.load %arg17[%c0_48, %c0_49, %c0_50] : memref<2x1x256xf32, #tpu.memory_space<vmem>>, vector<1x1x256xf32>
    %52 = vector.shape_cast %51 : vector<1x1x256xf32> to vector<1x256xf32>
    %c0_51 = arith.constant 0 : index
    %c0_52 = arith.constant 0 : index
    %c0_53 = arith.constant 0 : index
    %53 = vector.load %arg18[%c0_51, %c0_52, %c0_53] : memref<2x256x64xbf16, #tpu.memory_space<vmem>>, vector<1x256x64xbf16>
    %54 = vector.shape_cast %53 : vector<1x256x64xbf16> to vector<256x64xbf16>
    %c0_54 = arith.constant 0 : index
    %c0_55 = arith.constant 0 : index
    %c0_56 = arith.constant 0 : index
    %55 = vector.load %arg19[%c0_54, %c0_55, %c0_56] : memref<2x1x64xf32, #tpu.memory_space<vmem>>, vector<1x1x64xf32>
    %56 = vector.shape_cast %55 : vector<1x1x64xf32> to vector<1x64xf32>
    %cst_57 = arith.constant dense<0.000000e+00> : vector<64xf32>
    %57 = vector.multi_reduction <add>, %24, %cst_57 [1] : vector<64x64xf32> to vector<64xf32>
    %58 = vector.shape_cast %57 : vector<64xf32> to vector<64x1xf32>
    %cst_58 = arith.constant 6.400000e+01 : f32
    %59 = vector.broadcast %cst_58 : f32 to vector<64x1xf32>
    %60 = arith.divf %58, %59 : vector<64x1xf32>
    %61 = vector.broadcast %60 : vector<64x1xf32> to vector<64x64xf32>
    %62 = arith.subf %24, %61 : vector<64x64xf32>
    %63 = arith.mulf %62, %62 : vector<64x64xf32>
    %cst_59 = arith.constant dense<0.000000e+00> : vector<64xf32>
    %64 = vector.multi_reduction <add>, %63, %cst_59 [1] : vector<64x64xf32> to vector<64xf32>
    %65 = vector.shape_cast %64 : vector<64xf32> to vector<64x1xf32>
    %cst_60 = arith.constant 6.400000e+01 : f32
    %66 = vector.broadcast %cst_60 : f32 to vector<64x1xf32>
    %67 = arith.divf %65, %66 : vector<64x1xf32>
    %68 = vector.broadcast %60 : vector<64x1xf32> to vector<64x64xf32>
    %69 = arith.subf %24, %68 : vector<64x64xf32>
    %cst_61 = arith.constant 9.99999974E-6 : f32
    %70 = vector.broadcast %cst_61 : f32 to vector<64x1xf32>
    %71 = arith.addf %67, %70 : vector<64x1xf32>
    %72 = math.rsqrt %71 : vector<64x1xf32>
    %73 = vector.broadcast %72 : vector<64x1xf32> to vector<64x64xf32>
    %74 = arith.mulf %69, %73 : vector<64x64xf32>
    %75 = vector.broadcast %26 : vector<1x64xf32> to vector<64x64xf32>
    %76 = arith.mulf %74, %75 : vector<64x64xf32>
    %77 = vector.broadcast %28 : vector<1x64xf32> to vector<64x64xf32>
    %78 = arith.addf %76, %77 : vector<64x64xf32>
    %79 = arith.truncf %78 : vector<64x64xf32> to vector<64x64xbf16>
    %cst_62 = arith.constant dense<0.000000e+00> : vector<64x64xf32>
    %80 = tpu.matmul %79, %30, %cst_62 {dimension_numbers = #tpu.dot_dimension_numbers<[1], [0], [0], [1], [0, 0, 1, 1], [], []>} : vector<64x64xbf16>, vector<64x64xbf16>, vector<64x64xf32> -> vector<64x64xf32>
    %81 = vector.broadcast %32 : vector<1x64xf32> to vector<64x64xf32>
    %82 = arith.addf %80, %81 : vector<64x64xf32>
    %cst_63 = arith.constant dense<0.000000e+00> : vector<64x64xf32>
    %83 = tpu.matmul %79, %34, %cst_63 {dimension_numbers = #tpu.dot_dimension_numbers<[1], [0], [0], [1], [0, 0, 1, 1], [], []>} : vector<64x64xbf16>, vector<64x64xbf16>, vector<64x64xf32> -> vector<64x64xf32>
    %84 = vector.broadcast %36 : vector<1x64xf32> to vector<64x64xf32>
    %85 = arith.addf %83, %84 : vector<64x64xf32>
    %cst_64 = arith.constant dense<0.000000e+00> : vector<64x64xf32>
    %86 = tpu.matmul %79, %38, %cst_64 {dimension_numbers = #tpu.dot_dimension_numbers<[1], [0], [0], [1], [0, 0, 1, 1], [], []>} : vector<64x64xbf16>, vector<64x64xbf16>, vector<64x64xf32> -> vector<64x64xf32>
    %87 = vector.broadcast %40 : vector<1x64xf32> to vector<64x64xf32>
    %88 = arith.addf %86, %87 : vector<64x64xf32>
    %89 = vector.shape_cast %82 : vector<64x64xf32> to vector<2x32x64xf32>
    %90 = vector.shape_cast %85 : vector<64x64xf32> to vector<2x32x64xf32>
    %91 = vector.shape_cast %88 : vector<64x64xf32> to vector<2x32x64xf32>
    %92 = vector.broadcast %44 : vector<1x64xf32> to vector<64x64xf32>
    %93 = arith.addf %24, %92 : vector<64x64xf32>
    %94 = vector.extract_strided_slice %89 {offsets = [0, 0, 0], sizes = [2, 32, 16], strides = [1, 1, 1]} : vector<2x32x64xf32> to vector<2x32x16xf32>
    %cst_65 = arith.constant 2.500000e-01 : f32
    %95 = vector.broadcast %cst_65 : f32 to vector<2x32x16xf32>
    %96 = arith.mulf %94, %95 : vector<2x32x16xf32>
    %97 = arith.truncf %96 : vector<2x32x16xf32> to vector<2x32x16xbf16>
    %98 = vector.extract_strided_slice %90 {offsets = [0, 0, 0], sizes = [2, 32, 16], strides = [1, 1, 1]} : vector<2x32x64xf32> to vector<2x32x16xf32>
    %99 = arith.truncf %98 : vector<2x32x16xf32> to vector<2x32x16xbf16>
    %100 = vector.extract_strided_slice %91 {offsets = [0, 0, 0], sizes = [2, 32, 16], strides = [1, 1, 1]} : vector<2x32x64xf32> to vector<2x32x16xf32>
    %101 = arith.truncf %100 : vector<2x32x16xf32> to vector<2x32x16xbf16>
    "tpu.trace_start"() <{level = 10 : i32, message = "bqd,bkd->bqk"}> : () -> ()
    %cst_66 = arith.constant dense<0.000000e+00> : vector<2x32x32xf32>
    %102 = tpu.matmul %97, %99, %cst_66 {dimension_numbers = #tpu.dot_dimension_numbers<[2], [2], [1], [1], [0, 0, 0, 1, 1, 1], [0], [0]>} : vector<2x32x16xbf16>, vector<2x32x16xbf16>, vector<2x32x32xf32> -> vector<2x32x32xf32>
    "tpu.trace_stop"() : () -> ()
    %cst_67 = arith.constant dense<0xFF800000> : vector<2x32xf32>
    %103 = vector.multi_reduction <maximumf>, %102, %cst_67 [2] : vector<2x32x32xf32> to vector<2x32xf32>
    %104 = vector.shape_cast %103 : vector<2x32xf32> to vector<2x32x1xf32>
    %105 = vector.broadcast %104 : vector<2x32x1xf32> to vector<2x32x32xf32>
    %106 = arith.subf %102, %105 : vector<2x32x32xf32>
    %107 = math.exp %106 : vector<2x32x32xf32>
    %cst_68 = arith.constant dense<0.000000e+00> : vector<2x32xf32>
    %108 = vector.multi_reduction <add>, %107, %cst_68 [2] : vector<2x32x32xf32> to vector<2x32xf32>
    %109 = vector.shape_cast %108 : vector<2x32xf32> to vector<2x32x1xf32>
    %110 = tpu.reciprocal %109 {approx = true} : vector<2x32x1xf32> -> vector<2x32x1xf32>
    %111 = vector.broadcast %110 : vector<2x32x1xf32> to vector<2x32x32xf32>
    %112 = arith.mulf %107, %111 : vector<2x32x32xf32>
    %113 = arith.truncf %112 : vector<2x32x32xf32> to vector<2x32x32xbf16>
    "tpu.trace_start"() <{level = 10 : i32, message = "bqk,bkd->bqd"}> : () -> ()
    %cst_69 = arith.constant dense<0.000000e+00> : vector<2x32x16xf32>
    %114 = tpu.matmul %113, %101, %cst_69 {dimension_numbers = #tpu.dot_dimension_numbers<[2], [1], [1], [2], [0, 0, 0, 1, 1, 2], [0], [0]>} : vector<2x32x32xbf16>, vector<2x32x16xbf16>, vector<2x32x16xf32> -> vector<2x32x16xf32>
    "tpu.trace_stop"() : () -> ()
    %115 = vector.shape_cast %114 : vector<2x32x16xf32> to vector<64x16xf32>
    %116 = arith.truncf %115 : vector<64x16xf32> to vector<64x16xbf16>
    %117 = vector.extract_strided_slice %42 {offsets = [0, 0], sizes = [16, 64], strides = [1, 1]} : vector<64x64xbf16> to vector<16x64xbf16>
    %cst_70 = arith.constant dense<0.000000e+00> : vector<64x64xf32>
    %118 = tpu.matmul %116, %117, %cst_70 {dimension_numbers = #tpu.dot_dimension_numbers<[1], [0], [0], [1], [0, 0, 1, 1], [], []>} : vector<64x16xbf16>, vector<16x64xbf16>, vector<64x64xf32> -> vector<64x64xf32>
    %119 = arith.addf %93, %118 : vector<64x64xf32>
    %120 = vector.extract_strided_slice %89 {offsets = [0, 0, 16], sizes = [2, 32, 16], strides = [1, 1, 1]} : vector<2x32x64xf32> to vector<2x32x16xf32>
    %cst_71 = arith.constant 2.500000e-01 : f32
    %121 = vector.broadcast %cst_71 : f32 to vector<2x32x16xf32>
    %122 = arith.mulf %120, %121 : vector<2x32x16xf32>
    %123 = arith.truncf %122 : vector<2x32x16xf32> to vector<2x32x16xbf16>
    %124 = vector.extract_strided_slice %90 {offsets = [0, 0, 16], sizes = [2, 32, 16], strides = [1, 1, 1]} : vector<2x32x64xf32> to vector<2x32x16xf32>
    %125 = arith.truncf %124 : vector<2x32x16xf32> to vector<2x32x16xbf16>
    %126 = vector.extract_strided_slice %91 {offsets = [0, 0, 16], sizes = [2, 32, 16], strides = [1, 1, 1]} : vector<2x32x64xf32> to vector<2x32x16xf32>
    %127 = arith.truncf %126 : vector<2x32x16xf32> to vector<2x32x16xbf16>
    "tpu.trace_start"() <{level = 10 : i32, message = "bqd,bkd->bqk"}> : () -> ()
    %cst_72 = arith.constant dense<0.000000e+00> : vector<2x32x32xf32>
    %128 = tpu.matmul %123, %125, %cst_72 {dimension_numbers = #tpu.dot_dimension_numbers<[2], [2], [1], [1], [0, 0, 0, 1, 1, 1], [0], [0]>} : vector<2x32x16xbf16>, vector<2x32x16xbf16>, vector<2x32x32xf32> -> vector<2x32x32xf32>
    "tpu.trace_stop"() : () -> ()
    %cst_73 = arith.constant dense<0xFF800000> : vector<2x32xf32>
    %129 = vector.multi_reduction <maximumf>, %128, %cst_73 [2] : vector<2x32x32xf32> to vector<2x32xf32>
    %130 = vector.shape_cast %129 : vector<2x32xf32> to vector<2x32x1xf32>
    %131 = vector.broadcast %130 : vector<2x32x1xf32> to vector<2x32x32xf32>
    %132 = arith.subf %128, %131 : vector<2x32x32xf32>
    %133 = math.exp %132 : vector<2x32x32xf32>
    %cst_74 = arith.constant dense<0.000000e+00> : vector<2x32xf32>
    %134 = vector.multi_reduction <add>, %133, %cst_74 [2] : vector<2x32x32xf32> to vector<2x32xf32>
    %135 = vector.shape_cast %134 : vector<2x32xf32> to vector<2x32x1xf32>
    %136 = tpu.reciprocal %135 {approx = true} : vector<2x32x1xf32> -> vector<2x32x1xf32>
    %137 = vector.broadcast %136 : vector<2x32x1xf32> to vector<2x32x32xf32>
    %138 = arith.mulf %133, %137 : vector<2x32x32xf32>
    %139 = arith.truncf %138 : vector<2x32x32xf32> to vector<2x32x32xbf16>
    "tpu.trace_start"() <{level = 10 : i32, message = "bqk,bkd->bqd"}> : () -> ()
    %cst_75 = arith.constant dense<0.000000e+00> : vector<2x32x16xf32>
    %140 = tpu.matmul %139, %127, %cst_75 {dimension_numbers = #tpu.dot_dimension_numbers<[2], [1], [1], [2], [0, 0, 0, 1, 1, 2], [0], [0]>} : vector<2x32x32xbf16>, vector<2x32x16xbf16>, vector<2x32x16xf32> -> vector<2x32x16xf32>
    "tpu.trace_stop"() : () -> ()
    %141 = vector.shape_cast %140 : vector<2x32x16xf32> to vector<64x16xf32>
    %142 = arith.truncf %141 : vector<64x16xf32> to vector<64x16xbf16>
    %143 = vector.extract_strided_slice %42 {offsets = [16, 0], sizes = [16, 64], strides = [1, 1]} : vector<64x64xbf16> to vector<16x64xbf16>
    %cst_76 = arith.constant dense<0.000000e+00> : vector<64x64xf32>
    %144 = tpu.matmul %142, %143, %cst_76 {dimension_numbers = #tpu.dot_dimension_numbers<[1], [0], [0], [1], [0, 0, 1, 1], [], []>} : vector<64x16xbf16>, vector<16x64xbf16>, vector<64x64xf32> -> vector<64x64xf32>
    %145 = arith.addf %119, %144 : vector<64x64xf32>
    %146 = vector.extract_strided_slice %89 {offsets = [0, 0, 32], sizes = [2, 32, 16], strides = [1, 1, 1]} : vector<2x32x64xf32> to vector<2x32x16xf32>
    %cst_77 = arith.constant 2.500000e-01 : f32
    %147 = vector.broadcast %cst_77 : f32 to vector<2x32x16xf32>
    %148 = arith.mulf %146, %147 : vector<2x32x16xf32>
    %149 = arith.truncf %148 : vector<2x32x16xf32> to vector<2x32x16xbf16>
    %150 = vector.extract_strided_slice %90 {offsets = [0, 0, 32], sizes = [2, 32, 16], strides = [1, 1, 1]} : vector<2x32x64xf32> to vector<2x32x16xf32>
    %151 = arith.truncf %150 : vector<2x32x16xf32> to vector<2x32x16xbf16>
    %152 = vector.extract_strided_slice %91 {offsets = [0, 0, 32], sizes = [2, 32, 16], strides = [1, 1, 1]} : vector<2x32x64xf32> to vector<2x32x16xf32>
    %153 = arith.truncf %152 : vector<2x32x16xf32> to vector<2x32x16xbf16>
    "tpu.trace_start"() <{level = 10 : i32, message = "bqd,bkd->bqk"}> : () -> ()
    %cst_78 = arith.constant dense<0.000000e+00> : vector<2x32x32xf32>
    %154 = tpu.matmul %149, %151, %cst_78 {dimension_numbers = #tpu.dot_dimension_numbers<[2], [2], [1], [1], [0, 0, 0, 1, 1, 1], [0], [0]>} : vector<2x32x16xbf16>, vector<2x32x16xbf16>, vector<2x32x32xf32> -> vector<2x32x32xf32>
    "tpu.trace_stop"() : () -> ()
    %cst_79 = arith.constant dense<0xFF800000> : vector<2x32xf32>
    %155 = vector.multi_reduction <maximumf>, %154, %cst_79 [2] : vector<2x32x32xf32> to vector<2x32xf32>
    %156 = vector.shape_cast %155 : vector<2x32xf32> to vector<2x32x1xf32>
    %157 = vector.broadcast %156 : vector<2x32x1xf32> to vector<2x32x32xf32>
    %158 = arith.subf %154, %157 : vector<2x32x32xf32>
    %159 = math.exp %158 : vector<2x32x32xf32>
    %cst_80 = arith.constant dense<0.000000e+00> : vector<2x32xf32>
    %160 = vector.multi_reduction <add>, %159, %cst_80 [2] : vector<2x32x32xf32> to vector<2x32xf32>
    %161 = vector.shape_cast %160 : vector<2x32xf32> to vector<2x32x1xf32>
    %162 = tpu.reciprocal %161 {approx = true} : vector<2x32x1xf32> -> vector<2x32x1xf32>
    %163 = vector.broadcast %162 : vector<2x32x1xf32> to vector<2x32x32xf32>
    %164 = arith.mulf %159, %163 : vector<2x32x32xf32>
    %165 = arith.truncf %164 : vector<2x32x32xf32> to vector<2x32x32xbf16>
    "tpu.trace_start"() <{level = 10 : i32, message = "bqk,bkd->bqd"}> : () -> ()
    %cst_81 = arith.constant dense<0.000000e+00> : vector<2x32x16xf32>
    %166 = tpu.matmul %165, %153, %cst_81 {dimension_numbers = #tpu.dot_dimension_numbers<[2], [1], [1], [2], [0, 0, 0, 1, 1, 2], [0], [0]>} : vector<2x32x32xbf16>, vector<2x32x16xbf16>, vector<2x32x16xf32> -> vector<2x32x16xf32>
    "tpu.trace_stop"() : () -> ()
    %167 = vector.shape_cast %166 : vector<2x32x16xf32> to vector<64x16xf32>
    %168 = arith.truncf %167 : vector<64x16xf32> to vector<64x16xbf16>
    %169 = vector.extract_strided_slice %42 {offsets = [32, 0], sizes = [16, 64], strides = [1, 1]} : vector<64x64xbf16> to vector<16x64xbf16>
    %cst_82 = arith.constant dense<0.000000e+00> : vector<64x64xf32>
    %170 = tpu.matmul %168, %169, %cst_82 {dimension_numbers = #tpu.dot_dimension_numbers<[1], [0], [0], [1], [0, 0, 1, 1], [], []>} : vector<64x16xbf16>, vector<16x64xbf16>, vector<64x64xf32> -> vector<64x64xf32>
    %171 = arith.addf %145, %170 : vector<64x64xf32>
    %172 = vector.extract_strided_slice %89 {offsets = [0, 0, 48], sizes = [2, 32, 16], strides = [1, 1, 1]} : vector<2x32x64xf32> to vector<2x32x16xf32>
    %cst_83 = arith.constant 2.500000e-01 : f32
    %173 = vector.broadcast %cst_83 : f32 to vector<2x32x16xf32>
    %174 = arith.mulf %172, %173 : vector<2x32x16xf32>
    %175 = arith.truncf %174 : vector<2x32x16xf32> to vector<2x32x16xbf16>
    %176 = vector.extract_strided_slice %90 {offsets = [0, 0, 48], sizes = [2, 32, 16], strides = [1, 1, 1]} : vector<2x32x64xf32> to vector<2x32x16xf32>
    %177 = arith.truncf %176 : vector<2x32x16xf32> to vector<2x32x16xbf16>
    %178 = vector.extract_strided_slice %91 {offsets = [0, 0, 48], sizes = [2, 32, 16], strides = [1, 1, 1]} : vector<2x32x64xf32> to vector<2x32x16xf32>
    %179 = arith.truncf %178 : vector<2x32x16xf32> to vector<2x32x16xbf16>
    "tpu.trace_start"() <{level = 10 : i32, message = "bqd,bkd->bqk"}> : () -> ()
    %cst_84 = arith.constant dense<0.000000e+00> : vector<2x32x32xf32>
    %180 = tpu.matmul %175, %177, %cst_84 {dimension_numbers = #tpu.dot_dimension_numbers<[2], [2], [1], [1], [0, 0, 0, 1, 1, 1], [0], [0]>} : vector<2x32x16xbf16>, vector<2x32x16xbf16>, vector<2x32x32xf32> -> vector<2x32x32xf32>
    "tpu.trace_stop"() : () -> ()
    %cst_85 = arith.constant dense<0xFF800000> : vector<2x32xf32>
    %181 = vector.multi_reduction <maximumf>, %180, %cst_85 [2] : vector<2x32x32xf32> to vector<2x32xf32>
    %182 = vector.shape_cast %181 : vector<2x32xf32> to vector<2x32x1xf32>
    %183 = vector.broadcast %182 : vector<2x32x1xf32> to vector<2x32x32xf32>
    %184 = arith.subf %180, %183 : vector<2x32x32xf32>
    %185 = math.exp %184 : vector<2x32x32xf32>
    %cst_86 = arith.constant dense<0.000000e+00> : vector<2x32xf32>
    %186 = vector.multi_reduction <add>, %185, %cst_86 [2] : vector<2x32x32xf32> to vector<2x32xf32>
    %187 = vector.shape_cast %186 : vector<2x32xf32> to vector<2x32x1xf32>
    %188 = tpu.reciprocal %187 {approx = true} : vector<2x32x1xf32> -> vector<2x32x1xf32>
    %189 = vector.broadcast %188 : vector<2x32x1xf32> to vector<2x32x32xf32>
    %190 = arith.mulf %185, %189 : vector<2x32x32xf32>
    %191 = arith.truncf %190 : vector<2x32x32xf32> to vector<2x32x32xbf16>
    "tpu.trace_start"() <{level = 10 : i32, message = "bqk,bkd->bqd"}> : () -> ()
    %cst_87 = arith.constant dense<0.000000e+00> : vector<2x32x16xf32>
    %192 = tpu.matmul %191, %179, %cst_87 {dimension_numbers = #tpu.dot_dimension_numbers<[2], [1], [1], [2], [0, 0, 0, 1, 1, 2], [0], [0]>} : vector<2x32x32xbf16>, vector<2x32x16xbf16>, vector<2x32x16xf32> -> vector<2x32x16xf32>
    "tpu.trace_stop"() : () -> ()
    %193 = vector.shape_cast %192 : vector<2x32x16xf32> to vector<64x16xf32>
    %194 = arith.truncf %193 : vector<64x16xf32> to vector<64x16xbf16>
    %195 = vector.extract_strided_slice %42 {offsets = [48, 0], sizes = [16, 64], strides = [1, 1]} : vector<64x64xbf16> to vector<16x64xbf16>
    %cst_88 = arith.constant dense<0.000000e+00> : vector<64x64xf32>
    %196 = tpu.matmul %194, %195, %cst_88 {dimension_numbers = #tpu.dot_dimension_numbers<[1], [0], [0], [1], [0, 0, 1, 1], [], []>} : vector<64x16xbf16>, vector<16x64xbf16>, vector<64x64xf32> -> vector<64x64xf32>
    %197 = arith.addf %171, %196 : vector<64x64xf32>
    %cst_89 = arith.constant dense<0.000000e+00> : vector<64xf32>
    %198 = vector.multi_reduction <add>, %197, %cst_89 [1] : vector<64x64xf32> to vector<64xf32>
    %199 = vector.shape_cast %198 : vector<64xf32> to vector<64x1xf32>
    %cst_90 = arith.constant 6.400000e+01 : f32
    %200 = vector.broadcast %cst_90 : f32 to vector<64x1xf32>
    %201 = arith.divf %199, %200 : vector<64x1xf32>
    %202 = vector.broadcast %201 : vector<64x1xf32> to vector<64x64xf32>
    %203 = arith.subf %197, %202 : vector<64x64xf32>
    %204 = arith.mulf %203, %203 : vector<64x64xf32>
    %cst_91 = arith.constant dense<0.000000e+00> : vector<64xf32>
    %205 = vector.multi_reduction <add>, %204, %cst_91 [1] : vector<64x64xf32> to vector<64xf32>
    %206 = vector.shape_cast %205 : vector<64xf32> to vector<64x1xf32>
    %cst_92 = arith.constant 6.400000e+01 : f32
    %207 = vector.broadcast %cst_92 : f32 to vector<64x1xf32>
    %208 = arith.divf %206, %207 : vector<64x1xf32>
    %209 = vector.broadcast %201 : vector<64x1xf32> to vector<64x64xf32>
    %210 = arith.subf %197, %209 : vector<64x64xf32>
    %cst_93 = arith.constant 9.99999974E-6 : f32
    %211 = vector.broadcast %cst_93 : f32 to vector<64x1xf32>
    %212 = arith.addf %208, %211 : vector<64x1xf32>
    %213 = math.rsqrt %212 : vector<64x1xf32>
    %214 = vector.broadcast %213 : vector<64x1xf32> to vector<64x64xf32>
    %215 = arith.mulf %210, %214 : vector<64x64xf32>
    %216 = vector.broadcast %46 : vector<1x64xf32> to vector<64x64xf32>
    %217 = arith.mulf %215, %216 : vector<64x64xf32>
    %218 = vector.broadcast %48 : vector<1x64xf32> to vector<64x64xf32>
    %219 = arith.addf %217, %218 : vector<64x64xf32>
    %220 = arith.truncf %219 : vector<64x64xf32> to vector<64x64xbf16>
    %cst_94 = arith.constant dense<0.000000e+00> : vector<64x256xf32>
    %221 = tpu.matmul %220, %50, %cst_94 {dimension_numbers = #tpu.dot_dimension_numbers<[1], [0], [0], [1], [0, 0, 1, 1], [], []>} : vector<64x64xbf16>, vector<64x256xbf16>, vector<64x256xf32> -> vector<64x256xf32>
    %222 = vector.broadcast %52 : vector<1x256xf32> to vector<64x256xf32>
    %223 = arith.addf %221, %222 : vector<64x256xf32>
    %cst_95 = arith.constant 1.702000e+00 : f32
    %224 = vector.broadcast %cst_95 : f32 to vector<64x256xf32>
    %225 = arith.mulf %224, %223 : vector<64x256xf32>
    %226 = arith.negf %225 : vector<64x256xf32>
    %227 = math.exp %226 : vector<64x256xf32>
    %cst_96 = arith.constant 1.000000e+00 : f32
    %228 = vector.broadcast %cst_96 : f32 to vector<64x256xf32>
    %229 = arith.addf %228, %227 : vector<64x256xf32>
    %230 = arith.divf %228, %229 : vector<64x256xf32>
    %231 = arith.mulf %223, %230 : vector<64x256xf32>
    %232 = arith.truncf %231 : vector<64x256xf32> to vector<64x256xbf16>
    %cst_97 = arith.constant dense<0.000000e+00> : vector<64x64xf32>
    %233 = tpu.matmul %232, %54, %cst_97 {dimension_numbers = #tpu.dot_dimension_numbers<[1], [0], [0], [1], [0, 0, 1, 1], [], []>} : vector<64x256xbf16>, vector<256x64xbf16>, vector<64x64xf32> -> vector<64x64xf32>
    %234 = arith.addf %197, %233 : vector<64x64xf32>
    %235 = vector.broadcast %56 : vector<1x64xf32> to vector<64x64xf32>
    %236 = arith.addf %234, %235 : vector<64x64xf32>
    %c1 = arith.constant 1 : index
    %c0_98 = arith.constant 0 : index
    %c0_99 = arith.constant 0 : index
    %237 = vector.load %arg4[%c1, %c0_98, %c0_99] : memref<2x1x64xf32, #tpu.memory_space<vmem>>, vector<1x1x64xf32>
    %238 = vector.shape_cast %237 : vector<1x1x64xf32> to vector<1x64xf32>
    %c1_100 = arith.constant 1 : index
    %c0_101 = arith.constant 0 : index
    %c0_102 = arith.constant 0 : index
    %239 = vector.load %arg5[%c1_100, %c0_101, %c0_102] : memref<2x1x64xf32, #tpu.memory_space<vmem>>, vector<1x1x64xf32>
    %240 = vector.shape_cast %239 : vector<1x1x64xf32> to vector<1x64xf32>
    %c1_103 = arith.constant 1 : index
    %c0_104 = arith.constant 0 : index
    %c0_105 = arith.constant 0 : index
    %241 = vector.load %arg6[%c1_103, %c0_104, %c0_105] : memref<2x64x64xbf16, #tpu.memory_space<vmem>>, vector<1x64x64xbf16>
    %242 = vector.shape_cast %241 : vector<1x64x64xbf16> to vector<64x64xbf16>
    %c1_106 = arith.constant 1 : index
    %c0_107 = arith.constant 0 : index
    %c0_108 = arith.constant 0 : index
    %243 = vector.load %arg7[%c1_106, %c0_107, %c0_108] : memref<2x1x64xf32, #tpu.memory_space<vmem>>, vector<1x1x64xf32>
    %244 = vector.shape_cast %243 : vector<1x1x64xf32> to vector<1x64xf32>
    %c1_109 = arith.constant 1 : index
    %c0_110 = arith.constant 0 : index
    %c0_111 = arith.constant 0 : index
    %245 = vector.load %arg8[%c1_109, %c0_110, %c0_111] : memref<2x64x64xbf16, #tpu.memory_space<vmem>>, vector<1x64x64xbf16>
    %246 = vector.shape_cast %245 : vector<1x64x64xbf16> to vector<64x64xbf16>
    %c1_112 = arith.constant 1 : index
    %c0_113 = arith.constant 0 : index
    %c0_114 = arith.constant 0 : index
    %247 = vector.load %arg9[%c1_112, %c0_113, %c0_114] : memref<2x1x64xf32, #tpu.memory_space<vmem>>, vector<1x1x64xf32>
    %248 = vector.shape_cast %247 : vector<1x1x64xf32> to vector<1x64xf32>
    %c1_115 = arith.constant 1 : index
    %c0_116 = arith.constant 0 : index
    %c0_117 = arith.constant 0 : index
    %249 = vector.load %arg10[%c1_115, %c0_116, %c0_117] : memref<2x64x64xbf16, #tpu.memory_space<vmem>>, vector<1x64x64xbf16>
    %250 = vector.shape_cast %249 : vector<1x64x64xbf16> to vector<64x64xbf16>
    %c1_118 = arith.constant 1 : index
    %c0_119 = arith.constant 0 : index
    %c0_120 = arith.constant 0 : index
    %251 = vector.load %arg11[%c1_118, %c0_119, %c0_120] : memref<2x1x64xf32, #tpu.memory_space<vmem>>, vector<1x1x64xf32>
    %252 = vector.shape_cast %251 : vector<1x1x64xf32> to vector<1x64xf32>
    %c1_121 = arith.constant 1 : index
    %c0_122 = arith.constant 0 : index
    %c0_123 = arith.constant 0 : index
    %253 = vector.load %arg12[%c1_121, %c0_122, %c0_123] : memref<2x64x64xbf16, #tpu.memory_space<vmem>>, vector<1x64x64xbf16>
    %254 = vector.shape_cast %253 : vector<1x64x64xbf16> to vector<64x64xbf16>
    %c1_124 = arith.constant 1 : index
    %c0_125 = arith.constant 0 : index
    %c0_126 = arith.constant 0 : index
    %255 = vector.load %arg13[%c1_124, %c0_125, %c0_126] : memref<2x1x64xf32, #tpu.memory_space<vmem>>, vector<1x1x64xf32>
    %256 = vector.shape_cast %255 : vector<1x1x64xf32> to vector<1x64xf32>
    %c1_127 = arith.constant 1 : index
    %c0_128 = arith.constant 0 : index
    %c0_129 = arith.constant 0 : index
    %257 = vector.load %arg14[%c1_127, %c0_128, %c0_129] : memref<2x1x64xf32, #tpu.memory_space<vmem>>, vector<1x1x64xf32>
    %258 = vector.shape_cast %257 : vector<1x1x64xf32> to vector<1x64xf32>
    %c1_130 = arith.constant 1 : index
    %c0_131 = arith.constant 0 : index
    %c0_132 = arith.constant 0 : index
    %259 = vector.load %arg15[%c1_130, %c0_131, %c0_132] : memref<2x1x64xf32, #tpu.memory_space<vmem>>, vector<1x1x64xf32>
    %260 = vector.shape_cast %259 : vector<1x1x64xf32> to vector<1x64xf32>
    %c1_133 = arith.constant 1 : index
    %c0_134 = arith.constant 0 : index
    %c0_135 = arith.constant 0 : index
    %261 = vector.load %arg16[%c1_133, %c0_134, %c0_135] : memref<2x64x256xbf16, #tpu.memory_space<vmem>>, vector<1x64x256xbf16>
    %262 = vector.shape_cast %261 : vector<1x64x256xbf16> to vector<64x256xbf16>
    %c1_136 = arith.constant 1 : index
    %c0_137 = arith.constant 0 : index
    %c0_138 = arith.constant 0 : index
    %263 = vector.load %arg17[%c1_136, %c0_137, %c0_138] : memref<2x1x256xf32, #tpu.memory_space<vmem>>, vector<1x1x256xf32>
    %264 = vector.shape_cast %263 : vector<1x1x256xf32> to vector<1x256xf32>
    %c1_139 = arith.constant 1 : index
    %c0_140 = arith.constant 0 : index
    %c0_141 = arith.constant 0 : index
    %265 = vector.load %arg18[%c1_139, %c0_140, %c0_141] : memref<2x256x64xbf16, #tpu.memory_space<vmem>>, vector<1x256x64xbf16>
    %266 = vector.shape_cast %265 : vector<1x256x64xbf16> to vector<256x64xbf16>
    %c1_142 = arith.constant 1 : index
    %c0_143 = arith.constant 0 : index
    %c0_144 = arith.constant 0 : index
    %267 = vector.load %arg19[%c1_142, %c0_143, %c0_144] : memref<2x1x64xf32, #tpu.memory_space<vmem>>, vector<1x1x64xf32>
    %268 = vector.shape_cast %267 : vector<1x1x64xf32> to vector<1x64xf32>
    %cst_145 = arith.constant dense<0.000000e+00> : vector<64xf32>
    %269 = vector.multi_reduction <add>, %236, %cst_145 [1] : vector<64x64xf32> to vector<64xf32>
    %270 = vector.shape_cast %269 : vector<64xf32> to vector<64x1xf32>
    %cst_146 = arith.constant 6.400000e+01 : f32
    %271 = vector.broadcast %cst_146 : f32 to vector<64x1xf32>
    %272 = arith.divf %270, %271 : vector<64x1xf32>
    %273 = vector.broadcast %272 : vector<64x1xf32> to vector<64x64xf32>
    %274 = arith.subf %236, %273 : vector<64x64xf32>
    %275 = arith.mulf %274, %274 : vector<64x64xf32>
    %cst_147 = arith.constant dense<0.000000e+00> : vector<64xf32>
    %276 = vector.multi_reduction <add>, %275, %cst_147 [1] : vector<64x64xf32> to vector<64xf32>
    %277 = vector.shape_cast %276 : vector<64xf32> to vector<64x1xf32>
    %cst_148 = arith.constant 6.400000e+01 : f32
    %278 = vector.broadcast %cst_148 : f32 to vector<64x1xf32>
    %279 = arith.divf %277, %278 : vector<64x1xf32>
    %280 = vector.broadcast %272 : vector<64x1xf32> to vector<64x64xf32>
    %281 = arith.subf %236, %280 : vector<64x64xf32>
    %cst_149 = arith.constant 9.99999974E-6 : f32
    %282 = vector.broadcast %cst_149 : f32 to vector<64x1xf32>
    %283 = arith.addf %279, %282 : vector<64x1xf32>
    %284 = math.rsqrt %283 : vector<64x1xf32>
    %285 = vector.broadcast %284 : vector<64x1xf32> to vector<64x64xf32>
    %286 = arith.mulf %281, %285 : vector<64x64xf32>
    %287 = vector.broadcast %238 : vector<1x64xf32> to vector<64x64xf32>
    %288 = arith.mulf %286, %287 : vector<64x64xf32>
    %289 = vector.broadcast %240 : vector<1x64xf32> to vector<64x64xf32>
    %290 = arith.addf %288, %289 : vector<64x64xf32>
    %291 = arith.truncf %290 : vector<64x64xf32> to vector<64x64xbf16>
    %cst_150 = arith.constant dense<0.000000e+00> : vector<64x64xf32>
    %292 = tpu.matmul %291, %242, %cst_150 {dimension_numbers = #tpu.dot_dimension_numbers<[1], [0], [0], [1], [0, 0, 1, 1], [], []>} : vector<64x64xbf16>, vector<64x64xbf16>, vector<64x64xf32> -> vector<64x64xf32>
    %293 = vector.broadcast %244 : vector<1x64xf32> to vector<64x64xf32>
    %294 = arith.addf %292, %293 : vector<64x64xf32>
    %cst_151 = arith.constant dense<0.000000e+00> : vector<64x64xf32>
    %295 = tpu.matmul %291, %246, %cst_151 {dimension_numbers = #tpu.dot_dimension_numbers<[1], [0], [0], [1], [0, 0, 1, 1], [], []>} : vector<64x64xbf16>, vector<64x64xbf16>, vector<64x64xf32> -> vector<64x64xf32>
    %296 = vector.broadcast %248 : vector<1x64xf32> to vector<64x64xf32>
    %297 = arith.addf %295, %296 : vector<64x64xf32>
    %cst_152 = arith.constant dense<0.000000e+00> : vector<64x64xf32>
    %298 = tpu.matmul %291, %250, %cst_152 {dimension_numbers = #tpu.dot_dimension_numbers<[1], [0], [0], [1], [0, 0, 1, 1], [], []>} : vector<64x64xbf16>, vector<64x64xbf16>, vector<64x64xf32> -> vector<64x64xf32>
    %299 = vector.broadcast %252 : vector<1x64xf32> to vector<64x64xf32>
    %300 = arith.addf %298, %299 : vector<64x64xf32>
    %301 = vector.shape_cast %294 : vector<64x64xf32> to vector<2x32x64xf32>
    %302 = vector.shape_cast %297 : vector<64x64xf32> to vector<2x32x64xf32>
    %303 = vector.shape_cast %300 : vector<64x64xf32> to vector<2x32x64xf32>
    %304 = vector.broadcast %256 : vector<1x64xf32> to vector<64x64xf32>
    %305 = arith.addf %236, %304 : vector<64x64xf32>
    %306 = vector.extract_strided_slice %301 {offsets = [0, 0, 0], sizes = [2, 32, 16], strides = [1, 1, 1]} : vector<2x32x64xf32> to vector<2x32x16xf32>
    %cst_153 = arith.constant 2.500000e-01 : f32
    %307 = vector.broadcast %cst_153 : f32 to vector<2x32x16xf32>
    %308 = arith.mulf %306, %307 : vector<2x32x16xf32>
    %309 = arith.truncf %308 : vector<2x32x16xf32> to vector<2x32x16xbf16>
    %310 = vector.extract_strided_slice %302 {offsets = [0, 0, 0], sizes = [2, 32, 16], strides = [1, 1, 1]} : vector<2x32x64xf32> to vector<2x32x16xf32>
    %311 = arith.truncf %310 : vector<2x32x16xf32> to vector<2x32x16xbf16>
    %312 = vector.extract_strided_slice %303 {offsets = [0, 0, 0], sizes = [2, 32, 16], strides = [1, 1, 1]} : vector<2x32x64xf32> to vector<2x32x16xf32>
    %313 = arith.truncf %312 : vector<2x32x16xf32> to vector<2x32x16xbf16>
    "tpu.trace_start"() <{level = 10 : i32, message = "bqd,bkd->bqk"}> : () -> ()
    %cst_154 = arith.constant dense<0.000000e+00> : vector<2x32x32xf32>
    %314 = tpu.matmul %309, %311, %cst_154 {dimension_numbers = #tpu.dot_dimension_numbers<[2], [2], [1], [1], [0, 0, 0, 1, 1, 1], [0], [0]>} : vector<2x32x16xbf16>, vector<2x32x16xbf16>, vector<2x32x32xf32> -> vector<2x32x32xf32>
    "tpu.trace_stop"() : () -> ()
    %cst_155 = arith.constant dense<0xFF800000> : vector<2x32xf32>
    %315 = vector.multi_reduction <maximumf>, %314, %cst_155 [2] : vector<2x32x32xf32> to vector<2x32xf32>
    %316 = vector.shape_cast %315 : vector<2x32xf32> to vector<2x32x1xf32>
    %317 = vector.broadcast %316 : vector<2x32x1xf32> to vector<2x32x32xf32>
    %318 = arith.subf %314, %317 : vector<2x32x32xf32>
    %319 = math.exp %318 : vector<2x32x32xf32>
    %cst_156 = arith.constant dense<0.000000e+00> : vector<2x32xf32>
    %320 = vector.multi_reduction <add>, %319, %cst_156 [2] : vector<2x32x32xf32> to vector<2x32xf32>
    %321 = vector.shape_cast %320 : vector<2x32xf32> to vector<2x32x1xf32>
    %322 = tpu.reciprocal %321 {approx = true} : vector<2x32x1xf32> -> vector<2x32x1xf32>
    %323 = vector.broadcast %322 : vector<2x32x1xf32> to vector<2x32x32xf32>
    %324 = arith.mulf %319, %323 : vector<2x32x32xf32>
    %325 = arith.truncf %324 : vector<2x32x32xf32> to vector<2x32x32xbf16>
    "tpu.trace_start"() <{level = 10 : i32, message = "bqk,bkd->bqd"}> : () -> ()
    %cst_157 = arith.constant dense<0.000000e+00> : vector<2x32x16xf32>
    %326 = tpu.matmul %325, %313, %cst_157 {dimension_numbers = #tpu.dot_dimension_numbers<[2], [1], [1], [2], [0, 0, 0, 1, 1, 2], [0], [0]>} : vector<2x32x32xbf16>, vector<2x32x16xbf16>, vector<2x32x16xf32> -> vector<2x32x16xf32>
    "tpu.trace_stop"() : () -> ()
    %327 = vector.shape_cast %326 : vector<2x32x16xf32> to vector<64x16xf32>
    %328 = arith.truncf %327 : vector<64x16xf32> to vector<64x16xbf16>
    %329 = vector.extract_strided_slice %254 {offsets = [0, 0], sizes = [16, 64], strides = [1, 1]} : vector<64x64xbf16> to vector<16x64xbf16>
    %cst_158 = arith.constant dense<0.000000e+00> : vector<64x64xf32>
    %330 = tpu.matmul %328, %329, %cst_158 {dimension_numbers = #tpu.dot_dimension_numbers<[1], [0], [0], [1], [0, 0, 1, 1], [], []>} : vector<64x16xbf16>, vector<16x64xbf16>, vector<64x64xf32> -> vector<64x64xf32>
    %331 = arith.addf %305, %330 : vector<64x64xf32>
    %332 = vector.extract_strided_slice %301 {offsets = [0, 0, 16], sizes = [2, 32, 16], strides = [1, 1, 1]} : vector<2x32x64xf32> to vector<2x32x16xf32>
    %cst_159 = arith.constant 2.500000e-01 : f32
    %333 = vector.broadcast %cst_159 : f32 to vector<2x32x16xf32>
    %334 = arith.mulf %332, %333 : vector<2x32x16xf32>
    %335 = arith.truncf %334 : vector<2x32x16xf32> to vector<2x32x16xbf16>
    %336 = vector.extract_strided_slice %302 {offsets = [0, 0, 16], sizes = [2, 32, 16], strides = [1, 1, 1]} : vector<2x32x64xf32> to vector<2x32x16xf32>
    %337 = arith.truncf %336 : vector<2x32x16xf32> to vector<2x32x16xbf16>
    %338 = vector.extract_strided_slice %303 {offsets = [0, 0, 16], sizes = [2, 32, 16], strides = [1, 1, 1]} : vector<2x32x64xf32> to vector<2x32x16xf32>
    %339 = arith.truncf %338 : vector<2x32x16xf32> to vector<2x32x16xbf16>
    "tpu.trace_start"() <{level = 10 : i32, message = "bqd,bkd->bqk"}> : () -> ()
    %cst_160 = arith.constant dense<0.000000e+00> : vector<2x32x32xf32>
    %340 = tpu.matmul %335, %337, %cst_160 {dimension_numbers = #tpu.dot_dimension_numbers<[2], [2], [1], [1], [0, 0, 0, 1, 1, 1], [0], [0]>} : vector<2x32x16xbf16>, vector<2x32x16xbf16>, vector<2x32x32xf32> -> vector<2x32x32xf32>
    "tpu.trace_stop"() : () -> ()
    %cst_161 = arith.constant dense<0xFF800000> : vector<2x32xf32>
    %341 = vector.multi_reduction <maximumf>, %340, %cst_161 [2] : vector<2x32x32xf32> to vector<2x32xf32>
    %342 = vector.shape_cast %341 : vector<2x32xf32> to vector<2x32x1xf32>
    %343 = vector.broadcast %342 : vector<2x32x1xf32> to vector<2x32x32xf32>
    %344 = arith.subf %340, %343 : vector<2x32x32xf32>
    %345 = math.exp %344 : vector<2x32x32xf32>
    %cst_162 = arith.constant dense<0.000000e+00> : vector<2x32xf32>
    %346 = vector.multi_reduction <add>, %345, %cst_162 [2] : vector<2x32x32xf32> to vector<2x32xf32>
    %347 = vector.shape_cast %346 : vector<2x32xf32> to vector<2x32x1xf32>
    %348 = tpu.reciprocal %347 {approx = true} : vector<2x32x1xf32> -> vector<2x32x1xf32>
    %349 = vector.broadcast %348 : vector<2x32x1xf32> to vector<2x32x32xf32>
    %350 = arith.mulf %345, %349 : vector<2x32x32xf32>
    %351 = arith.truncf %350 : vector<2x32x32xf32> to vector<2x32x32xbf16>
    "tpu.trace_start"() <{level = 10 : i32, message = "bqk,bkd->bqd"}> : () -> ()
    %cst_163 = arith.constant dense<0.000000e+00> : vector<2x32x16xf32>
    %352 = tpu.matmul %351, %339, %cst_163 {dimension_numbers = #tpu.dot_dimension_numbers<[2], [1], [1], [2], [0, 0, 0, 1, 1, 2], [0], [0]>} : vector<2x32x32xbf16>, vector<2x32x16xbf16>, vector<2x32x16xf32> -> vector<2x32x16xf32>
    "tpu.trace_stop"() : () -> ()
    %353 = vector.shape_cast %352 : vector<2x32x16xf32> to vector<64x16xf32>
    %354 = arith.truncf %353 : vector<64x16xf32> to vector<64x16xbf16>
    %355 = vector.extract_strided_slice %254 {offsets = [16, 0], sizes = [16, 64], strides = [1, 1]} : vector<64x64xbf16> to vector<16x64xbf16>
    %cst_164 = arith.constant dense<0.000000e+00> : vector<64x64xf32>
    %356 = tpu.matmul %354, %355, %cst_164 {dimension_numbers = #tpu.dot_dimension_numbers<[1], [0], [0], [1], [0, 0, 1, 1], [], []>} : vector<64x16xbf16>, vector<16x64xbf16>, vector<64x64xf32> -> vector<64x64xf32>
    %357 = arith.addf %331, %356 : vector<64x64xf32>
    %358 = vector.extract_strided_slice %301 {offsets = [0, 0, 32], sizes = [2, 32, 16], strides = [1, 1, 1]} : vector<2x32x64xf32> to vector<2x32x16xf32>
    %cst_165 = arith.constant 2.500000e-01 : f32
    %359 = vector.broadcast %cst_165 : f32 to vector<2x32x16xf32>
    %360 = arith.mulf %358, %359 : vector<2x32x16xf32>
    %361 = arith.truncf %360 : vector<2x32x16xf32> to vector<2x32x16xbf16>
    %362 = vector.extract_strided_slice %302 {offsets = [0, 0, 32], sizes = [2, 32, 16], strides = [1, 1, 1]} : vector<2x32x64xf32> to vector<2x32x16xf32>
    %363 = arith.truncf %362 : vector<2x32x16xf32> to vector<2x32x16xbf16>
    %364 = vector.extract_strided_slice %303 {offsets = [0, 0, 32], sizes = [2, 32, 16], strides = [1, 1, 1]} : vector<2x32x64xf32> to vector<2x32x16xf32>
    %365 = arith.truncf %364 : vector<2x32x16xf32> to vector<2x32x16xbf16>
    "tpu.trace_start"() <{level = 10 : i32, message = "bqd,bkd->bqk"}> : () -> ()
    %cst_166 = arith.constant dense<0.000000e+00> : vector<2x32x32xf32>
    %366 = tpu.matmul %361, %363, %cst_166 {dimension_numbers = #tpu.dot_dimension_numbers<[2], [2], [1], [1], [0, 0, 0, 1, 1, 1], [0], [0]>} : vector<2x32x16xbf16>, vector<2x32x16xbf16>, vector<2x32x32xf32> -> vector<2x32x32xf32>
    "tpu.trace_stop"() : () -> ()
    %cst_167 = arith.constant dense<0xFF800000> : vector<2x32xf32>
    %367 = vector.multi_reduction <maximumf>, %366, %cst_167 [2] : vector<2x32x32xf32> to vector<2x32xf32>
    %368 = vector.shape_cast %367 : vector<2x32xf32> to vector<2x32x1xf32>
    %369 = vector.broadcast %368 : vector<2x32x1xf32> to vector<2x32x32xf32>
    %370 = arith.subf %366, %369 : vector<2x32x32xf32>
    %371 = math.exp %370 : vector<2x32x32xf32>
    %cst_168 = arith.constant dense<0.000000e+00> : vector<2x32xf32>
    %372 = vector.multi_reduction <add>, %371, %cst_168 [2] : vector<2x32x32xf32> to vector<2x32xf32>
    %373 = vector.shape_cast %372 : vector<2x32xf32> to vector<2x32x1xf32>
    %374 = tpu.reciprocal %373 {approx = true} : vector<2x32x1xf32> -> vector<2x32x1xf32>
    %375 = vector.broadcast %374 : vector<2x32x1xf32> to vector<2x32x32xf32>
    %376 = arith.mulf %371, %375 : vector<2x32x32xf32>
    %377 = arith.truncf %376 : vector<2x32x32xf32> to vector<2x32x32xbf16>
    "tpu.trace_start"() <{level = 10 : i32, message = "bqk,bkd->bqd"}> : () -> ()
    %cst_169 = arith.constant dense<0.000000e+00> : vector<2x32x16xf32>
    %378 = tpu.matmul %377, %365, %cst_169 {dimension_numbers = #tpu.dot_dimension_numbers<[2], [1], [1], [2], [0, 0, 0, 1, 1, 2], [0], [0]>} : vector<2x32x32xbf16>, vector<2x32x16xbf16>, vector<2x32x16xf32> -> vector<2x32x16xf32>
    "tpu.trace_stop"() : () -> ()
    %379 = vector.shape_cast %378 : vector<2x32x16xf32> to vector<64x16xf32>
    %380 = arith.truncf %379 : vector<64x16xf32> to vector<64x16xbf16>
    %381 = vector.extract_strided_slice %254 {offsets = [32, 0], sizes = [16, 64], strides = [1, 1]} : vector<64x64xbf16> to vector<16x64xbf16>
    %cst_170 = arith.constant dense<0.000000e+00> : vector<64x64xf32>
    %382 = tpu.matmul %380, %381, %cst_170 {dimension_numbers = #tpu.dot_dimension_numbers<[1], [0], [0], [1], [0, 0, 1, 1], [], []>} : vector<64x16xbf16>, vector<16x64xbf16>, vector<64x64xf32> -> vector<64x64xf32>
    %383 = arith.addf %357, %382 : vector<64x64xf32>
    %384 = vector.extract_strided_slice %301 {offsets = [0, 0, 48], sizes = [2, 32, 16], strides = [1, 1, 1]} : vector<2x32x64xf32> to vector<2x32x16xf32>
    %cst_171 = arith.constant 2.500000e-01 : f32
    %385 = vector.broadcast %cst_171 : f32 to vector<2x32x16xf32>
    %386 = arith.mulf %384, %385 : vector<2x32x16xf32>
    %387 = arith.truncf %386 : vector<2x32x16xf32> to vector<2x32x16xbf16>
    %388 = vector.extract_strided_slice %302 {offsets = [0, 0, 48], sizes = [2, 32, 16], strides = [1, 1, 1]} : vector<2x32x64xf32> to vector<2x32x16xf32>
    %389 = arith.truncf %388 : vector<2x32x16xf32> to vector<2x32x16xbf16>
    %390 = vector.extract_strided_slice %303 {offsets = [0, 0, 48], sizes = [2, 32, 16], strides = [1, 1, 1]} : vector<2x32x64xf32> to vector<2x32x16xf32>
    %391 = arith.truncf %390 : vector<2x32x16xf32> to vector<2x32x16xbf16>
    "tpu.trace_start"() <{level = 10 : i32, message = "bqd,bkd->bqk"}> : () -> ()
    %cst_172 = arith.constant dense<0.000000e+00> : vector<2x32x32xf32>
    %392 = tpu.matmul %387, %389, %cst_172 {dimension_numbers = #tpu.dot_dimension_numbers<[2], [2], [1], [1], [0, 0, 0, 1, 1, 1], [0], [0]>} : vector<2x32x16xbf16>, vector<2x32x16xbf16>, vector<2x32x32xf32> -> vector<2x32x32xf32>
    "tpu.trace_stop"() : () -> ()
    %cst_173 = arith.constant dense<0xFF800000> : vector<2x32xf32>
    %393 = vector.multi_reduction <maximumf>, %392, %cst_173 [2] : vector<2x32x32xf32> to vector<2x32xf32>
    %394 = vector.shape_cast %393 : vector<2x32xf32> to vector<2x32x1xf32>
    %395 = vector.broadcast %394 : vector<2x32x1xf32> to vector<2x32x32xf32>
    %396 = arith.subf %392, %395 : vector<2x32x32xf32>
    %397 = math.exp %396 : vector<2x32x32xf32>
    %cst_174 = arith.constant dense<0.000000e+00> : vector<2x32xf32>
    %398 = vector.multi_reduction <add>, %397, %cst_174 [2] : vector<2x32x32xf32> to vector<2x32xf32>
    %399 = vector.shape_cast %398 : vector<2x32xf32> to vector<2x32x1xf32>
    %400 = tpu.reciprocal %399 {approx = true} : vector<2x32x1xf32> -> vector<2x32x1xf32>
    %401 = vector.broadcast %400 : vector<2x32x1xf32> to vector<2x32x32xf32>
    %402 = arith.mulf %397, %401 : vector<2x32x32xf32>
    %403 = arith.truncf %402 : vector<2x32x32xf32> to vector<2x32x32xbf16>
    "tpu.trace_start"() <{level = 10 : i32, message = "bqk,bkd->bqd"}> : () -> ()
    %cst_175 = arith.constant dense<0.000000e+00> : vector<2x32x16xf32>
    %404 = tpu.matmul %403, %391, %cst_175 {dimension_numbers = #tpu.dot_dimension_numbers<[2], [1], [1], [2], [0, 0, 0, 1, 1, 2], [0], [0]>} : vector<2x32x32xbf16>, vector<2x32x16xbf16>, vector<2x32x16xf32> -> vector<2x32x16xf32>
    "tpu.trace_stop"() : () -> ()
    %405 = vector.shape_cast %404 : vector<2x32x16xf32> to vector<64x16xf32>
    %406 = arith.truncf %405 : vector<64x16xf32> to vector<64x16xbf16>
    %407 = vector.extract_strided_slice %254 {offsets = [48, 0], sizes = [16, 64], strides = [1, 1]} : vector<64x64xbf16> to vector<16x64xbf16>
    %cst_176 = arith.constant dense<0.000000e+00> : vector<64x64xf32>
    %408 = tpu.matmul %406, %407, %cst_176 {dimension_numbers = #tpu.dot_dimension_numbers<[1], [0], [0], [1], [0, 0, 1, 1], [], []>} : vector<64x16xbf16>, vector<16x64xbf16>, vector<64x64xf32> -> vector<64x64xf32>
    %409 = arith.addf %383, %408 : vector<64x64xf32>
    %cst_177 = arith.constant dense<0.000000e+00> : vector<64xf32>
    %410 = vector.multi_reduction <add>, %409, %cst_177 [1] : vector<64x64xf32> to vector<64xf32>
    %411 = vector.shape_cast %410 : vector<64xf32> to vector<64x1xf32>
    %cst_178 = arith.constant 6.400000e+01 : f32
    %412 = vector.broadcast %cst_178 : f32 to vector<64x1xf32>
    %413 = arith.divf %411, %412 : vector<64x1xf32>
    %414 = vector.broadcast %413 : vector<64x1xf32> to vector<64x64xf32>
    %415 = arith.subf %409, %414 : vector<64x64xf32>
    %416 = arith.mulf %415, %415 : vector<64x64xf32>
    %cst_179 = arith.constant dense<0.000000e+00> : vector<64xf32>
    %417 = vector.multi_reduction <add>, %416, %cst_179 [1] : vector<64x64xf32> to vector<64xf32>
    %418 = vector.shape_cast %417 : vector<64xf32> to vector<64x1xf32>
    %cst_180 = arith.constant 6.400000e+01 : f32
    %419 = vector.broadcast %cst_180 : f32 to vector<64x1xf32>
    %420 = arith.divf %418, %419 : vector<64x1xf32>
    %421 = vector.broadcast %413 : vector<64x1xf32> to vector<64x64xf32>
    %422 = arith.subf %409, %421 : vector<64x64xf32>
    %cst_181 = arith.constant 9.99999974E-6 : f32
    %423 = vector.broadcast %cst_181 : f32 to vector<64x1xf32>
    %424 = arith.addf %420, %423 : vector<64x1xf32>
    %425 = math.rsqrt %424 : vector<64x1xf32>
    %426 = vector.broadcast %425 : vector<64x1xf32> to vector<64x64xf32>
    %427 = arith.mulf %422, %426 : vector<64x64xf32>
    %428 = vector.broadcast %258 : vector<1x64xf32> to vector<64x64xf32>
    %429 = arith.mulf %427, %428 : vector<64x64xf32>
    %430 = vector.broadcast %260 : vector<1x64xf32> to vector<64x64xf32>
    %431 = arith.addf %429, %430 : vector<64x64xf32>
    %432 = arith.truncf %431 : vector<64x64xf32> to vector<64x64xbf16>
    %cst_182 = arith.constant dense<0.000000e+00> : vector<64x256xf32>
    %433 = tpu.matmul %432, %262, %cst_182 {dimension_numbers = #tpu.dot_dimension_numbers<[1], [0], [0], [1], [0, 0, 1, 1], [], []>} : vector<64x64xbf16>, vector<64x256xbf16>, vector<64x256xf32> -> vector<64x256xf32>
    %434 = vector.broadcast %264 : vector<1x256xf32> to vector<64x256xf32>
    %435 = arith.addf %433, %434 : vector<64x256xf32>
    %cst_183 = arith.constant 1.702000e+00 : f32
    %436 = vector.broadcast %cst_183 : f32 to vector<64x256xf32>
    %437 = arith.mulf %436, %435 : vector<64x256xf32>
    %438 = arith.negf %437 : vector<64x256xf32>
    %439 = math.exp %438 : vector<64x256xf32>
    %cst_184 = arith.constant 1.000000e+00 : f32
    %440 = vector.broadcast %cst_184 : f32 to vector<64x256xf32>
    %441 = arith.addf %440, %439 : vector<64x256xf32>
    %442 = arith.divf %440, %441 : vector<64x256xf32>
    %443 = arith.mulf %435, %442 : vector<64x256xf32>
    %444 = arith.truncf %443 : vector<64x256xf32> to vector<64x256xbf16>
    %cst_185 = arith.constant dense<0.000000e+00> : vector<64x64xf32>
    %445 = tpu.matmul %444, %266, %cst_185 {dimension_numbers = #tpu.dot_dimension_numbers<[1], [0], [0], [1], [0, 0, 1, 1], [], []>} : vector<64x256xbf16>, vector<256x64xbf16>, vector<64x64xf32> -> vector<64x64xf32>
    %446 = arith.addf %409, %445 : vector<64x64xf32>
    %447 = vector.broadcast %268 : vector<1x64xf32> to vector<64x64xf32>
    %448 = arith.addf %446, %447 : vector<64x64xf32>
    %c0_186 = arith.constant 0 : index
    %c0_187 = arith.constant 0 : index
    %449 = vector.load %arg20[%c0_186, %c0_187] : memref<1x64xf32, #tpu.memory_space<vmem>>, vector<1x64xf32>
    %c0_188 = arith.constant 0 : index
    %c0_189 = arith.constant 0 : index
    %450 = vector.load %arg21[%c0_188, %c0_189] : memref<1x64xf32, #tpu.memory_space<vmem>>, vector<1x64xf32>
    %cst_190 = arith.constant dense<0.000000e+00> : vector<64xf32>
    %451 = vector.multi_reduction <add>, %448, %cst_190 [1] : vector<64x64xf32> to vector<64xf32>
    %452 = vector.shape_cast %451 : vector<64xf32> to vector<64x1xf32>
    %cst_191 = arith.constant 6.400000e+01 : f32
    %453 = vector.broadcast %cst_191 : f32 to vector<64x1xf32>
    %454 = arith.divf %452, %453 : vector<64x1xf32>
    %455 = vector.broadcast %454 : vector<64x1xf32> to vector<64x64xf32>
    %456 = arith.subf %448, %455 : vector<64x64xf32>
    %457 = arith.mulf %456, %456 : vector<64x64xf32>
    %cst_192 = arith.constant dense<0.000000e+00> : vector<64xf32>
    %458 = vector.multi_reduction <add>, %457, %cst_192 [1] : vector<64x64xf32> to vector<64xf32>
    %459 = vector.shape_cast %458 : vector<64xf32> to vector<64x1xf32>
    %cst_193 = arith.constant 6.400000e+01 : f32
    %460 = vector.broadcast %cst_193 : f32 to vector<64x1xf32>
    %461 = arith.divf %459, %460 : vector<64x1xf32>
    %462 = vector.broadcast %454 : vector<64x1xf32> to vector<64x64xf32>
    %463 = arith.subf %448, %462 : vector<64x64xf32>
    %cst_194 = arith.constant 9.99999974E-6 : f32
    %464 = vector.broadcast %cst_194 : f32 to vector<64x1xf32>
    %465 = arith.addf %461, %464 : vector<64x1xf32>
    %466 = math.rsqrt %465 : vector<64x1xf32>
    %467 = vector.broadcast %466 : vector<64x1xf32> to vector<64x64xf32>
    %468 = arith.mulf %463, %467 : vector<64x64xf32>
    %469 = vector.broadcast %449 : vector<1x64xf32> to vector<64x64xf32>
    %470 = arith.mulf %468, %469 : vector<64x64xf32>
    %471 = vector.broadcast %450 : vector<1x64xf32> to vector<64x64xf32>
    %472 = arith.addf %470, %471 : vector<64x64xf32>
    %c0_195 = arith.constant 0 : index
    %c0_196 = arith.constant 0 : index
    %473 = vector.load %arg22[%c0_195, %c0_196] : memref<64x64xf32, #tpu.memory_space<vmem>>, vector<64x64xf32>
    tpu.vector_store %arg22[%c0_195, %c0_196], %472 {strides = array<i32>} : memref<64x64xf32, #tpu.memory_space<vmem>>, vector<64x64xf32>,
    return
  }
  func.func @transform_0(%arg0: i32) -> (i32, i32) {
    %c0_i32 = arith.constant 0 : i32
    %c0_i32_0 = arith.constant 0 : i32
    return %arg0, %c0_i32 : i32, i32
  }
  func.func @transform_1(%arg0: i32) -> (i32, i32) {
    %c0_i32 = arith.constant 0 : i32
    %c0_i32_0 = arith.constant 0 : i32
    %c0_i32_1 = arith.constant 0 : i32
    return %c0_i32, %c0_i32_0 : i32, i32
  }
  func.func @transform_2(%arg0: i32) -> (i32, i32) {
    %c0_i32 = arith.constant 0 : i32
    %c0_i32_0 = arith.constant 0 : i32
    %c0_i32_1 = arith.constant 0 : i32
    return %c0_i32, %c0_i32_0 : i32, i32
  }
  func.func @transform_3(%arg0: i32) -> (i32, i32, i32) {
    %c0_i32 = arith.constant 0 : i32
    %c0_i32_0 = arith.constant 0 : i32
    %c0_i32_1 = arith.constant 0 : i32
    %c0_i32_2 = arith.constant 0 : i32
    return %c0_i32, %c0_i32_0, %c0_i32_1 : i32, i32, i32
  }
  func.func @transform_4(%arg0: i32) -> (i32, i32, i32) {
    %c0_i32 = arith.constant 0 : i32
    %c0_i32_0 = arith.constant 0 : i32
    %c0_i32_1 = arith.constant 0 : i32
    %c0_i32_2 = arith.constant 0 : i32
    return %c0_i32, %c0_i32_0, %c0_i32_1 : i32, i32, i32
  }
  func.func @transform_5(%arg0: i32) -> (i32, i32, i32) {
    %c0_i32 = arith.constant 0 : i32
    %c0_i32_0 = arith.constant 0 : i32
    %c0_i32_1 = arith.constant 0 : i32
    %c0_i32_2 = arith.constant 0 : i32
    return %c0_i32, %c0_i32_0, %c0_i32_1 : i32, i32, i32
  }
  func.func @transform_6(%arg0: i32) -> (i32, i32, i32) {
    %c0_i32 = arith.constant 0 : i32
    %c0_i32_0 = arith.constant 0 : i32
    %c0_i32_1 = arith.constant 0 : i32
    %c0_i32_2 = arith.constant 0 : i32
    return %c0_i32, %c0_i32_0, %c0_i32_1 : i32, i32, i32
  }
  func.func @transform_7(%arg0: i32) -> (i32, i32, i32) {
    %c0_i32 = arith.constant 0 : i32
    %c0_i32_0 = arith.constant 0 : i32
    %c0_i32_1 = arith.constant 0 : i32
    %c0_i32_2 = arith.constant 0 : i32
    return %c0_i32, %c0_i32_0, %c0_i32_1 : i32, i32, i32
  }
  func.func @transform_8(%arg0: i32) -> (i32, i32, i32) {
    %c0_i32 = arith.constant 0 : i32
    %c0_i32_0 = arith.constant 0 : i32
    %c0_i32_1 = arith.constant 0 : i32
    %c0_i32_2 = arith.constant 0 : i32
    return %c0_i32, %c0_i32_0, %c0_i32_1 : i32, i32, i32
  }
  func.func @transform_9(%arg0: i32) -> (i32, i32, i32) {
    %c0_i32 = arith.constant 0 : i32
    %c0_i32_0 = arith.constant 0 : i32
    %c0_i32_1 = arith.constant 0 : i32
    %c0_i32_2 = arith.constant 0 : i32
    return %c0_i32, %c0_i32_0, %c0_i32_1 : i32, i32, i32
  }
  func.func @transform_10(%arg0: i32) -> (i32, i32, i32) {
    %c0_i32 = arith.constant 0 : i32
    %c0_i32_0 = arith.constant 0 : i32
    %c0_i32_1 = arith.constant 0 : i32
    %c0_i32_2 = arith.constant 0 : i32
    return %c0_i32, %c0_i32_0, %c0_i32_1 : i32, i32, i32
  }
  func.func @transform_11(%arg0: i32) -> (i32, i32, i32) {
    %c0_i32 = arith.constant 0 : i32
    %c0_i32_0 = arith.constant 0 : i32
    %c0_i32_1 = arith.constant 0 : i32
    %c0_i32_2 = arith.constant 0 : i32
    return %c0_i32, %c0_i32_0, %c0_i32_1 : i32, i32, i32
  }
  func.func @transform_12(%arg0: i32) -> (i32, i32, i32) {
    %c0_i32 = arith.constant 0 : i32
    %c0_i32_0 = arith.constant 0 : i32
    %c0_i32_1 = arith.constant 0 : i32
    %c0_i32_2 = arith.constant 0 : i32
    return %c0_i32, %c0_i32_0, %c0_i32_1 : i32, i32, i32
  }
  func.func @transform_13(%arg0: i32) -> (i32, i32, i32) {
    %c0_i32 = arith.constant 0 : i32
    %c0_i32_0 = arith.constant 0 : i32
    %c0_i32_1 = arith.constant 0 : i32
    %c0_i32_2 = arith.constant 0 : i32
    return %c0_i32, %c0_i32_0, %c0_i32_1 : i32, i32, i32
  }
  func.func @transform_14(%arg0: i32) -> (i32, i32, i32) {
    %c0_i32 = arith.constant 0 : i32
    %c0_i32_0 = arith.constant 0 : i32
    %c0_i32_1 = arith.constant 0 : i32
    %c0_i32_2 = arith.constant 0 : i32
    return %c0_i32, %c0_i32_0, %c0_i32_1 : i32, i32, i32
  }
  func.func @transform_15(%arg0: i32) -> (i32, i32, i32) {
    %c0_i32 = arith.constant 0 : i32
    %c0_i32_0 = arith.constant 0 : i32
    %c0_i32_1 = arith.constant 0 : i32
    %c0_i32_2 = arith.constant 0 : i32
    return %c0_i32, %c0_i32_0, %c0_i32_1 : i32, i32, i32
  }
  func.func @transform_16(%arg0: i32) -> (i32, i32, i32) {
    %c0_i32 = arith.constant 0 : i32
    %c0_i32_0 = arith.constant 0 : i32
    %c0_i32_1 = arith.constant 0 : i32
    %c0_i32_2 = arith.constant 0 : i32
    return %c0_i32, %c0_i32_0, %c0_i32_1 : i32, i32, i32
  }
  func.func @transform_17(%arg0: i32) -> (i32, i32, i32) {
    %c0_i32 = arith.constant 0 : i32
    %c0_i32_0 = arith.constant 0 : i32
    %c0_i32_1 = arith.constant 0 : i32
    %c0_i32_2 = arith.constant 0 : i32
    return %c0_i32, %c0_i32_0, %c0_i32_1 : i32, i32, i32
  }
  func.func @transform_18(%arg0: i32) -> (i32, i32, i32) {
    %c0_i32 = arith.constant 0 : i32
    %c0_i32_0 = arith.constant 0 : i32
    %c0_i32_1 = arith.constant 0 : i32
    %c0_i32_2 = arith.constant 0 : i32
    return %c0_i32, %c0_i32_0, %c0_i32_1 : i32, i32, i32
  }
  func.func @transform_19(%arg0: i32) -> (i32, i32) {
    %c0_i32 = arith.constant 0 : i32
    %c0_i32_0 = arith.constant 0 : i32
    %c0_i32_1 = arith.constant 0 : i32
    return %c0_i32, %c0_i32_0 : i32, i32
  }
  func.func @transform_20(%arg0: i32) -> (i32, i32) {
    %c0_i32 = arith.constant 0 : i32
    %c0_i32_0 = arith.constant 0 : i32
    %c0_i32_1 = arith.constant 0 : i32
    return %c0_i32, %c0_i32_0 : i32, i32
  }
  func.func @transform_21(%arg0: i32) -> (i32, i32) {
    %c0_i32 = arith.constant 0 : i32
    %c0_i32_0 = arith.constant 0 : i32
    return %arg0, %c0_i32 : i32, i32
  }
}

</mosaic_0001>

<llo_original>
// kernel: tpu_custom_call.1
$region0: #{tpu_custom_call.1}
  #allocation0 [shape = 'u32[]', space=smem, size = 0x4, offset = 0x4, fixed_abs, tag = 'smem constant byte address 0x4 - core index']
  #allocation1 [shape = 'u32[144,128]{1,0:T(1,128)}', space=vmem, size = 0x12000, scoped, tag = 'internal scratch']
  %s0 = inlined_call_operand.vmem [shape: f32[128,64], index: 0, kind: input, shape index: {}]
  %s1 = inlined_call_operand.vmem [shape: f32[1,64], index: 1, kind: input, shape index: {}]
  %s2 = inlined_call_operand.vmem [shape: f32[1,64], index: 2, kind: input, shape index: {}]
  %s3 = inlined_call_operand.vmem [shape: f32[2,1,64], index: 3, kind: input, shape index: {}]
  %s4 = inlined_call_operand.vmem [shape: f32[2,1,64], index: 4, kind: input, shape index: {}]
  %s5 = inlined_call_operand.vmem [shape: bf16[2,64,64], index: 5, kind: input, shape index: {}]
  %s6 = inlined_call_operand.vmem [shape: f32[2,1,64], index: 6, kind: input, shape index: {}]
  %s7 = inlined_call_operand.vmem [shape: bf16[2,64,64], index: 7, kind: input, shape index: {}]
  %s8 = inlined_call_operand.vmem [shape: f32[2,1,64], index: 8, kind: input, shape index: {}]
  %s9 = inlined_call_operand.vmem [shape: bf16[2,64,64], index: 9, kind: input, shape index: {}]
  %s10 = inlined_call_operand.vmem [shape: f32[2,1,64], index: 10, kind: input, shape index: {}]
  %s11 = inlined_call_operand.vmem [shape: bf16[2,64,64], index: 11, kind: input, shape index: {}]
  %s12 = inlined_call_operand.vmem [shape: f32[2,1,64], index: 12, kind: input, shape index: {}]
  %s13 = inlined_call_operand.vmem [shape: f32[2,1,64], index: 13, kind: input, shape index: {}]
  %s14 = inlined_call_operand.vmem [shape: f32[2,1,64], index: 14, kind: input, shape index: {}]
  %s15 = inlined_call_operand.vmem [shape: bf16[2,64,256], index: 15, kind: input, shape index: {}]
  %s16 = inlined_call_operand.vmem [shape: f32[2,1,256], index: 16, kind: input, shape index: {}]
  %s17 = inlined_call_operand.vmem [shape: bf16[2,256,64], index: 17, kind: input, shape index: {}]
  %s18 = inlined_call_operand.vmem [shape: f32[2,1,64], index: 18, kind: input, shape index: {}]
  %s19 = inlined_call_operand.vmem [shape: f32[1,64], index: 19, kind: input, shape index: {}]
  %s20 = inlined_call_operand.vmem [shape: f32[1,64], index: 20, kind: input, shape index: {}]
  %s21 = inlined_call_operand.vmem [shape: f32[128,64], index: 21, kind: output, shape index: {}]
  %s22 = sld [smem:[#allocation0]]
  $region117: #{tpu_custom_call.1} parent=0
    _
  %s24 = ssub.s32 1, %s22
  %s25 = scalar_select 0, %s24, %s22
  loop: start=0, step=1, limit=4
  $region2: #{tpu_custom_call.1} parent=0 // loop_pre_header
    _
  $region3: #{tpu_custom_call.1} parent=0 // loop_header
    %s27 = sphi 0, %s31
    %p28 = scmp.ge.s32.totalorder %s27, 4
    %s37 = sphi 0, %s39
    %s40 = sphi 0, %s37
    %s41 = sphi 0, %s40
    %s57 = sphi 0, %s41
    %s61 = sphi 0, %s61
    %s63 = sphi 0, %s61
    %s64 = sphi 0, %s63
    %s78 = sphi 0, %s64
    %s82 = sphi 0, %s82
    %s84 = sphi 0, %s82
    %s85 = sphi 0, %s84
    %s99 = sphi 0, %s85
    %s103 = sphi 0, %s103
    %s105 = sphi 0, %s103
    %s106 = sphi 0, %s105
    %s120 = sphi 0, %s106
    %s124 = sphi 0, %s124
    %s126 = sphi 0, %s124
    %s127 = sphi 0, %s126
    %s141 = sphi 0, %s127
    %s145 = sphi 0, %s145
    %s147 = sphi 0, %s145
    %s148 = sphi 0, %s147
    %s162 = sphi 0, %s148
    %s166 = sphi 0, %s166
    %s168 = sphi 0, %s166
    %s169 = sphi 0, %s168
    %s183 = sphi 0, %s169
    %s187 = sphi 0, %s187
    %s189 = sphi 0, %s187
    %s190 = sphi 0, %s189
    %s204 = sphi 0, %s190
    %s208 = sphi 0, %s208
    %s210 = sphi 0, %s208
    %s211 = sphi 0, %s210
    %s225 = sphi 0, %s211
    %s229 = sphi 0, %s229
    %s231 = sphi 0, %s229
    %s232 = sphi 0, %s231
    %s246 = sphi 0, %s232
    %s250 = sphi 0, %s250
    %s252 = sphi 0, %s250
    %s253 = sphi 0, %s252
    %s267 = sphi 0, %s253
    %s271 = sphi 0, %s271
    %s273 = sphi 0, %s271
    %s274 = sphi 0, %s273
    %s288 = sphi 0, %s274
    %s292 = sphi 0, %s292
    %s294 = sphi 0, %s292
    %s295 = sphi 0, %s294
    %s309 = sphi 0, %s295
    %s313 = sphi 0, %s313
    %s315 = sphi 0, %s313
    %s316 = sphi 0, %s315
    %s330 = sphi 0, %s316
    %s334 = sphi 0, %s334
    %s336 = sphi 0, %s334
    %s337 = sphi 0, %s336
    %s351 = sphi 0, %s337
    %s355 = sphi 0, %s355
    %s357 = sphi 0, %s355
    %s358 = sphi 0, %s357
    %s372 = sphi 0, %s358
    %s376 = sphi 0, %s376
    %s378 = sphi 0, %s376
    %s379 = sphi 0, %s378
    %s393 = sphi 0, %s379
    %s397 = sphi 0, %s397
    %s399 = sphi 0, %s397
    %s400 = sphi 0, %s399
    %s414 = sphi 0, %s400
    %s418 = sphi 0, %s418
    %s420 = sphi 0, %s418
    %s421 = sphi 0, %s420
    %s435 = sphi 0, %s421
    %s439 = sphi 0, %s439
    %s441 = sphi 0, %s439
    %s442 = sphi 0, %s441
    %s456 = sphi 0, %s442
    %s460 = sphi 0, %s460
    %s462 = sphi 0, %s460
    %s463 = sphi 0, %s462
    %s477 = sphi 0, %s463
    %s483 = sphi 0, %s485
    %s486 = sphi 0, %s483
    %s487 = sphi 0, %s486
    %s503 = sphi 0, %s487
  $region4: #{tpu_custom_call.1} parent=0 // loop_header_branch
    %30 = sbr.rel (%p28) target = $region8
  $region5: #{tpu_custom_call.1} parent=0 // loop_body
    %s32 = ssub.s32 %s27, 1
    %s33 = ssub.s32 %s27, 2
    %s34 = sadd.s32 %s27, 1
    %s35 = ssub.s32 %s27, %s34
    %p36 = scmp.eq.s32.totalorder %s35, 0
    %s38 = sadd.s32 %s37, 1
    %s39 = scalar_select %p36, %s37, %s38
    %p42 = pneg %p36
    %p43 = scmp.eq.s32.totalorder %s27, 1
    %p44 = por %p42, %p43
    %p45 = scmp.ne.s32.totalorder %s37, %s40
    %p46 = scmp.eq.s32.totalorder %s27, 0
    %p47 = por %p45, %p46
    %p48 = scmp.ne.s32.totalorder %s37, %s40
    %p49 = scmp.eq.s32.totalorder %s32, 1
    %p50 = por %p48, %p49
    %p51 = scmp.ne.s32.totalorder %s40, %s41
    %p52 = scmp.eq.s32.totalorder %s32, 0
    %p53 = por %p51, %p52
    %p54 = scmp.ne.s32.totalorder %s40, %s41
    %p55 = scmp.eq.s32.totalorder %s33, 1
    %p56 = por %p54, %p55
    %p58 = scmp.ne.s32.totalorder %s41, %s57
    %p59 = scmp.eq.s32.totalorder %s33, 0
    %p60 = por %p58, %p59
    %s62 = sadd.s32 %s61, 1
    %p65 = scmp.eq.s32.totalorder %s27, 1
    %p66 = scmp.ne.s32.totalorder %s61, %s63
    %p67 = scmp.eq.s32.totalorder %s27, 0
    %p68 = por %p66, %p67
    %p69 = scmp.ne.s32.totalorder %s61, %s63
    %p70 = scmp.eq.s32.totalorder %s32, 1
    %p71 = por %p69, %p70
    %p72 = scmp.ne.s32.totalorder %s63, %s64
    %p73 = scmp.eq.s32.totalorder %s32, 0
    %p74 = por %p72, %p73
    %p75 = scmp.ne.s32.totalorder %s63, %s64
    %p76 = scmp.eq.s32.totalorder %s33, 1
    %p77 = por %p75, %p76
    %p79 = scmp.ne.s32.totalorder %s64, %s78
    %p80 = scmp.eq.s32.totalorder %s33, 0
    %p81 = por %p79, %p80
    %s83 = sadd.s32 %s82, 1
    %p86 = scmp.eq.s32.totalorder %s27, 1
    %p87 = scmp.ne.s32.totalorder %s82, %s84
    %p88 = scmp.eq.s32.totalorder %s27, 0
    %p89 = por %p87, %p88
    %p90 = scmp.ne.s32.totalorder %s82, %s84
    %p91 = scmp.eq.s32.totalorder %s32, 1
    %p92 = por %p90, %p91
    %p93 = scmp.ne.s32.totalorder %s84, %s85
    %p94 = scmp.eq.s32.totalorder %s32, 0
    %p95 = por %p93, %p94
    %p96 = scmp.ne.s32.totalorder %s84, %s85
    %p97 = scmp.eq.s32.totalorder %s33, 1
    %p98 = por %p96, %p97
    %p100 = scmp.ne.s32.totalorder %s85, %s99
    %p101 = scmp.eq.s32.totalorder %s33, 0
    %p102 = por %p100, %p101
    %s104 = sadd.s32 %s103, 1
    %p107 = scmp.eq.s32.totalorder %s27, 1
    %p108 = scmp.ne.s32.totalorder %s103, %s105
    %p109 = scmp.eq.s32.totalorder %s27, 0
    %p110 = por %p108, %p109
    %p111 = scmp.ne.s32.totalorder %s103, %s105
    %p112 = scmp.eq.s32.totalorder %s32, 1
    %p113 = por %p111, %p112
    %p114 = scmp.ne.s32.totalorder %s105, %s106
    %p115 = scmp.eq.s32.totalorder %s32, 0
    %p116 = por %p114, %p115
    %p117 = scmp.ne.s32.totalorder %s105, %s106
    %p118 = scmp.eq.s32.totalorder %s33, 1
    %p119 = por %p117, %p118
    %p121 = scmp.ne.s32.totalorder %s106, %s120
    %p122 = scmp.eq.s32.totalorder %s33, 0
    %p123 = por %p121, %p122
    %s125 = sadd.s32 %s124, 1
    %p128 = scmp.eq.s32.totalorder %s27, 1
    %p129 = scmp.ne.s32.totalorder %s124, %s126
    %p130 = scmp.eq.s32.totalorder %s27, 0
    %p131 = por %p129, %p130
    %p132 = scmp.ne.s32.totalorder %s124, %s126
    %p133 = scmp.eq.s32.totalorder %s32, 1
    %p134 = por %p132, %p133
    %p135 = scmp.ne.s32.totalorder %s126, %s127
    %p136 = scmp.eq.s32.totalorder %s32, 0
    %p137 = por %p135, %p136
    %p138 = scmp.ne.s32.totalorder %s126, %s127
    %p139 = scmp.eq.s32.totalorder %s33, 1
    %p140 = por %p138, %p139
    %p142 = scmp.ne.s32.totalorder %s127, %s141
    %p143 = scmp.eq.s32.totalorder %s33, 0
    %p144 = por %p142, %p143
    %s146 = sadd.s32 %s145, 1
    %p149 = scmp.eq.s32.totalorder %s27, 1
    %p150 = scmp.ne.s32.totalorder %s145, %s147
    %p151 = scmp.eq.s32.totalorder %s27, 0
    %p152 = por %p150, %p151
    %p153 = scmp.ne.s32.totalorder %s145, %s147
    %p154 = scmp.eq.s32.totalorder %s32, 1
    %p155 = por %p153, %p154
    %p156 = scmp.ne.s32.totalorder %s147, %s148
    %p157 = scmp.eq.s32.totalorder %s32, 0
    %p158 = por %p156, %p157
    %p159 = scmp.ne.s32.totalorder %s147, %s148
    %p160 = scmp.eq.s32.totalorder %s33, 1
    %p161 = por %p159, %p160
    %p163 = scmp.ne.s32.totalorder %s148, %s162
    %p164 = scmp.eq.s32.totalorder %s33, 0
    %p165 = por %p163, %p164
    %s167 = sadd.s32 %s166, 1
    %p170 = scmp.eq.s32.totalorder %s27, 1
    %p171 = scmp.ne.s32.totalorder %s166, %s168
    %p172 = scmp.eq.s32.totalorder %s27, 0
    %p173 = por %p171, %p172
    %p174 = scmp.ne.s32.totalorder %s166, %s168
    %p175 = scmp.eq.s32.totalorder %s32, 1
    %p176 = por %p174, %p175
    %p177 = scmp.ne.s32.totalorder %s168, %s169
    %p178 = scmp.eq.s32.totalorder %s32, 0
    %p179 = por %p177, %p178
    %p180 = scmp.ne.s32.totalorder %s168, %s169
    %p181 = scmp.eq.s32.totalorder %s33, 1
    %p182 = por %p180, %p181
    %p184 = scmp.ne.s32.totalorder %s169, %s183
    %p185 = scmp.eq.s32.totalorder %s33, 0
    %p186 = por %p184, %p185
    %s188 = sadd.s32 %s187, 1
    %p191 = scmp.eq.s32.totalorder %s27, 1
    %p192 = scmp.ne.s32.totalorder %s187, %s189
    %p193 = scmp.eq.s32.totalorder %s27, 0
    %p194 = por %p192, %p193
    %p195 = scmp.ne.s32.totalorder %s187, %s189
    %p196 = scmp.eq.s32.totalorder %s32, 1
    %p197 = por %p195, %p196
    %p198 = scmp.ne.s32.totalorder %s189, %s190
    %p199 = scmp.eq.s32.totalorder %s32, 0
    %p200 = por %p198, %p199
    %p201 = scmp.ne.s32.totalorder %s189, %s190
    %p202 = scmp.eq.s32.totalorder %s33, 1
    %p203 = por %p201, %p202
    %p205 = scmp.ne.s32.totalorder %s190, %s204
    %p206 = scmp.eq.s32.totalorder %s33, 0
    %p207 = por %p205, %p206
    %s209 = sadd.s32 %s208, 1
    %p212 = scmp.eq.s32.totalorder %s27, 1
    %p213 = scmp.ne.s32.totalorder %s208, %s210
    %p214 = scmp.eq.s32.totalorder %s27, 0
    %p215 = por %p213, %p214
    %p216 = scmp.ne.s32.totalorder %s208, %s210
    %p217 = scmp.eq.s32.totalorder %s32, 1
    %p218 = por %p216, %p217
    %p219 = scmp.ne.s32.totalorder %s210, %s211
    %p220 = scmp.eq.s32.totalorder %s32, 0
    %p221 = por %p219, %p220
    %p222 = scmp.ne.s32.totalorder %s210, %s211
    %p223 = scmp.eq.s32.totalorder %s33, 1
    %p224 = por %p222, %p223
    %p226 = scmp.ne.s32.totalorder %s211, %s225
    %p227 = scmp.eq.s32.totalorder %s33, 0
    %p228 = por %p226, %p227
    %s230 = sadd.s32 %s229, 1
    %p233 = scmp.eq.s32.totalorder %s27, 1
    %p234 = scmp.ne.s32.totalorder %s229, %s231
    %p235 = scmp.eq.s32.totalorder %s27, 0
    %p236 = por %p234, %p235
    %p237 = scmp.ne.s32.totalorder %s229, %s231
    %p238 = scmp.eq.s32.totalorder %s32, 1
    %p239 = por %p237, %p238
    %p240 = scmp.ne.s32.totalorder %s231, %s232
    %p241 = scmp.eq.s32.totalorder %s32, 0
    %p242 = por %p240, %p241
    %p243 = scmp.ne.s32.totalorder %s231, %s232
    %p244 = scmp.eq.s32.totalorder %s33, 1
    %p245 = por %p243, %p244
    %p247 = scmp.ne.s32.totalorder %s232, %s246
    %p248 = scmp.eq.s32.totalorder %s33, 0
    %p249 = por %p247, %p248
    %s251 = sadd.s32 %s250, 1
    %p254 = scmp.eq.s32.totalorder %s27, 1
    %p255 = scmp.ne.s32.totalorder %s250, %s252
    %p256 = scmp.eq.s32.totalorder %s27, 0
    %p257 = por %p255, %p256
    %p258 = scmp.ne.s32.totalorder %s250, %s252
    %p259 = scmp.eq.s32.totalorder %s32, 1
    %p260 = por %p258, %p259
    %p261 = scmp.ne.s32.totalorder %s252, %s253
    %p262 = scmp.eq.s32.totalorder %s32, 0
    %p263 = por %p261, %p262
    %p264 = scmp.ne.s32.totalorder %s252, %s253
    %p265 = scmp.eq.s32.totalorder %s33, 1
    %p266 = por %p264, %p265
    %p268 = scmp.ne.s32.totalorder %s253, %s267
    %p269 = scmp.eq.s32.totalorder %s33, 0
    %p270 = por %p268, %p269
    %s272 = sadd.s32 %s271, 1
    %p275 = scmp.eq.s32.totalorder %s27, 1
    %p276 = scmp.ne.s32.totalorder %s271, %s273
    %p277 = scmp.eq.s32.totalorder %s27, 0
    %p278 = por %p276, %p277
    %p279 = scmp.ne.s32.totalorder %s271, %s273
    %p280 = scmp.eq.s32.totalorder %s32, 1
    %p281 = por %p279, %p280
    %p282 = scmp.ne.s32.totalorder %s273, %s274
    %p283 = scmp.eq.s32.totalorder %s32, 0
    %p284 = por %p282, %p283
    %p285 = scmp.ne.s32.totalorder %s273, %s274
    %p286 = scmp.eq.s32.totalorder %s33, 1
    %p287 = por %p285, %p286
    %p289 = scmp.ne.s32.totalorder %s274, %s288
    %p290 = scmp.eq.s32.totalorder %s33, 0
    %p291 = por %p289, %p290
    %s293 = sadd.s32 %s292, 1
    %p296 = scmp.eq.s32.totalorder %s27, 1
    %p297 = scmp.ne.s32.totalorder %s292, %s294
    %p298 = scmp.eq.s32.totalorder %s27, 0
    %p299 = por %p297, %p298
    %p300 = scmp.ne.s32.totalorder %s292, %s294
    %p301 = scmp.eq.s32.totalorder %s32, 1
    %p302 = por %p300, %p301
    %p303 = scmp.ne.s32.totalorder %s294, %s295
    %p304 = scmp.eq.s32.totalorder %s32, 0
    %p305 = por %p303, %p304
    %p306 = scmp.ne.s32.totalorder %s294, %s295
    %p307 = scmp.eq.s32.totalorder %s33, 1
    %p308 = por %p306, %p307
    %p310 = scmp.ne.s32.totalorder %s295, %s309
    %p311 = scmp.eq.s32.totalorder %s33, 0
    %p312 = por %p310, %p311
    %s314 = sadd.s32 %s313, 1
    %p317 = scmp.eq.s32.totalorder %s27, 1
    %p318 = scmp.ne.s32.totalorder %s313, %s315
    %p319 = scmp.eq.s32.totalorder %s27, 0
    %p320 = por %p318, %p319
    %p321 = scmp.ne.s32.totalorder %s313, %s315
    %p322 = scmp.eq.s32.totalorder %s32, 1
    %p323 = por %p321, %p322
    %p324 = scmp.ne.s32.totalorder %s315, %s316
    %p325 = scmp.eq.s32.totalorder %s32, 0
    %p326 = por %p324, %p325
    %p327 = scmp.ne.s32.totalorder %s315, %s316
    %p328 = scmp.eq.s32.totalorder %s33, 1
    %p329 = por %p327, %p328
    %p331 = scmp.ne.s32.totalorder %s316, %s330
    %p332 = scmp.eq.s32.totalorder %s33, 0
    %p333 = por %p331, %p332
    %s335 = sadd.s32 %s334, 1
    %p338 = scmp.eq.s32.totalorder %s27, 1
    %p339 = scmp.ne.s32.totalorder %s334, %s336
    %p340 = scmp.eq.s32.totalorder %s27, 0
    %p341 = por %p339, %p340
    %p342 = scmp.ne.s32.totalorder %s334, %s336
    %p343 = scmp.eq.s32.totalorder %s32, 1
    %p344 = por %p342, %p343
    %p345 = scmp.ne.s32.totalorder %s336, %s337
    %p346 = scmp.eq.s32.totalorder %s32, 0
    %p347 = por %p345, %p346
    %p348 = scmp.ne.s32.totalorder %s336, %s337
    %p349 = scmp.eq.s32.totalorder %s33, 1
    %p350 = por %p348, %p349
    %p352 = scmp.ne.s32.totalorder %s337, %s351
    %p353 = scmp.eq.s32.totalorder %s33, 0
    %p354 = por %p352, %p353
    %s356 = sadd.s32 %s355, 1
    %p359 = scmp.eq.s32.totalorder %s27, 1
    %p360 = scmp.ne.s32.totalorder %s355, %s357
    %p361 = scmp.eq.s32.totalorder %s27, 0
    %p362 = por %p360, %p361
    %p363 = scmp.ne.s32.totalorder %s355, %s357
    %p364 = scmp.eq.s32.totalorder %s32, 1
    %p365 = por %p363, %p364
    %p366 = scmp.ne.s32.totalorder %s357, %s358
    %p367 = scmp.eq.s32.totalorder %s32, 0
    %p368 = por %p366, %p367
    %p369 = scmp.ne.s32.totalorder %s357, %s358
    %p370 = scmp.eq.s32.totalorder %s33, 1
    %p371 = por %p369, %p370
    %p373 = scmp.ne.s32.totalorder %s358, %s372
    %p374 = scmp.eq.s32.totalorder %s33, 0
    %p375 = por %p373, %p374
    %s377 = sadd.s32 %s376, 1
    %p380 = scmp.eq.s32.totalorder %s27, 1
    %p381 = scmp.ne.s32.totalorder %s376, %s378
    %p382 = scmp.eq.s32.totalorder %s27, 0
    %p383 = por %p381, %p382
    %p384 = scmp.ne.s32.totalorder %s376, %s378
    %p385 = scmp.eq.s32.totalorder %s32, 1
    %p386 = por %p384, %p385
    %p387 = scmp.ne.s32.totalorder %s378, %s379
    %p388 = scmp.eq.s32.totalorder %s32, 0
    %p389 = por %p387, %p388
    %p390 = scmp.ne.s32.totalorder %s378, %s379
    %p391 = scmp.eq.s32.totalorder %s33, 1
    %p392 = por %p390, %p391
    %p394 = scmp.ne.s32.totalorder %s379, %s393
    %p395 = scmp.eq.s32.totalorder %s33, 0
    %p396 = por %p394, %p395
    %s398 = sadd.s32 %s397, 1
    %p401 = scmp.eq.s32.totalorder %s27, 1
    %p402 = scmp.ne.s32.totalorder %s397, %s399
    %p403 = scmp.eq.s32.totalorder %s27, 0
    %p404 = por %p402, %p403
    %p405 = scmp.ne.s32.totalorder %s397, %s399
    %p406 = scmp.eq.s32.totalorder %s32, 1
    %p407 = por %p405, %p406
    %p408 = scmp.ne.s32.totalorder %s399, %s400
    %p409 = scmp.eq.s32.totalorder %s32, 0
    %p410 = por %p408, %p409
    %p411 = scmp.ne.s32.totalorder %s399, %s400
    %p412 = scmp.eq.s32.totalorder %s33, 1
    %p413 = por %p411, %p412
    %p415 = scmp.ne.s32.totalorder %s400, %s414
    %p416 = scmp.eq.s32.totalorder %s33, 0
    %p417 = por %p415, %p416
    %s419 = sadd.s32 %s418, 1
    %p422 = scmp.eq.s32.totalorder %s27, 1
    %p423 = scmp.ne.s32.totalorder %s418, %s420
    %p424 = scmp.eq.s32.totalorder %s27, 0
    %p425 = por %p423, %p424
    %p426 = scmp.ne.s32.totalorder %s418, %s420
    %p427 = scmp.eq.s32.totalorder %s32, 1
    %p428 = por %p426, %p427
    %p429 = scmp.ne.s32.totalorder %s420, %s421
    %p430 = scmp.eq.s32.totalorder %s32, 0
    %p431 = por %p429, %p430
    %p432 = scmp.ne.s32.totalorder %s420, %s421
    %p433 = scmp.eq.s32.totalorder %s33, 1
    %p434 = por %p432, %p433
    %p436 = scmp.ne.s32.totalorder %s421, %s435
    %p437 = scmp.eq.s32.totalorder %s33, 0
    %p438 = por %p436, %p437
    %s440 = sadd.s32 %s439, 1
    %p443 = scmp.eq.s32.totalorder %s27, 1
    %p444 = scmp.ne.s32.totalorder %s439, %s441
    %p445 = scmp.eq.s32.totalorder %s27, 0
    %p446 = por %p444, %p445
    %p447 = scmp.ne.s32.totalorder %s439, %s441
    %p448 = scmp.eq.s32.totalorder %s32, 1
    %p449 = por %p447, %p448
    %p450 = scmp.ne.s32.totalorder %s441, %s442
    %p451 = scmp.eq.s32.totalorder %s32, 0
    %p452 = por %p450, %p451
    %p453 = scmp.ne.s32.totalorder %s441, %s442
    %p454 = scmp.eq.s32.totalorder %s33, 1
    %p455 = por %p453, %p454
    %p457 = scmp.ne.s32.totalorder %s442, %s456
    %p458 = scmp.eq.s32.totalorder %s33, 0
    %p459 = por %p457, %p458
    %s461 = sadd.s32 %s460, 1
    %p464 = scmp.eq.s32.totalorder %s27, 1
    %p465 = scmp.ne.s32.totalorder %s460, %s462
    %p466 = scmp.eq.s32.totalorder %s27, 0
    %p467 = por %p465, %p466
    %p468 = scmp.ne.s32.totalorder %s460, %s462
    %p469 = scmp.eq.s32.totalorder %s32, 1
    %p470 = por %p468, %p469
    %p471 = scmp.ne.s32.totalorder %s462, %s463
    %p472 = scmp.eq.s32.totalorder %s32, 0
    %p473 = por %p471, %p472
    %p474 = scmp.ne.s32.totalorder %s462, %s463
    %p475 = scmp.eq.s32.totalorder %s33, 1
    %p476 = por %p474, %p475
    %p478 = scmp.ne.s32.totalorder %s463, %s477
    %p479 = scmp.eq.s32.totalorder %s33, 0
    %p480 = por %p478, %p479
    %s481 = ssub.s32 %s27, %s34
    %p482 = scmp.eq.s32.totalorder %s481, 0
    %s484 = sadd.s32 %s483, 1
    %s485 = scalar_select %p482, %s483, %s484
    %p488 = pneg %p482
    %p489 = scmp.eq.s32.totalorder %s27, 1
    %p490 = por %p488, %p489
    %p491 = scmp.ne.s32.totalorder %s483, %s486
    %p492 = scmp.eq.s32.totalorder %s27, 0
    %p493 = por %p491, %p492
    %p494 = scmp.ne.s32.totalorder %s483, %s486
    %p495 = scmp.eq.s32.totalorder %s32, 1
    %p496 = por %p494, %p495
    %p497 = scmp.ne.s32.totalorder %s486, %s487
    %p498 = scmp.eq.s32.totalorder %s32, 0
    %p499 = por %p497, %p498
    %p500 = scmp.ne.s32.totalorder %s486, %s487
    %p501 = scmp.eq.s32.totalorder %s33, 1
    %p502 = por %p500, %p501
    %p504 = scmp.ne.s32.totalorder %s487, %s503
    %p505 = scmp.eq.s32.totalorder %s33, 0
    %p506 = por %p504, %p505
    %p507 = scmp.le.s32.totalorder 1, %s27
    %p508 = scmp.lt.s32.totalorder %s27, 3
    %p509 = pnand %p507, %p508
    %p510 = pneg %p509
    // Predicated region
    $region9: #{tpu_custom_call.1} parent=5 // pred_check
      _
    $region10: #{tpu_custom_call.1} parent=5 // pred_check_branch
      %512 = sbr.rel (%p509) target = $region12
    $region11: #{tpu_custom_call.1} parent=5 // pred_region
      %s513 = ssub.s32 %s27, 1
      // Predicated region
      $region13: #{tpu_custom_call.1} parent=11 // pred_check
        %p514 = pneg %p74
      $region14: #{tpu_custom_call.1} parent=11 // pred_check_branch
        %516 = sbr.rel (%p514) target = $region16
      $region15: #{tpu_custom_call.1} parent=11 // pred_region
        _
      $region16: #{tpu_custom_call.1} parent=11 // pred_fallthru
        _
      // Predicated region
      $region17: #{tpu_custom_call.1} parent=11 // pred_check
        %p517 = pneg %p95
      $region18: #{tpu_custom_call.1} parent=11 // pred_check_branch
        %519 = sbr.rel (%p517) target = $region20
      $region19: #{tpu_custom_call.1} parent=11 // pred_region
        _
      $region20: #{tpu_custom_call.1} parent=11 // pred_fallthru
        _
      // Predicated region
      $region21: #{tpu_custom_call.1} parent=11 // pred_check
        %p520 = pneg %p116
      $region22: #{tpu_custom_call.1} parent=11 // pred_check_branch
        %522 = sbr.rel (%p520) target = $region24
      $region23: #{tpu_custom_call.1} parent=11 // pred_region
        _
      $region24: #{tpu_custom_call.1} parent=11 // pred_fallthru
        _
      // Predicated region
      $region25: #{tpu_custom_call.1} parent=11 // pred_check
        %p523 = pneg %p137
      $region26: #{tpu_custom_call.1} parent=11 // pred_check_branch
        %525 = sbr.rel (%p523) target = $region28
      $region27: #{tpu_custom_call.1} parent=11 // pred_region
        _
      $region28: #{tpu_custom_call.1} parent=11 // pred_fallthru
        _
      // Predicated region
      $region29: #{tpu_custom_call.1} parent=11 // pred_check
        %p526 = pneg %p158
      $region30: #{tpu_custom_call.1} parent=11 // pred_check_branch
        %528 = sbr.rel (%p526) target = $region32
      $region31: #{tpu_custom_call.1} parent=11 // pred_region
        _
      $region32: #{tpu_custom_call.1} parent=11 // pred_fallthru
        _
      // Predicated region
      $region33: #{tpu_custom_call.1} parent=11 // pred_check
        %p529 = pneg %p179
      $region34: #{tpu_custom_call.1} parent=11 // pred_check_branch
        %531 = sbr.rel (%p529) target = $region36
      $region35: #{tpu_custom_call.1} parent=11 // pred_region
        _
      $region36: #{tpu_custom_call.1} parent=11 // pred_fallthru
        _
      // Predicated region
      $region37: #{tpu_custom_call.1} parent=11 // pred_check
        %p532 = pneg %p200
      $region38: #{tpu_custom_call.1} parent=11 // pred_check_branch
        %534 = sbr.rel (%p532) target = $region40
      $region39: #{tpu_custom_call.1} parent=11 // pred_region
        _
      $region40: #{tpu_custom_call.1} parent=11 // pred_fallthru
        _
      // Predicated region
      $region41: #{tpu_custom_call.1} parent=11 // pred_check
        %p535 = pneg %p221
      $region42: #{tpu_custom_call.1} parent=11 // pred_check_branch
        %537 = sbr.rel (%p535) target = $region44
      $region43: #{tpu_custom_call.1} parent=11 // pred_region
        _
      $region44: #{tpu_custom_call.1} parent=11 // pred_fallthru
        _
      // Predicated region
      $region45: #{tpu_custom_call.1} parent=11 // pred_check
        %p538 = pneg %p242
      $region46: #{tpu_custom_call.1} parent=11 // pred_check_branch
        %540 = sbr.rel (%p538) target = $region48
      $region47: #{tpu_custom_call.1} parent=11 // pred_region
        _
      $region48: #{tpu_custom_call.1} parent=11 // pred_fallthru
        _
      // Predicated region
      $region49: #{tpu_custom_call.1} parent=11 // pred_check
        %p541 = pneg %p263
      $region50: #{tpu_custom_call.1} parent=11 // pred_check_branch
        %543 = sbr.rel (%p541) target = $region52
      $region51: #{tpu_custom_call.1} parent=11 // pred_region
        _
      $region52: #{tpu_custom_call.1} parent=11 // pred_fallthru
        _
      // Predicated region
      $region53: #{tpu_custom_call.1} parent=11 // pred_check
        %p544 = pneg %p284
      $region54: #{tpu_custom_call.1} parent=11 // pred_check_branch
        %546 = sbr.rel (%p544) target = $region56
      $region55: #{tpu_custom_call.1} parent=11 // pred_region
        _
      $region56: #{tpu_custom_call.1} parent=11 // pred_fallthru
        _
      // Predicated region
      $region57: #{tpu_custom_call.1} parent=11 // pred_check
        %p547 = pneg %p305
      $region58: #{tpu_custom_call.1} parent=11 // pred_check_branch
        %549 = sbr.rel (%p547) target = $region60
      $region59: #{tpu_custom_call.1} parent=11 // pred_region
        _
      $region60: #{tpu_custom_call.1} parent=11 // pred_fallthru
        _
      // Predicated region
      $region61: #{tpu_custom_call.1} parent=11 // pred_check
        %p550 = pneg %p326
      $region62: #{tpu_custom_call.1} parent=11 // pred_check_branch
        %552 = sbr.rel (%p550) target = $region64
      $region63: #{tpu_custom_call.1} parent=11 // pred_region
        _
      $region64: #{tpu_custom_call.1} parent=11 // pred_fallthru
        _
      // Predicated region
      $region65: #{tpu_custom_call.1} parent=11 // pred_check
        %p553 = pneg %p347
      $region66: #{tpu_custom_call.1} parent=11 // pred_check_branch
        %555 = sbr.rel (%p553) target = $region68
      $region67: #{tpu_custom_call.1} parent=11 // pred_region
        _
      $region68: #{tpu_custom_call.1} parent=11 // pred_fallthru
        _
      // Predicated region
      $region69: #{tpu_custom_call.1} parent=11 // pred_check
        %p556 = pneg %p368
      $region70: #{tpu_custom_call.1} parent=11 // pred_check_branch
        %558 = sbr.rel (%p556) target = $region72
      $region71: #{tpu_custom_call.1} parent=11 // pred_region
        _
      $region72: #{tpu_custom_call.1} parent=11 // pred_fallthru
        _
      // Predicated region
      $region73: #{tpu_custom_call.1} parent=11 // pred_check
        %p559 = pneg %p389
      $region74: #{tpu_custom_call.1} parent=11 // pred_check_branch
        %561 = sbr.rel (%p559) target = $region76
      $region75: #{tpu_custom_call.1} parent=11 // pred_region
        _
      $region76: #{tpu_custom_call.1} parent=11 // pred_fallthru
        _
      // Predicated region
      $region77: #{tpu_custom_call.1} parent=11 // pred_check
        %p562 = pneg %p410
      $region78: #{tpu_custom_call.1} parent=11 // pred_check_branch
        %564 = sbr.rel (%p562) target = $region80
      $region79: #{tpu_custom_call.1} parent=11 // pred_region
        _
      $region80: #{tpu_custom_call.1} parent=11 // pred_fallthru
        _
      // Predicated region
      $region81: #{tpu_custom_call.1} parent=11 // pred_check
        %p565 = pneg %p431
      $region82: #{tpu_custom_call.1} parent=11 // pred_check_branch
        %567 = sbr.rel (%p565) target = $region84
      $region83: #{tpu_custom_call.1} parent=11 // pred_region
        _
      $region84: #{tpu_custom_call.1} parent=11 // pred_fallthru
        _
      // Predicated region
      $region85: #{tpu_custom_call.1} parent=11 // pred_check
        %p568 = pneg %p452
      $region86: #{tpu_custom_call.1} parent=11 // pred_check_branch
        %570 = sbr.rel (%p568) target = $region88
      $region87: #{tpu_custom_call.1} parent=11 // pred_region
        _
      $region88: #{tpu_custom_call.1} parent=11 // pred_fallthru
        _
      // Predicated region
      $region89: #{tpu_custom_call.1} parent=11 // pred_check
        %p571 = pneg %p473
      $region90: #{tpu_custom_call.1} parent=11 // pred_check_branch
        %573 = sbr.rel (%p571) target = $region92
      $region91: #{tpu_custom_call.1} parent=11 // pred_region
        _
      $region92: #{tpu_custom_call.1} parent=11 // pred_fallthru
        _
    $region12: #{tpu_custom_call.1} parent=5 // pred_fallthru
      _
    %p574 = scmp.lt.s32.totalorder %s27, 2
    // Predicated region
    $region93: #{tpu_custom_call.1} parent=5 // pred_check
      %p575 = pneg %p574
    $region94: #{tpu_custom_call.1} parent=5 // pred_check_branch
      %577 = sbr.rel (%p575) target = $region96
    $region95: #{tpu_custom_call.1} parent=5 // pred_region
      // Predicated region
      $region97: #{tpu_custom_call.1} parent=95 // pred_check
        %p578 = pneg %p47
      $region98: #{tpu_custom_call.1} parent=95 // pred_check_branch
        %580 = sbr.rel (%p578) target = $region100
      $region99: #{tpu_custom_call.1} parent=95 // pred_region
        %s581 = smul.u32 8, %s27
        %p582 = scmp.lt.s32.totalorder %s581, 15
        %s583 = scalar_select %p582, %s581, 15
        %s584 = smul.addr %s583, 8
        %s585 = scalar_lea.vmem %s0, %s584
        %s586 = smul.u32 8, %s27
      $region100: #{tpu_custom_call.1} parent=95 // pred_fallthru
        _
    $region96: #{tpu_custom_call.1} parent=5 // pred_fallthru
      _
    %p587 = scmp.le.s32.totalorder 1, %s27
    %p588 = scmp.lt.s32.totalorder %s27, 3
    %p589 = pnand %p587, %p588
    %p590 = pneg %p589
    // Predicated region
    $region101: #{tpu_custom_call.1} parent=5 // pred_check
      _
    $region102: #{tpu_custom_call.1} parent=5 // pred_check_branch
      %592 = sbr.rel (%p589) target = $region104
    $region103: #{tpu_custom_call.1} parent=5 // pred_region
      %s593 = ssub.s32 %s27, 1
      %s594 = smul.u32 8, %s32
      %p595 = scmp.lt.s32.totalorder %s594, 15
      %s596 = scalar_select %p595, %s594, 15
      %s597 = smul.addr %s596, 8
      %s598 = scalar_lea.vmem %s0, %s597
      %p599 = pneg %p53
      %p600 = pneg %p50
      %p601 = pneg %p74
      %p602 = pneg %p71
      %p603 = pneg %p95
      %p604 = pneg %p92
      %p605 = pneg %p116
      %p606 = pneg %p113
      %p607 = pneg %p137
      %p608 = pneg %p134
      %p609 = pneg %p158
      %p610 = pneg %p155
      %p611 = pneg %p179
      %p612 = pneg %p176
      %p613 = pneg %p200
      %p614 = pneg %p197
      %p615 = pneg %p221
      %p616 = pneg %p218
      %p617 = pneg %p242
      %p618 = pneg %p239
      %p619 = pneg %p263
      %p620 = pneg %p260
      %p621 = pneg %p284
      %p622 = pneg %p281
      %p623 = pneg %p305
      %p624 = pneg %p302
      %p625 = pneg %p326
      %p626 = pneg %p323
      %p627 = pneg %p347
      %p628 = pneg %p344
      %p629 = pneg %p368
      %p630 = pneg %p365
      %p631 = pneg %p389
      %p632 = pneg %p386
      %p633 = pneg %p410
      %p634 = pneg %p407
      %p635 = pneg %p431
      %p636 = pneg %p428
      %p637 = pneg %p452
      %p638 = pneg %p449
      %p639 = pneg %p473
      %p640 = pneg %p470
      %p641 = pneg %p499
      %p642 = pneg %p496
      %s643 = smul.u32 8, %s32
      %p644 = scmp.lt.s32.totalorder %s643, 15
      %s645 = scalar_select %p644, %s643, 15
      %s646 = smul.addr %s645, 8
      %s647 = scalar_lea.vmem %s21, %s646
      %s648 = smul.u32 8, %s32
      %p649 = scmp.lt.s32.totalorder %s648, 15
      %s650 = scalar_select %p649, %s648, 15
      %s651 = smul.addr %s650, 8
      %s652 = scalar_lea.vmem %s0, %s651
      %s653 = smul.u32 8, %s32
      %s654 = smul.u32 8, %s32
      %p655 = scmp.lt.s32.totalorder %s654, 15
      %s656 = scalar_select %p655, %s654, 15
      %s657 = smul.addr %s656, 8
      %s658 = scalar_lea.vmem %s21, %s657
      %s659 = smul.u32 8, %s32
      %v661 = vld [vmem:[%s652] sm:$0xff]
      %v662 = vld [vmem:[%s652 + $0x8] sm:$0xff]
      %v663 = vld [vmem:[%s652 + $0x10] sm:$0xff]
      %v664 = vld [vmem:[%s652 + $0x18] sm:$0xff]
      %v665 = vld [vmem:[%s652 + $0x20] sm:$0xff]
      %v666 = vld [vmem:[%s652 + $0x28] sm:$0xff]
      %v667 = vld [vmem:[%s652 + $0x30] sm:$0xff]
      %v668 = vld [vmem:[%s652 + $0x38] sm:$0xff]
      %v669 = vld [vmem:[%s1] sm:$0x1]
      %v670 = vld [vmem:[%s2] sm:$0x1]
      %vm671 = vcmask 523264
      %v672 = vsel %vm671, %v661, 0.0
      %673 = vadd.xlane.f32.xlu0 %v672
      %v674 = vpop.xlane.xlu0 %673
      %v675 = vsel %vm671, %v662, 0.0
      %676 = vadd.xlane.f32.xlu0 %v675
      %v677 = vpop.xlane.xlu0 %676
      %v678 = vsel %vm671, %v663, 0.0
      %679 = vadd.xlane.f32.xlu0 %v678
      %v680 = vpop.xlane.xlu0 %679
      %v681 = vsel %vm671, %v664, 0.0
      %682 = vadd.xlane.f32.xlu0 %v681
      %v683 = vpop.xlane.xlu0 %682
      %v684 = vsel %vm671, %v665, 0.0
      %685 = vadd.xlane.f32.xlu0 %v684
      %v686 = vpop.xlane.xlu0 %685
      %v687 = vsel %vm671, %v666, 0.0
      %688 = vadd.xlane.f32.xlu0 %v687
      %v689 = vpop.xlane.xlu0 %688
      %v690 = vsel %vm671, %v667, 0.0
      %691 = vadd.xlane.f32.xlu0 %v690
      %v692 = vpop.xlane.xlu0 %691
      %v693 = vsel %vm671, %v668, 0.0
      %694 = vadd.xlane.f32.xlu0 %v693
      %v695 = vpop.xlane.xlu0 %694
      %v696 = vrcp.pop 64.0
      %v697 = vmul.f32 %v674, %v696
      %v698 = vmul.f32 %v677, %v696
      %v699 = vmul.f32 %v680, %v696
      %v700 = vmul.f32 %v683, %v696
      %v701 = vmul.f32 %v686, %v696
      %v702 = vmul.f32 %v689, %v696
      %v703 = vmul.f32 %v692, %v696
      %v704 = vmul.f32 %v695, %v696
      %v705 = vsub.f32 %v661, %v697
      %v706 = vsub.f32 %v662, %v698
      %v707 = vsub.f32 %v663, %v699
      %v708 = vsub.f32 %v664, %v700
      %v709 = vsub.f32 %v665, %v701
      %v710 = vsub.f32 %v666, %v702
      %v711 = vsub.f32 %v667, %v703
      %v712 = vsub.f32 %v668, %v704
      %v713 = vmul.f32 %v705, %v705
      %v714 = vmul.f32 %v706, %v706
      %v715 = vmul.f32 %v707, %v707
      %v716 = vmul.f32 %v708, %v708
      %v717 = vmul.f32 %v709, %v709
      %v718 = vmul.f32 %v710, %v710
      %v719 = vmul.f32 %v711, %v711
      %v720 = vmul.f32 %v712, %v712
      %v721 = vsel %vm671, %v713, 0.0
      %722 = vadd.xlane.f32.xlu0 %v721
      %v723 = vpop.xlane.xlu0 %722
      %v724 = vsel %vm671, %v714, 0.0
      %725 = vadd.xlane.f32.xlu0 %v724
      %v726 = vpop.xlane.xlu0 %725
      %v727 = vsel %vm671, %v715, 0.0
      %728 = vadd.xlane.f32.xlu0 %v727
      %v729 = vpop.xlane.xlu0 %728
      %v730 = vsel %vm671, %v716, 0.0
      %731 = vadd.xlane.f32.xlu0 %v730
      %v732 = vpop.xlane.xlu0 %731
      %v733 = vsel %vm671, %v717, 0.0
      %734 = vadd.xlane.f32.xlu0 %v733
      %v735 = vpop.xlane.xlu0 %734
      %v736 = vsel %vm671, %v718, 0.0
      %737 = vadd.xlane.f32.xlu0 %v736
      %v738 = vpop.xlane.xlu0 %737
      %v739 = vsel %vm671, %v719, 0.0
      %740 = vadd.xlane.f32.xlu0 %v739
      %v741 = vpop.xlane.xlu0 %740
      %v742 = vsel %vm671, %v720, 0.0
      %743 = vadd.xlane.f32.xlu0 %v742
      %v744 = vpop.xlane.xlu0 %743
      %v745 = vmul.f32 %v723, %v696
      %v746 = vmul.f32 %v726, %v696
      %v747 = vmul.f32 %v729, %v696
      %v748 = vmul.f32 %v732, %v696
      %v749 = vmul.f32 %v735, %v696
      %v750 = vmul.f32 %v738, %v696
      %v751 = vmul.f32 %v741, %v696
      %v752 = vmul.f32 %v744, %v696
      %v753 = vadd.f32 %v745, 1e-05
      %v754 = vadd.f32 %v746, 1e-05
      %v755 = vadd.f32 %v747, 1e-05
      %v756 = vadd.f32 %v748, 1e-05
      %v757 = vadd.f32 %v749, 1e-05
      %v758 = vadd.f32 %v750, 1e-05
      %v759 = vadd.f32 %v751, 1e-05
      %v760 = vadd.f32 %v752, 1e-05
      %v761 = vrsqrt.pop %v753
      %v762 = vrsqrt.pop %v754
      %v763 = vrsqrt.pop %v755
      %v764 = vrsqrt.pop %v756
      %v765 = vrsqrt.pop %v757
      %v766 = vrsqrt.pop %v758
      %v767 = vrsqrt.pop %v759
      %v768 = vrsqrt.pop %v760
      %v769 = vmul.f32 %v705, %v761
      %v770 = vmul.f32 %v706, %v762
      %v771 = vmul.f32 %v707, %v763
      %v772 = vmul.f32 %v708, %v764
      %v773 = vmul.f32 %v709, %v765
      %v774 = vmul.f32 %v710, %v766
      %v775 = vmul.f32 %v711, %v767
      %v776 = vmul.f32 %v712, %v768
      %v778 = vlaneseq
      %v779 = vshrl.u32 %v778, 7
      %v780 = vsub.s32 0, %v779
      %v781 = vrot.slane %v669, %v780
      %v783 = vmul.f32 %v769, %v781
      %v784 = vmul.f32 %v770, %v781
      %v785 = vmul.f32 %v771, %v781
      %v786 = vmul.f32 %v772, %v781
      %v787 = vmul.f32 %v773, %v781
      %v788 = vmul.f32 %v774, %v781
      %v789 = vmul.f32 %v775, %v781
      %v790 = vmul.f32 %v776, %v781
      %v792 = vlaneseq
      %v793 = vshrl.u32 %v792, 7
      %v794 = vsub.s32 0, %v793
      %v795 = vrot.slane %v670, %v794
      %v797 = vadd.f32 %v783, %v795
      %v798 = vadd.f32 %v784, %v795
      %v799 = vadd.f32 %v785, %v795
      %v800 = vadd.f32 %v786, %v795
      %v801 = vadd.f32 %v787, %v795
      %v802 = vadd.f32 %v788, %v795
      %v803 = vadd.f32 %v789, %v795
      %v804 = vadd.f32 %v790, %v795
      %v805 = vld [vmem:[%s3] sm:$0x1]
      %v806 = vld [vmem:[%s4] sm:$0x1]
      %v807 = vld [vmem:[%s5] sm:$0xf]
      %v808 = vld [vmem:[%s5 + $0x4] sm:$0xf]
      %v809 = vld [vmem:[%s5 + $0x8] sm:$0xf]
      %v810 = vld [vmem:[%s5 + $0xc] sm:$0xf]
      %v811 = vld [vmem:[%s5 + $0x10] sm:$0xf]
      %v812 = vld [vmem:[%s5 + $0x14] sm:$0xf]
      %v813 = vld [vmem:[%s5 + $0x18] sm:$0xf]
      %v814 = vld [vmem:[%s5 + $0x1c] sm:$0xf]
      %v815 = vld [vmem:[%s6] sm:$0x1]
      %v816 = vld [vmem:[%s7] sm:$0xf]
      %v817 = vld [vmem:[%s7 + $0x4] sm:$0xf]
      %v818 = vld [vmem:[%s7 + $0x8] sm:$0xf]
      %v819 = vld [vmem:[%s7 + $0xc] sm:$0xf]
      %v820 = vld [vmem:[%s7 + $0x10] sm:$0xf]
      %v821 = vld [vmem:[%s7 + $0x14] sm:$0xf]
      %v822 = vld [vmem:[%s7 + $0x18] sm:$0xf]
      %v823 = vld [vmem:[%s7 + $0x1c] sm:$0xf]
      %v824 = vld [vmem:[%s8] sm:$0x1]
      %v825 = vld [vmem:[%s9] sm:$0xf]
      %v826 = vld [vmem:[%s9 + $0x4] sm:$0xf]
      %v827 = vld [vmem:[%s9 + $0x8] sm:$0xf]
      %v828 = vld [vmem:[%s9 + $0xc] sm:$0xf]
      %v829 = vld [vmem:[%s9 + $0x10] sm:$0xf]
      %v830 = vld [vmem:[%s9 + $0x14] sm:$0xf]
      %v831 = vld [vmem:[%s9 + $0x18] sm:$0xf]
      %v832 = vld [vmem:[%s9 + $0x1c] sm:$0xf]
      %v833 = vld [vmem:[%s10] sm:$0x1]
      %v834 = vld [vmem:[%s11] sm:$0xf]
      %v835 = vld [vmem:[%s11 + $0x4] sm:$0xf]
      %v836 = vld [vmem:[%s11 + $0x8] sm:$0xf]
      %v837 = vld [vmem:[%s11 + $0xc] sm:$0xf]
      %v838 = vld [vmem:[%s11 + $0x10] sm:$0xf]
      %v839 = vld [vmem:[%s11 + $0x14] sm:$0xf]
      %v840 = vld [vmem:[%s11 + $0x18] sm:$0xf]
      %v841 = vld [vmem:[%s11 + $0x1c] sm:$0xf]
      %v842 = vld [vmem:[%s12] sm:$0x1]
      %v843 = vld [vmem:[%s13] sm:$0x1]
      %v844 = vld [vmem:[%s14] sm:$0x1]
      %v845 = vld [vmem:[%s15] sm:$0xff]
      %v846 = vld [vmem:[%s15 + $0x8] sm:$0xff]
      %v847 = vld [vmem:[%s15 + $0x10] sm:$0xff]
      %v848 = vld [vmem:[%s15 + $0x18] sm:$0xff]
      %v849 = vld [vmem:[%s15 + $0x20] sm:$0xff]
      %v850 = vld [vmem:[%s15 + $0x28] sm:$0xff]
      %v851 = vld [vmem:[%s15 + $0x30] sm:$0xff]
      %v852 = vld [vmem:[%s15 + $0x38] sm:$0xff]
      %v853 = vld [vmem:[%s16] sm:$0x3]
      %v854 = vld [vmem:[%s17] sm:$0xf]
      %v855 = vld [vmem:[%s17 + $0x4] sm:$0xf]
      %v856 = vld [vmem:[%s17 + $0x8] sm:$0xf]
      %v857 = vld [vmem:[%s17 + $0xc] sm:$0xf]
      %v858 = vld [vmem:[%s17 + $0x10] sm:$0xf]
      %v859 = vld [vmem:[%s17 + $0x14] sm:$0xf]
      %v860 = vld [vmem:[%s17 + $0x18] sm:$0xf]
      %v861 = vld [vmem:[%s17 + $0x1c] sm:$0xf]
      %v862 = vld [vmem:[%s17 + $0x20] sm:$0xf]
      %v863 = vld [vmem:[%s17 + $0x24] sm:$0xf]
      %v864 = vld [vmem:[%s17 + $0x28] sm:$0xf]
      %v865 = vld [vmem:[%s17 + $0x2c] sm:$0xf]
      %v866 = vld [vmem:[%s17 + $0x30] sm:$0xf]
      %v867 = vld [vmem:[%s17 + $0x34] sm:$0xf]
      %v868 = vld [vmem:[%s17 + $0x38] sm:$0xf]
      %v869 = vld [vmem:[%s17 + $0x3c] sm:$0xf]
      %v870 = vld [vmem:[%s17 + $0x40] sm:$0xf]
      %v871 = vld [vmem:[%s17 + $0x44] sm:$0xf]
      %v872 = vld [vmem:[%s17 + $0x48] sm:$0xf]
      %v873 = vld [vmem:[%s17 + $0x4c] sm:$0xf]
      %v874 = vld [vmem:[%s17 + $0x50] sm:$0xf]
      %v875 = vld [vmem:[%s17 + $0x54] sm:$0xf]
      %v876 = vld [vmem:[%s17 + $0x58] sm:$0xf]
      %v877 = vld [vmem:[%s17 + $0x5c] sm:$0xf]
      %v878 = vld [vmem:[%s17 + $0x60] sm:$0xf]
      %v879 = vld [vmem:[%s17 + $0x64] sm:$0xf]
      %v880 = vld [vmem:[%s17 + $0x68] sm:$0xf]
      %v881 = vld [vmem:[%s17 + $0x6c] sm:$0xf]
      %v882 = vld [vmem:[%s17 + $0x70] sm:$0xf]
      %v883 = vld [vmem:[%s17 + $0x74] sm:$0xf]
      %v884 = vld [vmem:[%s17 + $0x78] sm:$0xf]
      %v885 = vld [vmem:[%s17 + $0x7c] sm:$0xf]
      %v886 = vld [vmem:[%s18] sm:$0x1]
      %v887 = vsel %vm671, %v797, 0.0
      %888 = vadd.xlane.f32.xlu0 %v887
      %v889 = vpop.xlane.xlu0 %888
      %v890 = vsel %vm671, %v798, 0.0
      %891 = vadd.xlane.f32.xlu0 %v890
      %v892 = vpop.xlane.xlu0 %891
      %v893 = vsel %vm671, %v799, 0.0
      %894 = vadd.xlane.f32.xlu0 %v893
      %v895 = vpop.xlane.xlu0 %894
      %v896 = vsel %vm671, %v800, 0.0
      %897 = vadd.xlane.f32.xlu0 %v896
      %v898 = vpop.xlane.xlu0 %897
      %v899 = vsel %vm671, %v801, 0.0
      %900 = vadd.xlane.f32.xlu0 %v899
      %v901 = vpop.xlane.xlu0 %900
      %v902 = vsel %vm671, %v802, 0.0
      %903 = vadd.xlane.f32.xlu0 %v902
      %v904 = vpop.xlane.xlu0 %903
      %v905 = vsel %vm671, %v803, 0.0
      %906 = vadd.xlane.f32.xlu0 %v905
      %v907 = vpop.xlane.xlu0 %906
      %v908 = vsel %vm671, %v804, 0.0
      %909 = vadd.xlane.f32.xlu0 %v908
      %v910 = vpop.xlane.xlu0 %909
      %v911 = vmul.f32 %v889, %v696
      %v912 = vmul.f32 %v892, %v696
      %v913 = vmul.f32 %v895, %v696
      %v914 = vmul.f32 %v898, %v696
      %v915 = vmul.f32 %v901, %v696
      %v916 = vmul.f32 %v904, %v696
      %v917 = vmul.f32 %v907, %v696
      %v918 = vmul.f32 %v910, %v696
      %v919 = vsub.f32 %v797, %v911
      %v920 = vsub.f32 %v798, %v912
      %v921 = vsub.f32 %v799, %v913
      %v922 = vsub.f32 %v800, %v914
      %v923 = vsub.f32 %v801, %v915
      %v924 = vsub.f32 %v802, %v916
      %v925 = vsub.f32 %v803, %v917
      %v926 = vsub.f32 %v804, %v918
      %v927 = vmul.f32 %v919, %v919
      %v928 = vmul.f32 %v920, %v920
      %v929 = vmul.f32 %v921, %v921
      %v930 = vmul.f32 %v922, %v922
      %v931 = vmul.f32 %v923, %v923
      %v932 = vmul.f32 %v924, %v924
      %v933 = vmul.f32 %v925, %v925
      %v934 = vmul.f32 %v926, %v926
      %v935 = vsel %vm671, %v927, 0.0
      %936 = vadd.xlane.f32.xlu0 %v935
      %v937 = vpop.xlane.xlu0 %936
      %v938 = vsel %vm671, %v928, 0.0
      %939 = vadd.xlane.f32.xlu0 %v938
      %v940 = vpop.xlane.xlu0 %939
      %v941 = vsel %vm671, %v929, 0.0
      %942 = vadd.xlane.f32.xlu0 %v941
      %v943 = vpop.xlane.xlu0 %942
      %v944 = vsel %vm671, %v930, 0.0
      %945 = vadd.xlane.f32.xlu0 %v944
      %v946 = vpop.xlane.xlu0 %945
      %v947 = vsel %vm671, %v931, 0.0
      %948 = vadd.xlane.f32.xlu0 %v947
      %v949 = vpop.xlane.xlu0 %948
      %v950 = vsel %vm671, %v932, 0.0
      %951 = vadd.xlane.f32.xlu0 %v950
      %v952 = vpop.xlane.xlu0 %951
      %v953 = vsel %vm671, %v933, 0.0
      %954 = vadd.xlane.f32.xlu0 %v953
      %v955 = vpop.xlane.xlu0 %954
      %v956 = vsel %vm671, %v934, 0.0
      %957 = vadd.xlane.f32.xlu0 %v956
      %v958 = vpop.xlane.xlu0 %957
      %v959 = vmul.f32 %v937, %v696
      %v960 = vmul.f32 %v940, %v696
      %v961 = vmul.f32 %v943, %v696
      %v962 = vmul.f32 %v946, %v696
      %v963 = vmul.f32 %v949, %v696
      %v964 = vmul.f32 %v952, %v696
      %v965 = vmul.f32 %v955, %v696
      %v966 = vmul.f32 %v958, %v696
      %v967 = vadd.f32 %v959, 1e-05
      %v968 = vadd.f32 %v960, 1e-05
      %v969 = vadd.f32 %v961, 1e-05
      %v970 = vadd.f32 %v962, 1e-05
      %v971 = vadd.f32 %v963, 1e-05
      %v972 = vadd.f32 %v964, 1e-05
      %v973 = vadd.f32 %v965, 1e-05
      %v974 = vadd.f32 %v966, 1e-05
      %v975 = vrsqrt.pop %v967
      %v976 = vrsqrt.pop %v968
      %v977 = vrsqrt.pop %v969
      %v978 = vrsqrt.pop %v970
      %v979 = vrsqrt.pop %v971
      %v980 = vrsqrt.pop %v972
      %v981 = vrsqrt.pop %v973
      %v982 = vrsqrt.pop %v974
      %v983 = vmul.f32 %v919, %v975
      %v984 = vmul.f32 %v920, %v976
      %v985 = vmul.f32 %v921, %v977
      %v986 = vmul.f32 %v922, %v978
      %v987 = vmul.f32 %v923, %v979
      %v988 = vmul.f32 %v924, %v980
      %v989 = vmul.f32 %v925, %v981
      %v990 = vmul.f32 %v926, %v982
      %v992 = vlaneseq
      %v993 = vshrl.u32 %v992, 7
      %v994 = vsub.s32 0, %v993
      %v995 = vrot.slane %v805, %v994
      %v997 = vmul.f32 %v983, %v995
      %v998 = vmul.f32 %v984, %v995
      %v999 = vmul.f32 %v985, %v995
      %v1000 = vmul.f32 %v986, %v995
      %v1001 = vmul.f32 %v987, %v995
      %v1002 = vmul.f32 %v988, %v995
      %v1003 = vmul.f32 %v989, %v995
      %v1004 = vmul.f32 %v990, %v995
      %v1006 = vlaneseq
      %v1007 = vshrl.u32 %v1006, 7
      %v1008 = vsub.s32 0, %v1007
      %v1009 = vrot.slane %v806, %v1008
      %v1011 = vadd.f32 %v997, %v1009
      %v1012 = vadd.f32 %v998, %v1009
      %v1013 = vadd.f32 %v999, %v1009
      %v1014 = vadd.f32 %v1000, %v1009
      %v1015 = vadd.f32 %v1001, %v1009
      %v1016 = vadd.f32 %v1002, %v1009
      %v1017 = vadd.f32 %v1003, %v1009
      %v1018 = vadd.f32 %v1004, %v1009
      %v1019 = vpack.c.bf16 %v1012, %v1011
      %v1020 = vpack.c.bf16 %v1014, %v1013
      %v1021 = vpack.c.bf16 %v1016, %v1015
      %v1022 = vpack.c.bf16 %v1018, %v1017
      %v1024 = vlaneseq
      %v1025 = vshrl.u32 %v1024, 7
      %v1026 = vsub.s32 0, %v1025
      %v1027 = vrot.slane %v815, %v1026
      %v1037 = vunpack.c.l.b16 %v807
      %v1038 = vunpack.c.l.b16 %v808
      %v1039 = vunpack.c.l.b16 %v809
      %v1040 = vunpack.c.l.b16 %v810
      %v1041 = vunpack.c.l.b16 %v811
      %v1042 = vunpack.c.l.b16 %v812
      %v1043 = vunpack.c.l.b16 %v813
      %v1044 = vunpack.c.l.b16 %v814
      %v1045 = vpack.c.b16 %v1038, %v1037
      %v1046 = vpack.c.b16 %v1040, %v1039
      %v1047 = vpack.c.b16 %v1042, %v1041
      %v1048 = vpack.c.b16 %v1044, %v1043
      %v1054 = vsel %vm671, %v1019, 0
      %v1057 = vsel %vm671, %v1020, 0
      %v1060 = vsel %vm671, %v1021, 0
      %v1063 = vsel %vm671, %v1022, 0
      %1065 = vmatprep.subr.bf16.mxu0 0
      %1066 = vmatpush1.bf16.msra.mxu0 0
      %1067 = vmatprep.subr.bf16.mxu0 0
      %1068 = vmatpush1.bf16.msra.mxu0 0
      %1069 = vmatprep.subr.bf16.mxu0 0
      %1070 = vmatpush1.bf16.msra.mxu0 0
      %1071 = vmatprep.subr.bf16.mxu0 0
      %1072 = vmatpush1.bf16.msra.mxu0 0
      %1073 = vmatprep.subr.bf16.mxu0 0
      %1074 = vmatpush1.bf16.msra.mxu0 %v1048
      %1075 = vmatprep.subr.bf16.mxu0 0
      %1076 = vmatpush1.bf16.msra.mxu0 %v1047
      %1077 = vmatprep.subr.bf16.mxu0 0
      %1078 = vmatpush1.bf16.msra.mxu0 %v1046
      %1079 = vmatprep.subr.bf16.mxu0 0
      %1080 = vmatpush1.bf16.msra.mxu0 %v1045
      %1081 = vmatprep.subr.bf16.mxu0 0
      %1082 = vmatpush2.bf16.msra.mxu0 0
      %1083 = vmatprep.subr.bf16.mxu0 0
      %1084 = vmatpush2.bf16.msra.mxu0 0
      %1085 = vmatprep.subr.bf16.mxu0 0
      %1086 = vmatpush2.bf16.msra.mxu0 0
      %1087 = vmatprep.subr.bf16.mxu0 0
      %1088 = vmatpush2.bf16.msra.mxu0 0
      %1089 = vmatprep.subr.bf16.mxu0 0
      %1090 = vmatpush2.bf16.msra.mxu0 0
      %1091 = vmatprep.subr.bf16.mxu0 0
      %1092 = vmatpush2.bf16.msra.mxu0 0
      %1093 = vmatprep.subr.bf16.mxu0 0
      %1094 = vmatpush2.bf16.msra.mxu0 0
      %1095 = vmatprep.subr.bf16.mxu0 0
      %1096 = vmatpush2.bf16.msra.mxu0 0
      %1097 = vmatprep.mubr.bf16.mxu0 0
      %1098 = vmatmul.mubr.bf16.gmra.mxu0 %v1054
      %v1099 = vpop.f32.mrf.mxu0
      %v1100 = vadd.f32 %v1027, %v1099
      %v1101 = vpop.f32.mrf.mxu0
      %v1102 = vpop.f32.mrf.mxu0
      %v1103 = vadd.f32 %v1027, %v1102
      %v1104 = vpop.f32.mrf.mxu0
      %1105 = vmatprep.mubr.bf16.mxu0 0
      %1106 = vmatmul.mubr.bf16.gmra.mxu0 %v1057
      %v1107 = vpop.f32.mrf.mxu0
      %v1108 = vadd.f32 %v1027, %v1107
      %v1109 = vpop.f32.mrf.mxu0
      %v1110 = vpop.f32.mrf.mxu0
      %v1111 = vadd.f32 %v1027, %v1110
      %v1112 = vpop.f32.mrf.mxu0
      %1113 = vmatprep.mubr.bf16.mxu0 0
      %1114 = vmatmul.mubr.bf16.gmra.mxu0 %v1060
      %v1115 = vpop.f32.mrf.mxu0
      %v1116 = vadd.f32 %v1027, %v1115
      %v1117 = vpop.f32.mrf.mxu0
      %v1118 = vpop.f32.mrf.mxu0
      %v1119 = vadd.f32 %v1027, %v1118
      %v1120 = vpop.f32.mrf.mxu0
      %1121 = vmatprep.mubr.bf16.mxu0 0
      %1122 = vmatmul.mubr.bf16.gmra.mxu0 %v1063
      %v1123 = vpop.f32.mrf.mxu0
      %v1124 = vadd.f32 %v1027, %v1123
      %v1125 = vpop.f32.mrf.mxu0
      %v1126 = vpop.f32.mrf.mxu0
      %v1127 = vadd.f32 %v1027, %v1126
      %v1128 = vpop.f32.mrf.mxu0
      %1129 = vdwg.mxu0
      %v1131 = vlaneseq
      %v1132 = vshrl.u32 %v1131, 7
      %v1133 = vsub.s32 0, %v1132
      %v1134 = vrot.slane %v824, %v1133
      %v1144 = vunpack.c.l.b16 %v816
      %v1145 = vunpack.c.l.b16 %v817
      %v1146 = vunpack.c.l.b16 %v818
      %v1147 = vunpack.c.l.b16 %v819
      %v1148 = vunpack.c.l.b16 %v820
      %v1149 = vunpack.c.l.b16 %v821
      %v1150 = vunpack.c.l.b16 %v822
      %v1151 = vunpack.c.l.b16 %v823
      %v1152 = vpack.c.b16 %v1145, %v1144
      %v1153 = vpack.c.b16 %v1147, %v1146
      %v1154 = vpack.c.b16 %v1149, %v1148
      %v1155 = vpack.c.b16 %v1151, %v1150
      %1160 = vmatprep.subr.bf16.mxu0 0
      %1161 = vmatpush1.bf16.msra.mxu0 0
      %1162 = vmatprep.subr.bf16.mxu0 0
      %1163 = vmatpush1.bf16.msra.mxu0 0
      %1164 = vmatprep.subr.bf16.mxu0 0
      %1165 = vmatpush1.bf16.msra.mxu0 0
      %1166 = vmatprep.subr.bf16.mxu0 0
      %1167 = vmatpush1.bf16.msra.mxu0 0
      %1168 = vmatprep.subr.bf16.mxu0 0
      %1169 = vmatpush1.bf16.msra.mxu0 %v1155
      %1170 = vmatprep.subr.bf16.mxu0 0
      %1171 = vmatpush1.bf16.msra.mxu0 %v1154
      %1172 = vmatprep.subr.bf16.mxu0 0
      %1173 = vmatpush1.bf16.msra.mxu0 %v1153
      %1174 = vmatprep.subr.bf16.mxu0 0
      %1175 = vmatpush1.bf16.msra.mxu0 %v1152
      %1176 = vmatprep.subr.bf16.mxu0 0
      %1177 = vmatpush2.bf16.msra.mxu0 0
      %1178 = vmatprep.subr.bf16.mxu0 0
      %1179 = vmatpush2.bf16.msra.mxu0 0
      %1180 = vmatprep.subr.bf16.mxu0 0
      %1181 = vmatpush2.bf16.msra.mxu0 0
      %1182 = vmatprep.subr.bf16.mxu0 0
      %1183 = vmatpush2.bf16.msra.mxu0 0
      %1184 = vmatprep.subr.bf16.mxu0 0
      %1185 = vmatpush2.bf16.msra.mxu0 0
      %1186 = vmatprep.subr.bf16.mxu0 0
      %1187 = vmatpush2.bf16.msra.mxu0 0
      %1188 = vmatprep.subr.bf16.mxu0 0
      %1189 = vmatpush2.bf16.msra.mxu0 0
      %1190 = vmatprep.subr.bf16.mxu0 0
      %1191 = vmatpush2.bf16.msra.mxu0 0
      %1192 = vmatprep.mubr.bf16.mxu0 0
      %1193 = vmatmul.mubr.bf16.gmra.mxu0 %v1054
      %v1194 = vpop.f32.mrf.mxu0
      %v1195 = vadd.f32 %v1134, %v1194
      %v1196 = vpop.f32.mrf.mxu0
      %v1197 = vpop.f32.mrf.mxu0
      %v1198 = vadd.f32 %v1134, %v1197
      %v1199 = vpop.f32.mrf.mxu0
      %1200 = vmatprep.mubr.bf16.mxu0 0
      %1201 = vmatmul.mubr.bf16.gmra.mxu0 %v1057
      %v1202 = vpop.f32.mrf.mxu0
      %v1203 = vadd.f32 %v1134, %v1202
      %v1204 = vpop.f32.mrf.mxu0
      %v1205 = vpop.f32.mrf.mxu0
      %v1206 = vadd.f32 %v1134, %v1205
      %v1207 = vpop.f32.mrf.mxu0
      %1208 = vmatprep.mubr.bf16.mxu0 0
      %1209 = vmatmul.mubr.bf16.gmra.mxu0 %v1060
      %v1210 = vpop.f32.mrf.mxu0
      %v1211 = vadd.f32 %v1134, %v1210
      %v1212 = vpop.f32.mrf.mxu0
      %v1213 = vpop.f32.mrf.mxu0
      %v1214 = vadd.f32 %v1134, %v1213
      %v1215 = vpop.f32.mrf.mxu0
      %1216 = vmatprep.mubr.bf16.mxu0 0
      %1217 = vmatmul.mubr.bf16.gmra.mxu0 %v1063
      %v1218 = vpop.f32.mrf.mxu0
      %v1219 = vadd.f32 %v1134, %v1218
      %v1220 = vpop.f32.mrf.mxu0
      %v1221 = vpop.f32.mrf.mxu0
      %v1222 = vadd.f32 %v1134, %v1221
      %v1223 = vpop.f32.mrf.mxu0
      %1224 = vdwg.mxu0
      %v1226 = vlaneseq
      %v1227 = vshrl.u32 %v1226, 7
      %v1228 = vsub.s32 0, %v1227
      %v1229 = vrot.slane %v833, %v1228
      %v1239 = vunpack.c.l.b16 %v825
      %v1240 = vunpack.c.l.b16 %v826
      %v1241 = vunpack.c.l.b16 %v827
      %v1242 = vunpack.c.l.b16 %v828
      %v1243 = vunpack.c.l.b16 %v829
      %v1244 = vunpack.c.l.b16 %v830
      %v1245 = vunpack.c.l.b16 %v831
      %v1246 = vunpack.c.l.b16 %v832
      %v1247 = vpack.c.b16 %v1240, %v1239
      %v1248 = vpack.c.b16 %v1242, %v1241
      %v1249 = vpack.c.b16 %v1244, %v1243
      %v1250 = vpack.c.b16 %v1246, %v1245
      %1255 = vmatprep.subr.bf16.mxu0 0
      %1256 = vmatpush1.bf16.msra.mxu0 0
      %1257 = vmatprep.subr.bf16.mxu0 0
      %1258 = vmatpush1.bf16.msra.mxu0 0
      %1259 = vmatprep.subr.bf16.mxu0 0
      %1260 = vmatpush1.bf16.msra.mxu0 0
      %1261 = vmatprep.subr.bf16.mxu0 0
      %1262 = vmatpush1.bf16.msra.mxu0 0
      %1263 = vmatprep.subr.bf16.mxu0 0
      %1264 = vmatpush1.bf16.msra.mxu0 %v1250
      %1265 = vmatprep.subr.bf16.mxu0 0
      %1266 = vmatpush1.bf16.msra.mxu0 %v1249
      %1267 = vmatprep.subr.bf16.mxu0 0
      %1268 = vmatpush1.bf16.msra.mxu0 %v1248
      %1269 = vmatprep.subr.bf16.mxu0 0
      %1270 = vmatpush1.bf16.msra.mxu0 %v1247
      %1271 = vmatprep.subr.bf16.mxu0 0
      %1272 = vmatpush2.bf16.msra.mxu0 0
      %1273 = vmatprep.subr.bf16.mxu0 0
      %1274 = vmatpush2.bf16.msra.mxu0 0
      %1275 = vmatprep.subr.bf16.mxu0 0
      %1276 = vmatpush2.bf16.msra.mxu0 0
      %1277 = vmatprep.subr.bf16.mxu0 0
      %1278 = vmatpush2.bf16.msra.mxu0 0
      %1279 = vmatprep.subr.bf16.mxu0 0
      %1280 = vmatpush2.bf16.msra.mxu0 0
      %1281 = vmatprep.subr.bf16.mxu0 0
      %1282 = vmatpush2.bf16.msra.mxu0 0
      %1283 = vmatprep.subr.bf16.mxu0 0
      %1284 = vmatpush2.bf16.msra.mxu0 0
      %1285 = vmatprep.subr.bf16.mxu0 0
      %1286 = vmatpush2.bf16.msra.mxu0 0
      %1287 = vmatprep.mubr.bf16.mxu0 0
      %1288 = vmatmul.mubr.bf16.gmra.mxu0 %v1054
      %v1289 = vpop.f32.mrf.mxu0
      %v1290 = vadd.f32 %v1229, %v1289
      %v1291 = vpop.f32.mrf.mxu0
      %v1292 = vpop.f32.mrf.mxu0
      %v1293 = vadd.f32 %v1229, %v1292
      %v1294 = vpop.f32.mrf.mxu0
      %1295 = vmatprep.mubr.bf16.mxu0 0
      %1296 = vmatmul.mubr.bf16.gmra.mxu0 %v1057
      %v1297 = vpop.f32.mrf.mxu0
      %v1298 = vadd.f32 %v1229, %v1297
      %v1299 = vpop.f32.mrf.mxu0
      %v1300 = vpop.f32.mrf.mxu0
      %v1301 = vadd.f32 %v1229, %v1300
      %v1302 = vpop.f32.mrf.mxu0
      %1303 = vmatprep.mubr.bf16.mxu0 0
      %1304 = vmatmul.mubr.bf16.gmra.mxu0 %v1060
      %v1305 = vpop.f32.mrf.mxu0
      %v1306 = vadd.f32 %v1229, %v1305
      %v1307 = vpop.f32.mrf.mxu0
      %v1308 = vpop.f32.mrf.mxu0
      %v1309 = vadd.f32 %v1229, %v1308
      %v1310 = vpop.f32.mrf.mxu0
      %1311 = vmatprep.mubr.bf16.mxu0 0
      %1312 = vmatmul.mubr.bf16.gmra.mxu0 %v1063
      %v1313 = vpop.f32.mrf.mxu0
      %v1314 = vadd.f32 %v1229, %v1313
      %v1315 = vpop.f32.mrf.mxu0
      %v1316 = vpop.f32.mrf.mxu0
      %v1317 = vadd.f32 %v1229, %v1316
      %v1318 = vpop.f32.mrf.mxu0
      %1319 = vdwg.mxu0
      %v1321 = vlaneseq
      %v1322 = vshrl.u32 %v1321, 7
      %v1323 = vsub.s32 0, %v1322
      %v1324 = vrot.slane %v842, %v1323
      %v1326 = vadd.f32 %v797, %v1324
      %v1327 = vadd.f32 %v798, %v1324
      %v1328 = vadd.f32 %v799, %v1324
      %v1329 = vadd.f32 %v800, %v1324
      %v1330 = vadd.f32 %v801, %v1324
      %v1331 = vadd.f32 %v802, %v1324
      %v1332 = vadd.f32 %v803, %v1324
      %v1333 = vadd.f32 %v804, %v1324
      %v1334 = vmul.f32 %v1100, 0.25
      %v1335 = vmul.f32 %v1103, 0.25
      %v1336 = vmul.f32 %v1108, 0.25
      %v1337 = vmul.f32 %v1111, 0.25
      %v1338 = vmul.f32 %v1116, 0.25
      %v1339 = vmul.f32 %v1119, 0.25
      %v1340 = vmul.f32 %v1124, 0.25
      %v1341 = vmul.f32 %v1127, 0.25
      %v1342 = vpack.c.bf16 %v1335, %v1334
      %v1343 = vpack.c.bf16 %v1337, %v1336
      %v1344 = vpack.c.bf16 %v1339, %v1338
      %v1345 = vpack.c.bf16 %v1341, %v1340
      %v1346 = vpack.c.bf16 %v1198, %v1195
      %v1347 = vpack.c.bf16 %v1206, %v1203
      %v1348 = vpack.c.bf16 %v1214, %v1211
      %v1349 = vpack.c.bf16 %v1222, %v1219
      %v1350 = vpack.c.bf16 %v1293, %v1290
      %v1351 = vpack.c.bf16 %v1301, %v1298
      %v1352 = vpack.c.bf16 %v1309, %v1306
      %v1353 = vpack.c.bf16 %v1317, %v1314
      %vm1354 = vcmask 130048
      %v1356 = vsel %vm1354, %v1342, 0
      %v1359 = vsel %vm1354, %v1343, 0
      %v1362 = vsel %vm1354, %v1346, 0
      %v1365 = vsel %vm1354, %v1347, 0
      %1367 = vmatprep.subr.bf16.mxu0 0
      %1368 = vmatpush1.bf16.xpose.msra.mxu0 0
      %1369 = vmatprep.subr.bf16.mxu0 0
      %1370 = vmatpush1.bf16.xpose.msra.mxu0 0
      %1371 = vmatprep.subr.bf16.mxu0 0
      %1372 = vmatpush1.bf16.xpose.msra.mxu0 0
      %1373 = vmatprep.subr.bf16.mxu0 0
      %1374 = vmatpush1.bf16.xpose.msra.mxu0 0
      %1375 = vmatprep.subr.bf16.mxu0 0
      %1376 = vmatpush1.bf16.xpose.msra.mxu0 0
      %1377 = vmatprep.subr.bf16.mxu0 0
      %1378 = vmatpush1.bf16.xpose.msra.mxu0 0
      %1379 = vmatprep.subr.bf16.mxu0 0
      %1380 = vmatpush1.bf16.xpose.msra.mxu0 %v1365
      %1381 = vmatprep.subr.bf16.mxu0 0
      %1382 = vmatpush1.bf16.xpose.msra.mxu0 %v1362
      %1383 = vmatprep.subr.bf16.mxu0 0
      %1384 = vmatpush2.bf16.xpose.msra.mxu0 0
      %1385 = vmatprep.subr.bf16.mxu0 0
      %1386 = vmatpush2.bf16.xpose.msra.mxu0 0
      %1387 = vmatprep.subr.bf16.mxu0 0
      %1388 = vmatpush2.bf16.xpose.msra.mxu0 0
      %1389 = vmatprep.subr.bf16.mxu0 0
      %1390 = vmatpush2.bf16.xpose.msra.mxu0 0
      %1391 = vmatprep.subr.bf16.mxu0 0
      %1392 = vmatpush2.bf16.xpose.msra.mxu0 0
      %1393 = vmatprep.subr.bf16.mxu0 0
      %1394 = vmatpush2.bf16.xpose.msra.mxu0 0
      %1395 = vmatprep.subr.bf16.mxu0 0
      %1396 = vmatpush2.bf16.xpose.msra.mxu0 0
      %1397 = vmatprep.subr.bf16.mxu0 0
      %1398 = vmatpush2.bf16.xpose.msra.mxu0 0
      %1399 = vmatprep.mubr.bf16.mxu0 0
      %1400 = vmatmul.mubr.bf16.gmra.mxu0 %v1356
      %v1401 = vpop.f32.mrf.mxu0
      %v1402 = vadd.f32 0.0, %v1401
      %v1403 = vpop.f32.mrf.mxu0
      %v1404 = vpop.f32.mrf.mxu0
      %v1405 = vadd.f32 0.0, %v1404
      %v1406 = vpop.f32.mrf.mxu0
      %1407 = vmatprep.mubr.bf16.mxu0 0
      %1408 = vmatmul.mubr.bf16.gmra.mxu0 %v1359
      %v1409 = vpop.f32.mrf.mxu0
      %v1410 = vadd.f32 0.0, %v1409
      %v1411 = vpop.f32.mrf.mxu0
      %v1412 = vpop.f32.mrf.mxu0
      %v1413 = vadd.f32 0.0, %v1412
      %v1414 = vpop.f32.mrf.mxu0
      %1415 = vdwg.mxu0
      %v1417 = vsel %vm1354, %v1344, 0
      %v1420 = vsel %vm1354, %v1345, 0
      %v1423 = vsel %vm1354, %v1348, 0
      %v1426 = vsel %vm1354, %v1349, 0
      %1428 = vmatprep.subr.bf16.mxu0 0
      %1429 = vmatpush1.bf16.xpose.msra.mxu0 0
      %1430 = vmatprep.subr.bf16.mxu0 0
      %1431 = vmatpush1.bf16.xpose.msra.mxu0 0
      %1432 = vmatprep.subr.bf16.mxu0 0
      %1433 = vmatpush1.bf16.xpose.msra.mxu0 0
      %1434 = vmatprep.subr.bf16.mxu0 0
      %1435 = vmatpush1.bf16.xpose.msra.mxu0 0
      %1436 = vmatprep.subr.bf16.mxu0 0
      %1437 = vmatpush1.bf16.xpose.msra.mxu0 0
      %1438 = vmatprep.subr.bf16.mxu0 0
      %1439 = vmatpush1.bf16.xpose.msra.mxu0 0
      %1440 = vmatprep.subr.bf16.mxu0 0
      %1441 = vmatpush1.bf16.xpose.msra.mxu0 %v1426
      %1442 = vmatprep.subr.bf16.mxu0 0
      %1443 = vmatpush1.bf16.xpose.msra.mxu0 %v1423
      %1444 = vmatprep.subr.bf16.mxu0 0
      %1445 = vmatpush2.bf16.xpose.msra.mxu0 0
      %1446 = vmatprep.subr.bf16.mxu0 0
      %1447 = vmatpush2.bf16.xpose.msra.mxu0 0
      %1448 = vmatprep.subr.bf16.mxu0 0
      %1449 = vmatpush2.bf16.xpose.msra.mxu0 0
      %1450 = vmatprep.subr.bf16.mxu0 0
      %1451 = vmatpush2.bf16.xpose.msra.mxu0 0
      %1452 = vmatprep.subr.bf16.mxu0 0
      %1453 = vmatpush2.bf16.xpose.msra.mxu0 0
      %1454 = vmatprep.subr.bf16.mxu0 0
      %1455 = vmatpush2.bf16.xpose.msra.mxu0 0
      %1456 = vmatprep.subr.bf16.mxu0 0
      %1457 = vmatpush2.bf16.xpose.msra.mxu0 0
      %1458 = vmatprep.subr.bf16.mxu0 0
      %1459 = vmatpush2.bf16.xpose.msra.mxu0 0
      %1460 = vmatprep.mubr.bf16.mxu0 0
      %1461 = vmatmul.mubr.bf16.gmra.mxu0 %v1417
      %v1462 = vpop.f32.mrf.mxu0
      %v1463 = vadd.f32 0.0, %v1462
      %v1464 = vpop.f32.mrf.mxu0
      %v1465 = vpop.f32.mrf.mxu0
      %v1466 = vadd.f32 0.0, %v1465
      %v1467 = vpop.f32.mrf.mxu0
      %1468 = vmatprep.mubr.bf16.mxu0 0
      %1469 = vmatmul.mubr.bf16.gmra.mxu0 %v1420
      %v1470 = vpop.f32.mrf.mxu0
      %v1471 = vadd.f32 0.0, %v1470
      %v1472 = vpop.f32.mrf.mxu0
      %v1473 = vpop.f32.mrf.mxu0
      %v1474 = vadd.f32 0.0, %v1473
      %v1475 = vpop.f32.mrf.mxu0
      %1476 = vdwg.mxu0
      %vm1477 = vcmask 261120
      %v1478 = vsel %vm1477, %v1402, -inf
      %1479 = vmax.xlane.f32.xlu0 %v1478
      %v1480 = vpop.xlane.xlu0 %1479
      %v1481 = vsel %vm1477, %v1405, -inf
      %1482 = vmax.xlane.f32.xlu0 %v1481
      %v1483 = vpop.xlane.xlu0 %1482
      %v1484 = vsel %vm1477, %v1410, -inf
      %1485 = vmax.xlane.f32.xlu0 %v1484
      %v1486 = vpop.xlane.xlu0 %1485
      %v1487 = vsel %vm1477, %v1413, -inf
      %1488 = vmax.xlane.f32.xlu0 %v1487
      %v1489 = vpop.xlane.xlu0 %1488
      %v1490 = vsel %vm1477, %v1463, -inf
      %1491 = vmax.xlane.f32.xlu0 %v1490
      %v1492 = vpop.xlane.xlu0 %1491
      %v1493 = vsel %vm1477, %v1466, -inf
      %1494 = vmax.xlane.f32.xlu0 %v1493
      %v1495 = vpop.xlane.xlu0 %1494
      %v1496 = vsel %vm1477, %v1471, -inf
      %1497 = vmax.xlane.f32.xlu0 %v1496
      %v1498 = vpop.xlane.xlu0 %1497
      %v1499 = vsel %vm1477, %v1474, -inf
      %1500 = vmax.xlane.f32.xlu0 %v1499
      %v1501 = vpop.xlane.xlu0 %1500
      %v1502 = vsub.f32 %v1402, %v1480
      %v1503 = vsub.f32 %v1405, %v1483
      %v1504 = vsub.f32 %v1410, %v1486
      %v1505 = vsub.f32 %v1413, %v1489
      %v1506 = vsub.f32 %v1463, %v1492
      %v1507 = vsub.f32 %v1466, %v1495
      %v1508 = vsub.f32 %v1471, %v1498
      %v1509 = vsub.f32 %v1474, %v1501
      %v1510 = vmul.f32 %v1502, 1.442695
      %v1511 = vpow.pop %v1510
      %v1512 = vmul.f32 %v1503, 1.442695
      %v1513 = vpow.pop %v1512
      %v1514 = vmul.f32 %v1504, 1.442695
      %v1515 = vpow.pop %v1514
      %v1516 = vmul.f32 %v1505, 1.442695
      %v1517 = vpow.pop %v1516
      %v1518 = vmul.f32 %v1506, 1.442695
      %v1519 = vpow.pop %v1518
      %v1520 = vmul.f32 %v1507, 1.442695
      %v1521 = vpow.pop %v1520
      %v1522 = vmul.f32 %v1508, 1.442695
      %v1523 = vpow.pop %v1522
      %v1524 = vmul.f32 %v1509, 1.442695
      %v1525 = vpow.pop %v1524
      %v1526 = vsel %vm1477, %v1511, 0.0
      %1527 = vadd.xlane.f32.xlu0 %v1526
      %v1528 = vpop.xlane.xlu0 %1527
      %v1529 = vsel %vm1477, %v1513, 0.0
      %1530 = vadd.xlane.f32.xlu0 %v1529
      %v1531 = vpop.xlane.xlu0 %1530
      %v1532 = vsel %vm1477, %v1515, 0.0
      %1533 = vadd.xlane.f32.xlu0 %v1532
      %v1534 = vpop.xlane.xlu0 %1533
      %v1535 = vsel %vm1477, %v1517, 0.0
      %1536 = vadd.xlane.f32.xlu0 %v1535
      %v1537 = vpop.xlane.xlu0 %1536
      %v1538 = vsel %vm1477, %v1519, 0.0
      %1539 = vadd.xlane.f32.xlu0 %v1538
      %v1540 = vpop.xlane.xlu0 %1539
      %v1541 = vsel %vm1477, %v1521, 0.0
      %1542 = vadd.xlane.f32.xlu0 %v1541
      %v1543 = vpop.xlane.xlu0 %1542
      %v1544 = vsel %vm1477, %v1523, 0.0
      %1545 = vadd.xlane.f32.xlu0 %v1544
      %v1546 = vpop.xlane.xlu0 %1545
      %v1547 = vsel %vm1477, %v1525, 0.0
      %1548 = vadd.xlane.f32.xlu0 %v1547
      %v1549 = vpop.xlane.xlu0 %1548
      %v1550 = vrcp.pop %v1528
      %v1551 = vrcp.pop %v1531
      %v1552 = vrcp.pop %v1534
      %v1553 = vrcp.pop %v1537
      %v1554 = vrcp.pop %v1540
      %v1555 = vrcp.pop %v1543
      %v1556 = vrcp.pop %v1546
      %v1557 = vrcp.pop %v1549
      %v1558 = vmul.f32 %v1511, %v1550
      %v1559 = vmul.f32 %v1513, %v1551
      %v1560 = vmul.f32 %v1515, %v1552
      %v1561 = vmul.f32 %v1517, %v1553
      %v1562 = vmul.f32 %v1519, %v1554
      %v1563 = vmul.f32 %v1521, %v1555
      %v1564 = vmul.f32 %v1523, %v1556
      %v1565 = vmul.f32 %v1525, %v1557
      %v1566 = vpack.c.bf16 %v1559, %v1558
      %v1567 = vpack.c.bf16 %v1561, %v1560
      %v1568 = vpack.c.bf16 %v1563, %v1562
      %v1569 = vpack.c.bf16 %v1565, %v1564
      %v1571 = vsel %vm1477, %v1566, 0
      %v1574 = vsel %vm1477, %v1567, 0
      %1576 = vmatprep.subr.bf16.mxu0 0
      %1577 = vmatpush1.bf16.msra.mxu0 0
      %1578 = vmatprep.subr.bf16.mxu0 0
      %1579 = vmatpush1.bf16.msra.mxu0 0
      %1580 = vmatprep.subr.bf16.mxu0 0
      %1581 = vmatpush1.bf16.msra.mxu0 0
      %1582 = vmatprep.subr.bf16.mxu0 0
      %1583 = vmatpush1.bf16.msra.mxu0 0
      %1584 = vmatprep.subr.bf16.mxu0 0
      %1585 = vmatpush1.bf16.msra.mxu0 0
      %1586 = vmatprep.subr.bf16.mxu0 0
      %1587 = vmatpush1.bf16.msra.mxu0 0
      %1588 = vmatprep.subr.bf16.mxu0 0
      %1589 = vmatpush1.bf16.msra.mxu0 %v1351
      %1590 = vmatprep.subr.bf16.mxu0 0
      %1591 = vmatpush1.bf16.msra.mxu0 %v1350
      %1592 = vmatprep.subr.bf16.mxu0 0
      %1593 = vmatpush2.bf16.msra.mxu0 0
      %1594 = vmatprep.subr.bf16.mxu0 0
      %1595 = vmatpush2.bf16.msra.mxu0 0
      %1596 = vmatprep.subr.bf16.mxu0 0
      %1597 = vmatpush2.bf16.msra.mxu0 0
      %1598 = vmatprep.subr.bf16.mxu0 0
      %1599 = vmatpush2.bf16.msra.mxu0 0
      %1600 = vmatprep.subr.bf16.mxu0 0
      %1601 = vmatpush2.bf16.msra.mxu0 0
      %1602 = vmatprep.subr.bf16.mxu0 0
      %1603 = vmatpush2.bf16.msra.mxu0 0
      %1604 = vmatprep.subr.bf16.mxu0 0
      %1605 = vmatpush2.bf16.msra.mxu0 0
      %1606 = vmatprep.subr.bf16.mxu0 0
      %1607 = vmatpush2.bf16.msra.mxu0 0
      %1608 = vmatprep.mubr.bf16.mxu0 0
      %1609 = vmatmul.mubr.bf16.gmra.mxu0 %v1571
      %v1610 = vpop.f32.mrf.mxu0
      %v1611 = vadd.f32 0.0, %v1610
      %v1612 = vpop.f32.mrf.mxu0
      %v1613 = vpop.f32.mrf.mxu0
      %v1614 = vadd.f32 0.0, %v1613
      %v1615 = vpop.f32.mrf.mxu0
      %1616 = vmatprep.mubr.bf16.mxu0 0
      %1617 = vmatmul.mubr.bf16.gmra.mxu0 %v1574
      %v1618 = vpop.f32.mrf.mxu0
      %v1619 = vadd.f32 0.0, %v1618
      %v1620 = vpop.f32.mrf.mxu0
      %v1621 = vpop.f32.mrf.mxu0
      %v1622 = vadd.f32 0.0, %v1621
      %v1623 = vpop.f32.mrf.mxu0
      %1624 = vdwg.mxu0
      %v1626 = vsel %vm1477, %v1568, 0
      %v1629 = vsel %vm1477, %v1569, 0
      %1631 = vmatprep.subr.bf16.mxu0 0
      %1632 = vmatpush1.bf16.msra.mxu0 0
      %1633 = vmatprep.subr.bf16.mxu0 0
      %1634 = vmatpush1.bf16.msra.mxu0 0
      %1635 = vmatprep.subr.bf16.mxu0 0
      %1636 = vmatpush1.bf16.msra.mxu0 0
      %1637 = vmatprep.subr.bf16.mxu0 0
      %1638 = vmatpush1.bf16.msra.mxu0 0
      %1639 = vmatprep.subr.bf16.mxu0 0
      %1640 = vmatpush1.bf16.msra.mxu0 0
      %1641 = vmatprep.subr.bf16.mxu0 0
      %1642 = vmatpush1.bf16.msra.mxu0 0
      %1643 = vmatprep.subr.bf16.mxu0 0
      %1644 = vmatpush1.bf16.msra.mxu0 %v1353
      %1645 = vmatprep.subr.bf16.mxu0 0
      %1646 = vmatpush1.bf16.msra.mxu0 %v1352
      %1647 = vmatprep.subr.bf16.mxu0 0
      %1648 = vmatpush2.bf16.msra.mxu0 0
      %1649 = vmatprep.subr.bf16.mxu0 0
      %1650 = vmatpush2.bf16.msra.mxu0 0
      %1651 = vmatprep.subr.bf16.mxu0 0
      %1652 = vmatpush2.bf16.msra.mxu0 0
      %1653 = vmatprep.subr.bf16.mxu0 0
      %1654 = vmatpush2.bf16.msra.mxu0 0
      %1655 = vmatprep.subr.bf16.mxu0 0
      %1656 = vmatpush2.bf16.msra.mxu0 0
      %1657 = vmatprep.subr.bf16.mxu0 0
      %1658 = vmatpush2.bf16.msra.mxu0 0
      %1659 = vmatprep.subr.bf16.mxu0 0
      %1660 = vmatpush2.bf16.msra.mxu0 0
      %1661 = vmatprep.subr.bf16.mxu0 0
      %1662 = vmatpush2.bf16.msra.mxu0 0
      %1663 = vmatprep.mubr.bf16.mxu0 0
      %1664 = vmatmul.mubr.bf16.gmra.mxu0 %v1626
      %v1665 = vpop.f32.mrf.mxu0
      %v1666 = vadd.f32 0.0, %v1665
      %v1667 = vpop.f32.mrf.mxu0
      %v1668 = vpop.f32.mrf.mxu0
      %v1669 = vadd.f32 0.0, %v1668
      %v1670 = vpop.f32.mrf.mxu0
      %1671 = vmatprep.mubr.bf16.mxu0 0
      %1672 = vmatmul.mubr.bf16.gmra.mxu0 %v1629
      %v1673 = vpop.f32.mrf.mxu0
      %v1674 = vadd.f32 0.0, %v1673
      %v1675 = vpop.f32.mrf.mxu0
      %v1676 = vpop.f32.mrf.mxu0
      %v1677 = vadd.f32 0.0, %v1676
      %v1678 = vpop.f32.mrf.mxu0
      %1679 = vdwg.mxu0
      %v1680 = vpack.c.bf16 %v1614, %v1611
      %v1681 = vpack.c.bf16 %v1622, %v1619
      %v1682 = vpack.c.bf16 %v1669, %v1666
      %v1683 = vpack.c.bf16 %v1677, %v1674
      %v1686 = vunpack.c.l.b16 %v834
      %v1687 = vunpack.c.l.b16 %v835
      %v1688 = vpack.c.b16 %v1687, %v1686
      %v1691 = vsel %vm1354, %v1680, 0
      %v1694 = vsel %vm1354, %v1681, 0
      %v1697 = vsel %vm1354, %v1682, 0
      %v1700 = vsel %vm1354, %v1683, 0
      %1702 = vmatprep.subr.bf16.mxu0 0
      %1703 = vmatpush1.bf16.msra.mxu0 0
      %1704 = vmatprep.subr.bf16.mxu0 0
      %1705 = vmatpush1.bf16.msra.mxu0 0
      %1706 = vmatprep.subr.bf16.mxu0 0
      %1707 = vmatpush1.bf16.msra.mxu0 0
      %1708 = vmatprep.subr.bf16.mxu0 0
      %1709 = vmatpush1.bf16.msra.mxu0 0
      %1710 = vmatprep.subr.bf16.mxu0 0
      %1711 = vmatpush1.bf16.msra.mxu0 0
      %1712 = vmatprep.subr.bf16.mxu0 0
      %1713 = vmatpush1.bf16.msra.mxu0 0
      %1714 = vmatprep.subr.bf16.mxu0 0
      %1715 = vmatpush1.bf16.msra.mxu0 0
      %1716 = vmatprep.subr.bf16.mxu0 0
      %1717 = vmatpush1.bf16.msra.mxu0 %v1688
      %1718 = vmatprep.subr.bf16.mxu0 0
      %1719 = vmatpush2.bf16.msra.mxu0 0
      %1720 = vmatprep.subr.bf16.mxu0 0
      %1721 = vmatpush2.bf16.msra.mxu0 0
      %1722 = vmatprep.subr.bf16.mxu0 0
      %1723 = vmatpush2.bf16.msra.mxu0 0
      %1724 = vmatprep.subr.bf16.mxu0 0
      %1725 = vmatpush2.bf16.msra.mxu0 0
      %1726 = vmatprep.subr.bf16.mxu0 0
      %1727 = vmatpush2.bf16.msra.mxu0 0
      %1728 = vmatprep.subr.bf16.mxu0 0
      %1729 = vmatpush2.bf16.msra.mxu0 0
      %1730 = vmatprep.subr.bf16.mxu0 0
      %1731 = vmatpush2.bf16.msra.mxu0 0
      %1732 = vmatprep.subr.bf16.mxu0 0
      %1733 = vmatpush2.bf16.msra.mxu0 0
      %1734 = vmatprep.mubr.bf16.mxu0 0
      %1735 = vmatmul.mubr.bf16.gmra.mxu0 %v1691
      %v1736 = vpop.f32.mrf.mxu0
      %v1737 = vadd.f32 0.0, %v1736
      %v1738 = vpop.f32.mrf.mxu0
      %v1739 = vpop.f32.mrf.mxu0
      %v1740 = vadd.f32 0.0, %v1739
      %v1741 = vpop.f32.mrf.mxu0
      %1742 = vmatprep.mubr.bf16.mxu0 0
      %1743 = vmatmul.mubr.bf16.gmra.mxu0 %v1694
      %v1744 = vpop.f32.mrf.mxu0
      %v1745 = vadd.f32 0.0, %v1744
      %v1746 = vpop.f32.mrf.mxu0
      %v1747 = vpop.f32.mrf.mxu0
      %v1748 = vadd.f32 0.0, %v1747
      %v1749 = vpop.f32.mrf.mxu0
      %1750 = vmatprep.mubr.bf16.mxu0 0
      %1751 = vmatmul.mubr.bf16.gmra.mxu0 %v1697
      %v1752 = vpop.f32.mrf.mxu0
      %v1753 = vadd.f32 0.0, %v1752
      %v1754 = vpop.f32.mrf.mxu0
      %v1755 = vpop.f32.mrf.mxu0
      %v1756 = vadd.f32 0.0, %v1755
      %v1757 = vpop.f32.mrf.mxu0
      %1758 = vmatprep.mubr.bf16.mxu0 0
      %1759 = vmatmul.mubr.bf16.gmra.mxu0 %v1700
      %v1760 = vpop.f32.mrf.mxu0
      %v1761 = vadd.f32 0.0, %v1760
      %v1762 = vpop.f32.mrf.mxu0
      %v1763 = vpop.f32.mrf.mxu0
      %v1764 = vadd.f32 0.0, %v1763
      %v1765 = vpop.f32.mrf.mxu0
      %1766 = vdwg.mxu0
      %v1767 = vadd.f32 %v1326, %v1737
      %v1768 = vadd.f32 %v1327, %v1740
      %v1769 = vadd.f32 %v1328, %v1745
      %v1770 = vadd.f32 %v1329, %v1748
      %v1771 = vadd.f32 %v1330, %v1753
      %v1772 = vadd.f32 %v1331, %v1756
      %v1773 = vadd.f32 %v1332, %v1761
      %v1774 = vadd.f32 %v1333, %v1764
      %1777 = vrot.lane.b32.xlu0 %v1342, 112
      %v1778 = vpop.permute.xlu0 %1777
      %1779 = vrot.lane.b32.xlu0 %v1343, 112
      %v1780 = vpop.permute.xlu0 %1779
      %1783 = vrot.lane.b32.xlu0 %v1346, 112
      %v1784 = vpop.permute.xlu0 %1783
      %1785 = vrot.lane.b32.xlu0 %v1347, 112
      %v1786 = vpop.permute.xlu0 %1785
      %v1788 = vsel %vm1354, %v1778, 0
      %v1791 = vsel %vm1354, %v1780, 0
      %v1794 = vsel %vm1354, %v1784, 0
      %v1797 = vsel %vm1354, %v1786, 0
      %1799 = vmatprep.subr.bf16.mxu0 0
      %1800 = vmatpush1.bf16.xpose.msra.mxu0 0
      %1801 = vmatprep.subr.bf16.mxu0 0
      %1802 = vmatpush1.bf16.xpose.msra.mxu0 0
      %1803 = vmatprep.subr.bf16.mxu0 0
      %1804 = vmatpush1.bf16.xpose.msra.mxu0 0
      %1805 = vmatprep.subr.bf16.mxu0 0
      %1806 = vmatpush1.bf16.xpose.msra.mxu0 0
      %1807 = vmatprep.subr.bf16.mxu0 0
      %1808 = vmatpush1.bf16.xpose.msra.mxu0 0
      %1809 = vmatprep.subr.bf16.mxu0 0
      %1810 = vmatpush1.bf16.xpose.msra.mxu0 0
      %1811 = vmatprep.subr.bf16.mxu0 0
      %1812 = vmatpush1.bf16.xpose.msra.mxu0 %v1797
      %1813 = vmatprep.subr.bf16.mxu0 0
      %1814 = vmatpush1.bf16.xpose.msra.mxu0 %v1794
      %1815 = vmatprep.subr.bf16.mxu0 0
      %1816 = vmatpush2.bf16.xpose.msra.mxu0 0
      %1817 = vmatprep.subr.bf16.mxu0 0
      %1818 = vmatpush2.bf16.xpose.msra.mxu0 0
      %1819 = vmatprep.subr.bf16.mxu0 0
      %1820 = vmatpush2.bf16.xpose.msra.mxu0 0
      %1821 = vmatprep.subr.bf16.mxu0 0
      %1822 = vmatpush2.bf16.xpose.msra.mxu0 0
      %1823 = vmatprep.subr.bf16.mxu0 0
      %1824 = vmatpush2.bf16.xpose.msra.mxu0 0
      %1825 = vmatprep.subr.bf16.mxu0 0
      %1826 = vmatpush2.bf16.xpose.msra.mxu0 0
      %1827 = vmatprep.subr.bf16.mxu0 0
      %1828 = vmatpush2.bf16.xpose.msra.mxu0 0
      %1829 = vmatprep.subr.bf16.mxu0 0
      %1830 = vmatpush2.bf16.xpose.msra.mxu0 0
      %1831 = vmatprep.mubr.bf16.mxu0 0
      %1832 = vmatmul.mubr.bf16.gmra.mxu0 %v1788
      %v1833 = vpop.f32.mrf.mxu0
      %v1834 = vadd.f32 0.0, %v1833
      %v1835 = vpop.f32.mrf.mxu0
      %v1836 = vpop.f32.mrf.mxu0
      %v1837 = vadd.f32 0.0, %v1836
      %v1838 = vpop.f32.mrf.mxu0
      %1839 = vmatprep.mubr.bf16.mxu0 0
      %1840 = vmatmul.mubr.bf16.gmra.mxu0 %v1791
      %v1841 = vpop.f32.mrf.mxu0
      %v1842 = vadd.f32 0.0, %v1841
      %v1843 = vpop.f32.mrf.mxu0
      %v1844 = vpop.f32.mrf.mxu0
      %v1845 = vadd.f32 0.0, %v1844
      %v1846 = vpop.f32.mrf.mxu0
      %1847 = vdwg.mxu0
      %1850 = vrot.lane.b32.xlu0 %v1344, 112
      %v1851 = vpop.permute.xlu0 %1850
      %1852 = vrot.lane.b32.xlu0 %v1345, 112
      %v1853 = vpop.permute.xlu0 %1852
      %1856 = vrot.lane.b32.xlu0 %v1348, 112
      %v1857 = vpop.permute.xlu0 %1856
      %1858 = vrot.lane.b32.xlu0 %v1349, 112
      %v1859 = vpop.permute.xlu0 %1858
      %v1861 = vsel %vm1354, %v1851, 0
      %v1864 = vsel %vm1354, %v1853, 0
      %v1867 = vsel %vm1354, %v1857, 0
      %v1870 = vsel %vm1354, %v1859, 0
      %1872 = vmatprep.subr.bf16.mxu0 0
      %1873 = vmatpush1.bf16.xpose.msra.mxu0 0
      %1874 = vmatprep.subr.bf16.mxu0 0
      %1875 = vmatpush1.bf16.xpose.msra.mxu0 0
      %1876 = vmatprep.subr.bf16.mxu0 0
      %1877 = vmatpush1.bf16.xpose.msra.mxu0 0
      %1878 = vmatprep.subr.bf16.mxu0 0
      %1879 = vmatpush1.bf16.xpose.msra.mxu0 0
      %1880 = vmatprep.subr.bf16.mxu0 0
      %1881 = vmatpush1.bf16.xpose.msra.mxu0 0
      %1882 = vmatprep.subr.bf16.mxu0 0
      %1883 = vmatpush1.bf16.xpose.msra.mxu0 0
      %1884 = vmatprep.subr.bf16.mxu0 0
      %1885 = vmatpush1.bf16.xpose.msra.mxu0 %v1870
      %1886 = vmatprep.subr.bf16.mxu0 0
      %1887 = vmatpush1.bf16.xpose.msra.mxu0 %v1867
      %1888 = vmatprep.subr.bf16.mxu0 0
      %1889 = vmatpush2.bf16.xpose.msra.mxu0 0
      %1890 = vmatprep.subr.bf16.mxu0 0
      %1891 = vmatpush2.bf16.xpose.msra.mxu0 0
      %1892 = vmatprep.subr.bf16.mxu0 0
      %1893 = vmatpush2.bf16.xpose.msra.mxu0 0
      %1894 = vmatprep.subr.bf16.mxu0 0
      %1895 = vmatpush2.bf16.xpose.msra.mxu0 0
      %1896 = vmatprep.subr.bf16.mxu0 0
      %1897 = vmatpush2.bf16.xpose.msra.mxu0 0
      %1898 = vmatprep.subr.bf16.mxu0 0
      %1899 = vmatpush2.bf16.xpose.msra.mxu0 0
      %1900 = vmatprep.subr.bf16.mxu0 0
      %1901 = vmatpush2.bf16.xpose.msra.mxu0 0
      %1902 = vmatprep.subr.bf16.mxu0 0
      %1903 = vmatpush2.bf16.xpose.msra.mxu0 0
      %1904 = vmatprep.mubr.bf16.mxu0 0
      %1905 = vmatmul.mubr.bf16.gmra.mxu0 %v1861
      %v1906 = vpop.f32.mrf.mxu0
      %v1907 = vadd.f32 0.0, %v1906
      %v1908 = vpop.f32.mrf.mxu0
      %v1909 = vpop.f32.mrf.mxu0
      %v1910 = vadd.f32 0.0, %v1909
      %v1911 = vpop.f32.mrf.mxu0
      %1912 = vmatprep.mubr.bf16.mxu0 0
      %1913 = vmatmul.mubr.bf16.gmra.mxu0 %v1864
      %v1914 = vpop.f32.mrf.mxu0
      %v1915 = vadd.f32 0.0, %v1914
      %v1916 = vpop.f32.mrf.mxu0
      %v1917 = vpop.f32.mrf.mxu0
      %v1918 = vadd.f32 0.0, %v1917
      %v1919 = vpop.f32.mrf.mxu0
      %1920 = vdwg.mxu0
      %v1921 = vsel %vm1477, %v1834, -inf
      %1922 = vmax.xlane.f32.xlu0 %v1921
      %v1923 = vpop.xlane.xlu0 %1922
      %v1924 = vsel %vm1477, %v1837, -inf
      %1925 = vmax.xlane.f32.xlu0 %v1924
      %v1926 = vpop.xlane.xlu0 %1925
      %v1927 = vsel %vm1477, %v1842, -inf
      %1928 = vmax.xlane.f32.xlu0 %v1927
      %v1929 = vpop.xlane.xlu0 %1928
      %v1930 = vsel %vm1477, %v1845, -inf
      %1931 = vmax.xlane.f32.xlu0 %v1930
      %v1932 = vpop.xlane.xlu0 %1931
      %v1933 = vsel %vm1477, %v1907, -inf
      %1934 = vmax.xlane.f32.xlu0 %v1933
      %v1935 = vpop.xlane.xlu0 %1934
      %v1936 = vsel %vm1477, %v1910, -inf
      %1937 = vmax.xlane.f32.xlu0 %v1936
      %v1938 = vpop.xlane.xlu0 %1937
      %v1939 = vsel %vm1477, %v1915, -inf
      %1940 = vmax.xlane.f32.xlu0 %v1939
      %v1941 = vpop.xlane.xlu0 %1940
      %v1942 = vsel %vm1477, %v1918, -inf
      %1943 = vmax.xlane.f32.xlu0 %v1942
      %v1944 = vpop.xlane.xlu0 %1943
      %v1945 = vsub.f32 %v1834, %v1923
      %v1946 = vsub.f32 %v1837, %v1926
      %v1947 = vsub.f32 %v1842, %v1929
      %v1948 = vsub.f32 %v1845, %v1932
      %v1949 = vsub.f32 %v1907, %v1935
      %v1950 = vsub.f32 %v1910, %v1938
      %v1951 = vsub.f32 %v1915, %v1941
      %v1952 = vsub.f32 %v1918, %v1944
      %v1953 = vmul.f32 %v1945, 1.442695
      %v1954 = vpow.pop %v1953
      %v1955 = vmul.f32 %v1946, 1.442695
      %v1956 = vpow.pop %v1955
      %v1957 = vmul.f32 %v1947, 1.442695
      %v1958 = vpow.pop %v1957
      %v1959 = vmul.f32 %v1948, 1.442695
      %v1960 = vpow.pop %v1959
      %v1961 = vmul.f32 %v1949, 1.442695
      %v1962 = vpow.pop %v1961
      %v1963 = vmul.f32 %v1950, 1.442695
      %v1964 = vpow.pop %v1963
      %v1965 = vmul.f32 %v1951, 1.442695
      %v1966 = vpow.pop %v1965
      %v1967 = vmul.f32 %v1952, 1.442695
      %v1968 = vpow.pop %v1967
      %v1969 = vsel %vm1477, %v1954, 0.0
      %1970 = vadd.xlane.f32.xlu0 %v1969
      %v1971 = vpop.xlane.xlu0 %1970
      %v1972 = vsel %vm1477, %v1956, 0.0
      %1973 = vadd.xlane.f32.xlu0 %v1972
      %v1974 = vpop.xlane.xlu0 %1973
      %v1975 = vsel %vm1477, %v1958, 0.0
      %1976 = vadd.xlane.f32.xlu0 %v1975
      %v1977 = vpop.xlane.xlu0 %1976
      %v1978 = vsel %vm1477, %v1960, 0.0
      %1979 = vadd.xlane.f32.xlu0 %v1978
      %v1980 = vpop.xlane.xlu0 %1979
      %v1981 = vsel %vm1477, %v1962, 0.0
      %1982 = vadd.xlane.f32.xlu0 %v1981
      %v1983 = vpop.xlane.xlu0 %1982
      %v1984 = vsel %vm1477, %v1964, 0.0
      %1985 = vadd.xlane.f32.xlu0 %v1984
      %v1986 = vpop.xlane.xlu0 %1985
      %v1987 = vsel %vm1477, %v1966, 0.0
      %1988 = vadd.xlane.f32.xlu0 %v1987
      %v1989 = vpop.xlane.xlu0 %1988
      %v1990 = vsel %vm1477, %v1968, 0.0
      %1991 = vadd.xlane.f32.xlu0 %v1990
      %v1992 = vpop.xlane.xlu0 %1991
      %v1993 = vrcp.pop %v1971
      %v1994 = vrcp.pop %v1974
      %v1995 = vrcp.pop %v1977
      %v1996 = vrcp.pop %v1980
      %v1997 = vrcp.pop %v1983
      %v1998 = vrcp.pop %v1986
      %v1999 = vrcp.pop %v1989
      %v2000 = vrcp.pop %v1992
      %v2001 = vmul.f32 %v1954, %v1993
      %v2002 = vmul.f32 %v1956, %v1994
      %v2003 = vmul.f32 %v1958, %v1995
      %v2004 = vmul.f32 %v1960, %v1996
      %v2005 = vmul.f32 %v1962, %v1997
      %v2006 = vmul.f32 %v1964, %v1998
      %v2007 = vmul.f32 %v1966, %v1999
      %v2008 = vmul.f32 %v1968, %v2000
      %v2009 = vpack.c.bf16 %v2002, %v2001
      %v2010 = vpack.c.bf16 %v2004, %v2003
      %v2011 = vpack.c.bf16 %v2006, %v2005
      %v2012 = vpack.c.bf16 %v2008, %v2007
      %2015 = vrot.lane.b32.xlu0 %v1350, 112
      %v2016 = vpop.permute.xlu0 %2015
      %2017 = vrot.lane.b32.xlu0 %v1351, 112
      %v2018 = vpop.permute.xlu0 %2017
      %v2022 = vsel %vm1477, %v2009, 0
      %v2025 = vsel %vm1477, %v2010, 0
      %2027 = vmatprep.subr.bf16.mxu0 0
      %2028 = vmatpush1.bf16.msra.mxu0 0
      %2029 = vmatprep.subr.bf16.mxu0 0
      %2030 = vmatpush1.bf16.msra.mxu0 0
      %2031 = vmatprep.subr.bf16.mxu0 0
      %2032 = vmatpush1.bf16.msra.mxu0 0
      %2033 = vmatprep.subr.bf16.mxu0 0
      %2034 = vmatpush1.bf16.msra.mxu0 0
      %2035 = vmatprep.subr.bf16.mxu0 0
      %2036 = vmatpush1.bf16.msra.mxu0 0
      %2037 = vmatprep.subr.bf16.mxu0 0
      %2038 = vmatpush1.bf16.msra.mxu0 0
      %2039 = vmatprep.subr.bf16.mxu0 0
      %2040 = vmatpush1.bf16.msra.mxu0 %v2018
      %2041 = vmatprep.subr.bf16.mxu0 0
      %2042 = vmatpush1.bf16.msra.mxu0 %v2016
      %2043 = vmatprep.subr.bf16.mxu0 0
      %2044 = vmatpush2.bf16.msra.mxu0 0
      %2045 = vmatprep.subr.bf16.mxu0 0
      %2046 = vmatpush2.bf16.msra.mxu0 0
      %2047 = vmatprep.subr.bf16.mxu0 0
      %2048 = vmatpush2.bf16.msra.mxu0 0
      %2049 = vmatprep.subr.bf16.mxu0 0
      %2050 = vmatpush2.bf16.msra.mxu0 0
      %2051 = vmatprep.subr.bf16.mxu0 0
      %2052 = vmatpush2.bf16.msra.mxu0 0
      %2053 = vmatprep.subr.bf16.mxu0 0
      %2054 = vmatpush2.bf16.msra.mxu0 0
      %2055 = vmatprep.subr.bf16.mxu0 0
      %2056 = vmatpush2.bf16.msra.mxu0 0
      %2057 = vmatprep.subr.bf16.mxu0 0
      %2058 = vmatpush2.bf16.msra.mxu0 0
      %2059 = vmatprep.mubr.bf16.mxu0 0
      %2060 = vmatmul.mubr.bf16.gmra.mxu0 %v2022
      %v2061 = vpop.f32.mrf.mxu0
      %v2062 = vadd.f32 0.0, %v2061
      %v2063 = vpop.f32.mrf.mxu0
      %v2064 = vpop.f32.mrf.mxu0
      %v2065 = vadd.f32 0.0, %v2064
      %v2066 = vpop.f32.mrf.mxu0
      %2067 = vmatprep.mubr.bf16.mxu0 0
      %2068 = vmatmul.mubr.bf16.gmra.mxu0 %v2025
      %v2069 = vpop.f32.mrf.mxu0
      %v2070 = vadd.f32 0.0, %v2069
      %v2071 = vpop.f32.mrf.mxu0
      %v2072 = vpop.f32.mrf.mxu0
      %v2073 = vadd.f32 0.0, %v2072
      %v2074 = vpop.f32.mrf.mxu0
      %2075 = vdwg.mxu0
      %2078 = vrot.lane.b32.xlu0 %v1352, 112
      %v2079 = vpop.permute.xlu0 %2078
      %2080 = vrot.lane.b32.xlu0 %v1353, 112
      %v2081 = vpop.permute.xlu0 %2080
      %v2085 = vsel %vm1477, %v2011, 0
      %v2088 = vsel %vm1477, %v2012, 0
      %2090 = vmatprep.subr.bf16.mxu0 0
      %2091 = vmatpush1.bf16.msra.mxu0 0
      %2092 = vmatprep.subr.bf16.mxu0 0
      %2093 = vmatpush1.bf16.msra.mxu0 0
      %2094 = vmatprep.subr.bf16.mxu0 0
      %2095 = vmatpush1.bf16.msra.mxu0 0
      %2096 = vmatprep.subr.bf16.mxu0 0
      %2097 = vmatpush1.bf16.msra.mxu0 0
      %2098 = vmatprep.subr.bf16.mxu0 0
      %2099 = vmatpush1.bf16.msra.mxu0 0
      %2100 = vmatprep.subr.bf16.mxu0 0
      %2101 = vmatpush1.bf16.msra.mxu0 0
      %2102 = vmatprep.subr.bf16.mxu0 0
      %2103 = vmatpush1.bf16.msra.mxu0 %v2081
      %2104 = vmatprep.subr.bf16.mxu0 0
      %2105 = vmatpush1.bf16.msra.mxu0 %v2079
      %2106 = vmatprep.subr.bf16.mxu0 0
      %2107 = vmatpush2.bf16.msra.mxu0 0
      %2108 = vmatprep.subr.bf16.mxu0 0
      %2109 = vmatpush2.bf16.msra.mxu0 0
      %2110 = vmatprep.subr.bf16.mxu0 0
      %2111 = vmatpush2.bf16.msra.mxu0 0
      %2112 = vmatprep.subr.bf16.mxu0 0
      %2113 = vmatpush2.bf16.msra.mxu0 0
      %2114 = vmatprep.subr.bf16.mxu0 0
      %2115 = vmatpush2.bf16.msra.mxu0 0
      %2116 = vmatprep.subr.bf16.mxu0 0
      %2117 = vmatpush2.bf16.msra.mxu0 0
      %2118 = vmatprep.subr.bf16.mxu0 0
      %2119 = vmatpush2.bf16.msra.mxu0 0
      %2120 = vmatprep.subr.bf16.mxu0 0
      %2121 = vmatpush2.bf16.msra.mxu0 0
      %2122 = vmatprep.mubr.bf16.mxu0 0
      %2123 = vmatmul.mubr.bf16.gmra.mxu0 %v2085
      %v2124 = vpop.f32.mrf.mxu0
      %v2125 = vadd.f32 0.0, %v2124
      %v2126 = vpop.f32.mrf.mxu0
      %v2127 = vpop.f32.mrf.mxu0
      %v2128 = vadd.f32 0.0, %v2127
      %v2129 = vpop.f32.mrf.mxu0
      %2130 = vmatprep.mubr.bf16.mxu0 0
      %2131 = vmatmul.mubr.bf16.gmra.mxu0 %v2088
      %v2132 = vpop.f32.mrf.mxu0
      %v2133 = vadd.f32 0.0, %v2132
      %v2134 = vpop.f32.mrf.mxu0
      %v2135 = vpop.f32.mrf.mxu0
      %v2136 = vadd.f32 0.0, %v2135
      %v2137 = vpop.f32.mrf.mxu0
      %2138 = vdwg.mxu0
      %v2139 = vpack.c.bf16 %v2065, %v2062
      %v2140 = vpack.c.bf16 %v2073, %v2070
      %v2141 = vpack.c.bf16 %v2128, %v2125
      %v2142 = vpack.c.bf16 %v2136, %v2133
      %v2145 = vunpack.c.l.b16 %v836
      %v2146 = vunpack.c.l.b16 %v837
      %v2147 = vpack.c.b16 %v2146, %v2145
      %v2150 = vsel %vm1354, %v2139, 0
      %v2153 = vsel %vm1354, %v2140, 0
      %v2156 = vsel %vm1354, %v2141, 0
      %v2159 = vsel %vm1354, %v2142, 0
      %2161 = vmatprep.subr.bf16.mxu0 0
      %2162 = vmatpush1.bf16.msra.mxu0 0
      %2163 = vmatprep.subr.bf16.mxu0 0
      %2164 = vmatpush1.bf16.msra.mxu0 0
      %2165 = vmatprep.subr.bf16.mxu0 0
      %2166 = vmatpush1.bf16.msra.mxu0 0
      %2167 = vmatprep.subr.bf16.mxu0 0
      %2168 = vmatpush1.bf16.msra.mxu0 0
      %2169 = vmatprep.subr.bf16.mxu0 0
      %2170 = vmatpush1.bf16.msra.mxu0 0
      %2171 = vmatprep.subr.bf16.mxu0 0
      %2172 = vmatpush1.bf16.msra.mxu0 0
      %2173 = vmatprep.subr.bf16.mxu0 0
      %2174 = vmatpush1.bf16.msra.mxu0 0
      %2175 = vmatprep.subr.bf16.mxu0 0
      %2176 = vmatpush1.bf16.msra.mxu0 %v2147
      %2177 = vmatprep.subr.bf16.mxu0 0
      %2178 = vmatpush2.bf16.msra.mxu0 0
      %2179 = vmatprep.subr.bf16.mxu0 0
      %2180 = vmatpush2.bf16.msra.mxu0 0
      %2181 = vmatprep.subr.bf16.mxu0 0
      %2182 = vmatpush2.bf16.msra.mxu0 0
      %2183 = vmatprep.subr.bf16.mxu0 0
      %2184 = vmatpush2.bf16.msra.mxu0 0
      %2185 = vmatprep.subr.bf16.mxu0 0
      %2186 = vmatpush2.bf16.msra.mxu0 0
      %2187 = vmatprep.subr.bf16.mxu0 0
      %2188 = vmatpush2.bf16.msra.mxu0 0
      %2189 = vmatprep.subr.bf16.mxu0 0
      %2190 = vmatpush2.bf16.msra.mxu0 0
      %2191 = vmatprep.subr.bf16.mxu0 0
      %2192 = vmatpush2.bf16.msra.mxu0 0
      %2193 = vmatprep.mubr.bf16.mxu0 0
      %2194 = vmatmul.mubr.bf16.gmra.mxu0 %v2150
      %v2195 = vpop.f32.mrf.mxu0
      %v2196 = vadd.f32 0.0, %v2195
      %v2197 = vpop.f32.mrf.mxu0
      %v2198 = vpop.f32.mrf.mxu0
      %v2199 = vadd.f32 0.0, %v2198
      %v2200 = vpop.f32.mrf.mxu0
      %2201 = vmatprep.mubr.bf16.mxu0 0
      %2202 = vmatmul.mubr.bf16.gmra.mxu0 %v2153
      %v2203 = vpop.f32.mrf.mxu0
      %v2204 = vadd.f32 0.0, %v2203
      %v2205 = vpop.f32.mrf.mxu0
      %v2206 = vpop.f32.mrf.mxu0
      %v2207 = vadd.f32 0.0, %v2206
      %v2208 = vpop.f32.mrf.mxu0
      %2209 = vmatprep.mubr.bf16.mxu0 0
      %2210 = vmatmul.mubr.bf16.gmra.mxu0 %v2156
      %v2211 = vpop.f32.mrf.mxu0
      %v2212 = vadd.f32 0.0, %v2211
      %v2213 = vpop.f32.mrf.mxu0
      %v2214 = vpop.f32.mrf.mxu0
      %v2215 = vadd.f32 0.0, %v2214
      %v2216 = vpop.f32.mrf.mxu0
      %2217 = vmatprep.mubr.bf16.mxu0 0
      %2218 = vmatmul.mubr.bf16.gmra.mxu0 %v2159
      %v2219 = vpop.f32.mrf.mxu0
      %v2220 = vadd.f32 0.0, %v2219
      %v2221 = vpop.f32.mrf.mxu0
      %v2222 = vpop.f32.mrf.mxu0
      %v2223 = vadd.f32 0.0, %v2222
      %v2224 = vpop.f32.mrf.mxu0
      %2225 = vdwg.mxu0
      %v2226 = vadd.f32 %v1767, %v2196
      %v2227 = vadd.f32 %v1768, %v2199
      %v2228 = vadd.f32 %v1769, %v2204
      %v2229 = vadd.f32 %v1770, %v2207
      %v2230 = vadd.f32 %v1771, %v2212
      %v2231 = vadd.f32 %v1772, %v2215
      %v2232 = vadd.f32 %v1773, %v2220
      %v2233 = vadd.f32 %v1774, %v2223
      %2234 = vrot.lane.b32.xlu0 %v1342, 96
      %v2235 = vpop.permute.xlu0 %2234
      %2236 = vrot.lane.b32.xlu0 %v1343, 96
      %v2237 = vpop.permute.xlu0 %2236
      %2238 = vrot.lane.b32.xlu0 %v1346, 96
      %v2239 = vpop.permute.xlu0 %2238
      %2240 = vrot.lane.b32.xlu0 %v1347, 96
      %v2241 = vpop.permute.xlu0 %2240
      %v2243 = vsel %vm1354, %v2235, 0
      %v2246 = vsel %vm1354, %v2237, 0
      %v2249 = vsel %vm1354, %v2239, 0
      %v2252 = vsel %vm1354, %v2241, 0
      %2254 = vmatprep.subr.bf16.mxu0 0
      %2255 = vmatpush1.bf16.xpose.msra.mxu0 0
      %2256 = vmatprep.subr.bf16.mxu0 0
      %2257 = vmatpush1.bf16.xpose.msra.mxu0 0
      %2258 = vmatprep.subr.bf16.mxu0 0
      %2259 = vmatpush1.bf16.xpose.msra.mxu0 0
      %2260 = vmatprep.subr.bf16.mxu0 0
      %2261 = vmatpush1.bf16.xpose.msra.mxu0 0
      %2262 = vmatprep.subr.bf16.mxu0 0
      %2263 = vmatpush1.bf16.xpose.msra.mxu0 0
      %2264 = vmatprep.subr.bf16.mxu0 0
      %2265 = vmatpush1.bf16.xpose.msra.mxu0 0
      %2266 = vmatprep.subr.bf16.mxu0 0
      %2267 = vmatpush1.bf16.xpose.msra.mxu0 %v2252
      %2268 = vmatprep.subr.bf16.mxu0 0
      %2269 = vmatpush1.bf16.xpose.msra.mxu0 %v2249
      %2270 = vmatprep.subr.bf16.mxu0 0
      %2271 = vmatpush2.bf16.xpose.msra.mxu0 0
      %2272 = vmatprep.subr.bf16.mxu0 0
      %2273 = vmatpush2.bf16.xpose.msra.mxu0 0
      %2274 = vmatprep.subr.bf16.mxu0 0
      %2275 = vmatpush2.bf16.xpose.msra.mxu0 0
      %2276 = vmatprep.subr.bf16.mxu0 0
      %2277 = vmatpush2.bf16.xpose.msra.mxu0 0
      %2278 = vmatprep.subr.bf16.mxu0 0
      %2279 = vmatpush2.bf16.xpose.msra.mxu0 0
      %2280 = vmatprep.subr.bf16.mxu0 0
      %2281 = vmatpush2.bf16.xpose.msra.mxu0 0
      %2282 = vmatprep.subr.bf16.mxu0 0
      %2283 = vmatpush2.bf16.xpose.msra.mxu0 0
      %2284 = vmatprep.subr.bf16.mxu0 0
      %2285 = vmatpush2.bf16.xpose.msra.mxu0 0
      %2286 = vmatprep.mubr.bf16.mxu0 0
      %2287 = vmatmul.mubr.bf16.gmra.mxu0 %v2243
      %v2288 = vpop.f32.mrf.mxu0
      %v2289 = vadd.f32 0.0, %v2288
      %v2290 = vpop.f32.mrf.mxu0
      %v2291 = vpop.f32.mrf.mxu0
      %v2292 = vadd.f32 0.0, %v2291
      %v2293 = vpop.f32.mrf.mxu0
      %2294 = vmatprep.mubr.bf16.mxu0 0
      %2295 = vmatmul.mubr.bf16.gmra.mxu0 %v2246
      %v2296 = vpop.f32.mrf.mxu0
      %v2297 = vadd.f32 0.0, %v2296
      %v2298 = vpop.f32.mrf.mxu0
      %v2299 = vpop.f32.mrf.mxu0
      %v2300 = vadd.f32 0.0, %v2299
      %v2301 = vpop.f32.mrf.mxu0
      %2302 = vdwg.mxu0
      %2303 = vrot.lane.b32.xlu0 %v1344, 96
      %v2304 = vpop.permute.xlu0 %2303
      %2305 = vrot.lane.b32.xlu0 %v1345, 96
      %v2306 = vpop.permute.xlu0 %2305
      %2307 = vrot.lane.b32.xlu0 %v1348, 96
      %v2308 = vpop.permute.xlu0 %2307
      %2309 = vrot.lane.b32.xlu0 %v1349, 96
      %v2310 = vpop.permute.xlu0 %2309
      %v2312 = vsel %vm1354, %v2304, 0
      %v2315 = vsel %vm1354, %v2306, 0
      %v2318 = vsel %vm1354, %v2308, 0
      %v2321 = vsel %vm1354, %v2310, 0
      %2323 = vmatprep.subr.bf16.mxu0 0
      %2324 = vmatpush1.bf16.xpose.msra.mxu0 0
      %2325 = vmatprep.subr.bf16.mxu0 0
      %2326 = vmatpush1.bf16.xpose.msra.mxu0 0
      %2327 = vmatprep.subr.bf16.mxu0 0
      %2328 = vmatpush1.bf16.xpose.msra.mxu0 0
      %2329 = vmatprep.subr.bf16.mxu0 0
      %2330 = vmatpush1.bf16.xpose.msra.mxu0 0
      %2331 = vmatprep.subr.bf16.mxu0 0
      %2332 = vmatpush1.bf16.xpose.msra.mxu0 0
      %2333 = vmatprep.subr.bf16.mxu0 0
      %2334 = vmatpush1.bf16.xpose.msra.mxu0 0
      %2335 = vmatprep.subr.bf16.mxu0 0
      %2336 = vmatpush1.bf16.xpose.msra.mxu0 %v2321
      %2337 = vmatprep.subr.bf16.mxu0 0
      %2338 = vmatpush1.bf16.xpose.msra.mxu0 %v2318
      %2339 = vmatprep.subr.bf16.mxu0 0
      %2340 = vmatpush2.bf16.xpose.msra.mxu0 0
      %2341 = vmatprep.subr.bf16.mxu0 0
      %2342 = vmatpush2.bf16.xpose.msra.mxu0 0
      %2343 = vmatprep.subr.bf16.mxu0 0
      %2344 = vmatpush2.bf16.xpose.msra.mxu0 0
      %2345 = vmatprep.subr.bf16.mxu0 0
      %2346 = vmatpush2.bf16.xpose.msra.mxu0 0
      %2347 = vmatprep.subr.bf16.mxu0 0
      %2348 = vmatpush2.bf16.xpose.msra.mxu0 0
      %2349 = vmatprep.subr.bf16.mxu0 0
      %2350 = vmatpush2.bf16.xpose.msra.mxu0 0
      %2351 = vmatprep.subr.bf16.mxu0 0
      %2352 = vmatpush2.bf16.xpose.msra.mxu0 0
      %2353 = vmatprep.subr.bf16.mxu0 0
      %2354 = vmatpush2.bf16.xpose.msra.mxu0 0
      %2355 = vmatprep.mubr.bf16.mxu0 0
      %2356 = vmatmul.mubr.bf16.gmra.mxu0 %v2312
      %v2357 = vpop.f32.mrf.mxu0
      %v2358 = vadd.f32 0.0, %v2357
      %v2359 = vpop.f32.mrf.mxu0
      %v2360 = vpop.f32.mrf.mxu0
      %v2361 = vadd.f32 0.0, %v2360
      %v2362 = vpop.f32.mrf.mxu0
      %2363 = vmatprep.mubr.bf16.mxu0 0
      %2364 = vmatmul.mubr.bf16.gmra.mxu0 %v2315
      %v2365 = vpop.f32.mrf.mxu0
      %v2366 = vadd.f32 0.0, %v2365
      %v2367 = vpop.f32.mrf.mxu0
      %v2368 = vpop.f32.mrf.mxu0
      %v2369 = vadd.f32 0.0, %v2368
      %v2370 = vpop.f32.mrf.mxu0
      %2371 = vdwg.mxu0
      %v2372 = vsel %vm1477, %v2289, -inf
      %2373 = vmax.xlane.f32.xlu0 %v2372
      %v2374 = vpop.xlane.xlu0 %2373
      %v2375 = vsel %vm1477, %v2292, -inf
      %2376 = vmax.xlane.f32.xlu0 %v2375
      %v2377 = vpop.xlane.xlu0 %2376
      %v2378 = vsel %vm1477, %v2297, -inf
      %2379 = vmax.xlane.f32.xlu0 %v2378
      %v2380 = vpop.xlane.xlu0 %2379
      %v2381 = vsel %vm1477, %v2300, -inf
      %2382 = vmax.xlane.f32.xlu0 %v2381
      %v2383 = vpop.xlane.xlu0 %2382
      %v2384 = vsel %vm1477, %v2358, -inf
      %2385 = vmax.xlane.f32.xlu0 %v2384
      %v2386 = vpop.xlane.xlu0 %2385
      %v2387 = vsel %vm1477, %v2361, -inf
      %2388 = vmax.xlane.f32.xlu0 %v2387
      %v2389 = vpop.xlane.xlu0 %2388
      %v2390 = vsel %vm1477, %v2366, -inf
      %2391 = vmax.xlane.f32.xlu0 %v2390
      %v2392 = vpop.xlane.xlu0 %2391
      %v2393 = vsel %vm1477, %v2369, -inf
      %2394 = vmax.xlane.f32.xlu0 %v2393
      %v2395 = vpop.xlane.xlu0 %2394
      %v2396 = vsub.f32 %v2289, %v2374
      %v2397 = vsub.f32 %v2292, %v2377
      %v2398 = vsub.f32 %v2297, %v2380
      %v2399 = vsub.f32 %v2300, %v2383
      %v2400 = vsub.f32 %v2358, %v2386
      %v2401 = vsub.f32 %v2361, %v2389
      %v2402 = vsub.f32 %v2366, %v2392
      %v2403 = vsub.f32 %v2369, %v2395
      %v2404 = vmul.f32 %v2396, 1.442695
      %v2405 = vpow.pop %v2404
      %v2406 = vmul.f32 %v2397, 1.442695
      %v2407 = vpow.pop %v2406
      %v2408 = vmul.f32 %v2398, 1.442695
      %v2409 = vpow.pop %v2408
      %v2410 = vmul.f32 %v2399, 1.442695
      %v2411 = vpow.pop %v2410
      %v2412 = vmul.f32 %v2400, 1.442695
      %v2413 = vpow.pop %v2412
      %v2414 = vmul.f32 %v2401, 1.442695
      %v2415 = vpow.pop %v2414
      %v2416 = vmul.f32 %v2402, 1.442695
      %v2417 = vpow.pop %v2416
      %v2418 = vmul.f32 %v2403, 1.442695
      %v2419 = vpow.pop %v2418
      %v2420 = vsel %vm1477, %v2405, 0.0
      %2421 = vadd.xlane.f32.xlu0 %v2420
      %v2422 = vpop.xlane.xlu0 %2421
      %v2423 = vsel %vm1477, %v2407, 0.0
      %2424 = vadd.xlane.f32.xlu0 %v2423
      %v2425 = vpop.xlane.xlu0 %2424
      %v2426 = vsel %vm1477, %v2409, 0.0
      %2427 = vadd.xlane.f32.xlu0 %v2426
      %v2428 = vpop.xlane.xlu0 %2427
      %v2429 = vsel %vm1477, %v2411, 0.0
      %2430 = vadd.xlane.f32.xlu0 %v2429
      %v2431 = vpop.xlane.xlu0 %2430
      %v2432 = vsel %vm1477, %v2413, 0.0
      %2433 = vadd.xlane.f32.xlu0 %v2432
      %v2434 = vpop.xlane.xlu0 %2433
      %v2435 = vsel %vm1477, %v2415, 0.0
      %2436 = vadd.xlane.f32.xlu0 %v2435
      %v2437 = vpop.xlane.xlu0 %2436
      %v2438 = vsel %vm1477, %v2417, 0.0
      %2439 = vadd.xlane.f32.xlu0 %v2438
      %v2440 = vpop.xlane.xlu0 %2439
      %v2441 = vsel %vm1477, %v2419, 0.0
      %2442 = vadd.xlane.f32.xlu0 %v2441
      %v2443 = vpop.xlane.xlu0 %2442
      %v2444 = vrcp.pop %v2422
      %v2445 = vrcp.pop %v2425
      %v2446 = vrcp.pop %v2428
      %v2447 = vrcp.pop %v2431
      %v2448 = vrcp.pop %v2434
      %v2449 = vrcp.pop %v2437
      %v2450 = vrcp.pop %v2440
      %v2451 = vrcp.pop %v2443
      %v2452 = vmul.f32 %v2405, %v2444
      %v2453 = vmul.f32 %v2407, %v2445
      %v2454 = vmul.f32 %v2409, %v2446
      %v2455 = vmul.f32 %v2411, %v2447
      %v2456 = vmul.f32 %v2413, %v2448
      %v2457 = vmul.f32 %v2415, %v2449
      %v2458 = vmul.f32 %v2417, %v2450
      %v2459 = vmul.f32 %v2419, %v2451
      %v2460 = vpack.c.bf16 %v2453, %v2452
      %v2461 = vpack.c.bf16 %v2455, %v2454
      %v2462 = vpack.c.bf16 %v2457, %v2456
      %v2463 = vpack.c.bf16 %v2459, %v2458
      %2464 = vrot.lane.b32.xlu0 %v1350, 96
      %v2465 = vpop.permute.xlu0 %2464
      %2466 = vrot.lane.b32.xlu0 %v1351, 96
      %v2467 = vpop.permute.xlu0 %2466
      %v2471 = vsel %vm1477, %v2460, 0
      %v2474 = vsel %vm1477, %v2461, 0
      %2476 = vmatprep.subr.bf16.mxu0 0
      %2477 = vmatpush1.bf16.msra.mxu0 0
      %2478 = vmatprep.subr.bf16.mxu0 0
      %2479 = vmatpush1.bf16.msra.mxu0 0
      %2480 = vmatprep.subr.bf16.mxu0 0
      %2481 = vmatpush1.bf16.msra.mxu0 0
      %2482 = vmatprep.subr.bf16.mxu0 0
      %2483 = vmatpush1.bf16.msra.mxu0 0
      %2484 = vmatprep.subr.bf16.mxu0 0
      %2485 = vmatpush1.bf16.msra.mxu0 0
      %2486 = vmatprep.subr.bf16.mxu0 0
      %2487 = vmatpush1.bf16.msra.mxu0 0
      %2488 = vmatprep.subr.bf16.mxu0 0
      %2489 = vmatpush1.bf16.msra.mxu0 %v2467
      %2490 = vmatprep.subr.bf16.mxu0 0
      %2491 = vmatpush1.bf16.msra.mxu0 %v2465
      %2492 = vmatprep.subr.bf16.mxu0 0
      %2493 = vmatpush2.bf16.msra.mxu0 0
      %2494 = vmatprep.subr.bf16.mxu0 0
      %2495 = vmatpush2.bf16.msra.mxu0 0
      %2496 = vmatprep.subr.bf16.mxu0 0
      %2497 = vmatpush2.bf16.msra.mxu0 0
      %2498 = vmatprep.subr.bf16.mxu0 0
      %2499 = vmatpush2.bf16.msra.mxu0 0
      %2500 = vmatprep.subr.bf16.mxu0 0
      %2501 = vmatpush2.bf16.msra.mxu0 0
      %2502 = vmatprep.subr.bf16.mxu0 0
      %2503 = vmatpush2.bf16.msra.mxu0 0
      %2504 = vmatprep.subr.bf16.mxu0 0
      %2505 = vmatpush2.bf16.msra.mxu0 0
      %2506 = vmatprep.subr.bf16.mxu0 0
      %2507 = vmatpush2.bf16.msra.mxu0 0
      %2508 = vmatprep.mubr.bf16.mxu0 0
      %2509 = vmatmul.mubr.bf16.gmra.mxu0 %v2471
      %v2510 = vpop.f32.mrf.mxu0
      %v2511 = vadd.f32 0.0, %v2510
      %v2512 = vpop.f32.mrf.mxu0
      %v2513 = vpop.f32.mrf.mxu0
      %v2514 = vadd.f32 0.0, %v2513
      %v2515 = vpop.f32.mrf.mxu0
      %2516 = vmatprep.mubr.bf16.mxu0 0
      %2517 = vmatmul.mubr.bf16.gmra.mxu0 %v2474
      %v2518 = vpop.f32.mrf.mxu0
      %v2519 = vadd.f32 0.0, %v2518
      %v2520 = vpop.f32.mrf.mxu0
      %v2521 = vpop.f32.mrf.mxu0
      %v2522 = vadd.f32 0.0, %v2521
      %v2523 = vpop.f32.mrf.mxu0
      %2524 = vdwg.mxu0
      %2525 = vrot.lane.b32.xlu0 %v1352, 96
      %v2526 = vpop.permute.xlu0 %2525
      %2527 = vrot.lane.b32.xlu0 %v1353, 96
      %v2528 = vpop.permute.xlu0 %2527
      %v2532 = vsel %vm1477, %v2462, 0
      %v2535 = vsel %vm1477, %v2463, 0
      %2537 = vmatprep.subr.bf16.mxu0 0
      %2538 = vmatpush1.bf16.msra.mxu0 0
      %2539 = vmatprep.subr.bf16.mxu0 0
      %2540 = vmatpush1.bf16.msra.mxu0 0
      %2541 = vmatprep.subr.bf16.mxu0 0
      %2542 = vmatpush1.bf16.msra.mxu0 0
      %2543 = vmatprep.subr.bf16.mxu0 0
      %2544 = vmatpush1.bf16.msra.mxu0 0
      %2545 = vmatprep.subr.bf16.mxu0 0
      %2546 = vmatpush1.bf16.msra.mxu0 0
      %2547 = vmatprep.subr.bf16.mxu0 0
      %2548 = vmatpush1.bf16.msra.mxu0 0
      %2549 = vmatprep.subr.bf16.mxu0 0
      %2550 = vmatpush1.bf16.msra.mxu0 %v2528
      %2551 = vmatprep.subr.bf16.mxu0 0
      %2552 = vmatpush1.bf16.msra.mxu0 %v2526
      %2553 = vmatprep.subr.bf16.mxu0 0
      %2554 = vmatpush2.bf16.msra.mxu0 0
      %2555 = vmatprep.subr.bf16.mxu0 0
      %2556 = vmatpush2.bf16.msra.mxu0 0
      %2557 = vmatprep.subr.bf16.mxu0 0
      %2558 = vmatpush2.bf16.msra.mxu0 0
      %2559 = vmatprep.subr.bf16.mxu0 0
      %2560 = vmatpush2.bf16.msra.mxu0 0
      %2561 = vmatprep.subr.bf16.mxu0 0
      %2562 = vmatpush2.bf16.msra.mxu0 0
      %2563 = vmatprep.subr.bf16.mxu0 0
      %2564 = vmatpush2.bf16.msra.mxu0 0
      %2565 = vmatprep.subr.bf16.mxu0 0
      %2566 = vmatpush2.bf16.msra.mxu0 0
      %2567 = vmatprep.subr.bf16.mxu0 0
      %2568 = vmatpush2.bf16.msra.mxu0 0
      %2569 = vmatprep.mubr.bf16.mxu0 0
      %2570 = vmatmul.mubr.bf16.gmra.mxu0 %v2532
      %v2571 = vpop.f32.mrf.mxu0
      %v2572 = vadd.f32 0.0, %v2571
      %v2573 = vpop.f32.mrf.mxu0
      %v2574 = vpop.f32.mrf.mxu0
      %v2575 = vadd.f32 0.0, %v2574
      %v2576 = vpop.f32.mrf.mxu0
      %2577 = vmatprep.mubr.bf16.mxu0 0
      %2578 = vmatmul.mubr.bf16.gmra.mxu0 %v2535
      %v2579 = vpop.f32.mrf.mxu0
      %v2580 = vadd.f32 0.0, %v2579
      %v2581 = vpop.f32.mrf.mxu0
      %v2582 = vpop.f32.mrf.mxu0
      %v2583 = vadd.f32 0.0, %v2582
      %v2584 = vpop.f32.mrf.mxu0
      %2585 = vdwg.mxu0
      %v2586 = vpack.c.bf16 %v2514, %v2511
      %v2587 = vpack.c.bf16 %v2522, %v2519
      %v2588 = vpack.c.bf16 %v2575, %v2572
      %v2589 = vpack.c.bf16 %v2583, %v2580
      %v2592 = vunpack.c.l.b16 %v838
      %v2593 = vunpack.c.l.b16 %v839
      %v2594 = vpack.c.b16 %v2593, %v2592
      %v2597 = vsel %vm1354, %v2586, 0
      %v2600 = vsel %vm1354, %v2587, 0
      %v2603 = vsel %vm1354, %v2588, 0
      %v2606 = vsel %vm1354, %v2589, 0
      %2608 = vmatprep.subr.bf16.mxu0 0
      %2609 = vmatpush1.bf16.msra.mxu0 0
      %2610 = vmatprep.subr.bf16.mxu0 0
      %2611 = vmatpush1.bf16.msra.mxu0 0
      %2612 = vmatprep.subr.bf16.mxu0 0
      %2613 = vmatpush1.bf16.msra.mxu0 0
      %2614 = vmatprep.subr.bf16.mxu0 0
      %2615 = vmatpush1.bf16.msra.mxu0 0
      %2616 = vmatprep.subr.bf16.mxu0 0
      %2617 = vmatpush1.bf16.msra.mxu0 0
      %2618 = vmatprep.subr.bf16.mxu0 0
      %2619 = vmatpush1.bf16.msra.mxu0 0
      %2620 = vmatprep.subr.bf16.mxu0 0
      %2621 = vmatpush1.bf16.msra.mxu0 0
      %2622 = vmatprep.subr.bf16.mxu0 0
      %2623 = vmatpush1.bf16.msra.mxu0 %v2594
      %2624 = vmatprep.subr.bf16.mxu0 0
      %2625 = vmatpush2.bf16.msra.mxu0 0
      %2626 = vmatprep.subr.bf16.mxu0 0
      %2627 = vmatpush2.bf16.msra.mxu0 0
      %2628 = vmatprep.subr.bf16.mxu0 0
      %2629 = vmatpush2.bf16.msra.mxu0 0
      %2630 = vmatprep.subr.bf16.mxu0 0
      %2631 = vmatpush2.bf16.msra.mxu0 0
      %2632 = vmatprep.subr.bf16.mxu0 0
      %2633 = vmatpush2.bf16.msra.mxu0 0
      %2634 = vmatprep.subr.bf16.mxu0 0
      %2635 = vmatpush2.bf16.msra.mxu0 0
      %2636 = vmatprep.subr.bf16.mxu0 0
      %2637 = vmatpush2.bf16.msra.mxu0 0
      %2638 = vmatprep.subr.bf16.mxu0 0
      %2639 = vmatpush2.bf16.msra.mxu0 0
      %2640 = vmatprep.mubr.bf16.mxu0 0
      %2641 = vmatmul.mubr.bf16.gmra.mxu0 %v2597
      %v2642 = vpop.f32.mrf.mxu0
      %v2643 = vadd.f32 0.0, %v2642
      %v2644 = vpop.f32.mrf.mxu0
      %v2645 = vpop.f32.mrf.mxu0
      %v2646 = vadd.f32 0.0, %v2645
      %v2647 = vpop.f32.mrf.mxu0
      %2648 = vmatprep.mubr.bf16.mxu0 0
      %2649 = vmatmul.mubr.bf16.gmra.mxu0 %v2600
      %v2650 = vpop.f32.mrf.mxu0
      %v2651 = vadd.f32 0.0, %v2650
      %v2652 = vpop.f32.mrf.mxu0
      %v2653 = vpop.f32.mrf.mxu0
      %v2654 = vadd.f32 0.0, %v2653
      %v2655 = vpop.f32.mrf.mxu0
      %2656 = vmatprep.mubr.bf16.mxu0 0
      %2657 = vmatmul.mubr.bf16.gmra.mxu0 %v2603
      %v2658 = vpop.f32.mrf.mxu0
      %v2659 = vadd.f32 0.0, %v2658
      %v2660 = vpop.f32.mrf.mxu0
      %v2661 = vpop.f32.mrf.mxu0
      %v2662 = vadd.f32 0.0, %v2661
      %v2663 = vpop.f32.mrf.mxu0
      %2664 = vmatprep.mubr.bf16.mxu0 0
      %2665 = vmatmul.mubr.bf16.gmra.mxu0 %v2606
      %v2666 = vpop.f32.mrf.mxu0
      %v2667 = vadd.f32 0.0, %v2666
      %v2668 = vpop.f32.mrf.mxu0
      %v2669 = vpop.f32.mrf.mxu0
      %v2670 = vadd.f32 0.0, %v2669
      %v2671 = vpop.f32.mrf.mxu0
      %2672 = vdwg.mxu0
      %v2673 = vadd.f32 %v2226, %v2643
      %v2674 = vadd.f32 %v2227, %v2646
      %v2675 = vadd.f32 %v2228, %v2651
      %v2676 = vadd.f32 %v2229, %v2654
      %v2677 = vadd.f32 %v2230, %v2659
      %v2678 = vadd.f32 %v2231, %v2662
      %v2679 = vadd.f32 %v2232, %v2667
      %v2680 = vadd.f32 %v2233, %v2670
      %2681 = vrot.lane.b32.xlu0 %v1342, 80
      %v2682 = vpop.permute.xlu0 %2681
      %2683 = vrot.lane.b32.xlu0 %v1343, 80
      %v2684 = vpop.permute.xlu0 %2683
      %2685 = vrot.lane.b32.xlu0 %v1346, 80
      %v2686 = vpop.permute.xlu0 %2685
      %2687 = vrot.lane.b32.xlu0 %v1347, 80
      %v2688 = vpop.permute.xlu0 %2687
      %v2690 = vsel %vm1354, %v2682, 0
      %v2693 = vsel %vm1354, %v2684, 0
      %v2696 = vsel %vm1354, %v2686, 0
      %v2699 = vsel %vm1354, %v2688, 0
      %2701 = vmatprep.subr.bf16.mxu0 0
      %2702 = vmatpush1.bf16.xpose.msra.mxu0 0
      %2703 = vmatprep.subr.bf16.mxu0 0
      %2704 = vmatpush1.bf16.xpose.msra.mxu0 0
      %2705 = vmatprep.subr.bf16.mxu0 0
      %2706 = vmatpush1.bf16.xpose.msra.mxu0 0
      %2707 = vmatprep.subr.bf16.mxu0 0
      %2708 = vmatpush1.bf16.xpose.msra.mxu0 0
      %2709 = vmatprep.subr.bf16.mxu0 0
      %2710 = vmatpush1.bf16.xpose.msra.mxu0 0
      %2711 = vmatprep.subr.bf16.mxu0 0
      %2712 = vmatpush1.bf16.xpose.msra.mxu0 0
      %2713 = vmatprep.subr.bf16.mxu0 0
      %2714 = vmatpush1.bf16.xpose.msra.mxu0 %v2699
      %2715 = vmatprep.subr.bf16.mxu0 0
      %2716 = vmatpush1.bf16.xpose.msra.mxu0 %v2696
      %2717 = vmatprep.subr.bf16.mxu0 0
      %2718 = vmatpush2.bf16.xpose.msra.mxu0 0
      %2719 = vmatprep.subr.bf16.mxu0 0
      %2720 = vmatpush2.bf16.xpose.msra.mxu0 0
      %2721 = vmatprep.subr.bf16.mxu0 0
      %2722 = vmatpush2.bf16.xpose.msra.mxu0 0
      %2723 = vmatprep.subr.bf16.mxu0 0
      %2724 = vmatpush2.bf16.xpose.msra.mxu0 0
      %2725 = vmatprep.subr.bf16.mxu0 0
      %2726 = vmatpush2.bf16.xpose.msra.mxu0 0
      %2727 = vmatprep.subr.bf16.mxu0 0
      %2728 = vmatpush2.bf16.xpose.msra.mxu0 0
      %2729 = vmatprep.subr.bf16.mxu0 0
      %2730 = vmatpush2.bf16.xpose.msra.mxu0 0
      %2731 = vmatprep.subr.bf16.mxu0 0
      %2732 = vmatpush2.bf16.xpose.msra.mxu0 0
      %2733 = vmatprep.mubr.bf16.mxu0 0
      %2734 = vmatmul.mubr.bf16.gmra.mxu0 %v2690
      %v2735 = vpop.f32.mrf.mxu0
      %v2736 = vadd.f32 0.0, %v2735
      %v2737 = vpop.f32.mrf.mxu0
      %v2738 = vpop.f32.mrf.mxu0
      %v2739 = vadd.f32 0.0, %v2738
      %v2740 = vpop.f32.mrf.mxu0
      %2741 = vmatprep.mubr.bf16.mxu0 0
      %2742 = vmatmul.mubr.bf16.gmra.mxu0 %v2693
      %v2743 = vpop.f32.mrf.mxu0
      %v2744 = vadd.f32 0.0, %v2743
      %v2745 = vpop.f32.mrf.mxu0
      %v2746 = vpop.f32.mrf.mxu0
      %v2747 = vadd.f32 0.0, %v2746
      %v2748 = vpop.f32.mrf.mxu0
      %2749 = vdwg.mxu0
      %2750 = vrot.lane.b32.xlu0 %v1344, 80
      %v2751 = vpop.permute.xlu0 %2750
      %2752 = vrot.lane.b32.xlu0 %v1345, 80
      %v2753 = vpop.permute.xlu0 %2752
      %2754 = vrot.lane.b32.xlu0 %v1348, 80
      %v2755 = vpop.permute.xlu0 %2754
      %2756 = vrot.lane.b32.xlu0 %v1349, 80
      %v2757 = vpop.permute.xlu0 %2756
      %v2759 = vsel %vm1354, %v2751, 0
      %v2762 = vsel %vm1354, %v2753, 0
      %v2765 = vsel %vm1354, %v2755, 0
      %v2768 = vsel %vm1354, %v2757, 0
      %2770 = vmatprep.subr.bf16.mxu0 0
      %2771 = vmatpush1.bf16.xpose.msra.mxu0 0
      %2772 = vmatprep.subr.bf16.mxu0 0
      %2773 = vmatpush1.bf16.xpose.msra.mxu0 0
      %2774 = vmatprep.subr.bf16.mxu0 0
      %2775 = vmatpush1.bf16.xpose.msra.mxu0 0
      %2776 = vmatprep.subr.bf16.mxu0 0
      %2777 = vmatpush1.bf16.xpose.msra.mxu0 0
      %2778 = vmatprep.subr.bf16.mxu0 0
      %2779 = vmatpush1.bf16.xpose.msra.mxu0 0
      %2780 = vmatprep.subr.bf16.mxu0 0
      %2781 = vmatpush1.bf16.xpose.msra.mxu0 0
      %2782 = vmatprep.subr.bf16.mxu0 0
      %2783 = vmatpush1.bf16.xpose.msra.mxu0 %v2768
      %2784 = vmatprep.subr.bf16.mxu0 0
      %2785 = vmatpush1.bf16.xpose.msra.mxu0 %v2765
      %2786 = vmatprep.subr.bf16.mxu0 0
      %2787 = vmatpush2.bf16.xpose.msra.mxu0 0
      %2788 = vmatprep.subr.bf16.mxu0 0
      %2789 = vmatpush2.bf16.xpose.msra.mxu0 0
      %2790 = vmatprep.subr.bf16.mxu0 0
      %2791 = vmatpush2.bf16.xpose.msra.mxu0 0
      %2792 = vmatprep.subr.bf16.mxu0 0
      %2793 = vmatpush2.bf16.xpose.msra.mxu0 0
      %2794 = vmatprep.subr.bf16.mxu0 0
      %2795 = vmatpush2.bf16.xpose.msra.mxu0 0
      %2796 = vmatprep.subr.bf16.mxu0 0
      %2797 = vmatpush2.bf16.xpose.msra.mxu0 0
      %2798 = vmatprep.subr.bf16.mxu0 0
      %2799 = vmatpush2.bf16.xpose.msra.mxu0 0
      %2800 = vmatprep.subr.bf16.mxu0 0
      %2801 = vmatpush2.bf16.xpose.msra.mxu0 0
      %2802 = vmatprep.mubr.bf16.mxu0 0
      %2803 = vmatmul.mubr.bf16.gmra.mxu0 %v2759
      %v2804 = vpop.f32.mrf.mxu0
      %v2805 = vadd.f32 0.0, %v2804
      %v2806 = vpop.f32.mrf.mxu0
      %v2807 = vpop.f32.mrf.mxu0
      %v2808 = vadd.f32 0.0, %v2807
      %v2809 = vpop.f32.mrf.mxu0
      %2810 = vmatprep.mubr.bf16.mxu0 0
      %2811 = vmatmul.mubr.bf16.gmra.mxu0 %v2762
      %v2812 = vpop.f32.mrf.mxu0
      %v2813 = vadd.f32 0.0, %v2812
      %v2814 = vpop.f32.mrf.mxu0
      %v2815 = vpop.f32.mrf.mxu0
      %v2816 = vadd.f32 0.0, %v2815
      %v2817 = vpop.f32.mrf.mxu0
      %2818 = vdwg.mxu0
      %v2819 = vsel %vm1477, %v2736, -inf
      %2820 = vmax.xlane.f32.xlu0 %v2819
      %v2821 = vpop.xlane.xlu0 %2820
      %v2822 = vsel %vm1477, %v2739, -inf
      %2823 = vmax.xlane.f32.xlu0 %v2822
      %v2824 = vpop.xlane.xlu0 %2823
      %v2825 = vsel %vm1477, %v2744, -inf
      %2826 = vmax.xlane.f32.xlu0 %v2825
      %v2827 = vpop.xlane.xlu0 %2826
      %v2828 = vsel %vm1477, %v2747, -inf
      %2829 = vmax.xlane.f32.xlu0 %v2828
      %v2830 = vpop.xlane.xlu0 %2829
      %v2831 = vsel %vm1477, %v2805, -inf
      %2832 = vmax.xlane.f32.xlu0 %v2831
      %v2833 = vpop.xlane.xlu0 %2832
      %v2834 = vsel %vm1477, %v2808, -inf
      %2835 = vmax.xlane.f32.xlu0 %v2834
      %v2836 = vpop.xlane.xlu0 %2835
      %v2837 = vsel %vm1477, %v2813, -inf
      %2838 = vmax.xlane.f32.xlu0 %v2837
      %v2839 = vpop.xlane.xlu0 %2838
      %v2840 = vsel %vm1477, %v2816, -inf
      %2841 = vmax.xlane.f32.xlu0 %v2840
      %v2842 = vpop.xlane.xlu0 %2841
      %v2843 = vsub.f32 %v2736, %v2821
      %v2844 = vsub.f32 %v2739, %v2824
      %v2845 = vsub.f32 %v2744, %v2827
      %v2846 = vsub.f32 %v2747, %v2830
      %v2847 = vsub.f32 %v2805, %v2833
      %v2848 = vsub.f32 %v2808, %v2836
      %v2849 = vsub.f32 %v2813, %v2839
      %v2850 = vsub.f32 %v2816, %v2842
      %v2851 = vmul.f32 %v2843, 1.442695
      %v2852 = vpow.pop %v2851
      %v2853 = vmul.f32 %v2844, 1.442695
      %v2854 = vpow.pop %v2853
      %v2855 = vmul.f32 %v2845, 1.442695
      %v2856 = vpow.pop %v2855
      %v2857 = vmul.f32 %v2846, 1.442695
      %v2858 = vpow.pop %v2857
      %v2859 = vmul.f32 %v2847, 1.442695
      %v2860 = vpow.pop %v2859
      %v2861 = vmul.f32 %v2848, 1.442695
      %v2862 = vpow.pop %v2861
      %v2863 = vmul.f32 %v2849, 1.442695
      %v2864 = vpow.pop %v2863
      %v2865 = vmul.f32 %v2850, 1.442695
      %v2866 = vpow.pop %v2865
      %v2867 = vsel %vm1477, %v2852, 0.0
      %2868 = vadd.xlane.f32.xlu0 %v2867
      %v2869 = vpop.xlane.xlu0 %2868
      %v2870 = vsel %vm1477, %v2854, 0.0
      %2871 = vadd.xlane.f32.xlu0 %v2870
      %v2872 = vpop.xlane.xlu0 %2871
      %v2873 = vsel %vm1477, %v2856, 0.0
      %2874 = vadd.xlane.f32.xlu0 %v2873
      %v2875 = vpop.xlane.xlu0 %2874
      %v2876 = vsel %vm1477, %v2858, 0.0
      %2877 = vadd.xlane.f32.xlu0 %v2876
      %v2878 = vpop.xlane.xlu0 %2877
      %v2879 = vsel %vm1477, %v2860, 0.0
      %2880 = vadd.xlane.f32.xlu0 %v2879
      %v2881 = vpop.xlane.xlu0 %2880
      %v2882 = vsel %vm1477, %v2862, 0.0
      %2883 = vadd.xlane.f32.xlu0 %v2882
      %v2884 = vpop.xlane.xlu0 %2883
      %v2885 = vsel %vm1477, %v2864, 0.0
      %2886 = vadd.xlane.f32.xlu0 %v2885
      %v2887 = vpop.xlane.xlu0 %2886
      %v2888 = vsel %vm1477, %v2866, 0.0
      %2889 = vadd.xlane.f32.xlu0 %v2888
      %v2890 = vpop.xlane.xlu0 %2889
      %v2891 = vrcp.pop %v2869
      %v2892 = vrcp.pop %v2872
      %v2893 = vrcp.pop %v2875
      %v2894 = vrcp.pop %v2878
      %v2895 = vrcp.pop %v2881
      %v2896 = vrcp.pop %v2884
      %v2897 = vrcp.pop %v2887
      %v2898 = vrcp.pop %v2890
      %v2899 = vmul.f32 %v2852, %v2891
      %v2900 = vmul.f32 %v2854, %v2892
      %v2901 = vmul.f32 %v2856, %v2893
      %v2902 = vmul.f32 %v2858, %v2894
      %v2903 = vmul.f32 %v2860, %v2895
      %v2904 = vmul.f32 %v2862, %v2896
      %v2905 = vmul.f32 %v2864, %v2897
      %v2906 = vmul.f32 %v2866, %v2898
      %v2907 = vpack.c.bf16 %v2900, %v2899
      %v2908 = vpack.c.bf16 %v2902, %v2901
      %v2909 = vpack.c.bf16 %v2904, %v2903
      %v2910 = vpack.c.bf16 %v2906, %v2905
      %2911 = vrot.lane.b32.xlu0 %v1350, 80
      %v2912 = vpop.permute.xlu0 %2911
      %2913 = vrot.lane.b32.xlu0 %v1351, 80
      %v2914 = vpop.permute.xlu0 %2913
      %v2918 = vsel %vm1477, %v2907, 0
      %v2921 = vsel %vm1477, %v2908, 0
      %2923 = vmatprep.subr.bf16.mxu0 0
      %2924 = vmatpush1.bf16.msra.mxu0 0
      %2925 = vmatprep.subr.bf16.mxu0 0
      %2926 = vmatpush1.bf16.msra.mxu0 0
      %2927 = vmatprep.subr.bf16.mxu0 0
      %2928 = vmatpush1.bf16.msra.mxu0 0
      %2929 = vmatprep.subr.bf16.mxu0 0
      %2930 = vmatpush1.bf16.msra.mxu0 0
      %2931 = vmatprep.subr.bf16.mxu0 0
      %2932 = vmatpush1.bf16.msra.mxu0 0
      %2933 = vmatprep.subr.bf16.mxu0 0
      %2934 = vmatpush1.bf16.msra.mxu0 0
      %2935 = vmatprep.subr.bf16.mxu0 0
      %2936 = vmatpush1.bf16.msra.mxu0 %v2914
      %2937 = vmatprep.subr.bf16.mxu0 0
      %2938 = vmatpush1.bf16.msra.mxu0 %v2912
      %2939 = vmatprep.subr.bf16.mxu0 0
      %2940 = vmatpush2.bf16.msra.mxu0 0
      %2941 = vmatprep.subr.bf16.mxu0 0
      %2942 = vmatpush2.bf16.msra.mxu0 0
      %2943 = vmatprep.subr.bf16.mxu0 0
      %2944 = vmatpush2.bf16.msra.mxu0 0
      %2945 = vmatprep.subr.bf16.mxu0 0
      %2946 = vmatpush2.bf16.msra.mxu0 0
      %2947 = vmatprep.subr.bf16.mxu0 0
      %2948 = vmatpush2.bf16.msra.mxu0 0
      %2949 = vmatprep.subr.bf16.mxu0 0
      %2950 = vmatpush2.bf16.msra.mxu0 0
      %2951 = vmatprep.subr.bf16.mxu0 0
      %2952 = vmatpush2.bf16.msra.mxu0 0
      %2953 = vmatprep.subr.bf16.mxu0 0
      %2954 = vmatpush2.bf16.msra.mxu0 0
      %2955 = vmatprep.mubr.bf16.mxu0 0
      %2956 = vmatmul.mubr.bf16.gmra.mxu0 %v2918
      %v2957 = vpop.f32.mrf.mxu0
      %v2958 = vadd.f32 0.0, %v2957
      %v2959 = vpop.f32.mrf.mxu0
      %v2960 = vpop.f32.mrf.mxu0
      %v2961 = vadd.f32 0.0, %v2960
      %v2962 = vpop.f32.mrf.mxu0
      %2963 = vmatprep.mubr.bf16.mxu0 0
      %2964 = vmatmul.mubr.bf16.gmra.mxu0 %v2921
      %v2965 = vpop.f32.mrf.mxu0
      %v2966 = vadd.f32 0.0, %v2965
      %v2967 = vpop.f32.mrf.mxu0
      %v2968 = vpop.f32.mrf.mxu0
      %v2969 = vadd.f32 0.0, %v2968
      %v2970 = vpop.f32.mrf.mxu0
      %2971 = vdwg.mxu0
      %2972 = vrot.lane.b32.xlu0 %v1352, 80
      %v2973 = vpop.permute.xlu0 %2972
      %2974 = vrot.lane.b32.xlu0 %v1353, 80
      %v2975 = vpop.permute.xlu0 %2974
      %v2979 = vsel %vm1477, %v2909, 0
      %v2982 = vsel %vm1477, %v2910, 0
      %2984 = vmatprep.subr.bf16.mxu0 0
      %2985 = vmatpush1.bf16.msra.mxu0 0
      %2986 = vmatprep.subr.bf16.mxu0 0
      %2987 = vmatpush1.bf16.msra.mxu0 0
      %2988 = vmatprep.subr.bf16.mxu0 0
      %2989 = vmatpush1.bf16.msra.mxu0 0
      %2990 = vmatprep.subr.bf16.mxu0 0
      %2991 = vmatpush1.bf16.msra.mxu0 0
      %2992 = vmatprep.subr.bf16.mxu0 0
      %2993 = vmatpush1.bf16.msra.mxu0 0
      %2994 = vmatprep.subr.bf16.mxu0 0
      %2995 = vmatpush1.bf16.msra.mxu0 0
      %2996 = vmatprep.subr.bf16.mxu0 0
      %2997 = vmatpush1.bf16.msra.mxu0 %v2975
      %2998 = vmatprep.subr.bf16.mxu0 0
      %2999 = vmatpush1.bf16.msra.mxu0 %v2973
      %3000 = vmatprep.subr.bf16.mxu0 0
      %3001 = vmatpush2.bf16.msra.mxu0 0
      %3002 = vmatprep.subr.bf16.mxu0 0
      %3003 = vmatpush2.bf16.msra.mxu0 0
      %3004 = vmatprep.subr.bf16.mxu0 0
      %3005 = vmatpush2.bf16.msra.mxu0 0
      %3006 = vmatprep.subr.bf16.mxu0 0
      %3007 = vmatpush2.bf16.msra.mxu0 0
      %3008 = vmatprep.subr.bf16.mxu0 0
      %3009 = vmatpush2.bf16.msra.mxu0 0
      %3010 = vmatprep.subr.bf16.mxu0 0
      %3011 = vmatpush2.bf16.msra.mxu0 0
      %3012 = vmatprep.subr.bf16.mxu0 0
      %3013 = vmatpush2.bf16.msra.mxu0 0
      %3014 = vmatprep.subr.bf16.mxu0 0
      %3015 = vmatpush2.bf16.msra.mxu0 0
      %3016 = vmatprep.mubr.bf16.mxu0 0
      %3017 = vmatmul.mubr.bf16.gmra.mxu0 %v2979
      %v3018 = vpop.f32.mrf.mxu0
      %v3019 = vadd.f32 0.0, %v3018
      %v3020 = vpop.f32.mrf.mxu0
      %v3021 = vpop.f32.mrf.mxu0
      %v3022 = vadd.f32 0.0, %v3021
      %v3023 = vpop.f32.mrf.mxu0
      %3024 = vmatprep.mubr.bf16.mxu0 0
      %3025 = vmatmul.mubr.bf16.gmra.mxu0 %v2982
      %v3026 = vpop.f32.mrf.mxu0
      %v3027 = vadd.f32 0.0, %v3026
      %v3028 = vpop.f32.mrf.mxu0
      %v3029 = vpop.f32.mrf.mxu0
      %v3030 = vadd.f32 0.0, %v3029
      %v3031 = vpop.f32.mrf.mxu0
      %3032 = vdwg.mxu0
      %v3033 = vpack.c.bf16 %v2961, %v2958
      %v3034 = vpack.c.bf16 %v2969, %v2966
      %v3035 = vpack.c.bf16 %v3022, %v3019
      %v3036 = vpack.c.bf16 %v3030, %v3027
      %v3039 = vunpack.c.l.b16 %v840
      %v3040 = vunpack.c.l.b16 %v841
      %v3041 = vpack.c.b16 %v3040, %v3039
      %v3044 = vsel %vm1354, %v3033, 0
      %v3047 = vsel %vm1354, %v3034, 0
      %v3050 = vsel %vm1354, %v3035, 0
      %v3053 = vsel %vm1354, %v3036, 0
      %3055 = vmatprep.subr.bf16.mxu0 0
      %3056 = vmatpush1.bf16.msra.mxu0 0
      %3057 = vmatprep.subr.bf16.mxu0 0
      %3058 = vmatpush1.bf16.msra.mxu0 0
      %3059 = vmatprep.subr.bf16.mxu0 0
      %3060 = vmatpush1.bf16.msra.mxu0 0
      %3061 = vmatprep.subr.bf16.mxu0 0
      %3062 = vmatpush1.bf16.msra.mxu0 0
      %3063 = vmatprep.subr.bf16.mxu0 0
      %3064 = vmatpush1.bf16.msra.mxu0 0
      %3065 = vmatprep.subr.bf16.mxu0 0
      %3066 = vmatpush1.bf16.msra.mxu0 0
      %3067 = vmatprep.subr.bf16.mxu0 0
      %3068 = vmatpush1.bf16.msra.mxu0 0
      %3069 = vmatprep.subr.bf16.mxu0 0
      %3070 = vmatpush1.bf16.msra.mxu0 %v3041
      %3071 = vmatprep.subr.bf16.mxu0 0
      %3072 = vmatpush2.bf16.msra.mxu0 0
      %3073 = vmatprep.subr.bf16.mxu0 0
      %3074 = vmatpush2.bf16.msra.mxu0 0
      %3075 = vmatprep.subr.bf16.mxu0 0
      %3076 = vmatpush2.bf16.msra.mxu0 0
      %3077 = vmatprep.subr.bf16.mxu0 0
      %3078 = vmatpush2.bf16.msra.mxu0 0
      %3079 = vmatprep.subr.bf16.mxu0 0
      %3080 = vmatpush2.bf16.msra.mxu0 0
      %3081 = vmatprep.subr.bf16.mxu0 0
      %3082 = vmatpush2.bf16.msra.mxu0 0
      %3083 = vmatprep.subr.bf16.mxu0 0
      %3084 = vmatpush2.bf16.msra.mxu0 0
      %3085 = vmatprep.subr.bf16.mxu0 0
      %3086 = vmatpush2.bf16.msra.mxu0 0
      %3087 = vmatprep.mubr.bf16.mxu0 0
      %3088 = vmatmul.mubr.bf16.gmra.mxu0 %v3044
      %v3089 = vpop.f32.mrf.mxu0
      %v3090 = vadd.f32 0.0, %v3089
      %v3091 = vpop.f32.mrf.mxu0
      %v3092 = vpop.f32.mrf.mxu0
      %v3093 = vadd.f32 0.0, %v3092
      %v3094 = vpop.f32.mrf.mxu0
      %3095 = vmatprep.mubr.bf16.mxu0 0
      %3096 = vmatmul.mubr.bf16.gmra.mxu0 %v3047
      %v3097 = vpop.f32.mrf.mxu0
      %v3098 = vadd.f32 0.0, %v3097
      %v3099 = vpop.f32.mrf.mxu0
      %v3100 = vpop.f32.mrf.mxu0
      %v3101 = vadd.f32 0.0, %v3100
      %v3102 = vpop.f32.mrf.mxu0
      %3103 = vmatprep.mubr.bf16.mxu0 0
      %3104 = vmatmul.mubr.bf16.gmra.mxu0 %v3050
      %v3105 = vpop.f32.mrf.mxu0
      %v3106 = vadd.f32 0.0, %v3105
      %v3107 = vpop.f32.mrf.mxu0
      %v3108 = vpop.f32.mrf.mxu0
      %v3109 = vadd.f32 0.0, %v3108
      %v3110 = vpop.f32.mrf.mxu0
      %3111 = vmatprep.mubr.bf16.mxu0 0
      %3112 = vmatmul.mubr.bf16.gmra.mxu0 %v3053
      %v3113 = vpop.f32.mrf.mxu0
      %v3114 = vadd.f32 0.0, %v3113
      %v3115 = vpop.f32.mrf.mxu0
      %v3116 = vpop.f32.mrf.mxu0
      %v3117 = vadd.f32 0.0, %v3116
      %v3118 = vpop.f32.mrf.mxu0
      %3119 = vdwg.mxu0
      %v3120 = vadd.f32 %v2673, %v3090
      %v3121 = vadd.f32 %v2674, %v3093
      %v3122 = vadd.f32 %v2675, %v3098
      %v3123 = vadd.f32 %v2676, %v3101
      %v3124 = vadd.f32 %v2677, %v3106
      %v3125 = vadd.f32 %v2678, %v3109
      %v3126 = vadd.f32 %v2679, %v3114
      %v3127 = vadd.f32 %v2680, %v3117
      %v3128 = vsel %vm671, %v3120, 0.0
      %3129 = vadd.xlane.f32.xlu0 %v3128
      %v3130 = vpop.xlane.xlu0 %3129
      %v3131 = vsel %vm671, %v3121, 0.0
      %3132 = vadd.xlane.f32.xlu0 %v3131
      %v3133 = vpop.xlane.xlu0 %3132
      %v3134 = vsel %vm671, %v3122, 0.0
      %3135 = vadd.xlane.f32.xlu0 %v3134
      %v3136 = vpop.xlane.xlu0 %3135
      %v3137 = vsel %vm671, %v3123, 0.0
      %3138 = vadd.xlane.f32.xlu0 %v3137
      %v3139 = vpop.xlane.xlu0 %3138
      %v3140 = vsel %vm671, %v3124, 0.0
      %3141 = vadd.xlane.f32.xlu0 %v3140
      %v3142 = vpop.xlane.xlu0 %3141
      %v3143 = vsel %vm671, %v3125, 0.0
      %3144 = vadd.xlane.f32.xlu0 %v3143
      %v3145 = vpop.xlane.xlu0 %3144
      %v3146 = vsel %vm671, %v3126, 0.0
      %3147 = vadd.xlane.f32.xlu0 %v3146
      %v3148 = vpop.xlane.xlu0 %3147
      %v3149 = vsel %vm671, %v3127, 0.0
      %3150 = vadd.xlane.f32.xlu0 %v3149
      %v3151 = vpop.xlane.xlu0 %3150
      %v3152 = vmul.f32 %v3130, %v696
      %v3153 = vmul.f32 %v3133, %v696
      %v3154 = vmul.f32 %v3136, %v696
      %v3155 = vmul.f32 %v3139, %v696
      %v3156 = vmul.f32 %v3142, %v696
      %v3157 = vmul.f32 %v3145, %v696
      %v3158 = vmul.f32 %v3148, %v696
      %v3159 = vmul.f32 %v3151, %v696
      %v3160 = vsub.f32 %v3120, %v3152
      %v3161 = vsub.f32 %v3121, %v3153
      %v3162 = vsub.f32 %v3122, %v3154
      %v3163 = vsub.f32 %v3123, %v3155
      %v3164 = vsub.f32 %v3124, %v3156
      %v3165 = vsub.f32 %v3125, %v3157
      %v3166 = vsub.f32 %v3126, %v3158
      %v3167 = vsub.f32 %v3127, %v3159
      %v3168 = vmul.f32 %v3160, %v3160
      %v3169 = vmul.f32 %v3161, %v3161
      %v3170 = vmul.f32 %v3162, %v3162
      %v3171 = vmul.f32 %v3163, %v3163
      %v3172 = vmul.f32 %v3164, %v3164
      %v3173 = vmul.f32 %v3165, %v3165
      %v3174 = vmul.f32 %v3166, %v3166
      %v3175 = vmul.f32 %v3167, %v3167
      %v3176 = vsel %vm671, %v3168, 0.0
      %3177 = vadd.xlane.f32.xlu0 %v3176
      %v3178 = vpop.xlane.xlu0 %3177
      %v3179 = vsel %vm671, %v3169, 0.0
      %3180 = vadd.xlane.f32.xlu0 %v3179
      %v3181 = vpop.xlane.xlu0 %3180
      %v3182 = vsel %vm671, %v3170, 0.0
      %3183 = vadd.xlane.f32.xlu0 %v3182
      %v3184 = vpop.xlane.xlu0 %3183
      %v3185 = vsel %vm671, %v3171, 0.0
      %3186 = vadd.xlane.f32.xlu0 %v3185
      %v3187 = vpop.xlane.xlu0 %3186
      %v3188 = vsel %vm671, %v3172, 0.0
      %3189 = vadd.xlane.f32.xlu0 %v3188
      %v3190 = vpop.xlane.xlu0 %3189
      %v3191 = vsel %vm671, %v3173, 0.0
      %3192 = vadd.xlane.f32.xlu0 %v3191
      %v3193 = vpop.xlane.xlu0 %3192
      %v3194 = vsel %vm671, %v3174, 0.0
      %3195 = vadd.xlane.f32.xlu0 %v3194
      %v3196 = vpop.xlane.xlu0 %3195
      %v3197 = vsel %vm671, %v3175, 0.0
      %3198 = vadd.xlane.f32.xlu0 %v3197
      %v3199 = vpop.xlane.xlu0 %3198
      %v3200 = vmul.f32 %v3178, %v696
      %v3201 = vmul.f32 %v3181, %v696
      %v3202 = vmul.f32 %v3184, %v696
      %v3203 = vmul.f32 %v3187, %v696
      %v3204 = vmul.f32 %v3190, %v696
      %v3205 = vmul.f32 %v3193, %v696
      %v3206 = vmul.f32 %v3196, %v696
      %v3207 = vmul.f32 %v3199, %v696
      %v3208 = vadd.f32 %v3200, 1e-05
      %v3209 = vadd.f32 %v3201, 1e-05
      %v3210 = vadd.f32 %v3202, 1e-05
      %v3211 = vadd.f32 %v3203, 1e-05
      %v3212 = vadd.f32 %v3204, 1e-05
      %v3213 = vadd.f32 %v3205, 1e-05
      %v3214 = vadd.f32 %v3206, 1e-05
      %v3215 = vadd.f32 %v3207, 1e-05
      %v3216 = vrsqrt.pop %v3208
      %v3217 = vrsqrt.pop %v3209
      %v3218 = vrsqrt.pop %v3210
      %v3219 = vrsqrt.pop %v3211
      %v3220 = vrsqrt.pop %v3212
      %v3221 = vrsqrt.pop %v3213
      %v3222 = vrsqrt.pop %v3214
      %v3223 = vrsqrt.pop %v3215
      %v3224 = vmul.f32 %v3160, %v3216
      %v3225 = vmul.f32 %v3161, %v3217
      %v3226 = vmul.f32 %v3162, %v3218
      %v3227 = vmul.f32 %v3163, %v3219
      %v3228 = vmul.f32 %v3164, %v3220
      %v3229 = vmul.f32 %v3165, %v3221
      %v3230 = vmul.f32 %v3166, %v3222
      %v3231 = vmul.f32 %v3167, %v3223
      %v3233 = vlaneseq
      %v3234 = vshrl.u32 %v3233, 7
      %v3235 = vsub.s32 0, %v3234
      %v3236 = vrot.slane %v843, %v3235
      %v3238 = vmul.f32 %v3224, %v3236
      %v3239 = vmul.f32 %v3225, %v3236
      %v3240 = vmul.f32 %v3226, %v3236
      %v3241 = vmul.f32 %v3227, %v3236
      %v3242 = vmul.f32 %v3228, %v3236
      %v3243 = vmul.f32 %v3229, %v3236
      %v3244 = vmul.f32 %v3230, %v3236
      %v3245 = vmul.f32 %v3231, %v3236
      %v3247 = vlaneseq
      %v3248 = vshrl.u32 %v3247, 7
      %v3249 = vsub.s32 0, %v3248
      %v3250 = vrot.slane %v844, %v3249
      %v3252 = vadd.f32 %v3238, %v3250
      %v3253 = vadd.f32 %v3239, %v3250
      %v3254 = vadd.f32 %v3240, %v3250
      %v3255 = vadd.f32 %v3241, %v3250
      %v3256 = vadd.f32 %v3242, %v3250
      %v3257 = vadd.f32 %v3243, %v3250
      %v3258 = vadd.f32 %v3244, %v3250
      %v3259 = vadd.f32 %v3245, %v3250
      %v3260 = vpack.c.bf16 %v3253, %v3252
      %v3261 = vpack.c.bf16 %v3255, %v3254
      %v3262 = vpack.c.bf16 %v3257, %v3256
      %v3263 = vpack.c.bf16 %v3259, %v3258
      %v3265 = vlaneseq
      %v3266 = vshrl.u32 %v3265, 7
      %v3267 = vsub.s32 0, %v3266
      %v3268 = vrot.slane %v853, %v3267
      %v3269 = vlaneseq
      %v3270 = vshrl.u32 %v3269, 7
      %v3271 = vsub.s32 1, %v3270
      %v3272 = vrot.slane %v853, %v3271
      %v3283 = vunpack.c.l.b16 %v845
      %v3284 = vunpack.c.h.b16 %v845
      %v3285 = vunpack.c.l.b16 %v846
      %v3286 = vunpack.c.h.b16 %v846
      %v3287 = vunpack.c.l.b16 %v847
      %v3288 = vunpack.c.h.b16 %v847
      %v3289 = vunpack.c.l.b16 %v848
      %v3290 = vunpack.c.h.b16 %v848
      %v3291 = vunpack.c.l.b16 %v849
      %v3292 = vunpack.c.h.b16 %v849
      %v3293 = vunpack.c.l.b16 %v850
      %v3294 = vunpack.c.h.b16 %v850
      %v3295 = vunpack.c.l.b16 %v851
      %v3296 = vunpack.c.h.b16 %v851
      %v3297 = vunpack.c.l.b16 %v852
      %v3298 = vunpack.c.h.b16 %v852
      %v3299 = vpack.c.b16 %v3285, %v3283
      %v3300 = vpack.c.b16 %v3286, %v3284
      %v3301 = vpack.c.b16 %v3289, %v3287
      %v3302 = vpack.c.b16 %v3290, %v3288
      %v3303 = vpack.c.b16 %v3293, %v3291
      %v3304 = vpack.c.b16 %v3294, %v3292
      %v3305 = vpack.c.b16 %v3297, %v3295
      %v3306 = vpack.c.b16 %v3298, %v3296
      %v3316 = vsel %vm671, %v3260, 0
      %v3319 = vsel %vm671, %v3261, 0
      %v3322 = vsel %vm671, %v3262, 0
      %v3325 = vsel %vm671, %v3263, 0
      %3327 = vmatprep.subr.bf16.mxu0 0
      %3328 = vmatpush1.bf16.msra.mxu0 0
      %3329 = vmatprep.subr.bf16.mxu0 0
      %3330 = vmatpush1.bf16.msra.mxu0 0
      %3331 = vmatprep.subr.bf16.mxu0 0
      %3332 = vmatpush1.bf16.msra.mxu0 0
      %3333 = vmatprep.subr.bf16.mxu0 0
      %3334 = vmatpush1.bf16.msra.mxu0 0
      %3335 = vmatprep.subr.bf16.mxu0 %v3306
      %3336 = vmatpush1.bf16.msra.mxu0 %v3305
      %3337 = vmatprep.subr.bf16.mxu0 %v3304
      %3338 = vmatpush1.bf16.msra.mxu0 %v3303
      %3339 = vmatprep.subr.bf16.mxu0 %v3302
      %3340 = vmatpush1.bf16.msra.mxu0 %v3301
      %3341 = vmatprep.subr.bf16.mxu0 %v3300
      %3342 = vmatpush1.bf16.msra.mxu0 %v3299
      %3343 = vmatprep.subr.bf16.mxu0 0
      %3344 = vmatpush2.bf16.msra.mxu0 0
      %3345 = vmatprep.subr.bf16.mxu0 0
      %3346 = vmatpush2.bf16.msra.mxu0 0
      %3347 = vmatprep.subr.bf16.mxu0 0
      %3348 = vmatpush2.bf16.msra.mxu0 0
      %3349 = vmatprep.subr.bf16.mxu0 0
      %3350 = vmatpush2.bf16.msra.mxu0 0
      %3351 = vmatprep.subr.bf16.mxu0 0
      %3352 = vmatpush2.bf16.msra.mxu0 0
      %3353 = vmatprep.subr.bf16.mxu0 0
      %3354 = vmatpush2.bf16.msra.mxu0 0
      %3355 = vmatprep.subr.bf16.mxu0 0
      %3356 = vmatpush2.bf16.msra.mxu0 0
      %3357 = vmatprep.subr.bf16.mxu0 0
      %3358 = vmatpush2.bf16.msra.mxu0 0
      %3359 = vmatprep.mubr.bf16.mxu0 0
      %3360 = vmatmul.mubr.bf16.gmra.mxu0 %v3316
      %v3361 = vpop.f32.mrf.mxu0
      %v3362 = vadd.f32 %v3268, %v3361
      %v3363 = vpop.f32.mrf.mxu0
      %v3364 = vadd.f32 %v3272, %v3363
      %v3365 = vpop.f32.mrf.mxu0
      %v3366 = vadd.f32 %v3268, %v3365
      %v3367 = vpop.f32.mrf.mxu0
      %v3368 = vadd.f32 %v3272, %v3367
      %3369 = vmatprep.mubr.bf16.mxu0 0
      %3370 = vmatmul.mubr.bf16.gmra.mxu0 %v3319
      %v3371 = vpop.f32.mrf.mxu0
      %v3372 = vadd.f32 %v3268, %v3371
      %v3373 = vpop.f32.mrf.mxu0
      %v3374 = vadd.f32 %v3272, %v3373
      %v3375 = vpop.f32.mrf.mxu0
      %v3376 = vadd.f32 %v3268, %v3375
      %v3377 = vpop.f32.mrf.mxu0
      %v3378 = vadd.f32 %v3272, %v3377
      %3379 = vmatprep.mubr.bf16.mxu0 0
      %3380 = vmatmul.mubr.bf16.gmra.mxu0 %v3322
      %v3381 = vpop.f32.mrf.mxu0
      %v3382 = vadd.f32 %v3268, %v3381
      %v3383 = vpop.f32.mrf.mxu0
      %v3384 = vadd.f32 %v3272, %v3383
      %v3385 = vpop.f32.mrf.mxu0
      %v3386 = vadd.f32 %v3268, %v3385
      %v3387 = vpop.f32.mrf.mxu0
      %v3388 = vadd.f32 %v3272, %v3387
      %3389 = vmatprep.mubr.bf16.mxu0 0
      %3390 = vmatmul.mubr.bf16.gmra.mxu0 %v3325
      %v3391 = vpop.f32.mrf.mxu0
      %v3392 = vadd.f32 %v3268, %v3391
      %v3393 = vpop.f32.mrf.mxu0
      %v3394 = vadd.f32 %v3272, %v3393
      %v3395 = vpop.f32.mrf.mxu0
      %v3396 = vadd.f32 %v3268, %v3395
      %v3397 = vpop.f32.mrf.mxu0
      %v3398 = vadd.f32 %v3272, %v3397
      %3399 = vdwg.mxu0
      %v3400 = vmul.f32 %v3362, 1.702
      %v3401 = vmul.f32 %v3364, 1.702
      %v3402 = vmul.f32 %v3366, 1.702
      %v3403 = vmul.f32 %v3368, 1.702
      %v3404 = vmul.f32 %v3372, 1.702
      %v3405 = vmul.f32 %v3374, 1.702
      %v3406 = vmul.f32 %v3376, 1.702
      %v3407 = vmul.f32 %v3378, 1.702
      %v3408 = vmul.f32 %v3382, 1.702
      %v3409 = vmul.f32 %v3384, 1.702
      %v3410 = vmul.f32 %v3386, 1.702
      %v3411 = vmul.f32 %v3388, 1.702
      %v3412 = vmul.f32 %v3392, 1.702
      %v3413 = vmul.f32 %v3394, 1.702
      %v3414 = vmul.f32 %v3396, 1.702
      %v3415 = vmul.f32 %v3398, 1.702
      %v3416 = vxor.u32 %v3400, 2147483648
      %v3417 = vxor.u32 %v3401, 2147483648
      %v3418 = vxor.u32 %v3402, 2147483648
      %v3419 = vxor.u32 %v3403, 2147483648
      %v3420 = vxor.u32 %v3404, 2147483648
      %v3421 = vxor.u32 %v3405, 2147483648
      %v3422 = vxor.u32 %v3406, 2147483648
      %v3423 = vxor.u32 %v3407, 2147483648
      %v3424 = vxor.u32 %v3408, 2147483648
      %v3425 = vxor.u32 %v3409, 2147483648
      %v3426 = vxor.u32 %v3410, 2147483648
      %v3427 = vxor.u32 %v3411, 2147483648
      %v3428 = vxor.u32 %v3412, 2147483648
      %v3429 = vxor.u32 %v3413, 2147483648
      %v3430 = vxor.u32 %v3414, 2147483648
      %v3431 = vxor.u32 %v3415, 2147483648
      %v3432 = vmul.f32 %v3416, 1.442695
      %v3433 = vpow.pop %v3432
      %v3434 = vmul.f32 %v3417, 1.442695
      %v3435 = vpow.pop %v3434
      %v3436 = vmul.f32 %v3418, 1.442695
      %v3437 = vpow.pop %v3436
      %v3438 = vmul.f32 %v3419, 1.442695
      %v3439 = vpow.pop %v3438
      %v3440 = vmul.f32 %v3420, 1.442695
      %v3441 = vpow.pop %v3440
      %v3442 = vmul.f32 %v3421, 1.442695
      %v3443 = vpow.pop %v3442
      %v3444 = vmul.f32 %v3422, 1.442695
      %v3445 = vpow.pop %v3444
      %v3446 = vmul.f32 %v3423, 1.442695
      %v3447 = vpow.pop %v3446
      %v3448 = vmul.f32 %v3424, 1.442695
      %v3449 = vpow.pop %v3448
      %v3450 = vmul.f32 %v3425, 1.442695
      %v3451 = vpow.pop %v3450
      %v3452 = vmul.f32 %v3426, 1.442695
      %v3453 = vpow.pop %v3452
      %v3454 = vmul.f32 %v3427, 1.442695
      %v3455 = vpow.pop %v3454
      %v3456 = vmul.f32 %v3428, 1.442695
      %v3457 = vpow.pop %v3456
      %v3458 = vmul.f32 %v3429, 1.442695
      %v3459 = vpow.pop %v3458
      %v3460 = vmul.f32 %v3430, 1.442695
      %v3461 = vpow.pop %v3460
      %v3462 = vmul.f32 %v3431, 1.442695
      %v3463 = vpow.pop %v3462
      %v3464 = vadd.f32 %v3433, 1.0
      %v3465 = vadd.f32 %v3435, 1.0
      %v3466 = vadd.f32 %v3437, 1.0
      %v3467 = vadd.f32 %v3439, 1.0
      %v3468 = vadd.f32 %v3441, 1.0
      %v3469 = vadd.f32 %v3443, 1.0
      %v3470 = vadd.f32 %v3445, 1.0
      %v3471 = vadd.f32 %v3447, 1.0
      %v3472 = vadd.f32 %v3449, 1.0
      %v3473 = vadd.f32 %v3451, 1.0
      %v3474 = vadd.f32 %v3453, 1.0
      %v3475 = vadd.f32 %v3455, 1.0
      %v3476 = vadd.f32 %v3457, 1.0
      %v3477 = vadd.f32 %v3459, 1.0
      %v3478 = vadd.f32 %v3461, 1.0
      %v3479 = vadd.f32 %v3463, 1.0
      %v3480 = vrcp.pop %v3464
      %v3481 = vmul.f32 1.0, %v3480
      %v3482 = vrcp.pop %v3465
      %v3483 = vmul.f32 1.0, %v3482
      %v3484 = vrcp.pop %v3466
      %v3485 = vmul.f32 1.0, %v3484
      %v3486 = vrcp.pop %v3467
      %v3487 = vmul.f32 1.0, %v3486
      %v3488 = vrcp.pop %v3468
      %v3489 = vmul.f32 1.0, %v3488
      %v3490 = vrcp.pop %v3469
      %v3491 = vmul.f32 1.0, %v3490
      %v3492 = vrcp.pop %v3470
      %v3493 = vmul.f32 1.0, %v3492
      %v3494 = vrcp.pop %v3471
      %v3495 = vmul.f32 1.0, %v3494
      %v3496 = vrcp.pop %v3472
      %v3497 = vmul.f32 1.0, %v3496
      %v3498 = vrcp.pop %v3473
      %v3499 = vmul.f32 1.0, %v3498
      %v3500 = vrcp.pop %v3474
      %v3501 = vmul.f32 1.0, %v3500
      %v3502 = vrcp.pop %v3475
      %v3503 = vmul.f32 1.0, %v3502
      %v3504 = vrcp.pop %v3476
      %v3505 = vmul.f32 1.0, %v3504
      %v3506 = vrcp.pop %v3477
      %v3507 = vmul.f32 1.0, %v3506
      %v3508 = vrcp.pop %v3478
      %v3509 = vmul.f32 1.0, %v3508
      %v3510 = vrcp.pop %v3479
      %v3511 = vmul.f32 1.0, %v3510
      %v3512 = vmul.f32 %v3362, %v3481
      %v3513 = vmul.f32 %v3364, %v3483
      %v3514 = vmul.f32 %v3366, %v3485
      %v3515 = vmul.f32 %v3368, %v3487
      %v3516 = vmul.f32 %v3372, %v3489
      %v3517 = vmul.f32 %v3374, %v3491
      %v3518 = vmul.f32 %v3376, %v3493
      %v3519 = vmul.f32 %v3378, %v3495
      %v3520 = vmul.f32 %v3382, %v3497
      %v3521 = vmul.f32 %v3384, %v3499
      %v3522 = vmul.f32 %v3386, %v3501
      %v3523 = vmul.f32 %v3388, %v3503
      %v3524 = vmul.f32 %v3392, %v3505
      %v3525 = vmul.f32 %v3394, %v3507
      %v3526 = vmul.f32 %v3396, %v3509
      %v3527 = vmul.f32 %v3398, %v3511
      %v3528 = vpack.c.bf16 %v3514, %v3512
      %v3529 = vpack.c.bf16 %v3515, %v3513
      %v3530 = vpack.c.bf16 %v3518, %v3516
      %v3531 = vpack.c.bf16 %v3519, %v3517
      %v3532 = vpack.c.bf16 %v3522, %v3520
      %v3533 = vpack.c.bf16 %v3523, %v3521
      %v3534 = vpack.c.bf16 %v3526, %v3524
      %v3535 = vpack.c.bf16 %v3527, %v3525
      %v3568 = vunpack.c.l.b16 %v854
      %v3569 = vunpack.c.l.b16 %v855
      %v3570 = vunpack.c.l.b16 %v856
      %v3571 = vunpack.c.l.b16 %v857
      %v3572 = vunpack.c.l.b16 %v858
      %v3573 = vunpack.c.l.b16 %v859
      %v3574 = vunpack.c.l.b16 %v860
      %v3575 = vunpack.c.l.b16 %v861
      %v3576 = vunpack.c.l.b16 %v862
      %v3577 = vunpack.c.l.b16 %v863
      %v3578 = vunpack.c.l.b16 %v864
      %v3579 = vunpack.c.l.b16 %v865
      %v3580 = vunpack.c.l.b16 %v866
      %v3581 = vunpack.c.l.b16 %v867
      %v3582 = vunpack.c.l.b16 %v868
      %v3583 = vunpack.c.l.b16 %v869
      %v3584 = vunpack.c.l.b16 %v870
      %v3585 = vunpack.c.l.b16 %v871
      %v3586 = vunpack.c.l.b16 %v872
      %v3587 = vunpack.c.l.b16 %v873
      %v3588 = vunpack.c.l.b16 %v874
      %v3589 = vunpack.c.l.b16 %v875
      %v3590 = vunpack.c.l.b16 %v876
      %v3591 = vunpack.c.l.b16 %v877
      %v3592 = vunpack.c.l.b16 %v878
      %v3593 = vunpack.c.l.b16 %v879
      %v3594 = vunpack.c.l.b16 %v880
      %v3595 = vunpack.c.l.b16 %v881
      %v3596 = vunpack.c.l.b16 %v882
      %v3597 = vunpack.c.l.b16 %v883
      %v3598 = vunpack.c.l.b16 %v884
      %v3599 = vunpack.c.l.b16 %v885
      %v3600 = vpack.c.b16 %v3569, %v3568
      %v3601 = vpack.c.b16 %v3571, %v3570
      %v3602 = vpack.c.b16 %v3573, %v3572
      %v3603 = vpack.c.b16 %v3575, %v3574
      %v3604 = vpack.c.b16 %v3577, %v3576
      %v3605 = vpack.c.b16 %v3579, %v3578
      %v3606 = vpack.c.b16 %v3581, %v3580
      %v3607 = vpack.c.b16 %v3583, %v3582
      %v3608 = vpack.c.b16 %v3585, %v3584
      %v3609 = vpack.c.b16 %v3587, %v3586
      %v3610 = vpack.c.b16 %v3589, %v3588
      %v3611 = vpack.c.b16 %v3591, %v3590
      %v3612 = vpack.c.b16 %v3593, %v3592
      %v3613 = vpack.c.b16 %v3595, %v3594
      %v3614 = vpack.c.b16 %v3597, %v3596
      %v3615 = vpack.c.b16 %v3599, %v3598
      %3632 = vmatprep.subr.bf16.mxu0 0
      %3633 = vmatpush1.bf16.msra.mxu0 %v3607
      %3634 = vmatprep.subr.bf16.mxu0 0
      %3635 = vmatpush1.bf16.msra.mxu0 %v3606
      %3636 = vmatprep.subr.bf16.mxu0 0
      %3637 = vmatpush1.bf16.msra.mxu0 %v3605
      %3638 = vmatprep.subr.bf16.mxu0 0
      %3639 = vmatpush1.bf16.msra.mxu0 %v3604
      %3640 = vmatprep.subr.bf16.mxu0 0
      %3641 = vmatpush1.bf16.msra.mxu0 %v3603
      %3642 = vmatprep.subr.bf16.mxu0 0
      %3643 = vmatpush1.bf16.msra.mxu0 %v3602
      %3644 = vmatprep.subr.bf16.mxu0 0
      %3645 = vmatpush1.bf16.msra.mxu0 %v3601
      %3646 = vmatprep.subr.bf16.mxu0 0
      %3647 = vmatpush1.bf16.msra.mxu0 %v3600
      %3648 = vmatprep.subr.bf16.mxu0 0
      %3649 = vmatpush2.bf16.msra.mxu0 %v3615
      %3650 = vmatprep.subr.bf16.mxu0 0
      %3651 = vmatpush2.bf16.msra.mxu0 %v3614
      %3652 = vmatprep.subr.bf16.mxu0 0
      %3653 = vmatpush2.bf16.msra.mxu0 %v3613
      %3654 = vmatprep.subr.bf16.mxu0 0
      %3655 = vmatpush2.bf16.msra.mxu0 %v3612
      %3656 = vmatprep.subr.bf16.mxu0 0
      %3657 = vmatpush2.bf16.msra.mxu0 %v3611
      %3658 = vmatprep.subr.bf16.mxu0 0
      %3659 = vmatpush2.bf16.msra.mxu0 %v3610
      %3660 = vmatprep.subr.bf16.mxu0 0
      %3661 = vmatpush2.bf16.msra.mxu0 %v3609
      %3662 = vmatprep.subr.bf16.mxu0 0
      %3663 = vmatpush2.bf16.msra.mxu0 %v3608
      %3664 = vmatprep.mubr.bf16.mxu0 %v3529
      %3665 = vmatmul.mubr.bf16.gmra.mxu0 %v3528
      %v3666 = vpop.f32.mrf.mxu0
      %v3667 = vadd.f32 0.0, %v3666
      %v3668 = vpop.f32.mrf.mxu0
      %v3669 = vpop.f32.mrf.mxu0
      %v3670 = vadd.f32 0.0, %v3669
      %v3671 = vpop.f32.mrf.mxu0
      %3672 = vmatprep.mubr.bf16.mxu0 %v3531
      %3673 = vmatmul.mubr.bf16.gmra.mxu0 %v3530
      %v3674 = vpop.f32.mrf.mxu0
      %v3675 = vadd.f32 0.0, %v3674
      %v3676 = vpop.f32.mrf.mxu0
      %v3677 = vpop.f32.mrf.mxu0
      %v3678 = vadd.f32 0.0, %v3677
      %v3679 = vpop.f32.mrf.mxu0
      %3680 = vmatprep.mubr.bf16.mxu0 %v3533
      %3681 = vmatmul.mubr.bf16.gmra.mxu0 %v3532
      %v3682 = vpop.f32.mrf.mxu0
      %v3683 = vadd.f32 0.0, %v3682
      %v3684 = vpop.f32.mrf.mxu0
      %v3685 = vpop.f32.mrf.mxu0
      %v3686 = vadd.f32 0.0, %v3685
      %v3687 = vpop.f32.mrf.mxu0
      %3688 = vmatprep.mubr.bf16.mxu0 %v3535
      %3689 = vmatmul.mubr.bf16.gmra.mxu0 %v3534
      %v3690 = vpop.f32.mrf.mxu0
      %v3691 = vadd.f32 0.0, %v3690
      %v3692 = vpop.f32.mrf.mxu0
      %v3693 = vpop.f32.mrf.mxu0
      %v3694 = vadd.f32 0.0, %v3693
      %v3695 = vpop.f32.mrf.mxu0
      %3696 = vdwg.mxu0
      %v3697 = vadd.f32 %v3120, %v3667
      %v3698 = vadd.f32 %v3121, %v3670
      %v3699 = vadd.f32 %v3122, %v3675
      %v3700 = vadd.f32 %v3123, %v3678
      %v3701 = vadd.f32 %v3124, %v3683
      %v3702 = vadd.f32 %v3125, %v3686
      %v3703 = vadd.f32 %v3126, %v3691
      %v3704 = vadd.f32 %v3127, %v3694
      %v3706 = vlaneseq
      %v3707 = vshrl.u32 %v3706, 7
      %v3708 = vsub.s32 0, %v3707
      %v3709 = vrot.slane %v886, %v3708
      %v3711 = vadd.f32 %v3697, %v3709
      %v3712 = vadd.f32 %v3698, %v3709
      %v3713 = vadd.f32 %v3699, %v3709
      %v3714 = vadd.f32 %v3700, %v3709
      %v3715 = vadd.f32 %v3701, %v3709
      %v3716 = vadd.f32 %v3702, %v3709
      %v3717 = vadd.f32 %v3703, %v3709
      %v3718 = vadd.f32 %v3704, %v3709
      %s3719 = scalar_lea.vmem %s3, 1
      %v3720 = vld [vmem:[%s3719] sm:$0x1]
      %s3721 = scalar_lea.vmem %s4, 1
      %v3722 = vld [vmem:[%s3721] sm:$0x1]
      %s3723 = scalar_lea.vmem %s5, 32
      %v3724 = vld [vmem:[%s3723] sm:$0xf]
      %v3725 = vld [vmem:[%s3723 + $0x4] sm:$0xf]
      %v3726 = vld [vmem:[%s3723 + $0x8] sm:$0xf]
      %v3727 = vld [vmem:[%s3723 + $0xc] sm:$0xf]
      %v3728 = vld [vmem:[%s3723 + $0x10] sm:$0xf]
      %v3729 = vld [vmem:[%s3723 + $0x14] sm:$0xf]
      %v3730 = vld [vmem:[%s3723 + $0x18] sm:$0xf]
      %v3731 = vld [vmem:[%s3723 + $0x1c] sm:$0xf]
      %s3732 = scalar_lea.vmem %s6, 1
      %v3733 = vld [vmem:[%s3732] sm:$0x1]
      %s3734 = scalar_lea.vmem %s7, 32
      %v3735 = vld [vmem:[%s3734] sm:$0xf]
      %v3736 = vld [vmem:[%s3734 + $0x4] sm:$0xf]
      %v3737 = vld [vmem:[%s3734 + $0x8] sm:$0xf]
      %v3738 = vld [vmem:[%s3734 + $0xc] sm:$0xf]
      %v3739 = vld [vmem:[%s3734 + $0x10] sm:$0xf]
      %v3740 = vld [vmem:[%s3734 + $0x14] sm:$0xf]
      %v3741 = vld [vmem:[%s3734 + $0x18] sm:$0xf]
      %v3742 = vld [vmem:[%s3734 + $0x1c] sm:$0xf]
      %s3743 = scalar_lea.vmem %s8, 1
      %v3744 = vld [vmem:[%s3743] sm:$0x1]
      %s3745 = scalar_lea.vmem %s9, 32
      %v3746 = vld [vmem:[%s3745] sm:$0xf]
      %v3747 = vld [vmem:[%s3745 + $0x4] sm:$0xf]
      %v3748 = vld [vmem:[%s3745 + $0x8] sm:$0xf]
      %v3749 = vld [vmem:[%s3745 + $0xc] sm:$0xf]
      %v3750 = vld [vmem:[%s3745 + $0x10] sm:$0xf]
      %v3751 = vld [vmem:[%s3745 + $0x14] sm:$0xf]
      %v3752 = vld [vmem:[%s3745 + $0x18] sm:$0xf]
      %v3753 = vld [vmem:[%s3745 + $0x1c] sm:$0xf]
      %s3754 = scalar_lea.vmem %s10, 1
      %v3755 = vld [vmem:[%s3754] sm:$0x1]
      %s3756 = scalar_lea.vmem %s11, 32
      %v3757 = vld [vmem:[%s3756] sm:$0xf]
      %v3758 = vld [vmem:[%s3756 + $0x4] sm:$0xf]
      %v3759 = vld [vmem:[%s3756 + $0x8] sm:$0xf]
      %v3760 = vld [vmem:[%s3756 + $0xc] sm:$0xf]
      %v3761 = vld [vmem:[%s3756 + $0x10] sm:$0xf]
      %v3762 = vld [vmem:[%s3756 + $0x14] sm:$0xf]
      %v3763 = vld [vmem:[%s3756 + $0x18] sm:$0xf]
      %v3764 = vld [vmem:[%s3756 + $0x1c] sm:$0xf]
      %s3765 = scalar_lea.vmem %s12, 1
      %v3766 = vld [vmem:[%s3765] sm:$0x1]
      %s3767 = scalar_lea.vmem %s13, 1
      %v3768 = vld [vmem:[%s3767] sm:$0x1]
      %s3769 = scalar_lea.vmem %s14, 1
      %v3770 = vld [vmem:[%s3769] sm:$0x1]
      %s3771 = scalar_lea.vmem %s15, 64
      %v3772 = vld [vmem:[%s3771] sm:$0xff]
      %v3773 = vld [vmem:[%s3771 + $0x8] sm:$0xff]
      %v3774 = vld [vmem:[%s3771 + $0x10] sm:$0xff]
      %v3775 = vld [vmem:[%s3771 + $0x18] sm:$0xff]
      %v3776 = vld [vmem:[%s3771 + $0x20] sm:$0xff]
      %v3777 = vld [vmem:[%s3771 + $0x28] sm:$0xff]
      %v3778 = vld [vmem:[%s3771 + $0x30] sm:$0xff]
      %v3779 = vld [vmem:[%s3771 + $0x38] sm:$0xff]
      %s3780 = scalar_lea.vmem %s16, 2
      %v3781 = vld [vmem:[%s3780] sm:$0x3]
      %s3782 = scalar_lea.vmem %s17, 128
      %v3783 = vld [vmem:[%s3782] sm:$0xf]
      %v3784 = vld [vmem:[%s3782 + $0x4] sm:$0xf]
      %v3785 = vld [vmem:[%s3782 + $0x8] sm:$0xf]
      %v3786 = vld [vmem:[%s3782 + $0xc] sm:$0xf]
      %v3787 = vld [vmem:[%s3782 + $0x10] sm:$0xf]
      %v3788 = vld [vmem:[%s3782 + $0x14] sm:$0xf]
      %v3789 = vld [vmem:[%s3782 + $0x18] sm:$0xf]
      %v3790 = vld [vmem:[%s3782 + $0x1c] sm:$0xf]
      %v3791 = vld [vmem:[%s3782 + $0x20] sm:$0xf]
      %v3792 = vld [vmem:[%s3782 + $0x24] sm:$0xf]
      %v3793 = vld [vmem:[%s3782 + $0x28] sm:$0xf]
      %v3794 = vld [vmem:[%s3782 + $0x2c] sm:$0xf]
      %v3795 = vld [vmem:[%s3782 + $0x30] sm:$0xf]
      %v3796 = vld [vmem:[%s3782 + $0x34] sm:$0xf]
      %v3797 = vld [vmem:[%s3782 + $0x38] sm:$0xf]
      %v3798 = vld [vmem:[%s3782 + $0x3c] sm:$0xf]
      %v3799 = vld [vmem:[%s3782 + $0x40] sm:$0xf]
      %v3800 = vld [vmem:[%s3782 + $0x44] sm:$0xf]
      %v3801 = vld [vmem:[%s3782 + $0x48] sm:$0xf]
      %v3802 = vld [vmem:[%s3782 + $0x4c] sm:$0xf]
      %v3803 = vld [vmem:[%s3782 + $0x50] sm:$0xf]
      %v3804 = vld [vmem:[%s3782 + $0x54] sm:$0xf]
      %v3805 = vld [vmem:[%s3782 + $0x58] sm:$0xf]
      %v3806 = vld [vmem:[%s3782 + $0x5c] sm:$0xf]
      %v3807 = vld [vmem:[%s3782 + $0x60] sm:$0xf]
      %v3808 = vld [vmem:[%s3782 + $0x64] sm:$0xf]
      %v3809 = vld [vmem:[%s3782 + $0x68] sm:$0xf]
      %v3810 = vld [vmem:[%s3782 + $0x6c] sm:$0xf]
      %v3811 = vld [vmem:[%s3782 + $0x70] sm:$0xf]
      %v3812 = vld [vmem:[%s3782 + $0x74] sm:$0xf]
      %v3813 = vld [vmem:[%s3782 + $0x78] sm:$0xf]
      %v3814 = vld [vmem:[%s3782 + $0x7c] sm:$0xf]
      %s3815 = scalar_lea.vmem %s18, 1
      %v3816 = vld [vmem:[%s3815] sm:$0x1]
      %v3817 = vsel %vm671, %v3711, 0.0
      %3818 = vadd.xlane.f32.xlu0 %v3817
      %v3819 = vpop.xlane.xlu0 %3818
      %v3820 = vsel %vm671, %v3712, 0.0
      %3821 = vadd.xlane.f32.xlu0 %v3820
      %v3822 = vpop.xlane.xlu0 %3821
      %v3823 = vsel %vm671, %v3713, 0.0
      %3824 = vadd.xlane.f32.xlu0 %v3823
      %v3825 = vpop.xlane.xlu0 %3824
      %v3826 = vsel %vm671, %v3714, 0.0
      %3827 = vadd.xlane.f32.xlu0 %v3826
      %v3828 = vpop.xlane.xlu0 %3827
      %v3829 = vsel %vm671, %v3715, 0.0
      %3830 = vadd.xlane.f32.xlu0 %v3829
      %v3831 = vpop.xlane.xlu0 %3830
      %v3832 = vsel %vm671, %v3716, 0.0
      %3833 = vadd.xlane.f32.xlu0 %v3832
      %v3834 = vpop.xlane.xlu0 %3833
      %v3835 = vsel %vm671, %v3717, 0.0
      %3836 = vadd.xlane.f32.xlu0 %v3835
      %v3837 = vpop.xlane.xlu0 %3836
      %v3838 = vsel %vm671, %v3718, 0.0
      %3839 = vadd.xlane.f32.xlu0 %v3838
      %v3840 = vpop.xlane.xlu0 %3839
      %v3841 = vmul.f32 %v3819, %v696
      %v3842 = vmul.f32 %v3822, %v696
      %v3843 = vmul.f32 %v3825, %v696
      %v3844 = vmul.f32 %v3828, %v696
      %v3845 = vmul.f32 %v3831, %v696
      %v3846 = vmul.f32 %v3834, %v696
      %v3847 = vmul.f32 %v3837, %v696
      %v3848 = vmul.f32 %v3840, %v696
      %v3849 = vsub.f32 %v3711, %v3841
      %v3850 = vsub.f32 %v3712, %v3842
      %v3851 = vsub.f32 %v3713, %v3843
      %v3852 = vsub.f32 %v3714, %v3844
      %v3853 = vsub.f32 %v3715, %v3845
      %v3854 = vsub.f32 %v3716, %v3846
      %v3855 = vsub.f32 %v3717, %v3847
      %v3856 = vsub.f32 %v3718, %v3848
      %v3857 = vmul.f32 %v3849, %v3849
      %v3858 = vmul.f32 %v3850, %v3850
      %v3859 = vmul.f32 %v3851, %v3851
      %v3860 = vmul.f32 %v3852, %v3852
      %v3861 = vmul.f32 %v3853, %v3853
      %v3862 = vmul.f32 %v3854, %v3854
      %v3863 = vmul.f32 %v3855, %v3855
      %v3864 = vmul.f32 %v3856, %v3856
      %v3865 = vsel %vm671, %v3857, 0.0
      %3866 = vadd.xlane.f32.xlu0 %v3865
      %v3867 = vpop.xlane.xlu0 %3866
      %v3868 = vsel %vm671, %v3858, 0.0
      %3869 = vadd.xlane.f32.xlu0 %v3868
      %v3870 = vpop.xlane.xlu0 %3869
      %v3871 = vsel %vm671, %v3859, 0.0
      %3872 = vadd.xlane.f32.xlu0 %v3871
      %v3873 = vpop.xlane.xlu0 %3872
      %v3874 = vsel %vm671, %v3860, 0.0
      %3875 = vadd.xlane.f32.xlu0 %v3874
      %v3876 = vpop.xlane.xlu0 %3875
      %v3877 = vsel %vm671, %v3861, 0.0
      %3878 = vadd.xlane.f32.xlu0 %v3877
      %v3879 = vpop.xlane.xlu0 %3878
      %v3880 = vsel %vm671, %v3862, 0.0
      %3881 = vadd.xlane.f32.xlu0 %v3880
      %v3882 = vpop.xlane.xlu0 %3881
      %v3883 = vsel %vm671, %v3863, 0.0
      %3884 = vadd.xlane.f32.xlu0 %v3883
      %v3885 = vpop.xlane.xlu0 %3884
      %v3886 = vsel %vm671, %v3864, 0.0
      %3887 = vadd.xlane.f32.xlu0 %v3886
      %v3888 = vpop.xlane.xlu0 %3887
      %v3889 = vmul.f32 %v3867, %v696
      %v3890 = vmul.f32 %v3870, %v696
      %v3891 = vmul.f32 %v3873, %v696
      %v3892 = vmul.f32 %v3876, %v696
      %v3893 = vmul.f32 %v3879, %v696
      %v3894 = vmul.f32 %v3882, %v696
      %v3895 = vmul.f32 %v3885, %v696
      %v3896 = vmul.f32 %v3888, %v696
      %v3897 = vadd.f32 %v3889, 1e-05
      %v3898 = vadd.f32 %v3890, 1e-05
      %v3899 = vadd.f32 %v3891, 1e-05
      %v3900 = vadd.f32 %v3892, 1e-05
      %v3901 = vadd.f32 %v3893, 1e-05
      %v3902 = vadd.f32 %v3894, 1e-05
      %v3903 = vadd.f32 %v3895, 1e-05
      %v3904 = vadd.f32 %v3896, 1e-05
      %v3905 = vrsqrt.pop %v3897
      %v3906 = vrsqrt.pop %v3898
      %v3907 = vrsqrt.pop %v3899
      %v3908 = vrsqrt.pop %v3900
      %v3909 = vrsqrt.pop %v3901
      %v3910 = vrsqrt.pop %v3902
      %v3911 = vrsqrt.pop %v3903
      %v3912 = vrsqrt.pop %v3904
      %v3913 = vmul.f32 %v3849, %v3905
      %v3914 = vmul.f32 %v3850, %v3906
      %v3915 = vmul.f32 %v3851, %v3907
      %v3916 = vmul.f32 %v3852, %v3908
      %v3917 = vmul.f32 %v3853, %v3909
      %v3918 = vmul.f32 %v3854, %v3910
      %v3919 = vmul.f32 %v3855, %v3911
      %v3920 = vmul.f32 %v3856, %v3912
      %v3922 = vlaneseq
      %v3923 = vshrl.u32 %v3922, 7
      %v3924 = vsub.s32 0, %v3923
      %v3925 = vrot.slane %v3720, %v3924
      %v3927 = vmul.f32 %v3913, %v3925
      %v3928 = vmul.f32 %v3914, %v3925
      %v3929 = vmul.f32 %v3915, %v3925
      %v3930 = vmul.f32 %v3916, %v3925
      %v3931 = vmul.f32 %v3917, %v3925
      %v3932 = vmul.f32 %v3918, %v3925
      %v3933 = vmul.f32 %v3919, %v3925
      %v3934 = vmul.f32 %v3920, %v3925
      %v3936 = vlaneseq
      %v3937 = vshrl.u32 %v3936, 7
      %v3938 = vsub.s32 0, %v3937
      %v3939 = vrot.slane %v3722, %v3938
      %v3941 = vadd.f32 %v3927, %v3939
      %v3942 = vadd.f32 %v3928, %v3939
      %v3943 = vadd.f32 %v3929, %v3939
      %v3944 = vadd.f32 %v3930, %v3939
      %v3945 = vadd.f32 %v3931, %v3939
      %v3946 = vadd.f32 %v3932, %v3939
      %v3947 = vadd.f32 %v3933, %v3939
      %v3948 = vadd.f32 %v3934, %v3939
      %v3949 = vpack.c.bf16 %v3942, %v3941
      %v3950 = vpack.c.bf16 %v3944, %v3943
      %v3951 = vpack.c.bf16 %v3946, %v3945
      %v3952 = vpack.c.bf16 %v3948, %v3947
      %v3954 = vlaneseq
      %v3955 = vshrl.u32 %v3954, 7
      %v3956 = vsub.s32 0, %v3955
      %v3957 = vrot.slane %v3733, %v3956
      %v3967 = vunpack.c.l.b16 %v3724
      %v3968 = vunpack.c.l.b16 %v3725
      %v3969 = vunpack.c.l.b16 %v3726
      %v3970 = vunpack.c.l.b16 %v3727
      %v3971 = vunpack.c.l.b16 %v3728
      %v3972 = vunpack.c.l.b16 %v3729
      %v3973 = vunpack.c.l.b16 %v3730
      %v3974 = vunpack.c.l.b16 %v3731
      %v3975 = vpack.c.b16 %v3968, %v3967
      %v3976 = vpack.c.b16 %v3970, %v3969
      %v3977 = vpack.c.b16 %v3972, %v3971
      %v3978 = vpack.c.b16 %v3974, %v3973
      %v3984 = vsel %vm671, %v3949, 0
      %v3987 = vsel %vm671, %v3950, 0
      %v3990 = vsel %vm671, %v3951, 0
      %v3993 = vsel %vm671, %v3952, 0
      %3995 = vmatprep.subr.bf16.mxu0 0
      %3996 = vmatpush1.bf16.msra.mxu0 0
      %3997 = vmatprep.subr.bf16.mxu0 0
      %3998 = vmatpush1.bf16.msra.mxu0 0
      %3999 = vmatprep.subr.bf16.mxu0 0
      %4000 = vmatpush1.bf16.msra.mxu0 0
      %4001 = vmatprep.subr.bf16.mxu0 0
      %4002 = vmatpush1.bf16.msra.mxu0 0
      %4003 = vmatprep.subr.bf16.mxu0 0
      %4004 = vmatpush1.bf16.msra.mxu0 %v3978
      %4005 = vmatprep.subr.bf16.mxu0 0
      %4006 = vmatpush1.bf16.msra.mxu0 %v3977
      %4007 = vmatprep.subr.bf16.mxu0 0
      %4008 = vmatpush1.bf16.msra.mxu0 %v3976
      %4009 = vmatprep.subr.bf16.mxu0 0
      %4010 = vmatpush1.bf16.msra.mxu0 %v3975
      %4011 = vmatprep.subr.bf16.mxu0 0
      %4012 = vmatpush2.bf16.msra.mxu0 0
      %4013 = vmatprep.subr.bf16.mxu0 0
      %4014 = vmatpush2.bf16.msra.mxu0 0
      %4015 = vmatprep.subr.bf16.mxu0 0
      %4016 = vmatpush2.bf16.msra.mxu0 0
      %4017 = vmatprep.subr.bf16.mxu0 0
      %4018 = vmatpush2.bf16.msra.mxu0 0
      %4019 = vmatprep.subr.bf16.mxu0 0
      %4020 = vmatpush2.bf16.msra.mxu0 0
      %4021 = vmatprep.subr.bf16.mxu0 0
      %4022 = vmatpush2.bf16.msra.mxu0 0
      %4023 = vmatprep.subr.bf16.mxu0 0
      %4024 = vmatpush2.bf16.msra.mxu0 0
      %4025 = vmatprep.subr.bf16.mxu0 0
      %4026 = vmatpush2.bf16.msra.mxu0 0
      %4027 = vmatprep.mubr.bf16.mxu0 0
      %4028 = vmatmul.mubr.bf16.gmra.mxu0 %v3984
      %v4029 = vpop.f32.mrf.mxu0
      %v4030 = vadd.f32 %v3957, %v4029
      %v4031 = vpop.f32.mrf.mxu0
      %v4032 = vpop.f32.mrf.mxu0
      %v4033 = vadd.f32 %v3957, %v4032
      %v4034 = vpop.f32.mrf.mxu0
      %4035 = vmatprep.mubr.bf16.mxu0 0
      %4036 = vmatmul.mubr.bf16.gmra.mxu0 %v3987
      %v4037 = vpop.f32.mrf.mxu0
      %v4038 = vadd.f32 %v3957, %v4037
      %v4039 = vpop.f32.mrf.mxu0
      %v4040 = vpop.f32.mrf.mxu0
      %v4041 = vadd.f32 %v3957, %v4040
      %v4042 = vpop.f32.mrf.mxu0
      %4043 = vmatprep.mubr.bf16.mxu0 0
      %4044 = vmatmul.mubr.bf16.gmra.mxu0 %v3990
      %v4045 = vpop.f32.mrf.mxu0
      %v4046 = vadd.f32 %v3957, %v4045
      %v4047 = vpop.f32.mrf.mxu0
      %v4048 = vpop.f32.mrf.mxu0
      %v4049 = vadd.f32 %v3957, %v4048
      %v4050 = vpop.f32.mrf.mxu0
      %4051 = vmatprep.mubr.bf16.mxu0 0
      %4052 = vmatmul.mubr.bf16.gmra.mxu0 %v3993
      %v4053 = vpop.f32.mrf.mxu0
      %v4054 = vadd.f32 %v3957, %v4053
      %v4055 = vpop.f32.mrf.mxu0
      %v4056 = vpop.f32.mrf.mxu0
      %v4057 = vadd.f32 %v3957, %v4056
      %v4058 = vpop.f32.mrf.mxu0
      %4059 = vdwg.mxu0
      %v4061 = vlaneseq
      %v4062 = vshrl.u32 %v4061, 7
      %v4063 = vsub.s32 0, %v4062
      %v4064 = vrot.slane %v3744, %v4063
      %v4074 = vunpack.c.l.b16 %v3735
      %v4075 = vunpack.c.l.b16 %v3736
      %v4076 = vunpack.c.l.b16 %v3737
      %v4077 = vunpack.c.l.b16 %v3738
      %v4078 = vunpack.c.l.b16 %v3739
      %v4079 = vunpack.c.l.b16 %v3740
      %v4080 = vunpack.c.l.b16 %v3741
      %v4081 = vunpack.c.l.b16 %v3742
      %v4082 = vpack.c.b16 %v4075, %v4074
      %v4083 = vpack.c.b16 %v4077, %v4076
      %v4084 = vpack.c.b16 %v4079, %v4078
      %v4085 = vpack.c.b16 %v4081, %v4080
      %4090 = vmatprep.subr.bf16.mxu0 0
      %4091 = vmatpush1.bf16.msra.mxu0 0
      %4092 = vmatprep.subr.bf16.mxu0 0
      %4093 = vmatpush1.bf16.msra.mxu0 0
      %4094 = vmatprep.subr.bf16.mxu0 0
      %4095 = vmatpush1.bf16.msra.mxu0 0
      %4096 = vmatprep.subr.bf16.mxu0 0
      %4097 = vmatpush1.bf16.msra.mxu0 0
      %4098 = vmatprep.subr.bf16.mxu0 0
      %4099 = vmatpush1.bf16.msra.mxu0 %v4085
      %4100 = vmatprep.subr.bf16.mxu0 0
      %4101 = vmatpush1.bf16.msra.mxu0 %v4084
      %4102 = vmatprep.subr.bf16.mxu0 0
      %4103 = vmatpush1.bf16.msra.mxu0 %v4083
      %4104 = vmatprep.subr.bf16.mxu0 0
      %4105 = vmatpush1.bf16.msra.mxu0 %v4082
      %4106 = vmatprep.subr.bf16.mxu0 0
      %4107 = vmatpush2.bf16.msra.mxu0 0
      %4108 = vmatprep.subr.bf16.mxu0 0
      %4109 = vmatpush2.bf16.msra.mxu0 0
      %4110 = vmatprep.subr.bf16.mxu0 0
      %4111 = vmatpush2.bf16.msra.mxu0 0
      %4112 = vmatprep.subr.bf16.mxu0 0
      %4113 = vmatpush2.bf16.msra.mxu0 0
      %4114 = vmatprep.subr.bf16.mxu0 0
      %4115 = vmatpush2.bf16.msra.mxu0 0
      %4116 = vmatprep.subr.bf16.mxu0 0
      %4117 = vmatpush2.bf16.msra.mxu0 0
      %4118 = vmatprep.subr.bf16.mxu0 0
      %4119 = vmatpush2.bf16.msra.mxu0 0
      %4120 = vmatprep.subr.bf16.mxu0 0
      %4121 = vmatpush2.bf16.msra.mxu0 0
      %4122 = vmatprep.mubr.bf16.mxu0 0
      %4123 = vmatmul.mubr.bf16.gmra.mxu0 %v3984
      %v4124 = vpop.f32.mrf.mxu0
      %v4125 = vadd.f32 %v4064, %v4124
      %v4126 = vpop.f32.mrf.mxu0
      %v4127 = vpop.f32.mrf.mxu0
      %v4128 = vadd.f32 %v4064, %v4127
      %v4129 = vpop.f32.mrf.mxu0
      %4130 = vmatprep.mubr.bf16.mxu0 0
      %4131 = vmatmul.mubr.bf16.gmra.mxu0 %v3987
      %v4132 = vpop.f32.mrf.mxu0
      %v4133 = vadd.f32 %v4064, %v4132
      %v4134 = vpop.f32.mrf.mxu0
      %v4135 = vpop.f32.mrf.mxu0
      %v4136 = vadd.f32 %v4064, %v4135
      %v4137 = vpop.f32.mrf.mxu0
      %4138 = vmatprep.mubr.bf16.mxu0 0
      %4139 = vmatmul.mubr.bf16.gmra.mxu0 %v3990
      %v4140 = vpop.f32.mrf.mxu0
      %v4141 = vadd.f32 %v4064, %v4140
      %v4142 = vpop.f32.mrf.mxu0
      %v4143 = vpop.f32.mrf.mxu0
      %v4144 = vadd.f32 %v4064, %v4143
      %v4145 = vpop.f32.mrf.mxu0
      %4146 = vmatprep.mubr.bf16.mxu0 0
      %4147 = vmatmul.mubr.bf16.gmra.mxu0 %v3993
      %v4148 = vpop.f32.mrf.mxu0
      %v4149 = vadd.f32 %v4064, %v4148
      %v4150 = vpop.f32.mrf.mxu0
      %v4151 = vpop.f32.mrf.mxu0
      %v4152 = vadd.f32 %v4064, %v4151
      %v4153 = vpop.f32.mrf.mxu0
      %4154 = vdwg.mxu0
      %v4156 = vlaneseq
      %v4157 = vshrl.u32 %v4156, 7
      %v4158 = vsub.s32 0, %v4157
      %v4159 = vrot.slane %v3755, %v4158
      %v4169 = vunpack.c.l.b16 %v3746
      %v4170 = vunpack.c.l.b16 %v3747
      %v4171 = vunpack.c.l.b16 %v3748
      %v4172 = vunpack.c.l.b16 %v3749
      %v4173 = vunpack.c.l.b16 %v3750
      %v4174 = vunpack.c.l.b16 %v3751
      %v4175 = vunpack.c.l.b16 %v3752
      %v4176 = vunpack.c.l.b16 %v3753
      %v4177 = vpack.c.b16 %v4170, %v4169
      %v4178 = vpack.c.b16 %v4172, %v4171
      %v4179 = vpack.c.b16 %v4174, %v4173
      %v4180 = vpack.c.b16 %v4176, %v4175
      %4185 = vmatprep.subr.bf16.mxu0 0
      %4186 = vmatpush1.bf16.msra.mxu0 0
      %4187 = vmatprep.subr.bf16.mxu0 0
      %4188 = vmatpush1.bf16.msra.mxu0 0
      %4189 = vmatprep.subr.bf16.mxu0 0
      %4190 = vmatpush1.bf16.msra.mxu0 0
      %4191 = vmatprep.subr.bf16.mxu0 0
      %4192 = vmatpush1.bf16.msra.mxu0 0
      %4193 = vmatprep.subr.bf16.mxu0 0
      %4194 = vmatpush1.bf16.msra.mxu0 %v4180
      %4195 = vmatprep.subr.bf16.mxu0 0
      %4196 = vmatpush1.bf16.msra.mxu0 %v4179
      %4197 = vmatprep.subr.bf16.mxu0 0
      %4198 = vmatpush1.bf16.msra.mxu0 %v4178
      %4199 = vmatprep.subr.bf16.mxu0 0
      %4200 = vmatpush1.bf16.msra.mxu0 %v4177
      %4201 = vmatprep.subr.bf16.mxu0 0
      %4202 = vmatpush2.bf16.msra.mxu0 0
      %4203 = vmatprep.subr.bf16.mxu0 0
      %4204 = vmatpush2.bf16.msra.mxu0 0
      %4205 = vmatprep.subr.bf16.mxu0 0
      %4206 = vmatpush2.bf16.msra.mxu0 0
      %4207 = vmatprep.subr.bf16.mxu0 0
      %4208 = vmatpush2.bf16.msra.mxu0 0
      %4209 = vmatprep.subr.bf16.mxu0 0
      %4210 = vmatpush2.bf16.msra.mxu0 0
      %4211 = vmatprep.subr.bf16.mxu0 0
      %4212 = vmatpush2.bf16.msra.mxu0 0
      %4213 = vmatprep.subr.bf16.mxu0 0
      %4214 = vmatpush2.bf16.msra.mxu0 0
      %4215 = vmatprep.subr.bf16.mxu0 0
      %4216 = vmatpush2.bf16.msra.mxu0 0
      %4217 = vmatprep.mubr.bf16.mxu0 0
      %4218 = vmatmul.mubr.bf16.gmra.mxu0 %v3984
      %v4219 = vpop.f32.mrf.mxu0
      %v4220 = vadd.f32 %v4159, %v4219
      %v4221 = vpop.f32.mrf.mxu0
      %v4222 = vpop.f32.mrf.mxu0
      %v4223 = vadd.f32 %v4159, %v4222
      %v4224 = vpop.f32.mrf.mxu0
      %4225 = vmatprep.mubr.bf16.mxu0 0
      %4226 = vmatmul.mubr.bf16.gmra.mxu0 %v3987
      %v4227 = vpop.f32.mrf.mxu0
      %v4228 = vadd.f32 %v4159, %v4227
      %v4229 = vpop.f32.mrf.mxu0
      %v4230 = vpop.f32.mrf.mxu0
      %v4231 = vadd.f32 %v4159, %v4230
      %v4232 = vpop.f32.mrf.mxu0
      %4233 = vmatprep.mubr.bf16.mxu0 0
      %4234 = vmatmul.mubr.bf16.gmra.mxu0 %v3990
      %v4235 = vpop.f32.mrf.mxu0
      %v4236 = vadd.f32 %v4159, %v4235
      %v4237 = vpop.f32.mrf.mxu0
      %v4238 = vpop.f32.mrf.mxu0
      %v4239 = vadd.f32 %v4159, %v4238
      %v4240 = vpop.f32.mrf.mxu0
      %4241 = vmatprep.mubr.bf16.mxu0 0
      %4242 = vmatmul.mubr.bf16.gmra.mxu0 %v3993
      %v4243 = vpop.f32.mrf.mxu0
      %v4244 = vadd.f32 %v4159, %v4243
      %v4245 = vpop.f32.mrf.mxu0
      %v4246 = vpop.f32.mrf.mxu0
      %v4247 = vadd.f32 %v4159, %v4246
      %v4248 = vpop.f32.mrf.mxu0
      %4249 = vdwg.mxu0
      %v4251 = vlaneseq
      %v4252 = vshrl.u32 %v4251, 7
      %v4253 = vsub.s32 0, %v4252
      %v4254 = vrot.slane %v3766, %v4253
      %v4256 = vadd.f32 %v3711, %v4254
      %v4257 = vadd.f32 %v3712, %v4254
      %v4258 = vadd.f32 %v3713, %v4254
      %v4259 = vadd.f32 %v3714, %v4254
      %v4260 = vadd.f32 %v3715, %v4254
      %v4261 = vadd.f32 %v3716, %v4254
      %v4262 = vadd.f32 %v3717, %v4254
      %v4263 = vadd.f32 %v3718, %v4254
      %v4264 = vmul.f32 %v4030, 0.25
      %v4265 = vmul.f32 %v4033, 0.25
      %v4266 = vmul.f32 %v4038, 0.25
      %v4267 = vmul.f32 %v4041, 0.25
      %v4268 = vmul.f32 %v4046, 0.25
      %v4269 = vmul.f32 %v4049, 0.25
      %v4270 = vmul.f32 %v4054, 0.25
      %v4271 = vmul.f32 %v4057, 0.25
      %v4272 = vpack.c.bf16 %v4265, %v4264
      %v4273 = vpack.c.bf16 %v4267, %v4266
      %v4274 = vpack.c.bf16 %v4269, %v4268
      %v4275 = vpack.c.bf16 %v4271, %v4270
      %v4276 = vpack.c.bf16 %v4128, %v4125
      %v4277 = vpack.c.bf16 %v4136, %v4133
      %v4278 = vpack.c.bf16 %v4144, %v4141
      %v4279 = vpack.c.bf16 %v4152, %v4149
      %v4280 = vpack.c.bf16 %v4223, %v4220
      %v4281 = vpack.c.bf16 %v4231, %v4228
      %v4282 = vpack.c.bf16 %v4239, %v4236
      %v4283 = vpack.c.bf16 %v4247, %v4244
      %v4285 = vsel %vm1354, %v4272, 0
      %v4288 = vsel %vm1354, %v4273, 0
      %v4291 = vsel %vm1354, %v4276, 0
      %v4294 = vsel %vm1354, %v4277, 0
      %4296 = vmatprep.subr.bf16.mxu0 0
      %4297 = vmatpush1.bf16.xpose.msra.mxu0 0
      %4298 = vmatprep.subr.bf16.mxu0 0
      %4299 = vmatpush1.bf16.xpose.msra.mxu0 0
      %4300 = vmatprep.subr.bf16.mxu0 0
      %4301 = vmatpush1.bf16.xpose.msra.mxu0 0
      %4302 = vmatprep.subr.bf16.mxu0 0
      %4303 = vmatpush1.bf16.xpose.msra.mxu0 0
      %4304 = vmatprep.subr.bf16.mxu0 0
      %4305 = vmatpush1.bf16.xpose.msra.mxu0 0
      %4306 = vmatprep.subr.bf16.mxu0 0
      %4307 = vmatpush1.bf16.xpose.msra.mxu0 0
      %4308 = vmatprep.subr.bf16.mxu0 0
      %4309 = vmatpush1.bf16.xpose.msra.mxu0 %v4294
      %4310 = vmatprep.subr.bf16.mxu0 0
      %4311 = vmatpush1.bf16.xpose.msra.mxu0 %v4291
      %4312 = vmatprep.subr.bf16.mxu0 0
      %4313 = vmatpush2.bf16.xpose.msra.mxu0 0
      %4314 = vmatprep.subr.bf16.mxu0 0
      %4315 = vmatpush2.bf16.xpose.msra.mxu0 0
      %4316 = vmatprep.subr.bf16.mxu0 0
      %4317 = vmatpush2.bf16.xpose.msra.mxu0 0
      %4318 = vmatprep.subr.bf16.mxu0 0
      %4319 = vmatpush2.bf16.xpose.msra.mxu0 0
      %4320 = vmatprep.subr.bf16.mxu0 0
      %4321 = vmatpush2.bf16.xpose.msra.mxu0 0
      %4322 = vmatprep.subr.bf16.mxu0 0
      %4323 = vmatpush2.bf16.xpose.msra.mxu0 0
      %4324 = vmatprep.subr.bf16.mxu0 0
      %4325 = vmatpush2.bf16.xpose.msra.mxu0 0
      %4326 = vmatprep.subr.bf16.mxu0 0
      %4327 = vmatpush2.bf16.xpose.msra.mxu0 0
      %4328 = vmatprep.mubr.bf16.mxu0 0
      %4329 = vmatmul.mubr.bf16.gmra.mxu0 %v4285
      %v4330 = vpop.f32.mrf.mxu0
      %v4331 = vadd.f32 0.0, %v4330
      %v4332 = vpop.f32.mrf.mxu0
      %v4333 = vpop.f32.mrf.mxu0
      %v4334 = vadd.f32 0.0, %v4333
      %v4335 = vpop.f32.mrf.mxu0
      %4336 = vmatprep.mubr.bf16.mxu0 0
      %4337 = vmatmul.mubr.bf16.gmra.mxu0 %v4288
      %v4338 = vpop.f32.mrf.mxu0
      %v4339 = vadd.f32 0.0, %v4338
      %v4340 = vpop.f32.mrf.mxu0
      %v4341 = vpop.f32.mrf.mxu0
      %v4342 = vadd.f32 0.0, %v4341
      %v4343 = vpop.f32.mrf.mxu0
      %4344 = vdwg.mxu0
      %v4346 = vsel %vm1354, %v4274, 0
      %v4349 = vsel %vm1354, %v4275, 0
      %v4352 = vsel %vm1354, %v4278, 0
      %v4355 = vsel %vm1354, %v4279, 0
      %4357 = vmatprep.subr.bf16.mxu0 0
      %4358 = vmatpush1.bf16.xpose.msra.mxu0 0
      %4359 = vmatprep.subr.bf16.mxu0 0
      %4360 = vmatpush1.bf16.xpose.msra.mxu0 0
      %4361 = vmatprep.subr.bf16.mxu0 0
      %4362 = vmatpush1.bf16.xpose.msra.mxu0 0
      %4363 = vmatprep.subr.bf16.mxu0 0
      %4364 = vmatpush1.bf16.xpose.msra.mxu0 0
      %4365 = vmatprep.subr.bf16.mxu0 0
      %4366 = vmatpush1.bf16.xpose.msra.mxu0 0
      %4367 = vmatprep.subr.bf16.mxu0 0
      %4368 = vmatpush1.bf16.xpose.msra.mxu0 0
      %4369 = vmatprep.subr.bf16.mxu0 0
      %4370 = vmatpush1.bf16.xpose.msra.mxu0 %v4355
      %4371 = vmatprep.subr.bf16.mxu0 0
      %4372 = vmatpush1.bf16.xpose.msra.mxu0 %v4352
      %4373 = vmatprep.subr.bf16.mxu0 0
      %4374 = vmatpush2.bf16.xpose.msra.mxu0 0
      %4375 = vmatprep.subr.bf16.mxu0 0
      %4376 = vmatpush2.bf16.xpose.msra.mxu0 0
      %4377 = vmatprep.subr.bf16.mxu0 0
      %4378 = vmatpush2.bf16.xpose.msra.mxu0 0
      %4379 = vmatprep.subr.bf16.mxu0 0
      %4380 = vmatpush2.bf16.xpose.msra.mxu0 0
      %4381 = vmatprep.subr.bf16.mxu0 0
      %4382 = vmatpush2.bf16.xpose.msra.mxu0 0
      %4383 = vmatprep.subr.bf16.mxu0 0
      %4384 = vmatpush2.bf16.xpose.msra.mxu0 0
      %4385 = vmatprep.subr.bf16.mxu0 0
      %4386 = vmatpush2.bf16.xpose.msra.mxu0 0
      %4387 = vmatprep.subr.bf16.mxu0 0
      %4388 = vmatpush2.bf16.xpose.msra.mxu0 0
      %4389 = vmatprep.mubr.bf16.mxu0 0
      %4390 = vmatmul.mubr.bf16.gmra.mxu0 %v4346
      %v4391 = vpop.f32.mrf.mxu0
      %v4392 = vadd.f32 0.0, %v4391
      %v4393 = vpop.f32.mrf.mxu0
      %v4394 = vpop.f32.mrf.mxu0
      %v4395 = vadd.f32 0.0, %v4394
      %v4396 = vpop.f32.mrf.mxu0
      %4397 = vmatprep.mubr.bf16.mxu0 0
      %4398 = vmatmul.mubr.bf16.gmra.mxu0 %v4349
      %v4399 = vpop.f32.mrf.mxu0
      %v4400 = vadd.f32 0.0, %v4399
      %v4401 = vpop.f32.mrf.mxu0
      %v4402 = vpop.f32.mrf.mxu0
      %v4403 = vadd.f32 0.0, %v4402
      %v4404 = vpop.f32.mrf.mxu0
      %4405 = vdwg.mxu0
      %v4406 = vsel %vm1477, %v4331, -inf
      %4407 = vmax.xlane.f32.xlu0 %v4406
      %v4408 = vpop.xlane.xlu0 %4407
      %v4409 = vsel %vm1477, %v4334, -inf
      %4410 = vmax.xlane.f32.xlu0 %v4409
      %v4411 = vpop.xlane.xlu0 %4410
      %v4412 = vsel %vm1477, %v4339, -inf
      %4413 = vmax.xlane.f32.xlu0 %v4412
      %v4414 = vpop.xlane.xlu0 %4413
      %v4415 = vsel %vm1477, %v4342, -inf
      %4416 = vmax.xlane.f32.xlu0 %v4415
      %v4417 = vpop.xlane.xlu0 %4416
      %v4418 = vsel %vm1477, %v4392, -inf
      %4419 = vmax.xlane.f32.xlu0 %v4418
      %v4420 = vpop.xlane.xlu0 %4419
      %v4421 = vsel %vm1477, %v4395, -inf
      %4422 = vmax.xlane.f32.xlu0 %v4421
      %v4423 = vpop.xlane.xlu0 %4422
      %v4424 = vsel %vm1477, %v4400, -inf
      %4425 = vmax.xlane.f32.xlu0 %v4424
      %v4426 = vpop.xlane.xlu0 %4425
      %v4427 = vsel %vm1477, %v4403, -inf
      %4428 = vmax.xlane.f32.xlu0 %v4427
      %v4429 = vpop.xlane.xlu0 %4428
      %v4430 = vsub.f32 %v4331, %v4408
      %v4431 = vsub.f32 %v4334, %v4411
      %v4432 = vsub.f32 %v4339, %v4414
      %v4433 = vsub.f32 %v4342, %v4417
      %v4434 = vsub.f32 %v4392, %v4420
      %v4435 = vsub.f32 %v4395, %v4423
      %v4436 = vsub.f32 %v4400, %v4426
      %v4437 = vsub.f32 %v4403, %v4429
      %v4438 = vmul.f32 %v4430, 1.442695
      %v4439 = vpow.pop %v4438
      %v4440 = vmul.f32 %v4431, 1.442695
      %v4441 = vpow.pop %v4440
      %v4442 = vmul.f32 %v4432, 1.442695
      %v4443 = vpow.pop %v4442
      %v4444 = vmul.f32 %v4433, 1.442695
      %v4445 = vpow.pop %v4444
      %v4446 = vmul.f32 %v4434, 1.442695
      %v4447 = vpow.pop %v4446
      %v4448 = vmul.f32 %v4435, 1.442695
      %v4449 = vpow.pop %v4448
      %v4450 = vmul.f32 %v4436, 1.442695
      %v4451 = vpow.pop %v4450
      %v4452 = vmul.f32 %v4437, 1.442695
      %v4453 = vpow.pop %v4452
      %v4454 = vsel %vm1477, %v4439, 0.0
      %4455 = vadd.xlane.f32.xlu0 %v4454
      %v4456 = vpop.xlane.xlu0 %4455
      %v4457 = vsel %vm1477, %v4441, 0.0
      %4458 = vadd.xlane.f32.xlu0 %v4457
      %v4459 = vpop.xlane.xlu0 %4458
      %v4460 = vsel %vm1477, %v4443, 0.0
      %4461 = vadd.xlane.f32.xlu0 %v4460
      %v4462 = vpop.xlane.xlu0 %4461
      %v4463 = vsel %vm1477, %v4445, 0.0
      %4464 = vadd.xlane.f32.xlu0 %v4463
      %v4465 = vpop.xlane.xlu0 %4464
      %v4466 = vsel %vm1477, %v4447, 0.0
      %4467 = vadd.xlane.f32.xlu0 %v4466
      %v4468 = vpop.xlane.xlu0 %4467
      %v4469 = vsel %vm1477, %v4449, 0.0
      %4470 = vadd.xlane.f32.xlu0 %v4469
      %v4471 = vpop.xlane.xlu0 %4470
      %v4472 = vsel %vm1477, %v4451, 0.0
      %4473 = vadd.xlane.f32.xlu0 %v4472
      %v4474 = vpop.xlane.xlu0 %4473
      %v4475 = vsel %vm1477, %v4453, 0.0
      %4476 = vadd.xlane.f32.xlu0 %v4475
      %v4477 = vpop.xlane.xlu0 %4476
      %v4478 = vrcp.pop %v4456
      %v4479 = vrcp.pop %v4459
      %v4480 = vrcp.pop %v4462
      %v4481 = vrcp.pop %v4465
      %v4482 = vrcp.pop %v4468
      %v4483 = vrcp.pop %v4471
      %v4484 = vrcp.pop %v4474
      %v4485 = vrcp.pop %v4477
      %v4486 = vmul.f32 %v4439, %v4478
      %v4487 = vmul.f32 %v4441, %v4479
      %v4488 = vmul.f32 %v4443, %v4480
      %v4489 = vmul.f32 %v4445, %v4481
      %v4490 = vmul.f32 %v4447, %v4482
      %v4491 = vmul.f32 %v4449, %v4483
      %v4492 = vmul.f32 %v4451, %v4484
      %v4493 = vmul.f32 %v4453, %v4485
      %v4494 = vpack.c.bf16 %v4487, %v4486
      %v4495 = vpack.c.bf16 %v4489, %v4488
      %v4496 = vpack.c.bf16 %v4491, %v4490
      %v4497 = vpack.c.bf16 %v4493, %v4492
      %v4499 = vsel %vm1477, %v4494, 0
      %v4502 = vsel %vm1477, %v4495, 0
      %4504 = vmatprep.subr.bf16.mxu0 0
      %4505 = vmatpush1.bf16.msra.mxu0 0
      %4506 = vmatprep.subr.bf16.mxu0 0
      %4507 = vmatpush1.bf16.msra.mxu0 0
      %4508 = vmatprep.subr.bf16.mxu0 0
      %4509 = vmatpush1.bf16.msra.mxu0 0
      %4510 = vmatprep.subr.bf16.mxu0 0
      %4511 = vmatpush1.bf16.msra.mxu0 0
      %4512 = vmatprep.subr.bf16.mxu0 0
      %4513 = vmatpush1.bf16.msra.mxu0 0
      %4514 = vmatprep.subr.bf16.mxu0 0
      %4515 = vmatpush1.bf16.msra.mxu0 0
      %4516 = vmatprep.subr.bf16.mxu0 0
      %4517 = vmatpush1.bf16.msra.mxu0 %v4281
      %4518 = vmatprep.subr.bf16.mxu0 0
      %4519 = vmatpush1.bf16.msra.mxu0 %v4280
      %4520 = vmatprep.subr.bf16.mxu0 0
      %4521 = vmatpush2.bf16.msra.mxu0 0
      %4522 = vmatprep.subr.bf16.mxu0 0
      %4523 = vmatpush2.bf16.msra.mxu0 0
      %4524 = vmatprep.subr.bf16.mxu0 0
      %4525 = vmatpush2.bf16.msra.mxu0 0
      %4526 = vmatprep.subr.bf16.mxu0 0
      %4527 = vmatpush2.bf16.msra.mxu0 0
      %4528 = vmatprep.subr.bf16.mxu0 0
      %4529 = vmatpush2.bf16.msra.mxu0 0
      %4530 = vmatprep.subr.bf16.mxu0 0
      %4531 = vmatpush2.bf16.msra.mxu0 0
      %4532 = vmatprep.subr.bf16.mxu0 0
      %4533 = vmatpush2.bf16.msra.mxu0 0
      %4534 = vmatprep.subr.bf16.mxu0 0
      %4535 = vmatpush2.bf16.msra.mxu0 0
      %4536 = vmatprep.mubr.bf16.mxu0 0
      %4537 = vmatmul.mubr.bf16.gmra.mxu0 %v4499
      %v4538 = vpop.f32.mrf.mxu0
      %v4539 = vadd.f32 0.0, %v4538
      %v4540 = vpop.f32.mrf.mxu0
      %v4541 = vpop.f32.mrf.mxu0
      %v4542 = vadd.f32 0.0, %v4541
      %v4543 = vpop.f32.mrf.mxu0
      %4544 = vmatprep.mubr.bf16.mxu0 0
      %4545 = vmatmul.mubr.bf16.gmra.mxu0 %v4502
      %v4546 = vpop.f32.mrf.mxu0
      %v4547 = vadd.f32 0.0, %v4546
      %v4548 = vpop.f32.mrf.mxu0
      %v4549 = vpop.f32.mrf.mxu0
      %v4550 = vadd.f32 0.0, %v4549
      %v4551 = vpop.f32.mrf.mxu0
      %4552 = vdwg.mxu0
      %v4554 = vsel %vm1477, %v4496, 0
      %v4557 = vsel %vm1477, %v4497, 0
      %4559 = vmatprep.subr.bf16.mxu0 0
      %4560 = vmatpush1.bf16.msra.mxu0 0
      %4561 = vmatprep.subr.bf16.mxu0 0
      %4562 = vmatpush1.bf16.msra.mxu0 0
      %4563 = vmatprep.subr.bf16.mxu0 0
      %4564 = vmatpush1.bf16.msra.mxu0 0
      %4565 = vmatprep.subr.bf16.mxu0 0
      %4566 = vmatpush1.bf16.msra.mxu0 0
      %4567 = vmatprep.subr.bf16.mxu0 0
      %4568 = vmatpush1.bf16.msra.mxu0 0
      %4569 = vmatprep.subr.bf16.mxu0 0
      %4570 = vmatpush1.bf16.msra.mxu0 0
      %4571 = vmatprep.subr.bf16.mxu0 0
      %4572 = vmatpush1.bf16.msra.mxu0 %v4283
      %4573 = vmatprep.subr.bf16.mxu0 0
      %4574 = vmatpush1.bf16.msra.mxu0 %v4282
      %4575 = vmatprep.subr.bf16.mxu0 0
      %4576 = vmatpush2.bf16.msra.mxu0 0
      %4577 = vmatprep.subr.bf16.mxu0 0
      %4578 = vmatpush2.bf16.msra.mxu0 0
      %4579 = vmatprep.subr.bf16.mxu0 0
      %4580 = vmatpush2.bf16.msra.mxu0 0
      %4581 = vmatprep.subr.bf16.mxu0 0
      %4582 = vmatpush2.bf16.msra.mxu0 0
      %4583 = vmatprep.subr.bf16.mxu0 0
      %4584 = vmatpush2.bf16.msra.mxu0 0
      %4585 = vmatprep.subr.bf16.mxu0 0
      %4586 = vmatpush2.bf16.msra.mxu0 0
      %4587 = vmatprep.subr.bf16.mxu0 0
      %4588 = vmatpush2.bf16.msra.mxu0 0
      %4589 = vmatprep.subr.bf16.mxu0 0
      %4590 = vmatpush2.bf16.msra.mxu0 0
      %4591 = vmatprep.mubr.bf16.mxu0 0
      %4592 = vmatmul.mubr.bf16.gmra.mxu0 %v4554
      %v4593 = vpop.f32.mrf.mxu0
      %v4594 = vadd.f32 0.0, %v4593
      %v4595 = vpop.f32.mrf.mxu0
      %v4596 = vpop.f32.mrf.mxu0
      %v4597 = vadd.f32 0.0, %v4596
      %v4598 = vpop.f32.mrf.mxu0
      %4599 = vmatprep.mubr.bf16.mxu0 0
      %4600 = vmatmul.mubr.bf16.gmra.mxu0 %v4557
      %v4601 = vpop.f32.mrf.mxu0
      %v4602 = vadd.f32 0.0, %v4601
      %v4603 = vpop.f32.mrf.mxu0
      %v4604 = vpop.f32.mrf.mxu0
      %v4605 = vadd.f32 0.0, %v4604
      %v4606 = vpop.f32.mrf.mxu0
      %4607 = vdwg.mxu0
      %v4608 = vpack.c.bf16 %v4542, %v4539
      %v4609 = vpack.c.bf16 %v4550, %v4547
      %v4610 = vpack.c.bf16 %v4597, %v4594
      %v4611 = vpack.c.bf16 %v4605, %v4602
      %v4614 = vunpack.c.l.b16 %v3757
      %v4615 = vunpack.c.l.b16 %v3758
      %v4616 = vpack.c.b16 %v4615, %v4614
      %v4619 = vsel %vm1354, %v4608, 0
      %v4622 = vsel %vm1354, %v4609, 0
      %v4625 = vsel %vm1354, %v4610, 0
      %v4628 = vsel %vm1354, %v4611, 0
      %4630 = vmatprep.subr.bf16.mxu0 0
      %4631 = vmatpush1.bf16.msra.mxu0 0
      %4632 = vmatprep.subr.bf16.mxu0 0
      %4633 = vmatpush1.bf16.msra.mxu0 0
      %4634 = vmatprep.subr.bf16.mxu0 0
      %4635 = vmatpush1.bf16.msra.mxu0 0
      %4636 = vmatprep.subr.bf16.mxu0 0
      %4637 = vmatpush1.bf16.msra.mxu0 0
      %4638 = vmatprep.subr.bf16.mxu0 0
      %4639 = vmatpush1.bf16.msra.mxu0 0
      %4640 = vmatprep.subr.bf16.mxu0 0
      %4641 = vmatpush1.bf16.msra.mxu0 0
      %4642 = vmatprep.subr.bf16.mxu0 0
      %4643 = vmatpush1.bf16.msra.mxu0 0
      %4644 = vmatprep.subr.bf16.mxu0 0
      %4645 = vmatpush1.bf16.msra.mxu0 %v4616
      %4646 = vmatprep.subr.bf16.mxu0 0
      %4647 = vmatpush2.bf16.msra.mxu0 0
      %4648 = vmatprep.subr.bf16.mxu0 0
      %4649 = vmatpush2.bf16.msra.mxu0 0
      %4650 = vmatprep.subr.bf16.mxu0 0
      %4651 = vmatpush2.bf16.msra.mxu0 0
      %4652 = vmatprep.subr.bf16.mxu0 0
      %4653 = vmatpush2.bf16.msra.mxu0 0
      %4654 = vmatprep.subr.bf16.mxu0 0
      %4655 = vmatpush2.bf16.msra.mxu0 0
      %4656 = vmatprep.subr.bf16.mxu0 0
      %4657 = vmatpush2.bf16.msra.mxu0 0
      %4658 = vmatprep.subr.bf16.mxu0 0
      %4659 = vmatpush2.bf16.msra.mxu0 0
      %4660 = vmatprep.subr.bf16.mxu0 0
      %4661 = vmatpush2.bf16.msra.mxu0 0
      %4662 = vmatprep.mubr.bf16.mxu0 0
      %4663 = vmatmul.mubr.bf16.gmra.mxu0 %v4619
      %v4664 = vpop.f32.mrf.mxu0
      %v4665 = vadd.f32 0.0, %v4664
      %v4666 = vpop.f32.mrf.mxu0
      %v4667 = vpop.f32.mrf.mxu0
      %v4668 = vadd.f32 0.0, %v4667
      %v4669 = vpop.f32.mrf.mxu0
      %4670 = vmatprep.mubr.bf16.mxu0 0
      %4671 = vmatmul.mubr.bf16.gmra.mxu0 %v4622
      %v4672 = vpop.f32.mrf.mxu0
      %v4673 = vadd.f32 0.0, %v4672
      %v4674 = vpop.f32.mrf.mxu0
      %v4675 = vpop.f32.mrf.mxu0
      %v4676 = vadd.f32 0.0, %v4675
      %v4677 = vpop.f32.mrf.mxu0
      %4678 = vmatprep.mubr.bf16.mxu0 0
      %4679 = vmatmul.mubr.bf16.gmra.mxu0 %v4625
      %v4680 = vpop.f32.mrf.mxu0
      %v4681 = vadd.f32 0.0, %v4680
      %v4682 = vpop.f32.mrf.mxu0
      %v4683 = vpop.f32.mrf.mxu0
      %v4684 = vadd.f32 0.0, %v4683
      %v4685 = vpop.f32.mrf.mxu0
      %4686 = vmatprep.mubr.bf16.mxu0 0
      %4687 = vmatmul.mubr.bf16.gmra.mxu0 %v4628
      %v4688 = vpop.f32.mrf.mxu0
      %v4689 = vadd.f32 0.0, %v4688
      %v4690 = vpop.f32.mrf.mxu0
      %v4691 = vpop.f32.mrf.mxu0
      %v4692 = vadd.f32 0.0, %v4691
      %v4693 = vpop.f32.mrf.mxu0
      %4694 = vdwg.mxu0
      %v4695 = vadd.f32 %v4256, %v4665
      %v4696 = vadd.f32 %v4257, %v4668
      %v4697 = vadd.f32 %v4258, %v4673
      %v4698 = vadd.f32 %v4259, %v4676
      %v4699 = vadd.f32 %v4260, %v4681
      %v4700 = vadd.f32 %v4261, %v4684
      %v4701 = vadd.f32 %v4262, %v4689
      %v4702 = vadd.f32 %v4263, %v4692
      %4705 = vrot.lane.b32.xlu0 %v4272, 112
      %v4706 = vpop.permute.xlu0 %4705
      %4707 = vrot.lane.b32.xlu0 %v4273, 112
      %v4708 = vpop.permute.xlu0 %4707
      %4711 = vrot.lane.b32.xlu0 %v4276, 112
      %v4712 = vpop.permute.xlu0 %4711
      %4713 = vrot.lane.b32.xlu0 %v4277, 112
      %v4714 = vpop.permute.xlu0 %4713
      %v4716 = vsel %vm1354, %v4706, 0
      %v4719 = vsel %vm1354, %v4708, 0
      %v4722 = vsel %vm1354, %v4712, 0
      %v4725 = vsel %vm1354, %v4714, 0
      %4727 = vmatprep.subr.bf16.mxu0 0
      %4728 = vmatpush1.bf16.xpose.msra.mxu0 0
      %4729 = vmatprep.subr.bf16.mxu0 0
      %4730 = vmatpush1.bf16.xpose.msra.mxu0 0
      %4731 = vmatprep.subr.bf16.mxu0 0
      %4732 = vmatpush1.bf16.xpose.msra.mxu0 0
      %4733 = vmatprep.subr.bf16.mxu0 0
      %4734 = vmatpush1.bf16.xpose.msra.mxu0 0
      %4735 = vmatprep.subr.bf16.mxu0 0
      %4736 = vmatpush1.bf16.xpose.msra.mxu0 0
      %4737 = vmatprep.subr.bf16.mxu0 0
      %4738 = vmatpush1.bf16.xpose.msra.mxu0 0
      %4739 = vmatprep.subr.bf16.mxu0 0
      %4740 = vmatpush1.bf16.xpose.msra.mxu0 %v4725
      %4741 = vmatprep.subr.bf16.mxu0 0
      %4742 = vmatpush1.bf16.xpose.msra.mxu0 %v4722
      %4743 = vmatprep.subr.bf16.mxu0 0
      %4744 = vmatpush2.bf16.xpose.msra.mxu0 0
      %4745 = vmatprep.subr.bf16.mxu0 0
      %4746 = vmatpush2.bf16.xpose.msra.mxu0 0
      %4747 = vmatprep.subr.bf16.mxu0 0
      %4748 = vmatpush2.bf16.xpose.msra.mxu0 0
      %4749 = vmatprep.subr.bf16.mxu0 0
      %4750 = vmatpush2.bf16.xpose.msra.mxu0 0
      %4751 = vmatprep.subr.bf16.mxu0 0
      %4752 = vmatpush2.bf16.xpose.msra.mxu0 0
      %4753 = vmatprep.subr.bf16.mxu0 0
      %4754 = vmatpush2.bf16.xpose.msra.mxu0 0
      %4755 = vmatprep.subr.bf16.mxu0 0
      %4756 = vmatpush2.bf16.xpose.msra.mxu0 0
      %4757 = vmatprep.subr.bf16.mxu0 0
      %4758 = vmatpush2.bf16.xpose.msra.mxu0 0
      %4759 = vmatprep.mubr.bf16.mxu0 0
      %4760 = vmatmul.mubr.bf16.gmra.mxu0 %v4716
      %v4761 = vpop.f32.mrf.mxu0
      %v4762 = vadd.f32 0.0, %v4761
      %v4763 = vpop.f32.mrf.mxu0
      %v4764 = vpop.f32.mrf.mxu0
      %v4765 = vadd.f32 0.0, %v4764
      %v4766 = vpop.f32.mrf.mxu0
      %4767 = vmatprep.mubr.bf16.mxu0 0
      %4768 = vmatmul.mubr.bf16.gmra.mxu0 %v4719
      %v4769 = vpop.f32.mrf.mxu0
      %v4770 = vadd.f32 0.0, %v4769
      %v4771 = vpop.f32.mrf.mxu0
      %v4772 = vpop.f32.mrf.mxu0
      %v4773 = vadd.f32 0.0, %v4772
      %v4774 = vpop.f32.mrf.mxu0
      %4775 = vdwg.mxu0
      %4778 = vrot.lane.b32.xlu0 %v4274, 112
      %v4779 = vpop.permute.xlu0 %4778
      %4780 = vrot.lane.b32.xlu0 %v4275, 112
      %v4781 = vpop.permute.xlu0 %4780
      %4784 = vrot.lane.b32.xlu0 %v4278, 112
      %v4785 = vpop.permute.xlu0 %4784
      %4786 = vrot.lane.b32.xlu0 %v4279, 112
      %v4787 = vpop.permute.xlu0 %4786
      %v4789 = vsel %vm1354, %v4779, 0
      %v4792 = vsel %vm1354, %v4781, 0
      %v4795 = vsel %vm1354, %v4785, 0
      %v4798 = vsel %vm1354, %v4787, 0
      %4800 = vmatprep.subr.bf16.mxu0 0
      %4801 = vmatpush1.bf16.xpose.msra.mxu0 0
      %4802 = vmatprep.subr.bf16.mxu0 0
      %4803 = vmatpush1.bf16.xpose.msra.mxu0 0
      %4804 = vmatprep.subr.bf16.mxu0 0
      %4805 = vmatpush1.bf16.xpose.msra.mxu0 0
      %4806 = vmatprep.subr.bf16.mxu0 0
      %4807 = vmatpush1.bf16.xpose.msra.mxu0 0
      %4808 = vmatprep.subr.bf16.mxu0 0
      %4809 = vmatpush1.bf16.xpose.msra.mxu0 0
      %4810 = vmatprep.subr.bf16.mxu0 0
      %4811 = vmatpush1.bf16.xpose.msra.mxu0 0
      %4812 = vmatprep.subr.bf16.mxu0 0
      %4813 = vmatpush1.bf16.xpose.msra.mxu0 %v4798
      %4814 = vmatprep.subr.bf16.mxu0 0
      %4815 = vmatpush1.bf16.xpose.msra.mxu0 %v4795
      %4816 = vmatprep.subr.bf16.mxu0 0
      %4817 = vmatpush2.bf16.xpose.msra.mxu0 0
      %4818 = vmatprep.subr.bf16.mxu0 0
      %4819 = vmatpush2.bf16.xpose.msra.mxu0 0
      %4820 = vmatprep.subr.bf16.mxu0 0
      %4821 = vmatpush2.bf16.xpose.msra.mxu0 0
      %4822 = vmatprep.subr.bf16.mxu0 0
      %4823 = vmatpush2.bf16.xpose.msra.mxu0 0
      %4824 = vmatprep.subr.bf16.mxu0 0
      %4825 = vmatpush2.bf16.xpose.msra.mxu0 0
      %4826 = vmatprep.subr.bf16.mxu0 0
      %4827 = vmatpush2.bf16.xpose.msra.mxu0 0
      %4828 = vmatprep.subr.bf16.mxu0 0
      %4829 = vmatpush2.bf16.xpose.msra.mxu0 0
      %4830 = vmatprep.subr.bf16.mxu0 0
      %4831 = vmatpush2.bf16.xpose.msra.mxu0 0
      %4832 = vmatprep.mubr.bf16.mxu0 0
      %4833 = vmatmul.mubr.bf16.gmra.mxu0 %v4789
      %v4834 = vpop.f32.mrf.mxu0
      %v4835 = vadd.f32 0.0, %v4834
      %v4836 = vpop.f32.mrf.mxu0
      %v4837 = vpop.f32.mrf.mxu0
      %v4838 = vadd.f32 0.0, %v4837
      %v4839 = vpop.f32.mrf.mxu0
      %4840 = vmatprep.mubr.bf16.mxu0 0
      %4841 = vmatmul.mubr.bf16.gmra.mxu0 %v4792
      %v4842 = vpop.f32.mrf.mxu0
      %v4843 = vadd.f32 0.0, %v4842
      %v4844 = vpop.f32.mrf.mxu0
      %v4845 = vpop.f32.mrf.mxu0
      %v4846 = vadd.f32 0.0, %v4845
      %v4847 = vpop.f32.mrf.mxu0
      %4848 = vdwg.mxu0
      %v4849 = vsel %vm1477, %v4762, -inf
      %4850 = vmax.xlane.f32.xlu0 %v4849
      %v4851 = vpop.xlane.xlu0 %4850
      %v4852 = vsel %vm1477, %v4765, -inf
      %4853 = vmax.xlane.f32.xlu0 %v4852
      %v4854 = vpop.xlane.xlu0 %4853
      %v4855 = vsel %vm1477, %v4770, -inf
      %4856 = vmax.xlane.f32.xlu0 %v4855
      %v4857 = vpop.xlane.xlu0 %4856
      %v4858 = vsel %vm1477, %v4773, -inf
      %4859 = vmax.xlane.f32.xlu0 %v4858
      %v4860 = vpop.xlane.xlu0 %4859
      %v4861 = vsel %vm1477, %v4835, -inf
      %4862 = vmax.xlane.f32.xlu0 %v4861
      %v4863 = vpop.xlane.xlu0 %4862
      %v4864 = vsel %vm1477, %v4838, -inf
      %4865 = vmax.xlane.f32.xlu0 %v4864
      %v4866 = vpop.xlane.xlu0 %4865
      %v4867 = vsel %vm1477, %v4843, -inf
      %4868 = vmax.xlane.f32.xlu0 %v4867
      %v4869 = vpop.xlane.xlu0 %4868
      %v4870 = vsel %vm1477, %v4846, -inf
      %4871 = vmax.xlane.f32.xlu0 %v4870
      %v4872 = vpop.xlane.xlu0 %4871
      %v4873 = vsub.f32 %v4762, %v4851
      %v4874 = vsub.f32 %v4765, %v4854
      %v4875 = vsub.f32 %v4770, %v4857
      %v4876 = vsub.f32 %v4773, %v4860
      %v4877 = vsub.f32 %v4835, %v4863
      %v4878 = vsub.f32 %v4838, %v4866
      %v4879 = vsub.f32 %v4843, %v4869
      %v4880 = vsub.f32 %v4846, %v4872
      %v4881 = vmul.f32 %v4873, 1.442695
      %v4882 = vpow.pop %v4881
      %v4883 = vmul.f32 %v4874, 1.442695
      %v4884 = vpow.pop %v4883
      %v4885 = vmul.f32 %v4875, 1.442695
      %v4886 = vpow.pop %v4885
      %v4887 = vmul.f32 %v4876, 1.442695
      %v4888 = vpow.pop %v4887
      %v4889 = vmul.f32 %v4877, 1.442695
      %v4890 = vpow.pop %v4889
      %v4891 = vmul.f32 %v4878, 1.442695
      %v4892 = vpow.pop %v4891
      %v4893 = vmul.f32 %v4879, 1.442695
      %v4894 = vpow.pop %v4893
      %v4895 = vmul.f32 %v4880, 1.442695
      %v4896 = vpow.pop %v4895
      %v4897 = vsel %vm1477, %v4882, 0.0
      %4898 = vadd.xlane.f32.xlu0 %v4897
      %v4899 = vpop.xlane.xlu0 %4898
      %v4900 = vsel %vm1477, %v4884, 0.0
      %4901 = vadd.xlane.f32.xlu0 %v4900
      %v4902 = vpop.xlane.xlu0 %4901
      %v4903 = vsel %vm1477, %v4886, 0.0
      %4904 = vadd.xlane.f32.xlu0 %v4903
      %v4905 = vpop.xlane.xlu0 %4904
      %v4906 = vsel %vm1477, %v4888, 0.0
      %4907 = vadd.xlane.f32.xlu0 %v4906
      %v4908 = vpop.xlane.xlu0 %4907
      %v4909 = vsel %vm1477, %v4890, 0.0
      %4910 = vadd.xlane.f32.xlu0 %v4909
      %v4911 = vpop.xlane.xlu0 %4910
      %v4912 = vsel %vm1477, %v4892, 0.0
      %4913 = vadd.xlane.f32.xlu0 %v4912
      %v4914 = vpop.xlane.xlu0 %4913
      %v4915 = vsel %vm1477, %v4894, 0.0
      %4916 = vadd.xlane.f32.xlu0 %v4915
      %v4917 = vpop.xlane.xlu0 %4916
      %v4918 = vsel %vm1477, %v4896, 0.0
      %4919 = vadd.xlane.f32.xlu0 %v4918
      %v4920 = vpop.xlane.xlu0 %4919
      %v4921 = vrcp.pop %v4899
      %v4922 = vrcp.pop %v4902
      %v4923 = vrcp.pop %v4905
      %v4924 = vrcp.pop %v4908
      %v4925 = vrcp.pop %v4911
      %v4926 = vrcp.pop %v4914
      %v4927 = vrcp.pop %v4917
      %v4928 = vrcp.pop %v4920
      %v4929 = vmul.f32 %v4882, %v4921
      %v4930 = vmul.f32 %v4884, %v4922
      %v4931 = vmul.f32 %v4886, %v4923
      %v4932 = vmul.f32 %v4888, %v4924
      %v4933 = vmul.f32 %v4890, %v4925
      %v4934 = vmul.f32 %v4892, %v4926
      %v4935 = vmul.f32 %v4894, %v4927
      %v4936 = vmul.f32 %v4896, %v4928
      %v4937 = vpack.c.bf16 %v4930, %v4929
      %v4938 = vpack.c.bf16 %v4932, %v4931
      %v4939 = vpack.c.bf16 %v4934, %v4933
      %v4940 = vpack.c.bf16 %v4936, %v4935
      %4943 = vrot.lane.b32.xlu0 %v4280, 112
      %v4944 = vpop.permute.xlu0 %4943
      %4945 = vrot.lane.b32.xlu0 %v4281, 112
      %v4946 = vpop.permute.xlu0 %4945
      %v4950 = vsel %vm1477, %v4937, 0
      %v4953 = vsel %vm1477, %v4938, 0
      %4955 = vmatprep.subr.bf16.mxu0 0
      %4956 = vmatpush1.bf16.msra.mxu0 0
      %4957 = vmatprep.subr.bf16.mxu0 0
      %4958 = vmatpush1.bf16.msra.mxu0 0
      %4959 = vmatprep.subr.bf16.mxu0 0
      %4960 = vmatpush1.bf16.msra.mxu0 0
      %4961 = vmatprep.subr.bf16.mxu0 0
      %4962 = vmatpush1.bf16.msra.mxu0 0
      %4963 = vmatprep.subr.bf16.mxu0 0
      %4964 = vmatpush1.bf16.msra.mxu0 0
      %4965 = vmatprep.subr.bf16.mxu0 0
      %4966 = vmatpush1.bf16.msra.mxu0 0
      %4967 = vmatprep.subr.bf16.mxu0 0
      %4968 = vmatpush1.bf16.msra.mxu0 %v4946
      %4969 = vmatprep.subr.bf16.mxu0 0
      %4970 = vmatpush1.bf16.msra.mxu0 %v4944
      %4971 = vmatprep.subr.bf16.mxu0 0
      %4972 = vmatpush2.bf16.msra.mxu0 0
      %4973 = vmatprep.subr.bf16.mxu0 0
      %4974 = vmatpush2.bf16.msra.mxu0 0
      %4975 = vmatprep.subr.bf16.mxu0 0
      %4976 = vmatpush2.bf16.msra.mxu0 0
      %4977 = vmatprep.subr.bf16.mxu0 0
      %4978 = vmatpush2.bf16.msra.mxu0 0
      %4979 = vmatprep.subr.bf16.mxu0 0
      %4980 = vmatpush2.bf16.msra.mxu0 0
      %4981 = vmatprep.subr.bf16.mxu0 0
      %4982 = vmatpush2.bf16.msra.mxu0 0
      %4983 = vmatprep.subr.bf16.mxu0 0
      %4984 = vmatpush2.bf16.msra.mxu0 0
      %4985 = vmatprep.subr.bf16.mxu0 0
      %4986 = vmatpush2.bf16.msra.mxu0 0
      %4987 = vmatprep.mubr.bf16.mxu0 0
      %4988 = vmatmul.mubr.bf16.gmra.mxu0 %v4950
      %v4989 = vpop.f32.mrf.mxu0
      %v4990 = vadd.f32 0.0, %v4989
      %v4991 = vpop.f32.mrf.mxu0
      %v4992 = vpop.f32.mrf.mxu0
      %v4993 = vadd.f32 0.0, %v4992
      %v4994 = vpop.f32.mrf.mxu0
      %4995 = vmatprep.mubr.bf16.mxu0 0
      %4996 = vmatmul.mubr.bf16.gmra.mxu0 %v4953
      %v4997 = vpop.f32.mrf.mxu0
      %v4998 = vadd.f32 0.0, %v4997
      %v4999 = vpop.f32.mrf.mxu0
      %v5000 = vpop.f32.mrf.mxu0
      %v5001 = vadd.f32 0.0, %v5000
      %v5002 = vpop.f32.mrf.mxu0
      %5003 = vdwg.mxu0
      %5006 = vrot.lane.b32.xlu0 %v4282, 112
      %v5007 = vpop.permute.xlu0 %5006
      %5008 = vrot.lane.b32.xlu0 %v4283, 112
      %v5009 = vpop.permute.xlu0 %5008
      %v5013 = vsel %vm1477, %v4939, 0
      %v5016 = vsel %vm1477, %v4940, 0
      %5018 = vmatprep.subr.bf16.mxu0 0
      %5019 = vmatpush1.bf16.msra.mxu0 0
      %5020 = vmatprep.subr.bf16.mxu0 0
      %5021 = vmatpush1.bf16.msra.mxu0 0
      %5022 = vmatprep.subr.bf16.mxu0 0
      %5023 = vmatpush1.bf16.msra.mxu0 0
      %5024 = vmatprep.subr.bf16.mxu0 0
      %5025 = vmatpush1.bf16.msra.mxu0 0
      %5026 = vmatprep.subr.bf16.mxu0 0
      %5027 = vmatpush1.bf16.msra.mxu0 0
      %5028 = vmatprep.subr.bf16.mxu0 0
      %5029 = vmatpush1.bf16.msra.mxu0 0
      %5030 = vmatprep.subr.bf16.mxu0 0
      %5031 = vmatpush1.bf16.msra.mxu0 %v5009
      %5032 = vmatprep.subr.bf16.mxu0 0
      %5033 = vmatpush1.bf16.msra.mxu0 %v5007
      %5034 = vmatprep.subr.bf16.mxu0 0
      %5035 = vmatpush2.bf16.msra.mxu0 0
      %5036 = vmatprep.subr.bf16.mxu0 0
      %5037 = vmatpush2.bf16.msra.mxu0 0
      %5038 = vmatprep.subr.bf16.mxu0 0
      %5039 = vmatpush2.bf16.msra.mxu0 0
      %5040 = vmatprep.subr.bf16.mxu0 0
      %5041 = vmatpush2.bf16.msra.mxu0 0
      %5042 = vmatprep.subr.bf16.mxu0 0
      %5043 = vmatpush2.bf16.msra.mxu0 0
      %5044 = vmatprep.subr.bf16.mxu0 0
      %5045 = vmatpush2.bf16.msra.mxu0 0
      %5046 = vmatprep.subr.bf16.mxu0 0
      %5047 = vmatpush2.bf16.msra.mxu0 0
      %5048 = vmatprep.subr.bf16.mxu0 0
      %5049 = vmatpush2.bf16.msra.mxu0 0
      %5050 = vmatprep.mubr.bf16.mxu0 0
      %5051 = vmatmul.mubr.bf16.gmra.mxu0 %v5013
      %v5052 = vpop.f32.mrf.mxu0
      %v5053 = vadd.f32 0.0, %v5052
      %v5054 = vpop.f32.mrf.mxu0
      %v5055 = vpop.f32.mrf.mxu0
      %v5056 = vadd.f32 0.0, %v5055
      %v5057 = vpop.f32.mrf.mxu0
      %5058 = vmatprep.mubr.bf16.mxu0 0
      %5059 = vmatmul.mubr.bf16.gmra.mxu0 %v5016
      %v5060 = vpop.f32.mrf.mxu0
      %v5061 = vadd.f32 0.0, %v5060
      %v5062 = vpop.f32.mrf.mxu0
      %v5063 = vpop.f32.mrf.mxu0
      %v5064 = vadd.f32 0.0, %v5063
      %v5065 = vpop.f32.mrf.mxu0
      %5066 = vdwg.mxu0
      %v5067 = vpack.c.bf16 %v4993, %v4990
      %v5068 = vpack.c.bf16 %v5001, %v4998
      %v5069 = vpack.c.bf16 %v5056, %v5053
      %v5070 = vpack.c.bf16 %v5064, %v5061
      %v5073 = vunpack.c.l.b16 %v3759
      %v5074 = vunpack.c.l.b16 %v3760
      %v5075 = vpack.c.b16 %v5074, %v5073
      %v5078 = vsel %vm1354, %v5067, 0
      %v5081 = vsel %vm1354, %v5068, 0
      %v5084 = vsel %vm1354, %v5069, 0
      %v5087 = vsel %vm1354, %v5070, 0
      %5089 = vmatprep.subr.bf16.mxu0 0
      %5090 = vmatpush1.bf16.msra.mxu0 0
      %5091 = vmatprep.subr.bf16.mxu0 0
      %5092 = vmatpush1.bf16.msra.mxu0 0
      %5093 = vmatprep.subr.bf16.mxu0 0
      %5094 = vmatpush1.bf16.msra.mxu0 0
      %5095 = vmatprep.subr.bf16.mxu0 0
      %5096 = vmatpush1.bf16.msra.mxu0 0
      %5097 = vmatprep.subr.bf16.mxu0 0
      %5098 = vmatpush1.bf16.msra.mxu0 0
      %5099 = vmatprep.subr.bf16.mxu0 0
      %5100 = vmatpush1.bf16.msra.mxu0 0
      %5101 = vmatprep.subr.bf16.mxu0 0
      %5102 = vmatpush1.bf16.msra.mxu0 0
      %5103 = vmatprep.subr.bf16.mxu0 0
      %5104 = vmatpush1.bf16.msra.mxu0 %v5075
      %5105 = vmatprep.subr.bf16.mxu0 0
      %5106 = vmatpush2.bf16.msra.mxu0 0
      %5107 = vmatprep.subr.bf16.mxu0 0
      %5108 = vmatpush2.bf16.msra.mxu0 0
      %5109 = vmatprep.subr.bf16.mxu0 0
      %5110 = vmatpush2.bf16.msra.mxu0 0
      %5111 = vmatprep.subr.bf16.mxu0 0
      %5112 = vmatpush2.bf16.msra.mxu0 0
      %5113 = vmatprep.subr.bf16.mxu0 0
      %5114 = vmatpush2.bf16.msra.mxu0 0
      %5115 = vmatprep.subr.bf16.mxu0 0
      %5116 = vmatpush2.bf16.msra.mxu0 0
      %5117 = vmatprep.subr.bf16.mxu0 0
      %5118 = vmatpush2.bf16.msra.mxu0 0
      %5119 = vmatprep.subr.bf16.mxu0 0
      %5120 = vmatpush2.bf16.msra.mxu0 0
      %5121 = vmatprep.mubr.bf16.mxu0 0
      %5122 = vmatmul.mubr.bf16.gmra.mxu0 %v5078
      %v5123 = vpop.f32.mrf.mxu0
      %v5124 = vadd.f32 0.0, %v5123
      %v5125 = vpop.f32.mrf.mxu0
      %v5126 = vpop.f32.mrf.mxu0
      %v5127 = vadd.f32 0.0, %v5126
      %v5128 = vpop.f32.mrf.mxu0
      %5129 = vmatprep.mubr.bf16.mxu0 0
      %5130 = vmatmul.mubr.bf16.gmra.mxu0 %v5081
      %v5131 = vpop.f32.mrf.mxu0
      %v5132 = vadd.f32 0.0, %v5131
      %v5133 = vpop.f32.mrf.mxu0
      %v5134 = vpop.f32.mrf.mxu0
      %v5135 = vadd.f32 0.0, %v5134
      %v5136 = vpop.f32.mrf.mxu0
      %5137 = vmatprep.mubr.bf16.mxu0 0
      %5138 = vmatmul.mubr.bf16.gmra.mxu0 %v5084
      %v5139 = vpop.f32.mrf.mxu0
      %v5140 = vadd.f32 0.0, %v5139
      %v5141 = vpop.f32.mrf.mxu0
      %v5142 = vpop.f32.mrf.mxu0
      %v5143 = vadd.f32 0.0, %v5142
      %v5144 = vpop.f32.mrf.mxu0
      %5145 = vmatprep.mubr.bf16.mxu0 0
      %5146 = vmatmul.mubr.bf16.gmra.mxu0 %v5087
      %v5147 = vpop.f32.mrf.mxu0
      %v5148 = vadd.f32 0.0, %v5147
      %v5149 = vpop.f32.mrf.mxu0
      %v5150 = vpop.f32.mrf.mxu0
      %v5151 = vadd.f32 0.0, %v5150
      %v5152 = vpop.f32.mrf.mxu0
      %5153 = vdwg.mxu0
      %v5154 = vadd.f32 %v4695, %v5124
      %v5155 = vadd.f32 %v4696, %v5127
      %v5156 = vadd.f32 %v4697, %v5132
      %v5157 = vadd.f32 %v4698, %v5135
      %v5158 = vadd.f32 %v4699, %v5140
      %v5159 = vadd.f32 %v4700, %v5143
      %v5160 = vadd.f32 %v4701, %v5148
      %v5161 = vadd.f32 %v4702, %v5151
      %5162 = vrot.lane.b32.xlu0 %v4272, 96
      %v5163 = vpop.permute.xlu0 %5162
      %5164 = vrot.lane.b32.xlu0 %v4273, 96
      %v5165 = vpop.permute.xlu0 %5164
      %5166 = vrot.lane.b32.xlu0 %v4276, 96
      %v5167 = vpop.permute.xlu0 %5166
      %5168 = vrot.lane.b32.xlu0 %v4277, 96
      %v5169 = vpop.permute.xlu0 %5168
      %v5171 = vsel %vm1354, %v5163, 0
      %v5174 = vsel %vm1354, %v5165, 0
      %v5177 = vsel %vm1354, %v5167, 0
      %v5180 = vsel %vm1354, %v5169, 0
      %5182 = vmatprep.subr.bf16.mxu0 0
      %5183 = vmatpush1.bf16.xpose.msra.mxu0 0
      %5184 = vmatprep.subr.bf16.mxu0 0
      %5185 = vmatpush1.bf16.xpose.msra.mxu0 0
      %5186 = vmatprep.subr.bf16.mxu0 0
      %5187 = vmatpush1.bf16.xpose.msra.mxu0 0
      %5188 = vmatprep.subr.bf16.mxu0 0
      %5189 = vmatpush1.bf16.xpose.msra.mxu0 0
      %5190 = vmatprep.subr.bf16.mxu0 0
      %5191 = vmatpush1.bf16.xpose.msra.mxu0 0
      %5192 = vmatprep.subr.bf16.mxu0 0
      %5193 = vmatpush1.bf16.xpose.msra.mxu0 0
      %5194 = vmatprep.subr.bf16.mxu0 0
      %5195 = vmatpush1.bf16.xpose.msra.mxu0 %v5180
      %5196 = vmatprep.subr.bf16.mxu0 0
      %5197 = vmatpush1.bf16.xpose.msra.mxu0 %v5177
      %5198 = vmatprep.subr.bf16.mxu0 0
      %5199 = vmatpush2.bf16.xpose.msra.mxu0 0
      %5200 = vmatprep.subr.bf16.mxu0 0
      %5201 = vmatpush2.bf16.xpose.msra.mxu0 0
      %5202 = vmatprep.subr.bf16.mxu0 0
      %5203 = vmatpush2.bf16.xpose.msra.mxu0 0
      %5204 = vmatprep.subr.bf16.mxu0 0
      %5205 = vmatpush2.bf16.xpose.msra.mxu0 0
      %5206 = vmatprep.subr.bf16.mxu0 0
      %5207 = vmatpush2.bf16.xpose.msra.mxu0 0
      %5208 = vmatprep.subr.bf16.mxu0 0
      %5209 = vmatpush2.bf16.xpose.msra.mxu0 0
      %5210 = vmatprep.subr.bf16.mxu0 0
      %5211 = vmatpush2.bf16.xpose.msra.mxu0 0
      %5212 = vmatprep.subr.bf16.mxu0 0
      %5213 = vmatpush2.bf16.xpose.msra.mxu0 0
      %5214 = vmatprep.mubr.bf16.mxu0 0
      %5215 = vmatmul.mubr.bf16.gmra.mxu0 %v5171
      %v5216 = vpop.f32.mrf.mxu0
      %v5217 = vadd.f32 0.0, %v5216
      %v5218 = vpop.f32.mrf.mxu0
      %v5219 = vpop.f32.mrf.mxu0
      %v5220 = vadd.f32 0.0, %v5219
      %v5221 = vpop.f32.mrf.mxu0
      %5222 = vmatprep.mubr.bf16.mxu0 0
      %5223 = vmatmul.mubr.bf16.gmra.mxu0 %v5174
      %v5224 = vpop.f32.mrf.mxu0
      %v5225 = vadd.f32 0.0, %v5224
      %v5226 = vpop.f32.mrf.mxu0
      %v5227 = vpop.f32.mrf.mxu0
      %v5228 = vadd.f32 0.0, %v5227
      %v5229 = vpop.f32.mrf.mxu0
      %5230 = vdwg.mxu0
      %5231 = vrot.lane.b32.xlu0 %v4274, 96
      %v5232 = vpop.permute.xlu0 %5231
      %5233 = vrot.lane.b32.xlu0 %v4275, 96
      %v5234 = vpop.permute.xlu0 %5233
      %5235 = vrot.lane.b32.xlu0 %v4278, 96
      %v5236 = vpop.permute.xlu0 %5235
      %5237 = vrot.lane.b32.xlu0 %v4279, 96
      %v5238 = vpop.permute.xlu0 %5237
      %v5240 = vsel %vm1354, %v5232, 0
      %v5243 = vsel %vm1354, %v5234, 0
      %v5246 = vsel %vm1354, %v5236, 0
      %v5249 = vsel %vm1354, %v5238, 0
      %5251 = vmatprep.subr.bf16.mxu0 0
      %5252 = vmatpush1.bf16.xpose.msra.mxu0 0
      %5253 = vmatprep.subr.bf16.mxu0 0
      %5254 = vmatpush1.bf16.xpose.msra.mxu0 0
      %5255 = vmatprep.subr.bf16.mxu0 0
      %5256 = vmatpush1.bf16.xpose.msra.mxu0 0
      %5257 = vmatprep.subr.bf16.mxu0 0
      %5258 = vmatpush1.bf16.xpose.msra.mxu0 0
      %5259 = vmatprep.subr.bf16.mxu0 0
      %5260 = vmatpush1.bf16.xpose.msra.mxu0 0
      %5261 = vmatprep.subr.bf16.mxu0 0
      %5262 = vmatpush1.bf16.xpose.msra.mxu0 0
      %5263 = vmatprep.subr.bf16.mxu0 0
      %5264 = vmatpush1.bf16.xpose.msra.mxu0 %v5249
      %5265 = vmatprep.subr.bf16.mxu0 0
      %5266 = vmatpush1.bf16.xpose.msra.mxu0 %v5246
      %5267 = vmatprep.subr.bf16.mxu0 0
      %5268 = vmatpush2.bf16.xpose.msra.mxu0 0
      %5269 = vmatprep.subr.bf16.mxu0 0
      %5270 = vmatpush2.bf16.xpose.msra.mxu0 0
      %5271 = vmatprep.subr.bf16.mxu0 0
      %5272 = vmatpush2.bf16.xpose.msra.mxu0 0
      %5273 = vmatprep.subr.bf16.mxu0 0
      %5274 = vmatpush2.bf16.xpose.msra.mxu0 0
      %5275 = vmatprep.subr.bf16.mxu0 0
      %5276 = vmatpush2.bf16.xpose.msra.mxu0 0
      %5277 = vmatprep.subr.bf16.mxu0 0
      %5278 = vmatpush2.bf16.xpose.msra.mxu0 0
      %5279 = vmatprep.subr.bf16.mxu0 0
      %5280 = vmatpush2.bf16.xpose.msra.mxu0 0
      %5281 = vmatprep.subr.bf16.mxu0 0
      %5282 = vmatpush2.bf16.xpose.msra.mxu0 0
      %5283 = vmatprep.mubr.bf16.mxu0 0
      %5284 = vmatmul.mubr.bf16.gmra.mxu0 %v5240
      %v5285 = vpop.f32.mrf.mxu0
      %v5286 = vadd.f32 0.0, %v5285
      %v5287 = vpop.f32.mrf.mxu0
      %v5288 = vpop.f32.mrf.mxu0
      %v5289 = vadd.f32 0.0, %v5288
      %v5290 = vpop.f32.mrf.mxu0
      %5291 = vmatprep.mubr.bf16.mxu0 0
      %5292 = vmatmul.mubr.bf16.gmra.mxu0 %v5243
      %v5293 = vpop.f32.mrf.mxu0
      %v5294 = vadd.f32 0.0, %v5293
      %v5295 = vpop.f32.mrf.mxu0
      %v5296 = vpop.f32.mrf.mxu0
      %v5297 = vadd.f32 0.0, %v5296
      %v5298 = vpop.f32.mrf.mxu0
      %5299 = vdwg.mxu0
      %v5300 = vsel %vm1477, %v5217, -inf
      %5301 = vmax.xlane.f32.xlu0 %v5300
      %v5302 = vpop.xlane.xlu0 %5301
      %v5303 = vsel %vm1477, %v5220, -inf
      %5304 = vmax.xlane.f32.xlu0 %v5303
      %v5305 = vpop.xlane.xlu0 %5304
      %v5306 = vsel %vm1477, %v5225, -inf
      %5307 = vmax.xlane.f32.xlu0 %v5306
      %v5308 = vpop.xlane.xlu0 %5307
      %v5309 = vsel %vm1477, %v5228, -inf
      %5310 = vmax.xlane.f32.xlu0 %v5309
      %v5311 = vpop.xlane.xlu0 %5310
      %v5312 = vsel %vm1477, %v5286, -inf
      %5313 = vmax.xlane.f32.xlu0 %v5312
      %v5314 = vpop.xlane.xlu0 %5313
      %v5315 = vsel %vm1477, %v5289, -inf
      %5316 = vmax.xlane.f32.xlu0 %v5315
      %v5317 = vpop.xlane.xlu0 %5316
      %v5318 = vsel %vm1477, %v5294, -inf
      %5319 = vmax.xlane.f32.xlu0 %v5318
      %v5320 = vpop.xlane.xlu0 %5319
      %v5321 = vsel %vm1477, %v5297, -inf
      %5322 = vmax.xlane.f32.xlu0 %v5321
      %v5323 = vpop.xlane.xlu0 %5322
      %v5324 = vsub.f32 %v5217, %v5302
      %v5325 = vsub.f32 %v5220, %v5305
      %v5326 = vsub.f32 %v5225, %v5308
      %v5327 = vsub.f32 %v5228, %v5311
      %v5328 = vsub.f32 %v5286, %v5314
      %v5329 = vsub.f32 %v5289, %v5317
      %v5330 = vsub.f32 %v5294, %v5320
      %v5331 = vsub.f32 %v5297, %v5323
      %v5332 = vmul.f32 %v5324, 1.442695
      %v5333 = vpow.pop %v5332
      %v5334 = vmul.f32 %v5325, 1.442695
      %v5335 = vpow.pop %v5334
      %v5336 = vmul.f32 %v5326, 1.442695
      %v5337 = vpow.pop %v5336
      %v5338 = vmul.f32 %v5327, 1.442695
      %v5339 = vpow.pop %v5338
      %v5340 = vmul.f32 %v5328, 1.442695
      %v5341 = vpow.pop %v5340
      %v5342 = vmul.f32 %v5329, 1.442695
      %v5343 = vpow.pop %v5342
      %v5344 = vmul.f32 %v5330, 1.442695
      %v5345 = vpow.pop %v5344
      %v5346 = vmul.f32 %v5331, 1.442695
      %v5347 = vpow.pop %v5346
      %v5348 = vsel %vm1477, %v5333, 0.0
      %5349 = vadd.xlane.f32.xlu0 %v5348
      %v5350 = vpop.xlane.xlu0 %5349
      %v5351 = vsel %vm1477, %v5335, 0.0
      %5352 = vadd.xlane.f32.xlu0 %v5351
      %v5353 = vpop.xlane.xlu0 %5352
      %v5354 = vsel %vm1477, %v5337, 0.0
      %5355 = vadd.xlane.f32.xlu0 %v5354
      %v5356 = vpop.xlane.xlu0 %5355
      %v5357 = vsel %vm1477, %v5339, 0.0
      %5358 = vadd.xlane.f32.xlu0 %v5357
      %v5359 = vpop.xlane.xlu0 %5358
      %v5360 = vsel %vm1477, %v5341, 0.0
      %5361 = vadd.xlane.f32.xlu0 %v5360
      %v5362 = vpop.xlane.xlu0 %5361
      %v5363 = vsel %vm1477, %v5343, 0.0
      %5364 = vadd.xlane.f32.xlu0 %v5363
      %v5365 = vpop.xlane.xlu0 %5364
      %v5366 = vsel %vm1477, %v5345, 0.0
      %5367 = vadd.xlane.f32.xlu0 %v5366
      %v5368 = vpop.xlane.xlu0 %5367
      %v5369 = vsel %vm1477, %v5347, 0.0
      %5370 = vadd.xlane.f32.xlu0 %v5369
      %v5371 = vpop.xlane.xlu0 %5370
      %v5372 = vrcp.pop %v5350
      %v5373 = vrcp.pop %v5353
      %v5374 = vrcp.pop %v5356
      %v5375 = vrcp.pop %v5359
      %v5376 = vrcp.pop %v5362
      %v5377 = vrcp.pop %v5365
      %v5378 = vrcp.pop %v5368
      %v5379 = vrcp.pop %v5371
      %v5380 = vmul.f32 %v5333, %v5372
      %v5381 = vmul.f32 %v5335, %v5373
      %v5382 = vmul.f32 %v5337, %v5374
      %v5383 = vmul.f32 %v5339, %v5375
      %v5384 = vmul.f32 %v5341, %v5376
      %v5385 = vmul.f32 %v5343, %v5377
      %v5386 = vmul.f32 %v5345, %v5378
      %v5387 = vmul.f32 %v5347, %v5379
      %v5388 = vpack.c.bf16 %v5381, %v5380
      %v5389 = vpack.c.bf16 %v5383, %v5382
      %v5390 = vpack.c.bf16 %v5385, %v5384
      %v5391 = vpack.c.bf16 %v5387, %v5386
      %5392 = vrot.lane.b32.xlu0 %v4280, 96
      %v5393 = vpop.permute.xlu0 %5392
      %5394 = vrot.lane.b32.xlu0 %v4281, 96
      %v5395 = vpop.permute.xlu0 %5394
      %v5399 = vsel %vm1477, %v5388, 0
      %v5402 = vsel %vm1477, %v5389, 0
      %5404 = vmatprep.subr.bf16.mxu0 0
      %5405 = vmatpush1.bf16.msra.mxu0 0
      %5406 = vmatprep.subr.bf16.mxu0 0
      %5407 = vmatpush1.bf16.msra.mxu0 0
      %5408 = vmatprep.subr.bf16.mxu0 0
      %5409 = vmatpush1.bf16.msra.mxu0 0
      %5410 = vmatprep.subr.bf16.mxu0 0
      %5411 = vmatpush1.bf16.msra.mxu0 0
      %5412 = vmatprep.subr.bf16.mxu0 0
      %5413 = vmatpush1.bf16.msra.mxu0 0
      %5414 = vmatprep.subr.bf16.mxu0 0
      %5415 = vmatpush1.bf16.msra.mxu0 0
      %5416 = vmatprep.subr.bf16.mxu0 0
      %5417 = vmatpush1.bf16.msra.mxu0 %v5395
      %5418 = vmatprep.subr.bf16.mxu0 0
      %5419 = vmatpush1.bf16.msra.mxu0 %v5393
      %5420 = vmatprep.subr.bf16.mxu0 0
      %5421 = vmatpush2.bf16.msra.mxu0 0
      %5422 = vmatprep.subr.bf16.mxu0 0
      %5423 = vmatpush2.bf16.msra.mxu0 0
      %5424 = vmatprep.subr.bf16.mxu0 0
      %5425 = vmatpush2.bf16.msra.mxu0 0
      %5426 = vmatprep.subr.bf16.mxu0 0
      %5427 = vmatpush2.bf16.msra.mxu0 0
      %5428 = vmatprep.subr.bf16.mxu0 0
      %5429 = vmatpush2.bf16.msra.mxu0 0
      %5430 = vmatprep.subr.bf16.mxu0 0
      %5431 = vmatpush2.bf16.msra.mxu0 0
      %5432 = vmatprep.subr.bf16.mxu0 0
      %5433 = vmatpush2.bf16.msra.mxu0 0
      %5434 = vmatprep.subr.bf16.mxu0 0
      %5435 = vmatpush2.bf16.msra.mxu0 0
      %5436 = vmatprep.mubr.bf16.mxu0 0
      %5437 = vmatmul.mubr.bf16.gmra.mxu0 %v5399
      %v5438 = vpop.f32.mrf.mxu0
      %v5439 = vadd.f32 0.0, %v5438
      %v5440 = vpop.f32.mrf.mxu0
      %v5441 = vpop.f32.mrf.mxu0
      %v5442 = vadd.f32 0.0, %v5441
      %v5443 = vpop.f32.mrf.mxu0
      %5444 = vmatprep.mubr.bf16.mxu0 0
      %5445 = vmatmul.mubr.bf16.gmra.mxu0 %v5402
      %v5446 = vpop.f32.mrf.mxu0
      %v5447 = vadd.f32 0.0, %v5446
      %v5448 = vpop.f32.mrf.mxu0
      %v5449 = vpop.f32.mrf.mxu0
      %v5450 = vadd.f32 0.0, %v5449
      %v5451 = vpop.f32.mrf.mxu0
      %5452 = vdwg.mxu0
      %5453 = vrot.lane.b32.xlu0 %v4282, 96
      %v5454 = vpop.permute.xlu0 %5453
      %5455 = vrot.lane.b32.xlu0 %v4283, 96
      %v5456 = vpop.permute.xlu0 %5455
      %v5460 = vsel %vm1477, %v5390, 0
      %v5463 = vsel %vm1477, %v5391, 0
      %5465 = vmatprep.subr.bf16.mxu0 0
      %5466 = vmatpush1.bf16.msra.mxu0 0
      %5467 = vmatprep.subr.bf16.mxu0 0
      %5468 = vmatpush1.bf16.msra.mxu0 0
      %5469 = vmatprep.subr.bf16.mxu0 0
      %5470 = vmatpush1.bf16.msra.mxu0 0
      %5471 = vmatprep.subr.bf16.mxu0 0
      %5472 = vmatpush1.bf16.msra.mxu0 0
      %5473 = vmatprep.subr.bf16.mxu0 0
      %5474 = vmatpush1.bf16.msra.mxu0 0
      %5475 = vmatprep.subr.bf16.mxu0 0
      %5476 = vmatpush1.bf16.msra.mxu0 0
      %5477 = vmatprep.subr.bf16.mxu0 0
      %5478 = vmatpush1.bf16.msra.mxu0 %v5456
      %5479 = vmatprep.subr.bf16.mxu0 0
      %5480 = vmatpush1.bf16.msra.mxu0 %v5454
      %5481 = vmatprep.subr.bf16.mxu0 0
      %5482 = vmatpush2.bf16.msra.mxu0 0
      %5483 = vmatprep.subr.bf16.mxu0 0
      %5484 = vmatpush2.bf16.msra.mxu0 0
      %5485 = vmatprep.subr.bf16.mxu0 0
      %5486 = vmatpush2.bf16.msra.mxu0 0
      %5487 = vmatprep.subr.bf16.mxu0 0
      %5488 = vmatpush2.bf16.msra.mxu0 0
      %5489 = vmatprep.subr.bf16.mxu0 0
      %5490 = vmatpush2.bf16.msra.mxu0 0
      %5491 = vmatprep.subr.bf16.mxu0 0
      %5492 = vmatpush2.bf16.msra.mxu0 0
      %5493 = vmatprep.subr.bf16.mxu0 0
      %5494 = vmatpush2.bf16.msra.mxu0 0
      %5495 = vmatprep.subr.bf16.mxu0 0
      %5496 = vmatpush2.bf16.msra.mxu0 0
      %5497 = vmatprep.mubr.bf16.mxu0 0
      %5498 = vmatmul.mubr.bf16.gmra.mxu0 %v5460
      %v5499 = vpop.f32.mrf.mxu0
      %v5500 = vadd.f32 0.0, %v5499
      %v5501 = vpop.f32.mrf.mxu0
      %v5502 = vpop.f32.mrf.mxu0
      %v5503 = vadd.f32 0.0, %v5502
      %v5504 = vpop.f32.mrf.mxu0
      %5505 = vmatprep.mubr.bf16.mxu0 0
      %5506 = vmatmul.mubr.bf16.gmra.mxu0 %v5463
      %v5507 = vpop.f32.mrf.mxu0
      %v5508 = vadd.f32 0.0, %v5507
      %v5509 = vpop.f32.mrf.mxu0
      %v5510 = vpop.f32.mrf.mxu0
      %v5511 = vadd.f32 0.0, %v5510
      %v5512 = vpop.f32.mrf.mxu0
      %5513 = vdwg.mxu0
      %v5514 = vpack.c.bf16 %v5442, %v5439
      %v5515 = vpack.c.bf16 %v5450, %v5447
      %v5516 = vpack.c.bf16 %v5503, %v5500
      %v5517 = vpack.c.bf16 %v5511, %v5508
      %v5520 = vunpack.c.l.b16 %v3761
      %v5521 = vunpack.c.l.b16 %v3762
      %v5522 = vpack.c.b16 %v5521, %v5520
      %v5525 = vsel %vm1354, %v5514, 0
      %v5528 = vsel %vm1354, %v5515, 0
      %v5531 = vsel %vm1354, %v5516, 0
      %v5534 = vsel %vm1354, %v5517, 0
      %5536 = vmatprep.subr.bf16.mxu0 0
      %5537 = vmatpush1.bf16.msra.mxu0 0
      %5538 = vmatprep.subr.bf16.mxu0 0
      %5539 = vmatpush1.bf16.msra.mxu0 0
      %5540 = vmatprep.subr.bf16.mxu0 0
      %5541 = vmatpush1.bf16.msra.mxu0 0
      %5542 = vmatprep.subr.bf16.mxu0 0
      %5543 = vmatpush1.bf16.msra.mxu0 0
      %5544 = vmatprep.subr.bf16.mxu0 0
      %5545 = vmatpush1.bf16.msra.mxu0 0
      %5546 = vmatprep.subr.bf16.mxu0 0
      %5547 = vmatpush1.bf16.msra.mxu0 0
      %5548 = vmatprep.subr.bf16.mxu0 0
      %5549 = vmatpush1.bf16.msra.mxu0 0
      %5550 = vmatprep.subr.bf16.mxu0 0
      %5551 = vmatpush1.bf16.msra.mxu0 %v5522
      %5552 = vmatprep.subr.bf16.mxu0 0
      %5553 = vmatpush2.bf16.msra.mxu0 0
      %5554 = vmatprep.subr.bf16.mxu0 0
      %5555 = vmatpush2.bf16.msra.mxu0 0
      %5556 = vmatprep.subr.bf16.mxu0 0
      %5557 = vmatpush2.bf16.msra.mxu0 0
      %5558 = vmatprep.subr.bf16.mxu0 0
      %5559 = vmatpush2.bf16.msra.mxu0 0
      %5560 = vmatprep.subr.bf16.mxu0 0
      %5561 = vmatpush2.bf16.msra.mxu0 0
      %5562 = vmatprep.subr.bf16.mxu0 0
      %5563 = vmatpush2.bf16.msra.mxu0 0
      %5564 = vmatprep.subr.bf16.mxu0 0
      %5565 = vmatpush2.bf16.msra.mxu0 0
      %5566 = vmatprep.subr.bf16.mxu0 0
      %5567 = vmatpush2.bf16.msra.mxu0 0
      %5568 = vmatprep.mubr.bf16.mxu0 0
      %5569 = vmatmul.mubr.bf16.gmra.mxu0 %v5525
      %v5570 = vpop.f32.mrf.mxu0
      %v5571 = vadd.f32 0.0, %v5570
      %v5572 = vpop.f32.mrf.mxu0
      %v5573 = vpop.f32.mrf.mxu0
      %v5574 = vadd.f32 0.0, %v5573
      %v5575 = vpop.f32.mrf.mxu0
      %5576 = vmatprep.mubr.bf16.mxu0 0
      %5577 = vmatmul.mubr.bf16.gmra.mxu0 %v5528
      %v5578 = vpop.f32.mrf.mxu0
      %v5579 = vadd.f32 0.0, %v5578
      %v5580 = vpop.f32.mrf.mxu0
      %v5581 = vpop.f32.mrf.mxu0
      %v5582 = vadd.f32 0.0, %v5581
      %v5583 = vpop.f32.mrf.mxu0
      %5584 = vmatprep.mubr.bf16.mxu0 0
      %5585 = vmatmul.mubr.bf16.gmra.mxu0 %v5531
      %v5586 = vpop.f32.mrf.mxu0
      %v5587 = vadd.f32 0.0, %v5586
      %v5588 = vpop.f32.mrf.mxu0
      %v5589 = vpop.f32.mrf.mxu0
      %v5590 = vadd.f32 0.0, %v5589
      %v5591 = vpop.f32.mrf.mxu0
      %5592 = vmatprep.mubr.bf16.mxu0 0
      %5593 = vmatmul.mubr.bf16.gmra.mxu0 %v5534
      %v5594 = vpop.f32.mrf.mxu0
      %v5595 = vadd.f32 0.0, %v5594
      %v5596 = vpop.f32.mrf.mxu0
      %v5597 = vpop.f32.mrf.mxu0
      %v5598 = vadd.f32 0.0, %v5597
      %v5599 = vpop.f32.mrf.mxu0
      %5600 = vdwg.mxu0
      %v5601 = vadd.f32 %v5154, %v5571
      %v5602 = vadd.f32 %v5155, %v5574
      %v5603 = vadd.f32 %v5156, %v5579
      %v5604 = vadd.f32 %v5157, %v5582
      %v5605 = vadd.f32 %v5158, %v5587
      %v5606 = vadd.f32 %v5159, %v5590
      %v5607 = vadd.f32 %v5160, %v5595
      %v5608 = vadd.f32 %v5161, %v5598
      %5609 = vrot.lane.b32.xlu0 %v4272, 80
      %v5610 = vpop.permute.xlu0 %5609
      %5611 = vrot.lane.b32.xlu0 %v4273, 80
      %v5612 = vpop.permute.xlu0 %5611
      %5613 = vrot.lane.b32.xlu0 %v4276, 80
      %v5614 = vpop.permute.xlu0 %5613
      %5615 = vrot.lane.b32.xlu0 %v4277, 80
      %v5616 = vpop.permute.xlu0 %5615
      %v5618 = vsel %vm1354, %v5610, 0
      %v5621 = vsel %vm1354, %v5612, 0
      %v5624 = vsel %vm1354, %v5614, 0
      %v5627 = vsel %vm1354, %v5616, 0
      %5629 = vmatprep.subr.bf16.mxu0 0
      %5630 = vmatpush1.bf16.xpose.msra.mxu0 0
      %5631 = vmatprep.subr.bf16.mxu0 0
      %5632 = vmatpush1.bf16.xpose.msra.mxu0 0
      %5633 = vmatprep.subr.bf16.mxu0 0
      %5634 = vmatpush1.bf16.xpose.msra.mxu0 0
      %5635 = vmatprep.subr.bf16.mxu0 0
      %5636 = vmatpush1.bf16.xpose.msra.mxu0 0
      %5637 = vmatprep.subr.bf16.mxu0 0
      %5638 = vmatpush1.bf16.xpose.msra.mxu0 0
      %5639 = vmatprep.subr.bf16.mxu0 0
      %5640 = vmatpush1.bf16.xpose.msra.mxu0 0
      %5641 = vmatprep.subr.bf16.mxu0 0
      %5642 = vmatpush1.bf16.xpose.msra.mxu0 %v5627
      %5643 = vmatprep.subr.bf16.mxu0 0
      %5644 = vmatpush1.bf16.xpose.msra.mxu0 %v5624
      %5645 = vmatprep.subr.bf16.mxu0 0
      %5646 = vmatpush2.bf16.xpose.msra.mxu0 0
      %5647 = vmatprep.subr.bf16.mxu0 0
      %5648 = vmatpush2.bf16.xpose.msra.mxu0 0
      %5649 = vmatprep.subr.bf16.mxu0 0
      %5650 = vmatpush2.bf16.xpose.msra.mxu0 0
      %5651 = vmatprep.subr.bf16.mxu0 0
      %5652 = vmatpush2.bf16.xpose.msra.mxu0 0
      %5653 = vmatprep.subr.bf16.mxu0 0
      %5654 = vmatpush2.bf16.xpose.msra.mxu0 0
      %5655 = vmatprep.subr.bf16.mxu0 0
      %5656 = vmatpush2.bf16.xpose.msra.mxu0 0
      %5657 = vmatprep.subr.bf16.mxu0 0
      %5658 = vmatpush2.bf16.xpose.msra.mxu0 0
      %5659 = vmatprep.subr.bf16.mxu0 0
      %5660 = vmatpush2.bf16.xpose.msra.mxu0 0
      %5661 = vmatprep.mubr.bf16.mxu0 0
      %5662 = vmatmul.mubr.bf16.gmra.mxu0 %v5618
      %v5663 = vpop.f32.mrf.mxu0
      %v5664 = vadd.f32 0.0, %v5663
      %v5665 = vpop.f32.mrf.mxu0
      %v5666 = vpop.f32.mrf.mxu0
      %v5667 = vadd.f32 0.0, %v5666
      %v5668 = vpop.f32.mrf.mxu0
      %5669 = vmatprep.mubr.bf16.mxu0 0
      %5670 = vmatmul.mubr.bf16.gmra.mxu0 %v5621
      %v5671 = vpop.f32.mrf.mxu0
      %v5672 = vadd.f32 0.0, %v5671
      %v5673 = vpop.f32.mrf.mxu0
      %v5674 = vpop.f32.mrf.mxu0
      %v5675 = vadd.f32 0.0, %v5674
      %v5676 = vpop.f32.mrf.mxu0
      %5677 = vdwg.mxu0
      %5678 = vrot.lane.b32.xlu0 %v4274, 80
      %v5679 = vpop.permute.xlu0 %5678
      %5680 = vrot.lane.b32.xlu0 %v4275, 80
      %v5681 = vpop.permute.xlu0 %5680
      %5682 = vrot.lane.b32.xlu0 %v4278, 80
      %v5683 = vpop.permute.xlu0 %5682
      %5684 = vrot.lane.b32.xlu0 %v4279, 80
      %v5685 = vpop.permute.xlu0 %5684
      %v5687 = vsel %vm1354, %v5679, 0
      %v5690 = vsel %vm1354, %v5681, 0
      %v5693 = vsel %vm1354, %v5683, 0
      %v5696 = vsel %vm1354, %v5685, 0
      %5698 = vmatprep.subr.bf16.mxu0 0
      %5699 = vmatpush1.bf16.xpose.msra.mxu0 0
      %5700 = vmatprep.subr.bf16.mxu0 0
      %5701 = vmatpush1.bf16.xpose.msra.mxu0 0
      %5702 = vmatprep.subr.bf16.mxu0 0
      %5703 = vmatpush1.bf16.xpose.msra.mxu0 0
      %5704 = vmatprep.subr.bf16.mxu0 0
      %5705 = vmatpush1.bf16.xpose.msra.mxu0 0
      %5706 = vmatprep.subr.bf16.mxu0 0
      %5707 = vmatpush1.bf16.xpose.msra.mxu0 0
      %5708 = vmatprep.subr.bf16.mxu0 0
      %5709 = vmatpush1.bf16.xpose.msra.mxu0 0
      %5710 = vmatprep.subr.bf16.mxu0 0
      %5711 = vmatpush1.bf16.xpose.msra.mxu0 %v5696
      %5712 = vmatprep.subr.bf16.mxu0 0
      %5713 = vmatpush1.bf16.xpose.msra.mxu0 %v5693
      %5714 = vmatprep.subr.bf16.mxu0 0
      %5715 = vmatpush2.bf16.xpose.msra.mxu0 0
      %5716 = vmatprep.subr.bf16.mxu0 0
      %5717 = vmatpush2.bf16.xpose.msra.mxu0 0
      %5718 = vmatprep.subr.bf16.mxu0 0
      %5719 = vmatpush2.bf16.xpose.msra.mxu0 0
      %5720 = vmatprep.subr.bf16.mxu0 0
      %5721 = vmatpush2.bf16.xpose.msra.mxu0 0
      %5722 = vmatprep.subr.bf16.mxu0 0
      %5723 = vmatpush2.bf16.xpose.msra.mxu0 0
      %5724 = vmatprep.subr.bf16.mxu0 0
      %5725 = vmatpush2.bf16.xpose.msra.mxu0 0
      %5726 = vmatprep.subr.bf16.mxu0 0
      %5727 = vmatpush2.bf16.xpose.msra.mxu0 0
      %5728 = vmatprep.subr.bf16.mxu0 0
      %5729 = vmatpush2.bf16.xpose.msra.mxu0 0
      %5730 = vmatprep.mubr.bf16.mxu0 0
      %5731 = vmatmul.mubr.bf16.gmra.mxu0 %v5687
      %v5732 = vpop.f32.mrf.mxu0
      %v5733 = vadd.f32 0.0, %v5732
      %v5734 = vpop.f32.mrf.mxu0
      %v5735 = vpop.f32.mrf.mxu0
      %v5736 = vadd.f32 0.0, %v5735
      %v5737 = vpop.f32.mrf.mxu0
      %5738 = vmatprep.mubr.bf16.mxu0 0
      %5739 = vmatmul.mubr.bf16.gmra.mxu0 %v5690
      %v5740 = vpop.f32.mrf.mxu0
      %v5741 = vadd.f32 0.0, %v5740
      %v5742 = vpop.f32.mrf.mxu0
      %v5743 = vpop.f32.mrf.mxu0
      %v5744 = vadd.f32 0.0, %v5743
      %v5745 = vpop.f32.mrf.mxu0
      %5746 = vdwg.mxu0
      %v5747 = vsel %vm1477, %v5664, -inf
      %5748 = vmax.xlane.f32.xlu0 %v5747
      %v5749 = vpop.xlane.xlu0 %5748
      %v5750 = vsel %vm1477, %v5667, -inf
      %5751 = vmax.xlane.f32.xlu0 %v5750
      %v5752 = vpop.xlane.xlu0 %5751
      %v5753 = vsel %vm1477, %v5672, -inf
      %5754 = vmax.xlane.f32.xlu0 %v5753
      %v5755 = vpop.xlane.xlu0 %5754
      %v5756 = vsel %vm1477, %v5675, -inf
      %5757 = vmax.xlane.f32.xlu0 %v5756
      %v5758 = vpop.xlane.xlu0 %5757
      %v5759 = vsel %vm1477, %v5733, -inf
      %5760 = vmax.xlane.f32.xlu0 %v5759
      %v5761 = vpop.xlane.xlu0 %5760
      %v5762 = vsel %vm1477, %v5736, -inf
      %5763 = vmax.xlane.f32.xlu0 %v5762
      %v5764 = vpop.xlane.xlu0 %5763
      %v5765 = vsel %vm1477, %v5741, -inf
      %5766 = vmax.xlane.f32.xlu0 %v5765
      %v5767 = vpop.xlane.xlu0 %5766
      %v5768 = vsel %vm1477, %v5744, -inf
      %5769 = vmax.xlane.f32.xlu0 %v5768
      %v5770 = vpop.xlane.xlu0 %5769
      %v5771 = vsub.f32 %v5664, %v5749
      %v5772 = vsub.f32 %v5667, %v5752
      %v5773 = vsub.f32 %v5672, %v5755
      %v5774 = vsub.f32 %v5675, %v5758
      %v5775 = vsub.f32 %v5733, %v5761
      %v5776 = vsub.f32 %v5736, %v5764
      %v5777 = vsub.f32 %v5741, %v5767
      %v5778 = vsub.f32 %v5744, %v5770
      %v5779 = vmul.f32 %v5771, 1.442695
      %v5780 = vpow.pop %v5779
      %v5781 = vmul.f32 %v5772, 1.442695
      %v5782 = vpow.pop %v5781
      %v5783 = vmul.f32 %v5773, 1.442695
      %v5784 = vpow.pop %v5783
      %v5785 = vmul.f32 %v5774, 1.442695
      %v5786 = vpow.pop %v5785
      %v5787 = vmul.f32 %v5775, 1.442695
      %v5788 = vpow.pop %v5787
      %v5789 = vmul.f32 %v5776, 1.442695
      %v5790 = vpow.pop %v5789
      %v5791 = vmul.f32 %v5777, 1.442695
      %v5792 = vpow.pop %v5791
      %v5793 = vmul.f32 %v5778, 1.442695
      %v5794 = vpow.pop %v5793
      %v5795 = vsel %vm1477, %v5780, 0.0
      %5796 = vadd.xlane.f32.xlu0 %v5795
      %v5797 = vpop.xlane.xlu0 %5796
      %v5798 = vsel %vm1477, %v5782, 0.0
      %5799 = vadd.xlane.f32.xlu0 %v5798
      %v5800 = vpop.xlane.xlu0 %5799
      %v5801 = vsel %vm1477, %v5784, 0.0
      %5802 = vadd.xlane.f32.xlu0 %v5801
      %v5803 = vpop.xlane.xlu0 %5802
      %v5804 = vsel %vm1477, %v5786, 0.0
      %5805 = vadd.xlane.f32.xlu0 %v5804
      %v5806 = vpop.xlane.xlu0 %5805
      %v5807 = vsel %vm1477, %v5788, 0.0
      %5808 = vadd.xlane.f32.xlu0 %v5807
      %v5809 = vpop.xlane.xlu0 %5808
      %v5810 = vsel %vm1477, %v5790, 0.0
      %5811 = vadd.xlane.f32.xlu0 %v5810
      %v5812 = vpop.xlane.xlu0 %5811
      %v5813 = vsel %vm1477, %v5792, 0.0
      %5814 = vadd.xlane.f32.xlu0 %v5813
      %v5815 = vpop.xlane.xlu0 %5814
      %v5816 = vsel %vm1477, %v5794, 0.0
      %5817 = vadd.xlane.f32.xlu0 %v5816
      %v5818 = vpop.xlane.xlu0 %5817
      %v5819 = vrcp.pop %v5797
      %v5820 = vrcp.pop %v5800
      %v5821 = vrcp.pop %v5803
      %v5822 = vrcp.pop %v5806
      %v5823 = vrcp.pop %v5809
      %v5824 = vrcp.pop %v5812
      %v5825 = vrcp.pop %v5815
      %v5826 = vrcp.pop %v5818
      %v5827 = vmul.f32 %v5780, %v5819
      %v5828 = vmul.f32 %v5782, %v5820
      %v5829 = vmul.f32 %v5784, %v5821
      %v5830 = vmul.f32 %v5786, %v5822
      %v5831 = vmul.f32 %v5788, %v5823
      %v5832 = vmul.f32 %v5790, %v5824
      %v5833 = vmul.f32 %v5792, %v5825
      %v5834 = vmul.f32 %v5794, %v5826
      %v5835 = vpack.c.bf16 %v5828, %v5827
      %v5836 = vpack.c.bf16 %v5830, %v5829
      %v5837 = vpack.c.bf16 %v5832, %v5831
      %v5838 = vpack.c.bf16 %v5834, %v5833
      %5839 = vrot.lane.b32.xlu0 %v4280, 80
      %v5840 = vpop.permute.xlu0 %5839
      %5841 = vrot.lane.b32.xlu0 %v4281, 80
      %v5842 = vpop.permute.xlu0 %5841
      %v5846 = vsel %vm1477, %v5835, 0
      %v5849 = vsel %vm1477, %v5836, 0
      %5851 = vmatprep.subr.bf16.mxu0 0
      %5852 = vmatpush1.bf16.msra.mxu0 0
      %5853 = vmatprep.subr.bf16.mxu0 0
      %5854 = vmatpush1.bf16.msra.mxu0 0
      %5855 = vmatprep.subr.bf16.mxu0 0
      %5856 = vmatpush1.bf16.msra.mxu0 0
      %5857 = vmatprep.subr.bf16.mxu0 0
      %5858 = vmatpush1.bf16.msra.mxu0 0
      %5859 = vmatprep.subr.bf16.mxu0 0
      %5860 = vmatpush1.bf16.msra.mxu0 0
      %5861 = vmatprep.subr.bf16.mxu0 0
      %5862 = vmatpush1.bf16.msra.mxu0 0
      %5863 = vmatprep.subr.bf16.mxu0 0
      %5864 = vmatpush1.bf16.msra.mxu0 %v5842
      %5865 = vmatprep.subr.bf16.mxu0 0
      %5866 = vmatpush1.bf16.msra.mxu0 %v5840
      %5867 = vmatprep.subr.bf16.mxu0 0
      %5868 = vmatpush2.bf16.msra.mxu0 0
      %5869 = vmatprep.subr.bf16.mxu0 0
      %5870 = vmatpush2.bf16.msra.mxu0 0
      %5871 = vmatprep.subr.bf16.mxu0 0
      %5872 = vmatpush2.bf16.msra.mxu0 0
      %5873 = vmatprep.subr.bf16.mxu0 0
      %5874 = vmatpush2.bf16.msra.mxu0 0
      %5875 = vmatprep.subr.bf16.mxu0 0
      %5876 = vmatpush2.bf16.msra.mxu0 0
      %5877 = vmatprep.subr.bf16.mxu0 0
      %5878 = vmatpush2.bf16.msra.mxu0 0
      %5879 = vmatprep.subr.bf16.mxu0 0
      %5880 = vmatpush2.bf16.msra.mxu0 0
      %5881 = vmatprep.subr.bf16.mxu0 0
      %5882 = vmatpush2.bf16.msra.mxu0 0
      %5883 = vmatprep.mubr.bf16.mxu0 0
      %5884 = vmatmul.mubr.bf16.gmra.mxu0 %v5846
      %v5885 = vpop.f32.mrf.mxu0
      %v5886 = vadd.f32 0.0, %v5885
      %v5887 = vpop.f32.mrf.mxu0
      %v5888 = vpop.f32.mrf.mxu0
      %v5889 = vadd.f32 0.0, %v5888
      %v5890 = vpop.f32.mrf.mxu0
      %5891 = vmatprep.mubr.bf16.mxu0 0
      %5892 = vmatmul.mubr.bf16.gmra.mxu0 %v5849
      %v5893 = vpop.f32.mrf.mxu0
      %v5894 = vadd.f32 0.0, %v5893
      %v5895 = vpop.f32.mrf.mxu0
      %v5896 = vpop.f32.mrf.mxu0
      %v5897 = vadd.f32 0.0, %v5896
      %v5898 = vpop.f32.mrf.mxu0
      %5899 = vdwg.mxu0
      %5900 = vrot.lane.b32.xlu0 %v4282, 80
      %v5901 = vpop.permute.xlu0 %5900
      %5902 = vrot.lane.b32.xlu0 %v4283, 80
      %v5903 = vpop.permute.xlu0 %5902
      %v5907 = vsel %vm1477, %v5837, 0
      %v5910 = vsel %vm1477, %v5838, 0
      %5912 = vmatprep.subr.bf16.mxu0 0
      %5913 = vmatpush1.bf16.msra.mxu0 0
      %5914 = vmatprep.subr.bf16.mxu0 0
      %5915 = vmatpush1.bf16.msra.mxu0 0
      %5916 = vmatprep.subr.bf16.mxu0 0
      %5917 = vmatpush1.bf16.msra.mxu0 0
      %5918 = vmatprep.subr.bf16.mxu0 0
      %5919 = vmatpush1.bf16.msra.mxu0 0
      %5920 = vmatprep.subr.bf16.mxu0 0
      %5921 = vmatpush1.bf16.msra.mxu0 0
      %5922 = vmatprep.subr.bf16.mxu0 0
      %5923 = vmatpush1.bf16.msra.mxu0 0
      %5924 = vmatprep.subr.bf16.mxu0 0
      %5925 = vmatpush1.bf16.msra.mxu0 %v5903
      %5926 = vmatprep.subr.bf16.mxu0 0
      %5927 = vmatpush1.bf16.msra.mxu0 %v5901
      %5928 = vmatprep.subr.bf16.mxu0 0
      %5929 = vmatpush2.bf16.msra.mxu0 0
      %5930 = vmatprep.subr.bf16.mxu0 0
      %5931 = vmatpush2.bf16.msra.mxu0 0
      %5932 = vmatprep.subr.bf16.mxu0 0
      %5933 = vmatpush2.bf16.msra.mxu0 0
      %5934 = vmatprep.subr.bf16.mxu0 0
      %5935 = vmatpush2.bf16.msra.mxu0 0
      %5936 = vmatprep.subr.bf16.mxu0 0
      %5937 = vmatpush2.bf16.msra.mxu0 0
      %5938 = vmatprep.subr.bf16.mxu0 0
      %5939 = vmatpush2.bf16.msra.mxu0 0
      %5940 = vmatprep.subr.bf16.mxu0 0
      %5941 = vmatpush2.bf16.msra.mxu0 0
      %5942 = vmatprep.subr.bf16.mxu0 0
      %5943 = vmatpush2.bf16.msra.mxu0 0
      %5944 = vmatprep.mubr.bf16.mxu0 0
      %5945 = vmatmul.mubr.bf16.gmra.mxu0 %v5907
      %v5946 = vpop.f32.mrf.mxu0
      %v5947 = vadd.f32 0.0, %v5946
      %v5948 = vpop.f32.mrf.mxu0
      %v5949 = vpop.f32.mrf.mxu0
      %v5950 = vadd.f32 0.0, %v5949
      %v5951 = vpop.f32.mrf.mxu0
      %5952 = vmatprep.mubr.bf16.mxu0 0
      %5953 = vmatmul.mubr.bf16.gmra.mxu0 %v5910
      %v5954 = vpop.f32.mrf.mxu0
      %v5955 = vadd.f32 0.0, %v5954
      %v5956 = vpop.f32.mrf.mxu0
      %v5957 = vpop.f32.mrf.mxu0
      %v5958 = vadd.f32 0.0, %v5957
      %v5959 = vpop.f32.mrf.mxu0
      %5960 = vdwg.mxu0
      %v5961 = vpack.c.bf16 %v5889, %v5886
      %v5962 = vpack.c.bf16 %v5897, %v5894
      %v5963 = vpack.c.bf16 %v5950, %v5947
      %v5964 = vpack.c.bf16 %v5958, %v5955
      %v5967 = vunpack.c.l.b16 %v3763
      %v5968 = vunpack.c.l.b16 %v3764
      %v5969 = vpack.c.b16 %v5968, %v5967
      %v5972 = vsel %vm1354, %v5961, 0
      %v5975 = vsel %vm1354, %v5962, 0
      %v5978 = vsel %vm1354, %v5963, 0
      %v5981 = vsel %vm1354, %v5964, 0
      %5983 = vmatprep.subr.bf16.mxu0 0
      %5984 = vmatpush1.bf16.msra.mxu0 0
      %5985 = vmatprep.subr.bf16.mxu0 0
      %5986 = vmatpush1.bf16.msra.mxu0 0
      %5987 = vmatprep.subr.bf16.mxu0 0
      %5988 = vmatpush1.bf16.msra.mxu0 0
      %5989 = vmatprep.subr.bf16.mxu0 0
      %5990 = vmatpush1.bf16.msra.mxu0 0
      %5991 = vmatprep.subr.bf16.mxu0 0
      %5992 = vmatpush1.bf16.msra.mxu0 0
      %5993 = vmatprep.subr.bf16.mxu0 0
      %5994 = vmatpush1.bf16.msra.mxu0 0
      %5995 = vmatprep.subr.bf16.mxu0 0
      %5996 = vmatpush1.bf16.msra.mxu0 0
      %5997 = vmatprep.subr.bf16.mxu0 0
      %5998 = vmatpush1.bf16.msra.mxu0 %v5969
      %5999 = vmatprep.subr.bf16.mxu0 0
      %6000 = vmatpush2.bf16.msra.mxu0 0
      %6001 = vmatprep.subr.bf16.mxu0 0
      %6002 = vmatpush2.bf16.msra.mxu0 0
      %6003 = vmatprep.subr.bf16.mxu0 0
      %6004 = vmatpush2.bf16.msra.mxu0 0
      %6005 = vmatprep.subr.bf16.mxu0 0
      %6006 = vmatpush2.bf16.msra.mxu0 0
      %6007 = vmatprep.subr.bf16.mxu0 0
      %6008 = vmatpush2.bf16.msra.mxu0 0
      %6009 = vmatprep.subr.bf16.mxu0 0
      %6010 = vmatpush2.bf16.msra.mxu0 0
      %6011 = vmatprep.subr.bf16.mxu0 0
      %6012 = vmatpush2.bf16.msra.mxu0 0
      %6013 = vmatprep.subr.bf16.mxu0 0
      %6014 = vmatpush2.bf16.msra.mxu0 0
      %6015 = vmatprep.mubr.bf16.mxu0 0
      %6016 = vmatmul.mubr.bf16.gmra.mxu0 %v5972
      %v6017 = vpop.f32.mrf.mxu0
      %v6018 = vadd.f32 0.0, %v6017
      %v6019 = vpop.f32.mrf.mxu0
      %v6020 = vpop.f32.mrf.mxu0
      %v6021 = vadd.f32 0.0, %v6020
      %v6022 = vpop.f32.mrf.mxu0
      %6023 = vmatprep.mubr.bf16.mxu0 0
      %6024 = vmatmul.mubr.bf16.gmra.mxu0 %v5975
      %v6025 = vpop.f32.mrf.mxu0
      %v6026 = vadd.f32 0.0, %v6025
      %v6027 = vpop.f32.mrf.mxu0
      %v6028 = vpop.f32.mrf.mxu0
      %v6029 = vadd.f32 0.0, %v6028
      %v6030 = vpop.f32.mrf.mxu0
      %6031 = vmatprep.mubr.bf16.mxu0 0
      %6032 = vmatmul.mubr.bf16.gmra.mxu0 %v5978
      %v6033 = vpop.f32.mrf.mxu0
      %v6034 = vadd.f32 0.0, %v6033
      %v6035 = vpop.f32.mrf.mxu0
      %v6036 = vpop.f32.mrf.mxu0
      %v6037 = vadd.f32 0.0, %v6036
      %v6038 = vpop.f32.mrf.mxu0
      %6039 = vmatprep.mubr.bf16.mxu0 0
      %6040 = vmatmul.mubr.bf16.gmra.mxu0 %v5981
      %v6041 = vpop.f32.mrf.mxu0
      %v6042 = vadd.f32 0.0, %v6041
      %v6043 = vpop.f32.mrf.mxu0
      %v6044 = vpop.f32.mrf.mxu0
      %v6045 = vadd.f32 0.0, %v6044
      %v6046 = vpop.f32.mrf.mxu0
      %6047 = vdwg.mxu0
      %v6048 = vadd.f32 %v5601, %v6018
      %v6049 = vadd.f32 %v5602, %v6021
      %v6050 = vadd.f32 %v5603, %v6026
      %v6051 = vadd.f32 %v5604, %v6029
      %v6052 = vadd.f32 %v5605, %v6034
      %v6053 = vadd.f32 %v5606, %v6037
      %v6054 = vadd.f32 %v5607, %v6042
      %v6055 = vadd.f32 %v5608, %v6045
      %v6056 = vsel %vm671, %v6048, 0.0
      %6057 = vadd.xlane.f32.xlu0 %v6056
      %v6058 = vpop.xlane.xlu0 %6057
      %v6059 = vsel %vm671, %v6049, 0.0
      %6060 = vadd.xlane.f32.xlu0 %v6059
      %v6061 = vpop.xlane.xlu0 %6060
      %v6062 = vsel %vm671, %v6050, 0.0
      %6063 = vadd.xlane.f32.xlu0 %v6062
      %v6064 = vpop.xlane.xlu0 %6063
      %v6065 = vsel %vm671, %v6051, 0.0
      %6066 = vadd.xlane.f32.xlu0 %v6065
      %v6067 = vpop.xlane.xlu0 %6066
      %v6068 = vsel %vm671, %v6052, 0.0
      %6069 = vadd.xlane.f32.xlu0 %v6068
      %v6070 = vpop.xlane.xlu0 %6069
      %v6071 = vsel %vm671, %v6053, 0.0
      %6072 = vadd.xlane.f32.xlu0 %v6071
      %v6073 = vpop.xlane.xlu0 %6072
      %v6074 = vsel %vm671, %v6054, 0.0
      %6075 = vadd.xlane.f32.xlu0 %v6074
      %v6076 = vpop.xlane.xlu0 %6075
      %v6077 = vsel %vm671, %v6055, 0.0
      %6078 = vadd.xlane.f32.xlu0 %v6077
      %v6079 = vpop.xlane.xlu0 %6078
      %v6080 = vmul.f32 %v6058, %v696
      %v6081 = vmul.f32 %v6061, %v696
      %v6082 = vmul.f32 %v6064, %v696
      %v6083 = vmul.f32 %v6067, %v696
      %v6084 = vmul.f32 %v6070, %v696
      %v6085 = vmul.f32 %v6073, %v696
      %v6086 = vmul.f32 %v6076, %v696
      %v6087 = vmul.f32 %v6079, %v696
      %v6088 = vsub.f32 %v6048, %v6080
      %v6089 = vsub.f32 %v6049, %v6081
      %v6090 = vsub.f32 %v6050, %v6082
      %v6091 = vsub.f32 %v6051, %v6083
      %v6092 = vsub.f32 %v6052, %v6084
      %v6093 = vsub.f32 %v6053, %v6085
      %v6094 = vsub.f32 %v6054, %v6086
      %v6095 = vsub.f32 %v6055, %v6087
      %v6096 = vmul.f32 %v6088, %v6088
      %v6097 = vmul.f32 %v6089, %v6089
      %v6098 = vmul.f32 %v6090, %v6090
      %v6099 = vmul.f32 %v6091, %v6091
      %v6100 = vmul.f32 %v6092, %v6092
      %v6101 = vmul.f32 %v6093, %v6093
      %v6102 = vmul.f32 %v6094, %v6094
      %v6103 = vmul.f32 %v6095, %v6095
      %v6104 = vsel %vm671, %v6096, 0.0
      %6105 = vadd.xlane.f32.xlu0 %v6104
      %v6106 = vpop.xlane.xlu0 %6105
      %v6107 = vsel %vm671, %v6097, 0.0
      %6108 = vadd.xlane.f32.xlu0 %v6107
      %v6109 = vpop.xlane.xlu0 %6108
      %v6110 = vsel %vm671, %v6098, 0.0
      %6111 = vadd.xlane.f32.xlu0 %v6110
      %v6112 = vpop.xlane.xlu0 %6111
      %v6113 = vsel %vm671, %v6099, 0.0
      %6114 = vadd.xlane.f32.xlu0 %v6113
      %v6115 = vpop.xlane.xlu0 %6114
      %v6116 = vsel %vm671, %v6100, 0.0
      %6117 = vadd.xlane.f32.xlu0 %v6116
      %v6118 = vpop.xlane.xlu0 %6117
      %v6119 = vsel %vm671, %v6101, 0.0
      %6120 = vadd.xlane.f32.xlu0 %v6119
      %v6121 = vpop.xlane.xlu0 %6120
      %v6122 = vsel %vm671, %v6102, 0.0
      %6123 = vadd.xlane.f32.xlu0 %v6122
      %v6124 = vpop.xlane.xlu0 %6123
      %v6125 = vsel %vm671, %v6103, 0.0
      %6126 = vadd.xlane.f32.xlu0 %v6125
      %v6127 = vpop.xlane.xlu0 %6126
      %v6128 = vmul.f32 %v6106, %v696
      %v6129 = vmul.f32 %v6109, %v696
      %v6130 = vmul.f32 %v6112, %v696
      %v6131 = vmul.f32 %v6115, %v696
      %v6132 = vmul.f32 %v6118, %v696
      %v6133 = vmul.f32 %v6121, %v696
      %v6134 = vmul.f32 %v6124, %v696
      %v6135 = vmul.f32 %v6127, %v696
      %v6136 = vadd.f32 %v6128, 1e-05
      %v6137 = vadd.f32 %v6129, 1e-05
      %v6138 = vadd.f32 %v6130, 1e-05
      %v6139 = vadd.f32 %v6131, 1e-05
      %v6140 = vadd.f32 %v6132, 1e-05
      %v6141 = vadd.f32 %v6133, 1e-05
      %v6142 = vadd.f32 %v6134, 1e-05
      %v6143 = vadd.f32 %v6135, 1e-05
      %v6144 = vrsqrt.pop %v6136
      %v6145 = vrsqrt.pop %v6137
      %v6146 = vrsqrt.pop %v6138
      %v6147 = vrsqrt.pop %v6139
      %v6148 = vrsqrt.pop %v6140
      %v6149 = vrsqrt.pop %v6141
      %v6150 = vrsqrt.pop %v6142
      %v6151 = vrsqrt.pop %v6143
      %v6152 = vmul.f32 %v6088, %v6144
      %v6153 = vmul.f32 %v6089, %v6145
      %v6154 = vmul.f32 %v6090, %v6146
      %v6155 = vmul.f32 %v6091, %v6147
      %v6156 = vmul.f32 %v6092, %v6148
      %v6157 = vmul.f32 %v6093, %v6149
      %v6158 = vmul.f32 %v6094, %v6150
      %v6159 = vmul.f32 %v6095, %v6151
      %v6161 = vlaneseq
      %v6162 = vshrl.u32 %v6161, 7
      %v6163 = vsub.s32 0, %v6162
      %v6164 = vrot.slane %v3768, %v6163
      %v6166 = vmul.f32 %v6152, %v6164
      %v6167 = vmul.f32 %v6153, %v6164
      %v6168 = vmul.f32 %v6154, %v6164
      %v6169 = vmul.f32 %v6155, %v6164
      %v6170 = vmul.f32 %v6156, %v6164
      %v6171 = vmul.f32 %v6157, %v6164
      %v6172 = vmul.f32 %v6158, %v6164
      %v6173 = vmul.f32 %v6159, %v6164
      %v6175 = vlaneseq
      %v6176 = vshrl.u32 %v6175, 7
      %v6177 = vsub.s32 0, %v6176
      %v6178 = vrot.slane %v3770, %v6177
      %v6180 = vadd.f32 %v6166, %v6178
      %v6181 = vadd.f32 %v6167, %v6178
      %v6182 = vadd.f32 %v6168, %v6178
      %v6183 = vadd.f32 %v6169, %v6178
      %v6184 = vadd.f32 %v6170, %v6178
      %v6185 = vadd.f32 %v6171, %v6178
      %v6186 = vadd.f32 %v6172, %v6178
      %v6187 = vadd.f32 %v6173, %v6178
      %v6188 = vpack.c.bf16 %v6181, %v6180
      %v6189 = vpack.c.bf16 %v6183, %v6182
      %v6190 = vpack.c.bf16 %v6185, %v6184
      %v6191 = vpack.c.bf16 %v6187, %v6186
      %v6193 = vlaneseq
      %v6194 = vshrl.u32 %v6193, 7
      %v6195 = vsub.s32 0, %v6194
      %v6196 = vrot.slane %v3781, %v6195
      %v6197 = vlaneseq
      %v6198 = vshrl.u32 %v6197, 7
      %v6199 = vsub.s32 1, %v6198
      %v6200 = vrot.slane %v3781, %v6199
      %v6211 = vunpack.c.l.b16 %v3772
      %v6212 = vunpack.c.h.b16 %v3772
      %v6213 = vunpack.c.l.b16 %v3773
      %v6214 = vunpack.c.h.b16 %v3773
      %v6215 = vunpack.c.l.b16 %v3774
      %v6216 = vunpack.c.h.b16 %v3774
      %v6217 = vunpack.c.l.b16 %v3775
      %v6218 = vunpack.c.h.b16 %v3775
      %v6219 = vunpack.c.l.b16 %v3776
      %v6220 = vunpack.c.h.b16 %v3776
      %v6221 = vunpack.c.l.b16 %v3777
      %v6222 = vunpack.c.h.b16 %v3777
      %v6223 = vunpack.c.l.b16 %v3778
      %v6224 = vunpack.c.h.b16 %v3778
      %v6225 = vunpack.c.l.b16 %v3779
      %v6226 = vunpack.c.h.b16 %v3779
      %v6227 = vpack.c.b16 %v6213, %v6211
      %v6228 = vpack.c.b16 %v6214, %v6212
      %v6229 = vpack.c.b16 %v6217, %v6215
      %v6230 = vpack.c.b16 %v6218, %v6216
      %v6231 = vpack.c.b16 %v6221, %v6219
      %v6232 = vpack.c.b16 %v6222, %v6220
      %v6233 = vpack.c.b16 %v6225, %v6223
      %v6234 = vpack.c.b16 %v6226, %v6224
      %v6244 = vsel %vm671, %v6188, 0
      %v6247 = vsel %vm671, %v6189, 0
      %v6250 = vsel %vm671, %v6190, 0
      %v6253 = vsel %vm671, %v6191, 0
      %6255 = vmatprep.subr.bf16.mxu0 0
      %6256 = vmatpush1.bf16.msra.mxu0 0
      %6257 = vmatprep.subr.bf16.mxu0 0
      %6258 = vmatpush1.bf16.msra.mxu0 0
      %6259 = vmatprep.subr.bf16.mxu0 0
      %6260 = vmatpush1.bf16.msra.mxu0 0
      %6261 = vmatprep.subr.bf16.mxu0 0
      %6262 = vmatpush1.bf16.msra.mxu0 0
      %6263 = vmatprep.subr.bf16.mxu0 %v6234
      %6264 = vmatpush1.bf16.msra.mxu0 %v6233
      %6265 = vmatprep.subr.bf16.mxu0 %v6232
      %6266 = vmatpush1.bf16.msra.mxu0 %v6231
      %6267 = vmatprep.subr.bf16.mxu0 %v6230
      %6268 = vmatpush1.bf16.msra.mxu0 %v6229
      %6269 = vmatprep.subr.bf16.mxu0 %v6228
      %6270 = vmatpush1.bf16.msra.mxu0 %v6227
      %6271 = vmatprep.subr.bf16.mxu0 0
      %6272 = vmatpush2.bf16.msra.mxu0 0
      %6273 = vmatprep.subr.bf16.mxu0 0
      %6274 = vmatpush2.bf16.msra.mxu0 0
      %6275 = vmatprep.subr.bf16.mxu0 0
      %6276 = vmatpush2.bf16.msra.mxu0 0
      %6277 = vmatprep.subr.bf16.mxu0 0
      %6278 = vmatpush2.bf16.msra.mxu0 0
      %6279 = vmatprep.subr.bf16.mxu0 0
      %6280 = vmatpush2.bf16.msra.mxu0 0
      %6281 = vmatprep.subr.bf16.mxu0 0
      %6282 = vmatpush2.bf16.msra.mxu0 0
      %6283 = vmatprep.subr.bf16.mxu0 0
      %6284 = vmatpush2.bf16.msra.mxu0 0
      %6285 = vmatprep.subr.bf16.mxu0 0
      %6286 = vmatpush2.bf16.msra.mxu0 0
      %6287 = vmatprep.mubr.bf16.mxu0 0
      %6288 = vmatmul.mubr.bf16.gmra.mxu0 %v6244
      %v6289 = vpop.f32.mrf.mxu0
      %v6290 = vadd.f32 %v6196, %v6289
      %v6291 = vpop.f32.mrf.mxu0
      %v6292 = vadd.f32 %v6200, %v6291
      %v6293 = vpop.f32.mrf.mxu0
      %v6294 = vadd.f32 %v6196, %v6293
      %v6295 = vpop.f32.mrf.mxu0
      %v6296 = vadd.f32 %v6200, %v6295
      %6297 = vmatprep.mubr.bf16.mxu0 0
      %6298 = vmatmul.mubr.bf16.gmra.mxu0 %v6247
      %v6299 = vpop.f32.mrf.mxu0
      %v6300 = vadd.f32 %v6196, %v6299
      %v6301 = vpop.f32.mrf.mxu0
      %v6302 = vadd.f32 %v6200, %v6301
      %v6303 = vpop.f32.mrf.mxu0
      %v6304 = vadd.f32 %v6196, %v6303
      %v6305 = vpop.f32.mrf.mxu0
      %v6306 = vadd.f32 %v6200, %v6305
      %6307 = vmatprep.mubr.bf16.mxu0 0
      %6308 = vmatmul.mubr.bf16.gmra.mxu0 %v6250
      %v6309 = vpop.f32.mrf.mxu0
      %v6310 = vadd.f32 %v6196, %v6309
      %v6311 = vpop.f32.mrf.mxu0
      %v6312 = vadd.f32 %v6200, %v6311
      %v6313 = vpop.f32.mrf.mxu0
      %v6314 = vadd.f32 %v6196, %v6313
      %v6315 = vpop.f32.mrf.mxu0
      %v6316 = vadd.f32 %v6200, %v6315
      %6317 = vmatprep.mubr.bf16.mxu0 0
      %6318 = vmatmul.mubr.bf16.gmra.mxu0 %v6253
      %v6319 = vpop.f32.mrf.mxu0
      %v6320 = vadd.f32 %v6196, %v6319
      %v6321 = vpop.f32.mrf.mxu0
      %v6322 = vadd.f32 %v6200, %v6321
      %v6323 = vpop.f32.mrf.mxu0
      %v6324 = vadd.f32 %v6196, %v6323
      %v6325 = vpop.f32.mrf.mxu0
      %v6326 = vadd.f32 %v6200, %v6325
      %6327 = vdwg.mxu0
      %v6328 = vmul.f32 %v6290, 1.702
      %v6329 = vmul.f32 %v6292, 1.702
      %v6330 = vmul.f32 %v6294, 1.702
      %v6331 = vmul.f32 %v6296, 1.702
      %v6332 = vmul.f32 %v6300, 1.702
      %v6333 = vmul.f32 %v6302, 1.702
      %v6334 = vmul.f32 %v6304, 1.702
      %v6335 = vmul.f32 %v6306, 1.702
      %v6336 = vmul.f32 %v6310, 1.702
      %v6337 = vmul.f32 %v6312, 1.702
      %v6338 = vmul.f32 %v6314, 1.702
      %v6339 = vmul.f32 %v6316, 1.702
      %v6340 = vmul.f32 %v6320, 1.702
      %v6341 = vmul.f32 %v6322, 1.702
      %v6342 = vmul.f32 %v6324, 1.702
      %v6343 = vmul.f32 %v6326, 1.702
      %v6344 = vxor.u32 %v6328, 2147483648
      %v6345 = vxor.u32 %v6329, 2147483648
      %v6346 = vxor.u32 %v6330, 2147483648
      %v6347 = vxor.u32 %v6331, 2147483648
      %v6348 = vxor.u32 %v6332, 2147483648
      %v6349 = vxor.u32 %v6333, 2147483648
      %v6350 = vxor.u32 %v6334, 2147483648
      %v6351 = vxor.u32 %v6335, 2147483648
      %v6352 = vxor.u32 %v6336, 2147483648
      %v6353 = vxor.u32 %v6337, 2147483648
      %v6354 = vxor.u32 %v6338, 2147483648
      %v6355 = vxor.u32 %v6339, 2147483648
      %v6356 = vxor.u32 %v6340, 2147483648
      %v6357 = vxor.u32 %v6341, 2147483648
      %v6358 = vxor.u32 %v6342, 2147483648
      %v6359 = vxor.u32 %v6343, 2147483648
      %v6360 = vmul.f32 %v6344, 1.442695
      %v6361 = vpow.pop %v6360
      %v6362 = vmul.f32 %v6345, 1.442695
      %v6363 = vpow.pop %v6362
      %v6364 = vmul.f32 %v6346, 1.442695
      %v6365 = vpow.pop %v6364
      %v6366 = vmul.f32 %v6347, 1.442695
      %v6367 = vpow.pop %v6366
      %v6368 = vmul.f32 %v6348, 1.442695
      %v6369 = vpow.pop %v6368
      %v6370 = vmul.f32 %v6349, 1.442695
      %v6371 = vpow.pop %v6370
      %v6372 = vmul.f32 %v6350, 1.442695
      %v6373 = vpow.pop %v6372
      %v6374 = vmul.f32 %v6351, 1.442695
      %v6375 = vpow.pop %v6374
      %v6376 = vmul.f32 %v6352, 1.442695
      %v6377 = vpow.pop %v6376
      %v6378 = vmul.f32 %v6353, 1.442695
      %v6379 = vpow.pop %v6378
      %v6380 = vmul.f32 %v6354, 1.442695
      %v6381 = vpow.pop %v6380
      %v6382 = vmul.f32 %v6355, 1.442695
      %v6383 = vpow.pop %v6382
      %v6384 = vmul.f32 %v6356, 1.442695
      %v6385 = vpow.pop %v6384
      %v6386 = vmul.f32 %v6357, 1.442695
      %v6387 = vpow.pop %v6386
      %v6388 = vmul.f32 %v6358, 1.442695
      %v6389 = vpow.pop %v6388
      %v6390 = vmul.f32 %v6359, 1.442695
      %v6391 = vpow.pop %v6390
      %v6392 = vadd.f32 %v6361, 1.0
      %v6393 = vadd.f32 %v6363, 1.0
      %v6394 = vadd.f32 %v6365, 1.0
      %v6395 = vadd.f32 %v6367, 1.0
      %v6396 = vadd.f32 %v6369, 1.0
      %v6397 = vadd.f32 %v6371, 1.0
      %v6398 = vadd.f32 %v6373, 1.0
      %v6399 = vadd.f32 %v6375, 1.0
      %v6400 = vadd.f32 %v6377, 1.0
      %v6401 = vadd.f32 %v6379, 1.0
      %v6402 = vadd.f32 %v6381, 1.0
      %v6403 = vadd.f32 %v6383, 1.0
      %v6404 = vadd.f32 %v6385, 1.0
      %v6405 = vadd.f32 %v6387, 1.0
      %v6406 = vadd.f32 %v6389, 1.0
      %v6407 = vadd.f32 %v6391, 1.0
      %v6408 = vrcp.pop %v6392
      %v6409 = vmul.f32 1.0, %v6408
      %v6410 = vrcp.pop %v6393
      %v6411 = vmul.f32 1.0, %v6410
      %v6412 = vrcp.pop %v6394
      %v6413 = vmul.f32 1.0, %v6412
      %v6414 = vrcp.pop %v6395
      %v6415 = vmul.f32 1.0, %v6414
      %v6416 = vrcp.pop %v6396
      %v6417 = vmul.f32 1.0, %v6416
      %v6418 = vrcp.pop %v6397
      %v6419 = vmul.f32 1.0, %v6418
      %v6420 = vrcp.pop %v6398
      %v6421 = vmul.f32 1.0, %v6420
      %v6422 = vrcp.pop %v6399
      %v6423 = vmul.f32 1.0, %v6422
      %v6424 = vrcp.pop %v6400
      %v6425 = vmul.f32 1.0, %v6424
      %v6426 = vrcp.pop %v6401
      %v6427 = vmul.f32 1.0, %v6426
      %v6428 = vrcp.pop %v6402
      %v6429 = vmul.f32 1.0, %v6428
      %v6430 = vrcp.pop %v6403
      %v6431 = vmul.f32 1.0, %v6430
      %v6432 = vrcp.pop %v6404
      %v6433 = vmul.f32 1.0, %v6432
      %v6434 = vrcp.pop %v6405
      %v6435 = vmul.f32 1.0, %v6434
      %v6436 = vrcp.pop %v6406
      %v6437 = vmul.f32 1.0, %v6436
      %v6438 = vrcp.pop %v6407
      %v6439 = vmul.f32 1.0, %v6438
      %v6440 = vmul.f32 %v6290, %v6409
      %v6441 = vmul.f32 %v6292, %v6411
      %v6442 = vmul.f32 %v6294, %v6413
      %v6443 = vmul.f32 %v6296, %v6415
      %v6444 = vmul.f32 %v6300, %v6417
      %v6445 = vmul.f32 %v6302, %v6419
      %v6446 = vmul.f32 %v6304, %v6421
      %v6447 = vmul.f32 %v6306, %v6423
      %v6448 = vmul.f32 %v6310, %v6425
      %v6449 = vmul.f32 %v6312, %v6427
      %v6450 = vmul.f32 %v6314, %v6429
      %v6451 = vmul.f32 %v6316, %v6431
      %v6452 = vmul.f32 %v6320, %v6433
      %v6453 = vmul.f32 %v6322, %v6435
      %v6454 = vmul.f32 %v6324, %v6437
      %v6455 = vmul.f32 %v6326, %v6439
      %v6456 = vpack.c.bf16 %v6442, %v6440
      %v6457 = vpack.c.bf16 %v6443, %v6441
      %v6458 = vpack.c.bf16 %v6446, %v6444
      %v6459 = vpack.c.bf16 %v6447, %v6445
      %v6460 = vpack.c.bf16 %v6450, %v6448
      %v6461 = vpack.c.bf16 %v6451, %v6449
      %v6462 = vpack.c.bf16 %v6454, %v6452
      %v6463 = vpack.c.bf16 %v6455, %v6453
      %v6496 = vunpack.c.l.b16 %v3783
      %v6497 = vunpack.c.l.b16 %v3784
      %v6498 = vunpack.c.l.b16 %v3785
      %v6499 = vunpack.c.l.b16 %v3786
      %v6500 = vunpack.c.l.b16 %v3787
      %v6501 = vunpack.c.l.b16 %v3788
      %v6502 = vunpack.c.l.b16 %v3789
      %v6503 = vunpack.c.l.b16 %v3790
      %v6504 = vunpack.c.l.b16 %v3791
      %v6505 = vunpack.c.l.b16 %v3792
      %v6506 = vunpack.c.l.b16 %v3793
      %v6507 = vunpack.c.l.b16 %v3794
      %v6508 = vunpack.c.l.b16 %v3795
      %v6509 = vunpack.c.l.b16 %v3796
      %v6510 = vunpack.c.l.b16 %v3797
      %v6511 = vunpack.c.l.b16 %v3798
      %v6512 = vunpack.c.l.b16 %v3799
      %v6513 = vunpack.c.l.b16 %v3800
      %v6514 = vunpack.c.l.b16 %v3801
      %v6515 = vunpack.c.l.b16 %v3802
      %v6516 = vunpack.c.l.b16 %v3803
      %v6517 = vunpack.c.l.b16 %v3804
      %v6518 = vunpack.c.l.b16 %v3805
      %v6519 = vunpack.c.l.b16 %v3806
      %v6520 = vunpack.c.l.b16 %v3807
      %v6521 = vunpack.c.l.b16 %v3808
      %v6522 = vunpack.c.l.b16 %v3809
      %v6523 = vunpack.c.l.b16 %v3810
      %v6524 = vunpack.c.l.b16 %v3811
      %v6525 = vunpack.c.l.b16 %v3812
      %v6526 = vunpack.c.l.b16 %v3813
      %v6527 = vunpack.c.l.b16 %v3814
      %v6528 = vpack.c.b16 %v6497, %v6496
      %v6529 = vpack.c.b16 %v6499, %v6498
      %v6530 = vpack.c.b16 %v6501, %v6500
      %v6531 = vpack.c.b16 %v6503, %v6502
      %v6532 = vpack.c.b16 %v6505, %v6504
      %v6533 = vpack.c.b16 %v6507, %v6506
      %v6534 = vpack.c.b16 %v6509, %v6508
      %v6535 = vpack.c.b16 %v6511, %v6510
      %v6536 = vpack.c.b16 %v6513, %v6512
      %v6537 = vpack.c.b16 %v6515, %v6514
      %v6538 = vpack.c.b16 %v6517, %v6516
      %v6539 = vpack.c.b16 %v6519, %v6518
      %v6540 = vpack.c.b16 %v6521, %v6520
      %v6541 = vpack.c.b16 %v6523, %v6522
      %v6542 = vpack.c.b16 %v6525, %v6524
      %v6543 = vpack.c.b16 %v6527, %v6526
      %6560 = vmatprep.subr.bf16.mxu0 0
      %6561 = vmatpush1.bf16.msra.mxu0 %v6535
      %6562 = vmatprep.subr.bf16.mxu0 0
      %6563 = vmatpush1.bf16.msra.mxu0 %v6534
      %6564 = vmatprep.subr.bf16.mxu0 0
      %6565 = vmatpush1.bf16.msra.mxu0 %v6533
      %6566 = vmatprep.subr.bf16.mxu0 0
      %6567 = vmatpush1.bf16.msra.mxu0 %v6532
      %6568 = vmatprep.subr.bf16.mxu0 0
      %6569 = vmatpush1.bf16.msra.mxu0 %v6531
      %6570 = vmatprep.subr.bf16.mxu0 0
      %6571 = vmatpush1.bf16.msra.mxu0 %v6530
      %6572 = vmatprep.subr.bf16.mxu0 0
      %6573 = vmatpush1.bf16.msra.mxu0 %v6529
      %6574 = vmatprep.subr.bf16.mxu0 0
      %6575 = vmatpush1.bf16.msra.mxu0 %v6528
      %6576 = vmatprep.subr.bf16.mxu0 0
      %6577 = vmatpush2.bf16.msra.mxu0 %v6543
      %6578 = vmatprep.subr.bf16.mxu0 0
      %6579 = vmatpush2.bf16.msra.mxu0 %v6542
      %6580 = vmatprep.subr.bf16.mxu0 0
      %6581 = vmatpush2.bf16.msra.mxu0 %v6541
      %6582 = vmatprep.subr.bf16.mxu0 0
      %6583 = vmatpush2.bf16.msra.mxu0 %v6540
      %6584 = vmatprep.subr.bf16.mxu0 0
      %6585 = vmatpush2.bf16.msra.mxu0 %v6539
      %6586 = vmatprep.subr.bf16.mxu0 0
      %6587 = vmatpush2.bf16.msra.mxu0 %v6538
      %6588 = vmatprep.subr.bf16.mxu0 0
      %6589 = vmatpush2.bf16.msra.mxu0 %v6537
      %6590 = vmatprep.subr.bf16.mxu0 0
      %6591 = vmatpush2.bf16.msra.mxu0 %v6536
      %6592 = vmatprep.mubr.bf16.mxu0 %v6457
      %6593 = vmatmul.mubr.bf16.gmra.mxu0 %v6456
      %v6594 = vpop.f32.mrf.mxu0
      %v6595 = vadd.f32 0.0, %v6594
      %v6596 = vpop.f32.mrf.mxu0
      %v6597 = vpop.f32.mrf.mxu0
      %v6598 = vadd.f32 0.0, %v6597
      %v6599 = vpop.f32.mrf.mxu0
      %6600 = vmatprep.mubr.bf16.mxu0 %v6459
      %6601 = vmatmul.mubr.bf16.gmra.mxu0 %v6458
      %v6602 = vpop.f32.mrf.mxu0
      %v6603 = vadd.f32 0.0, %v6602
      %v6604 = vpop.f32.mrf.mxu0
      %v6605 = vpop.f32.mrf.mxu0
      %v6606 = vadd.f32 0.0, %v6605
      %v6607 = vpop.f32.mrf.mxu0
      %6608 = vmatprep.mubr.bf16.mxu0 %v6461
      %6609 = vmatmul.mubr.bf16.gmra.mxu0 %v6460
      %v6610 = vpop.f32.mrf.mxu0
      %v6611 = vadd.f32 0.0, %v6610
      %v6612 = vpop.f32.mrf.mxu0
      %v6613 = vpop.f32.mrf.mxu0
      %v6614 = vadd.f32 0.0, %v6613
      %v6615 = vpop.f32.mrf.mxu0
      %6616 = vmatprep.mubr.bf16.mxu0 %v6463
      %6617 = vmatmul.mubr.bf16.gmra.mxu0 %v6462
      %v6618 = vpop.f32.mrf.mxu0
      %v6619 = vadd.f32 0.0, %v6618
      %v6620 = vpop.f32.mrf.mxu0
      %v6621 = vpop.f32.mrf.mxu0
      %v6622 = vadd.f32 0.0, %v6621
      %v6623 = vpop.f32.mrf.mxu0
      %6624 = vdwg.mxu0
      %v6625 = vadd.f32 %v6048, %v6595
      %v6626 = vadd.f32 %v6049, %v6598
      %v6627 = vadd.f32 %v6050, %v6603
      %v6628 = vadd.f32 %v6051, %v6606
      %v6629 = vadd.f32 %v6052, %v6611
      %v6630 = vadd.f32 %v6053, %v6614
      %v6631 = vadd.f32 %v6054, %v6619
      %v6632 = vadd.f32 %v6055, %v6622
      %v6634 = vlaneseq
      %v6635 = vshrl.u32 %v6634, 7
      %v6636 = vsub.s32 0, %v6635
      %v6637 = vrot.slane %v3816, %v6636
      %v6639 = vadd.f32 %v6625, %v6637
      %v6640 = vadd.f32 %v6626, %v6637
      %v6641 = vadd.f32 %v6627, %v6637
      %v6642 = vadd.f32 %v6628, %v6637
      %v6643 = vadd.f32 %v6629, %v6637
      %v6644 = vadd.f32 %v6630, %v6637
      %v6645 = vadd.f32 %v6631, %v6637
      %v6646 = vadd.f32 %v6632, %v6637
      %v6647 = vld [vmem:[%s19] sm:$0x1]
      %v6648 = vld [vmem:[%s20] sm:$0x1]
      %v6649 = vsel %vm671, %v6639, 0.0
      %6650 = vadd.xlane.f32.xlu0 %v6649
      %v6651 = vpop.xlane.xlu0 %6650
      %v6652 = vsel %vm671, %v6640, 0.0
      %6653 = vadd.xlane.f32.xlu0 %v6652
      %v6654 = vpop.xlane.xlu0 %6653
      %v6655 = vsel %vm671, %v6641, 0.0
      %6656 = vadd.xlane.f32.xlu0 %v6655
      %v6657 = vpop.xlane.xlu0 %6656
      %v6658 = vsel %vm671, %v6642, 0.0
      %6659 = vadd.xlane.f32.xlu0 %v6658
      %v6660 = vpop.xlane.xlu0 %6659
      %v6661 = vsel %vm671, %v6643, 0.0
      %6662 = vadd.xlane.f32.xlu0 %v6661
      %v6663 = vpop.xlane.xlu0 %6662
      %v6664 = vsel %vm671, %v6644, 0.0
      %6665 = vadd.xlane.f32.xlu0 %v6664
      %v6666 = vpop.xlane.xlu0 %6665
      %v6667 = vsel %vm671, %v6645, 0.0
      %6668 = vadd.xlane.f32.xlu0 %v6667
      %v6669 = vpop.xlane.xlu0 %6668
      %v6670 = vsel %vm671, %v6646, 0.0
      %6671 = vadd.xlane.f32.xlu0 %v6670
      %v6672 = vpop.xlane.xlu0 %6671
      %v6673 = vmul.f32 %v6651, %v696
      %v6674 = vmul.f32 %v6654, %v696
      %v6675 = vmul.f32 %v6657, %v696
      %v6676 = vmul.f32 %v6660, %v696
      %v6677 = vmul.f32 %v6663, %v696
      %v6678 = vmul.f32 %v6666, %v696
      %v6679 = vmul.f32 %v6669, %v696
      %v6680 = vmul.f32 %v6672, %v696
      %v6681 = vsub.f32 %v6639, %v6673
      %v6682 = vsub.f32 %v6640, %v6674
      %v6683 = vsub.f32 %v6641, %v6675
      %v6684 = vsub.f32 %v6642, %v6676
      %v6685 = vsub.f32 %v6643, %v6677
      %v6686 = vsub.f32 %v6644, %v6678
      %v6687 = vsub.f32 %v6645, %v6679
      %v6688 = vsub.f32 %v6646, %v6680
      %v6689 = vmul.f32 %v6681, %v6681
      %v6690 = vmul.f32 %v6682, %v6682
      %v6691 = vmul.f32 %v6683, %v6683
      %v6692 = vmul.f32 %v6684, %v6684
      %v6693 = vmul.f32 %v6685, %v6685
      %v6694 = vmul.f32 %v6686, %v6686
      %v6695 = vmul.f32 %v6687, %v6687
      %v6696 = vmul.f32 %v6688, %v6688
      %v6697 = vsel %vm671, %v6689, 0.0
      %6698 = vadd.xlane.f32.xlu0 %v6697
      %v6699 = vpop.xlane.xlu0 %6698
      %v6700 = vsel %vm671, %v6690, 0.0
      %6701 = vadd.xlane.f32.xlu0 %v6700
      %v6702 = vpop.xlane.xlu0 %6701
      %v6703 = vsel %vm671, %v6691, 0.0
      %6704 = vadd.xlane.f32.xlu0 %v6703
      %v6705 = vpop.xlane.xlu0 %6704
      %v6706 = vsel %vm671, %v6692, 0.0
      %6707 = vadd.xlane.f32.xlu0 %v6706
      %v6708 = vpop.xlane.xlu0 %6707
      %v6709 = vsel %vm671, %v6693, 0.0
      %6710 = vadd.xlane.f32.xlu0 %v6709
      %v6711 = vpop.xlane.xlu0 %6710
      %v6712 = vsel %vm671, %v6694, 0.0
      %6713 = vadd.xlane.f32.xlu0 %v6712
      %v6714 = vpop.xlane.xlu0 %6713
      %v6715 = vsel %vm671, %v6695, 0.0
      %6716 = vadd.xlane.f32.xlu0 %v6715
      %v6717 = vpop.xlane.xlu0 %6716
      %v6718 = vsel %vm671, %v6696, 0.0
      %6719 = vadd.xlane.f32.xlu0 %v6718
      %v6720 = vpop.xlane.xlu0 %6719
      %v6721 = vmul.f32 %v6699, %v696
      %v6722 = vmul.f32 %v6702, %v696
      %v6723 = vmul.f32 %v6705, %v696
      %v6724 = vmul.f32 %v6708, %v696
      %v6725 = vmul.f32 %v6711, %v696
      %v6726 = vmul.f32 %v6714, %v696
      %v6727 = vmul.f32 %v6717, %v696
      %v6728 = vmul.f32 %v6720, %v696
      %v6729 = vadd.f32 %v6721, 1e-05
      %v6730 = vadd.f32 %v6722, 1e-05
      %v6731 = vadd.f32 %v6723, 1e-05
      %v6732 = vadd.f32 %v6724, 1e-05
      %v6733 = vadd.f32 %v6725, 1e-05
      %v6734 = vadd.f32 %v6726, 1e-05
      %v6735 = vadd.f32 %v6727, 1e-05
      %v6736 = vadd.f32 %v6728, 1e-05
      %v6737 = vrsqrt.pop %v6729
      %v6738 = vrsqrt.pop %v6730
      %v6739 = vrsqrt.pop %v6731
      %v6740 = vrsqrt.pop %v6732
      %v6741 = vrsqrt.pop %v6733
      %v6742 = vrsqrt.pop %v6734
      %v6743 = vrsqrt.pop %v6735
      %v6744 = vrsqrt.pop %v6736
      %v6745 = vmul.f32 %v6681, %v6737
      %v6746 = vmul.f32 %v6682, %v6738
      %v6747 = vmul.f32 %v6683, %v6739
      %v6748 = vmul.f32 %v6684, %v6740
      %v6749 = vmul.f32 %v6685, %v6741
      %v6750 = vmul.f32 %v6686, %v6742
      %v6751 = vmul.f32 %v6687, %v6743
      %v6752 = vmul.f32 %v6688, %v6744
      %v6754 = vlaneseq
      %v6755 = vshrl.u32 %v6754, 7
      %v6756 = vsub.s32 0, %v6755
      %v6757 = vrot.slane %v6647, %v6756
      %v6759 = vmul.f32 %v6745, %v6757
      %v6760 = vmul.f32 %v6746, %v6757
      %v6761 = vmul.f32 %v6747, %v6757
      %v6762 = vmul.f32 %v6748, %v6757
      %v6763 = vmul.f32 %v6749, %v6757
      %v6764 = vmul.f32 %v6750, %v6757
      %v6765 = vmul.f32 %v6751, %v6757
      %v6766 = vmul.f32 %v6752, %v6757
      %v6768 = vlaneseq
      %v6769 = vshrl.u32 %v6768, 7
      %v6770 = vsub.s32 0, %v6769
      %v6771 = vrot.slane %v6648, %v6770
      %v6773 = vadd.f32 %v6759, %v6771
      %v6774 = vadd.f32 %v6760, %v6771
      %v6775 = vadd.f32 %v6761, %v6771
      %v6776 = vadd.f32 %v6762, %v6771
      %v6777 = vadd.f32 %v6763, %v6771
      %v6778 = vadd.f32 %v6764, %v6771
      %v6779 = vadd.f32 %v6765, %v6771
      %v6780 = vadd.f32 %v6766, %v6771
      %6781 = vst.msk [vmem:[%s658] sm:$0xff] %vm671, %v6773
      %6782 = vst.msk [vmem:[%s658 + $0x8] sm:$0xff] %vm671, %v6774
      %6783 = vst.msk [vmem:[%s658 + $0x10] sm:$0xff] %vm671, %v6775
      %6784 = vst.msk [vmem:[%s658 + $0x18] sm:$0xff] %vm671, %v6776
      %6785 = vst.msk [vmem:[%s658 + $0x20] sm:$0xff] %vm671, %v6777
      %6786 = vst.msk [vmem:[%s658 + $0x28] sm:$0xff] %vm671, %v6778
      %6787 = vst.msk [vmem:[%s658 + $0x30] sm:$0xff] %vm671, %v6779
      %6788 = vst.msk [vmem:[%s658 + $0x38] sm:$0xff] %vm671, %v6780
      %s6789 = smul.u32 8, %s32
      %p6790 = scmp.lt.s32.totalorder %s6789, 15
      %s6791 = scalar_select %p6790, %s6789, 15
      %s6792 = smul.addr %s6791, 8
      %s6793 = scalar_lea.vmem %s21, %s6792
      // Predicated region
      $region105: #{tpu_custom_call.1} parent=103 // pred_check
        %p6794 = pneg %p496
      $region106: #{tpu_custom_call.1} parent=103 // pred_check_branch
        %6796 = sbr.rel (%p6794) target = $region108
      $region107: #{tpu_custom_call.1} parent=103 // pred_region
        %s6797 = smul.u32 8, %s32
      $region108: #{tpu_custom_call.1} parent=103 // pred_fallthru
        _
    $region104: #{tpu_custom_call.1} parent=5 // pred_fallthru
      _
    %p6798 = scmp.le.s32.totalorder 2, %s27
    // Predicated region
    $region109: #{tpu_custom_call.1} parent=5 // pred_check
      %p6799 = pneg %p6798
    $region110: #{tpu_custom_call.1} parent=5 // pred_check_branch
      %6801 = sbr.rel (%p6799) target = $region112
    $region111: #{tpu_custom_call.1} parent=5 // pred_region
      %s6802 = ssub.s32 %s27, 2
      // Predicated region
      $region113: #{tpu_custom_call.1} parent=111 // pred_check
        %p6803 = pneg %p502
      $region114: #{tpu_custom_call.1} parent=111 // pred_check_branch
        %6805 = sbr.rel (%p6803) target = $region116
      $region115: #{tpu_custom_call.1} parent=111 // pred_region
        %s6806 = smul.u32 8, %s33
        %p6807 = scmp.lt.s32.totalorder %s6806, 15
        %s6808 = scalar_select %p6807, %s6806, 15
        %s6809 = smul.addr %s6808, 8
        %s6810 = scalar_lea.vmem %s21, %s6809
      $region116: #{tpu_custom_call.1} parent=111 // pred_fallthru
        _
    $region112: #{tpu_custom_call.1} parent=5 // pred_fallthru
      _
  $region6: #{tpu_custom_call.1} parent=0 // loop_footer
    %s31 = sadd.s32 1, %s27
  $region7: #{tpu_custom_call.1} parent=0 // loop_footer_branch
    %26 = sbr.rel target = $region3
  $region8: #{tpu_custom_call.1} parent=0 // loop_exit
    _

</llo_original>
